<compile_context>
chip_gen: v5e
topology: v5e:2x2
jax: 0.10.0
libtpu: 0.0.40
codegen_flags: <defaults>
</compile_context>

<pallas_src>
import functools
import math

import jax
import jax.numpy as jnp
from jax.experimental import pallas as pl
from jax.experimental.pallas import tpu as pltpu

# ----------------------------------------------------------------------------
# Model configuration (small, consistent with the module's constructor)
# ----------------------------------------------------------------------------
INPUT_DIM = 4
ENCODER_WIDTHS = [16, 32]
DECODER_WIDTHS = [16, 32]
OUT_CONV = [8, 1]
STR_K, STR_S, STR_P = 2, 2, 0          # strided up/down conv hyper-params
N_HEAD = 4
D_MODEL = 32
D_K = 4
PAD_VALUE = 0.0
N_GROUPS = 4                            # GroupNorm groups in ConvLayer
PE_T = 1000.0
BN_EPS = 1e-5

# MXU operand dtype: bf16 inputs + f32 accumulation (v5e/v6e/v7x MXUs are
# bf16-native; epilogue / all non-matmul math stays f32).  Set to jnp.float32
# to recover exact f32 semantics.
MXU_DTYPE = jnp.bfloat16

MAX_TILE_M = 512                        # lane tile for the big (N*Ho*Wo) dim


# ----------------------------------------------------------------------------
# Pallas matmul + bias (+ optional fused ReLU) kernel — the hot path
# ----------------------------------------------------------------------------
def _round_up(x, m):
    return (x + m - 1) // m * m


def _pick_tile(mp):
    """mp is a multiple of 128. Prefer >= 2 grid steps (both v7x TCs get work)
    with a tile of at most MAX_TILE_M lanes."""
    if mp <= 128:
        return mp
    for t in (MAX_TILE_M, 256, 128):
        if mp % t == 0 and mp // t >= 2:
            return t
    return 128


def _mm_kernel(w_ref, x_ref, b_ref, o_ref, *, relu):
    # Single K block -> no accumulator scratch, no init/finalize conditionals.
    acc = jnp.dot(w_ref[...], x_ref[...], preferred_element_type=jnp.float32)
    acc = acc + b_ref[...]                      # (Cout,1) lane-broadcast, f32
    if relu:
        acc = jnp.maximum(acc, 0.0)
    o_ref[...] = acc.astype(o_ref.dtype)


def matmul_bias_act(w, x, bias, relu=False):
    """out(Cout, M) = w(Cout, K) @ x(K, M) + bias[:, None]  (+ optional ReLU).

    Full-extent blocks for w / bias / the K axis (no zero padding of K or Cout);
    only M is tiled (lane-dense output).  Weights stay resident in VMEM via a
    constant index_map.  Operands go to the MXU as bf16, accumulation is f32.
    """
    cout, K = w.shape
    K2, M = x.shape
    assert K == K2
    mp = _round_up(M, 128)
    if mp != M:
        x = jnp.pad(x, ((0, 0), (0, mp - M)))
    tile = _pick_tile(mp)

    w_op = w.astype(MXU_DTYPE)
    x_op = x.astype(MXU_DTYPE)
    b_op = bias.astype(jnp.float32).reshape(cout, 1)

    out = pl.pallas_call(
        functools.partial(_mm_kernel, relu=relu),
        out_shape=jax.ShapeDtypeStruct((cout, mp), jnp.float32),
        grid_spec=pltpu.PrefetchScalarGridSpec(
            num_scalar_prefetch=0,
            grid=(mp // tile,),
            in_specs=[
                pl.BlockSpec((cout, K), lambda i: (0, 0)),   # weights: resident
                pl.BlockSpec((K, tile), lambda i: (0, i)),   # patches: M-tiled
                pl.BlockSpec((cout, 1), lambda i: (0, 0)),   # bias: resident
            ],
            out_specs=pl.BlockSpec((cout, tile), lambda i: (0, i)),
        ),
        compiler_params=pltpu.CompilerParams(
            dimension_semantics=("parallel",)),
    )(w_op, x_op, b_op)
    if mp != M:
        out = out[:, :M]
    return out


# ----------------------------------------------------------------------------
# Conv / norm helpers (im2col in (K, M) layout -> Pallas matmul)
# ----------------------------------------------------------------------------
def conv2d(x, wm, b, k, stride=1, padding=1, padding_mode="reflect",
           relu=False):
    """x: (N,Cin,H,W), wm: (Cout, Cin*k*k), b: (Cout,) -> (N,Cout,Ho,Wo)."""
    N, C, H, W = x.shape
    cout = wm.shape[0]
    if padding > 0:
        x = jnp.pad(x, ((0, 0), (0, 0), (padding, padding), (padding, padding)),
                    mode=padding_mode)
    Hp, Wp = x.shape[2], x.shape[3]
    Ho = (Hp - k) // stride + 1
    Wo = (Wp - k) // stride + 1
    if k == 1 and stride == 1:
        p = x.reshape(N, C, Ho * Wo).transpose(1, 0, 2).reshape(C, N * Ho * Wo)
    else:
        # TODO(synk): eliminate the materialized im2col by doing the k*k tap
        # shifts on a VMEM-resident padded feature map inside the kernel.
        cols = [x[:, :, i:i + stride * Ho:stride, j:j + stride * Wo:stride]
                for i in range(k) for j in range(k)]
        p = jnp.stack(cols, axis=2)                    # (N, C, k*k, Ho, Wo)
        p = p.transpose(1, 2, 0, 3, 4).reshape(C * k * k, N * Ho * Wo)
    out = matmul_bias_act(wm, p, b, relu=relu)         # (Cout, N*Ho*Wo)
    return out.reshape(cout, N, Ho, Wo).transpose(1, 0, 2, 3)


def conv_transpose2d_k2s2(x, wm, b, relu=False):
    """ConvTranspose2d kernel=stride=2, padding=0.
    x: (N,Cin,H,W), wm: (Cout*4, Cin) with rows ordered (cout, kh, kw),
    b: (Cout,) -> (N,Cout,2H,2W)."""
    N, Cin, H, W = x.shape
    cout4 = wm.shape[0]
    cout = cout4 // 4
    xm = x.reshape(N, Cin, H * W).transpose(1, 0, 2).reshape(Cin, N * H * W)
    bias_full = jnp.repeat(b, 4)                       # cout-major, matches rows
    out = matmul_bias_act(wm, xm, bias_full, relu=relu)   # (Cout*4, N*H*W)
    out = out.reshape(cout, 2, 2, N, H, W)
    out = out.transpose(3, 0, 4, 1, 5, 2).reshape(N, cout, 2 * H, 2 * W)
    return out


def group_norm(x, gamma, beta, num_groups, eps=1e-5):
    N, C = x.shape[0], x.shape[1]
    xr = x.reshape(N, num_groups, -1)
    mean = xr.mean(-1, keepdims=True)
    var = xr.var(-1, keepdims=True)
    xn = ((xr - mean) / jnp.sqrt(var + eps)).reshape(x.shape)
    bshape = (1, C) + (1,) * (x.ndim - 2)
    return xn * gamma.reshape(bshape) + beta.reshape(bshape)


def fold_bn(wm, b, gamma, beta):
    """Fold eval-mode BatchNorm (running mean=0, var=1) into weights + bias."""
    s = gamma / jnp.sqrt(1.0 + BN_EPS)
    return wm * s[:, None], b * s + beta


def conv_layer_group(x, layers, k=3, s=1, pad=1, last_relu=True,
                     padding_mode="reflect"):
    """Conv -> GroupNorm -> ReLU per layer (GroupNorm cannot be folded)."""
    n = len(layers)
    for i, lp in enumerate(layers):
        x = conv2d(x, lp["wm"], lp["b"], k, stride=s, padding=pad,
                   padding_mode=padding_mode, relu=False)
        x = group_norm(x, lp["gamma"], lp["beta"], N_GROUPS)
        if last_relu or i < n - 1:
            x = jax.nn.relu(x)
    return x


def conv_layer_batch(x, layers, k=3, s=1, pad=1, last_relu=True,
                     padding_mode="reflect"):
    """Conv -> BatchNorm(eval) -> ReLU per layer; BN folded, ReLU fused."""
    n = len(layers)
    for i, lp in enumerate(layers):
        wm, b = fold_bn(lp["wm"], lp["b"], lp["gamma"], lp["beta"])
        relu = last_relu or i < n - 1
        x = conv2d(x, wm, b, k, stride=s, padding=pad,
                   padding_mode=padding_mode, relu=relu)
    return x


# ----------------------------------------------------------------------------
# LTAE2d temporal encoder (tiny matmuls: plain jnp, XLA fuses them)
# ----------------------------------------------------------------------------
def positional_encoding(positions):
    """positions: (N, T) -> (N, T, D_MODEL) sinusoidal table repeated per head."""
    d = D_MODEL // N_HEAD
    denom = jnp.power(PE_T, 2.0 * (jnp.arange(d) // 2) / d)
    table = positions[:, :, None] / denom[None, None, :]
    idx = jnp.arange(d)
    table = jnp.where(idx % 2 == 0, jnp.sin(table), jnp.cos(table))
    return jnp.tile(table, (1, 1, N_HEAD))


def ltae_forward(p, x5, batch_positions, pad_mask):
    B, T, d, h, w = x5.shape
    sz = B * h * w
    out = x5.transpose(0, 3, 4, 1, 2).reshape(sz, T, d)          # (sz, T, d)
    pm = jnp.broadcast_to(pad_mask[:, None, None, :], (B, h, w, T)).reshape(sz, T)

    # in_norm: GroupNorm(n_head) over (C, T)
    o = out.transpose(0, 2, 1)                                    # (sz, d, T)
    o = group_norm(o, p["in_norm_g"], p["in_norm_b"], N_HEAD)
    out = o.transpose(0, 2, 1)

    # inconv: Conv1d(k=1) == per-timestep linear (weight pre-transposed)
    out = (out.reshape(sz * T, d) @ p["inconv_wT"]
           + p["inconv_b"]).reshape(sz, T, D_MODEL)

    # positional encoding
    bp = jnp.broadcast_to(batch_positions[:, None, None, :],
                          (B, h, w, T)).reshape(sz, T)
    out = out + positional_encoding(bp)

    # multi-head attention (master-query style, LTAE)
    k = (out.reshape(sz * T, D_MODEL) @ p["fc1k_wT"]
         + p["fc1k_b"]).reshape(sz, T, N_HEAD, D_K)
    k = k.transpose(2, 0, 1, 3)                                   # (H, sz, T, dk)
    scores = jnp.einsum("hd,hstd->hst", p["Q"], k) / jnp.sqrt(float(D_K))
    scores = jnp.where(pm[None, :, :], -1e3, scores)              # masked_fill
    attn = jax.nn.softmax(scores, axis=-1)                        # (H, sz, T)

    dh = D_MODEL // N_HEAD
    vh = out.reshape(sz, T, N_HEAD, dh).transpose(2, 0, 1, 3)     # (H, sz, T, dh)
    o_att = jnp.einsum("hst,hstd->hsd", attn, vh)                 # (H, sz, dh)
    o_cat = o_att.transpose(1, 0, 2).reshape(sz, N_HEAD * dh)     # concat heads

    # MLP: Linear + BatchNorm1d(eval, folded) + ReLU; dropout(eval)=identity
    s_bn = p["mlp_bn_g"] / jnp.sqrt(1.0 + BN_EPS)
    o2 = o_cat @ (p["mlp_wT"] * s_bn[None, :]) + (p["mlp_b"] * s_bn + p["mlp_bn_b"])
    o2 = jax.nn.relu(o2)
    o2 = group_norm(o2, p["out_norm_g"], p["out_norm_b"], N_HEAD)

    out_map = o2.reshape(B, h, w, -1).transpose(0, 3, 1, 2)       # (B, C, h, w)
    att_map = attn.reshape(N_HEAD, B, h, w, T).transpose(0, 1, 4, 2, 3)
    return out_map, att_map


# ----------------------------------------------------------------------------
# Temporal aggregator (att_group mode, pad-mask branch)
# ----------------------------------------------------------------------------
def temporal_aggregator(x, pad_mask, attn_mask):
    n_heads, B, T, h, w = attn_mask.shape
    Hx, Wx = x.shape[-2:]
    attn = attn_mask.reshape(n_heads * B, T, h, w)
    if Hx > w:
        # bilinear upsample, half-pixel centers == PyTorch align_corners=False
        attn = jax.image.resize(attn, (n_heads * B, T, Hx, Wx), method="bilinear")
    else:
        ks = w // Hx
        attn = attn.reshape(n_heads * B, T, Hx, ks, Wx, ks).mean(axis=(3, 5))
    attn = attn.reshape(n_heads, B, T, Hx, Wx)
    attn = attn * (1.0 - pad_mask.astype(attn.dtype))[None, :, :, None, None]
    C = x.shape[2]
    cg = C // n_heads
    xg = x.reshape(B, T, n_heads, cg, Hx, Wx).transpose(2, 0, 1, 3, 4, 5)
    out = (attn[:, :, :, None, :, :] * xg).sum(axis=2)            # (H,B,cg,Hx,Wx)
    out = out.transpose(1, 0, 2, 3, 4).reshape(B, n_heads * cg, Hx, Wx)
    return out


# ----------------------------------------------------------------------------
# UTAE blocks
# ----------------------------------------------------------------------------
def down_block(z, p):
    z = conv_layer_group(z, p["down"], k=STR_K, s=STR_S, pad=STR_P)
    z = conv_layer_group(z, p["conv1"])
    z = z + conv_layer_group(z, p["conv2"])
    return z


def up_block(out, skip, p):
    # ConvTranspose2d + BatchNorm(eval, folded) + ReLU(fused)
    s_up = p["up_bn_g"] / jnp.sqrt(1.0 + BN_EPS)
    wm_up = p["up_wm"] * jnp.repeat(s_up, STR_K * STR_K)[:, None]
    b_up = p["up_b"] * s_up + p["up_bn_b"]
    o = conv_transpose2d_k2s2(out, wm_up, b_up, relu=True)

    # skip: Conv2d(1x1) + BatchNorm(eval, folded) + ReLU(fused)
    wm_sk, b_sk = fold_bn(p["skip_wm"], p["skip_b"],
                          p["skip_bn_g"], p["skip_bn_b"])
    s = conv2d(skip, wm_sk, b_sk, 1, stride=1, padding=0, relu=True)

    o = jnp.concatenate([o, s], axis=1)
    o = conv_layer_batch(o, p["conv1"])
    o = o + conv_layer_batch(o, p["conv2"])
    return o


def utae_forward(params, x, batch_positions):
    """x: (B, T, C, H, W) float32, batch_positions: (B, T) float32."""
    B, T, C, H, W = x.shape
    pad_mask = jnp.all(x == PAD_VALUE, axis=(2, 3, 4))            # (B, T)

    def apply_shared(fn, inp):
        b, t = inp.shape[:2]
        flat = inp.reshape((b * t,) + inp.shape[2:])
        out = fn(flat)
        out = out.reshape((b, t) + out.shape[1:])
        # smart_forward: padded frames -> pad_value
        return jnp.where(pad_mask[:, :, None, None, None], PAD_VALUE, out)

    f0 = apply_shared(lambda z: conv_layer_group(z, params["in_conv"]), x)
    f1 = apply_shared(lambda z: down_block(z, params["down0"]), f0)

    enc, att = ltae_forward(params["ltae"], f1, batch_positions, pad_mask)

    skip = temporal_aggregator(f0, pad_mask, att)
    dec = up_block(enc, skip, params["up0"])

    out = conv_layer_batch(dec, params["out_conv"], last_relu=False)
    return out


# ----------------------------------------------------------------------------
# Deterministic parameter initialisation (weights stored pre-reshaped)
# ----------------------------------------------------------------------------
def _conv_params(key, cout, cin, kh, kw=None):
    kw = kh if kw is None else kw
    k1, k2 = jax.random.split(key)
    bound = 1.0 / math.sqrt(cin * kh * kw)
    w = jax.random.uniform(k1, (cout, cin, kh, kw), jnp.float32, -bound, bound)
    b = jax.random.uniform(k2, (cout,), jnp.float32, -bound, bound)
    return w, b


def _linear_params(key, cout, cin):
    k1, k2 = jax.random.split(key)
    bound = 1.0 / math.sqrt(cin)
    w = jax.random.uniform(k1, (cout, cin), jnp.float32, -bound, bound)
    b = jax.random.uniform(k2, (cout,), jnp.float32, -bound, bound)
    return w, b


def init_params(key):
    keys = iter(jax.random.split(key, 64))

    def conv_p(cout, cin, k):
        w, b = _conv_params(next(keys), cout, cin, k)
        return {"wm": w.reshape(cout, cin * k * k), "b": b,
                "gamma": jnp.ones((cout,), jnp.float32),
                "beta": jnp.zeros((cout,), jnp.float32)}

    params = {}
    # in_conv: ConvLayer [input_dim, 16, 16], GroupNorm
    params["in_conv"] = [conv_p(ENCODER_WIDTHS[0], INPUT_DIM, 3),
                         conv_p(ENCODER_WIDTHS[0], ENCODER_WIDTHS[0], 3)]
    # one DownConvBlock (16 -> 32)
    params["down0"] = {
        "down": [conv_p(ENCODER_WIDTHS[0], ENCODER_WIDTHS[0], STR_K)],
        "conv1": [conv_p(ENCODER_WIDTHS[1], ENCODER_WIDTHS[0], 3)],
        "conv2": [conv_p(ENCODER_WIDTHS[1], ENCODER_WIDTHS[1], 3)],
    }
    # LTAE2d (linear weights pre-transposed)
    in_w, in_b = _linear_params(next(keys), D_MODEL, ENCODER_WIDTHS[-1])
    Q = jax.random.normal(next(keys), (N_HEAD, D_K), jnp.float32) * math.sqrt(2.0 / D_K)
    fc1k_w = jax.random.normal(next(keys), (N_HEAD * D_K, D_MODEL),
                               jnp.float32) * math.sqrt(2.0 / D_K)
    fc1k_b = jnp.zeros((N_HEAD * D_K,), jnp.float32)
    mlp_w, mlp_b = _linear_params(next(keys), D_MODEL, D_MODEL)
    params["ltae"] = {
        "in_norm_g": jnp.ones((ENCODER_WIDTHS[-1],), jnp.float32),
        "in_norm_b": jnp.zeros((ENCODER_WIDTHS[-1],), jnp.float32),
        "inconv_wT": in_w.T, "inconv_b": in_b,
        "Q": Q, "fc1k_wT": fc1k_w.T, "fc1k_b": fc1k_b,
        "mlp_wT": mlp_w.T, "mlp_b": mlp_b,
        "mlp_bn_g": jnp.ones((D_MODEL,), jnp.float32),
        "mlp_bn_b": jnp.zeros((D_MODEL,), jnp.float32),
        "out_norm_g": jnp.ones((ENCODER_WIDTHS[-1],), jnp.float32),
        "out_norm_b": jnp.zeros((ENCODER_WIDTHS[-1],), jnp.float32),
    }
    # one UpConvBlock (32 -> 16, skip 16)
    k1, k2 = jax.random.split(next(keys))
    up_bound = 1.0 / math.sqrt(DECODER_WIDTHS[0] * STR_K * STR_K)
    up_w = jax.random.uniform(k1, (DECODER_WIDTHS[1], DECODER_WIDTHS[0],
                                   STR_K, STR_K), jnp.float32, -up_bound, up_bound)
    up_b = jax.random.uniform(k2, (DECODER_WIDTHS[0],), jnp.float32,
                              -up_bound, up_bound)
    skip_w, skip_b = _conv_params(next(keys), ENCODER_WIDTHS[0],
                                  ENCODER_WIDTHS[0], 1)
    params["up0"] = {
        # rows ordered (cout, kh, kw): wm[cout*4 + i*2 + j, cin] = w[cin,cout,i,j]
        "up_wm": up_w.transpose(1, 2, 3, 0).reshape(
            DECODER_WIDTHS[0] * STR_K * STR_K, DECODER_WIDTHS[1]),
        "up_b": up_b,
        "up_bn_g": jnp.ones((DECODER_WIDTHS[0],), jnp.float32),
        "up_bn_b": jnp.zeros((DECODER_WIDTHS[0],), jnp.float32),
        "skip_wm": skip_w.reshape(ENCODER_WIDTHS[0], ENCODER_WIDTHS[0]),
        "skip_b": skip_b,
        "skip_bn_g": jnp.ones((ENCODER_WIDTHS[0],), jnp.float32),
        "skip_bn_b": jnp.zeros((ENCODER_WIDTHS[0],), jnp.float32),
        "conv1": [conv_p(DECODER_WIDTHS[0],
                         DECODER_WIDTHS[0] + ENCODER_WIDTHS[0], 3)],
        "conv2": [conv_p(DECODER_WIDTHS[0], DECODER_WIDTHS[0], 3)],
    }
    # out_conv: ConvLayer [16, 8, 1], BatchNorm, last_relu=False
    params["out_conv"] = [conv_p(OUT_CONV[0], DECODER_WIDTHS[0], 3),
                          conv_p(OUT_CONV[1], OUT_CONV[0], 3)]
    return params


# ----------------------------------------------------------------------------
if __name__ == "__main__":
    key = jax.random.PRNGKey(0)
    pkey, xkey = jax.random.split(key)
    params = init_params(pkey)

    B, T, C, H, W = 2, 4, INPUT_DIM, 16, 16
    x = jax.random.normal(xkey, (B, T, C, H, W), jnp.float32)
    # make one temporally padded frame to exercise the pad-mask path
    x = x.at[0, -1].set(PAD_VALUE)
    batch_positions = jnp.array([[0., 10., 20., 30.],
                                 [0., 5., 15., 25.]], jnp.float32)

    fwd = jax.jit(functools.partial(utae_forward, params))
    out = fwd(x, batch_positions)
    jax.block_until_ready(out)
    assert out.shape == (B, OUT_CONV[-1], H, W)
    assert bool(jnp.all(jnp.isfinite(out)))
    print("KERNEL_OK")
</pallas_src>

<mosaic_0001>
module attributes {stable_mosaic.version = 11 : i64} {
  func.func @_mm_kernel(%arg0: i32, %arg1: memref<16x36xbf16, #tpu.memory_space<vmem>>, %arg2: memref<36x512xbf16, #tpu.memory_space<vmem>>, %arg3: memref<16x1xf32, #tpu.memory_space<vmem>>, %arg4: memref<16x512xf32, #tpu.memory_space<vmem>>) attributes {dimension_semantics = [#tpu.dimension_semantics<parallel>], iteration_bounds = array<i64: 4>, scalar_prefetch = 0 : i64, scratch_operands = 0 : i64, tpu.core_type = #tpu.core_type<tc>, window_params = [{pipeline_mode = #tpu.pipeline_mode<synchronous>, transform_indices = @transform_0, window_bounds = array<i64: 16, 36>}, {transform_indices = @transform_1, window_bounds = array<i64: 36, 512>}, {pipeline_mode = #tpu.pipeline_mode<synchronous>, transform_indices = @transform_2, window_bounds = array<i64: 16, 1>}, {transform_indices = @transform_3, window_bounds = array<i64: 16, 512>}]} {
    %c0 = arith.constant 0 : index
    %c0_0 = arith.constant 0 : index
    %0 = vector.load %arg1[%c0, %c0_0] : memref<16x36xbf16, #tpu.memory_space<vmem>>, vector<16x36xbf16>
    %c0_1 = arith.constant 0 : index
    %c0_2 = arith.constant 0 : index
    %1 = vector.load %arg2[%c0_1, %c0_2] : memref<36x512xbf16, #tpu.memory_space<vmem>>, vector<36x512xbf16>
    %cst = arith.constant dense<0.000000e+00> : vector<16x512xf32>
    %2 = tpu.matmul %0, %1, %cst {dimension_numbers = #tpu.dot_dimension_numbers<[1], [0], [0], [1], [0, 0, 1, 1], [], []>} : vector<16x36xbf16>, vector<36x512xbf16>, vector<16x512xf32> -> vector<16x512xf32>
    %c0_3 = arith.constant 0 : index
    %c0_4 = arith.constant 0 : index
    %3 = vector.load %arg3[%c0_3, %c0_4] : memref<16x1xf32, #tpu.memory_space<vmem>>, vector<16x1xf32>
    %4 = vector.broadcast %3 : vector<16x1xf32> to vector<16x512xf32>
    %5 = arith.addf %2, %4 : vector<16x512xf32>
    %c0_5 = arith.constant 0 : index
    %c0_6 = arith.constant 0 : index
    %6 = vector.load %arg4[%c0_5, %c0_6] : memref<16x512xf32, #tpu.memory_space<vmem>>, vector<16x512xf32>
    tpu.vector_store %arg4[%c0_5, %c0_6], %5 {strides = array<i32>} : memref<16x512xf32, #tpu.memory_space<vmem>>, vector<16x512xf32>,
    return
  }
  func.func @transform_0(%arg0: i32) -> (i32, i32) {
    %c0_i32 = arith.constant 0 : i32
    %c0_i32_0 = arith.constant 0 : i32
    %c0_i32_1 = arith.constant 0 : i32
    return %c0_i32, %c0_i32_0 : i32, i32
  }
  func.func @transform_1(%arg0: i32) -> (i32, i32) {
    %c0_i32 = arith.constant 0 : i32
    %c0_i32_0 = arith.constant 0 : i32
    return %c0_i32, %arg0 : i32, i32
  }
  func.func @transform_2(%arg0: i32) -> (i32, i32) {
    %c0_i32 = arith.constant 0 : i32
    %c0_i32_0 = arith.constant 0 : i32
    %c0_i32_1 = arith.constant 0 : i32
    return %c0_i32, %c0_i32_0 : i32, i32
  }
  func.func @transform_3(%arg0: i32) -> (i32, i32) {
    %c0_i32 = arith.constant 0 : i32
    %c0_i32_0 = arith.constant 0 : i32
    return %c0_i32, %arg0 : i32, i32
  }
}

module attributes {stable_mosaic.version = 11 : i64} {
  func.func @_mm_kernel(%arg0: i32, %arg1: memref<16x144xbf16, #tpu.memory_space<vmem>>, %arg2: memref<144x512xbf16, #tpu.memory_space<vmem>>, %arg3: memref<16x1xf32, #tpu.memory_space<vmem>>, %arg4: memref<16x512xf32, #tpu.memory_space<vmem>>) attributes {dimension_semantics = [#tpu.dimension_semantics<parallel>], iteration_bounds = array<i64: 4>, scalar_prefetch = 0 : i64, scratch_operands = 0 : i64, tpu.core_type = #tpu.core_type<tc>, window_params = [{pipeline_mode = #tpu.pipeline_mode<synchronous>, transform_indices = @transform_0, window_bounds = array<i64: 16, 144>}, {transform_indices = @transform_1, window_bounds = array<i64: 144, 512>}, {pipeline_mode = #tpu.pipeline_mode<synchronous>, transform_indices = @transform_2, window_bounds = array<i64: 16, 1>}, {transform_indices = @transform_3, window_bounds = array<i64: 16, 512>}]} {
    %c0 = arith.constant 0 : index
    %c0_0 = arith.constant 0 : index
    %0 = vector.load %arg1[%c0, %c0_0] : memref<16x144xbf16, #tpu.memory_space<vmem>>, vector<16x144xbf16>
    %c0_1 = arith.constant 0 : index
    %c0_2 = arith.constant 0 : index
    %1 = vector.load %arg2[%c0_1, %c0_2] : memref<144x512xbf16, #tpu.memory_space<vmem>>, vector<144x512xbf16>
    %cst = arith.constant dense<0.000000e+00> : vector<16x512xf32>
    %2 = tpu.matmul %0, %1, %cst {dimension_numbers = #tpu.dot_dimension_numbers<[1], [0], [0], [1], [0, 0, 1, 1], [], []>} : vector<16x144xbf16>, vector<144x512xbf16>, vector<16x512xf32> -> vector<16x512xf32>
    %c0_3 = arith.constant 0 : index
    %c0_4 = arith.constant 0 : index
    %3 = vector.load %arg3[%c0_3, %c0_4] : memref<16x1xf32, #tpu.memory_space<vmem>>, vector<16x1xf32>
    %4 = vector.broadcast %3 : vector<16x1xf32> to vector<16x512xf32>
    %5 = arith.addf %2, %4 : vector<16x512xf32>
    %c0_5 = arith.constant 0 : index
    %c0_6 = arith.constant 0 : index
    %6 = vector.load %arg4[%c0_5, %c0_6] : memref<16x512xf32, #tpu.memory_space<vmem>>, vector<16x512xf32>
    tpu.vector_store %arg4[%c0_5, %c0_6], %5 {strides = array<i32>} : memref<16x512xf32, #tpu.memory_space<vmem>>, vector<16x512xf32>,
    return
  }
  func.func @transform_0(%arg0: i32) -> (i32, i32) {
    %c0_i32 = arith.constant 0 : i32
    %c0_i32_0 = arith.constant 0 : i32
    %c0_i32_1 = arith.constant 0 : i32
    return %c0_i32, %c0_i32_0 : i32, i32
  }
  func.func @transform_1(%arg0: i32) -> (i32, i32) {
    %c0_i32 = arith.constant 0 : i32
    %c0_i32_0 = arith.constant 0 : i32
    return %c0_i32, %arg0 : i32, i32
  }
  func.func @transform_2(%arg0: i32) -> (i32, i32) {
    %c0_i32 = arith.constant 0 : i32
    %c0_i32_0 = arith.constant 0 : i32
    %c0_i32_1 = arith.constant 0 : i32
    return %c0_i32, %c0_i32_0 : i32, i32
  }
  func.func @transform_3(%arg0: i32) -> (i32, i32) {
    %c0_i32 = arith.constant 0 : i32
    %c0_i32_0 = arith.constant 0 : i32
    return %c0_i32, %arg0 : i32, i32
  }
}

module attributes {stable_mosaic.version = 11 : i64} {
  func.func @_mm_kernel(%arg0: i32, %arg1: memref<16x64xbf16, #tpu.memory_space<vmem>>, %arg2: memref<64x256xbf16, #tpu.memory_space<vmem>>, %arg3: memref<16x1xf32, #tpu.memory_space<vmem>>, %arg4: memref<16x256xf32, #tpu.memory_space<vmem>>) attributes {dimension_semantics = [#tpu.dimension_semantics<parallel>], iteration_bounds = array<i64: 2>, scalar_prefetch = 0 : i64, scratch_operands = 0 : i64, tpu.core_type = #tpu.core_type<tc>, window_params = [{pipeline_mode = #tpu.pipeline_mode<synchronous>, transform_indices = @transform_0, window_bounds = array<i64: 16, 64>}, {transform_indices = @transform_1, window_bounds = array<i64: 64, 256>}, {pipeline_mode = #tpu.pipeline_mode<synchronous>, transform_indices = @transform_2, window_bounds = array<i64: 16, 1>}, {transform_indices = @transform_3, window_bounds = array<i64: 16, 256>}]} {
    %c0 = arith.constant 0 : index
    %c0_0 = arith.constant 0 : index
    %0 = vector.load %arg1[%c0, %c0_0] : memref<16x64xbf16, #tpu.memory_space<vmem>>, vector<16x64xbf16>
    %c0_1 = arith.constant 0 : index
    %c0_2 = arith.constant 0 : index
    %1 = vector.load %arg2[%c0_1, %c0_2] : memref<64x256xbf16, #tpu.memory_space<vmem>>, vector<64x256xbf16>
    %cst = arith.constant dense<0.000000e+00> : vector<16x256xf32>
    %2 = tpu.matmul %0, %1, %cst {dimension_numbers = #tpu.dot_dimension_numbers<[1], [0], [0], [1], [0, 0, 1, 1], [], []>} : vector<16x64xbf16>, vector<64x256xbf16>, vector<16x256xf32> -> vector<16x256xf32>
    %c0_3 = arith.constant 0 : index
    %c0_4 = arith.constant 0 : index
    %3 = vector.load %arg3[%c0_3, %c0_4] : memref<16x1xf32, #tpu.memory_space<vmem>>, vector<16x1xf32>
    %4 = vector.broadcast %3 : vector<16x1xf32> to vector<16x256xf32>
    %5 = arith.addf %2, %4 : vector<16x256xf32>
    %c0_5 = arith.constant 0 : index
    %c0_6 = arith.constant 0 : index
    %6 = vector.load %arg4[%c0_5, %c0_6] : memref<16x256xf32, #tpu.memory_space<vmem>>, vector<16x256xf32>
    tpu.vector_store %arg4[%c0_5, %c0_6], %5 {strides = array<i32>} : memref<16x256xf32, #tpu.memory_space<vmem>>, vector<16x256xf32>,
    return
  }
  func.func @transform_0(%arg0: i32) -> (i32, i32) {
    %c0_i32 = arith.constant 0 : i32
    %c0_i32_0 = arith.constant 0 : i32
    %c0_i32_1 = arith.constant 0 : i32
    return %c0_i32, %c0_i32_0 : i32, i32
  }
  func.func @transform_1(%arg0: i32) -> (i32, i32) {
    %c0_i32 = arith.constant 0 : i32
    %c0_i32_0 = arith.constant 0 : i32
    return %c0_i32, %arg0 : i32, i32
  }
  func.func @transform_2(%arg0: i32) -> (i32, i32) {
    %c0_i32 = arith.constant 0 : i32
    %c0_i32_0 = arith.constant 0 : i32
    %c0_i32_1 = arith.constant 0 : i32
    return %c0_i32, %c0_i32_0 : i32, i32
  }
  func.func @transform_3(%arg0: i32) -> (i32, i32) {
    %c0_i32 = arith.constant 0 : i32
    %c0_i32_0 = arith.constant 0 : i32
    return %c0_i32, %arg0 : i32, i32
  }
}

module attributes {stable_mosaic.version = 11 : i64} {
  func.func @_mm_kernel(%arg0: i32, %arg1: memref<32x144xbf16, #tpu.memory_space<vmem>>, %arg2: memref<144x256xbf16, #tpu.memory_space<vmem>>, %arg3: memref<32x1xf32, #tpu.memory_space<vmem>>, %arg4: memref<32x256xf32, #tpu.memory_space<vmem>>) attributes {dimension_semantics = [#tpu.dimension_semantics<parallel>], iteration_bounds = array<i64: 2>, scalar_prefetch = 0 : i64, scratch_operands = 0 : i64, tpu.core_type = #tpu.core_type<tc>, window_params = [{pipeline_mode = #tpu.pipeline_mode<synchronous>, transform_indices = @transform_0, window_bounds = array<i64: 32, 144>}, {transform_indices = @transform_1, window_bounds = array<i64: 144, 256>}, {pipeline_mode = #tpu.pipeline_mode<synchronous>, transform_indices = @transform_2, window_bounds = array<i64: 32, 1>}, {transform_indices = @transform_3, window_bounds = array<i64: 32, 256>}]} {
    %c0 = arith.constant 0 : index
    %c0_0 = arith.constant 0 : index
    %0 = vector.load %arg1[%c0, %c0_0] : memref<32x144xbf16, #tpu.memory_space<vmem>>, vector<32x144xbf16>
    %c0_1 = arith.constant 0 : index
    %c0_2 = arith.constant 0 : index
    %1 = vector.load %arg2[%c0_1, %c0_2] : memref<144x256xbf16, #tpu.memory_space<vmem>>, vector<144x256xbf16>
    %cst = arith.constant dense<0.000000e+00> : vector<32x256xf32>
    %2 = tpu.matmul %0, %1, %cst {dimension_numbers = #tpu.dot_dimension_numbers<[1], [0], [0], [1], [0, 0, 1, 1], [], []>} : vector<32x144xbf16>, vector<144x256xbf16>, vector<32x256xf32> -> vector<32x256xf32>
    %c0_3 = arith.constant 0 : index
    %c0_4 = arith.constant 0 : index
    %3 = vector.load %arg3[%c0_3, %c0_4] : memref<32x1xf32, #tpu.memory_space<vmem>>, vector<32x1xf32>
    %4 = vector.broadcast %3 : vector<32x1xf32> to vector<32x256xf32>
    %5 = arith.addf %2, %4 : vector<32x256xf32>
    %c0_5 = arith.constant 0 : index
    %c0_6 = arith.constant 0 : index
    %6 = vector.load %arg4[%c0_5, %c0_6] : memref<32x256xf32, #tpu.memory_space<vmem>>, vector<32x256xf32>
    tpu.vector_store %arg4[%c0_5, %c0_6], %5 {strides = array<i32>} : memref<32x256xf32, #tpu.memory_space<vmem>>, vector<32x256xf32>,
    return
  }
  func.func @transform_0(%arg0: i32) -> (i32, i32) {
    %c0_i32 = arith.constant 0 : i32
    %c0_i32_0 = arith.constant 0 : i32
    %c0_i32_1 = arith.constant 0 : i32
    return %c0_i32, %c0_i32_0 : i32, i32
  }
  func.func @transform_1(%arg0: i32) -> (i32, i32) {
    %c0_i32 = arith.constant 0 : i32
    %c0_i32_0 = arith.constant 0 : i32
    return %c0_i32, %arg0 : i32, i32
  }
  func.func @transform_2(%arg0: i32) -> (i32, i32) {
    %c0_i32 = arith.constant 0 : i32
    %c0_i32_0 = arith.constant 0 : i32
    %c0_i32_1 = arith.constant 0 : i32
    return %c0_i32, %c0_i32_0 : i32, i32
  }
  func.func @transform_3(%arg0: i32) -> (i32, i32) {
    %c0_i32 = arith.constant 0 : i32
    %c0_i32_0 = arith.constant 0 : i32
    return %c0_i32, %arg0 : i32, i32
  }
}

module attributes {stable_mosaic.version = 11 : i64} {
  func.func @_mm_kernel(%arg0: i32, %arg1: memref<32x288xbf16, #tpu.memory_space<vmem>>, %arg2: memref<288x256xbf16, #tpu.memory_space<vmem>>, %arg3: memref<32x1xf32, #tpu.memory_space<vmem>>, %arg4: memref<32x256xf32, #tpu.memory_space<vmem>>) attributes {dimension_semantics = [#tpu.dimension_semantics<parallel>], iteration_bounds = array<i64: 2>, scalar_prefetch = 0 : i64, scratch_operands = 0 : i64, tpu.core_type = #tpu.core_type<tc>, window_params = [{pipeline_mode = #tpu.pipeline_mode<synchronous>, transform_indices = @transform_0, window_bounds = array<i64: 32, 288>}, {transform_indices = @transform_1, window_bounds = array<i64: 288, 256>}, {pipeline_mode = #tpu.pipeline_mode<synchronous>, transform_indices = @transform_2, window_bounds = array<i64: 32, 1>}, {transform_indices = @transform_3, window_bounds = array<i64: 32, 256>}]} {
    %c0 = arith.constant 0 : index
    %c0_0 = arith.constant 0 : index
    %0 = vector.load %arg1[%c0, %c0_0] : memref<32x288xbf16, #tpu.memory_space<vmem>>, vector<32x288xbf16>
    %c0_1 = arith.constant 0 : index
    %c0_2 = arith.constant 0 : index
    %1 = vector.load %arg2[%c0_1, %c0_2] : memref<288x256xbf16, #tpu.memory_space<vmem>>, vector<288x256xbf16>
    %cst = arith.constant dense<0.000000e+00> : vector<32x256xf32>
    %2 = tpu.matmul %0, %1, %cst {dimension_numbers = #tpu.dot_dimension_numbers<[1], [0], [0], [1], [0, 0, 1, 1], [], []>} : vector<32x288xbf16>, vector<288x256xbf16>, vector<32x256xf32> -> vector<32x256xf32>
    %c0_3 = arith.constant 0 : index
    %c0_4 = arith.constant 0 : index
    %3 = vector.load %arg3[%c0_3, %c0_4] : memref<32x1xf32, #tpu.memory_space<vmem>>, vector<32x1xf32>
    %4 = vector.broadcast %3 : vector<32x1xf32> to vector<32x256xf32>
    %5 = arith.addf %2, %4 : vector<32x256xf32>
    %c0_5 = arith.constant 0 : index
    %c0_6 = arith.constant 0 : index
    %6 = vector.load %arg4[%c0_5, %c0_6] : memref<32x256xf32, #tpu.memory_space<vmem>>, vector<32x256xf32>
    tpu.vector_store %arg4[%c0_5, %c0_6], %5 {strides = array<i32>} : memref<32x256xf32, #tpu.memory_space<vmem>>, vector<32x256xf32>,
    return
  }
  func.func @transform_0(%arg0: i32) -> (i32, i32) {
    %c0_i32 = arith.constant 0 : i32
    %c0_i32_0 = arith.constant 0 : i32
    %c0_i32_1 = arith.constant 0 : i32
    return %c0_i32, %c0_i32_0 : i32, i32
  }
  func.func @transform_1(%arg0: i32) -> (i32, i32) {
    %c0_i32 = arith.constant 0 : i32
    %c0_i32_0 = arith.constant 0 : i32
    return %c0_i32, %arg0 : i32, i32
  }
  func.func @transform_2(%arg0: i32) -> (i32, i32) {
    %c0_i32 = arith.constant 0 : i32
    %c0_i32_0 = arith.constant 0 : i32
    %c0_i32_1 = arith.constant 0 : i32
    return %c0_i32, %c0_i32_0 : i32, i32
  }
  func.func @transform_3(%arg0: i32) -> (i32, i32) {
    %c0_i32 = arith.constant 0 : i32
    %c0_i32_0 = arith.constant 0 : i32
    return %c0_i32, %arg0 : i32, i32
  }
}

module attributes {stable_mosaic.version = 11 : i64} {
  func.func @_mm_kernel(%arg0: i32, %arg1: memref<16x16xbf16, #tpu.memory_space<vmem>>, %arg2: memref<16x256xbf16, #tpu.memory_space<vmem>>, %arg3: memref<16x1xf32, #tpu.memory_space<vmem>>, %arg4: memref<16x256xf32, #tpu.memory_space<vmem>>) attributes {dimension_semantics = [#tpu.dimension_semantics<parallel>], iteration_bounds = array<i64: 2>, scalar_prefetch = 0 : i64, scratch_operands = 0 : i64, tpu.core_type = #tpu.core_type<tc>, window_params = [{pipeline_mode = #tpu.pipeline_mode<synchronous>, transform_indices = @transform_0, window_bounds = array<i64: 16, 16>}, {transform_indices = @transform_1, window_bounds = array<i64: 16, 256>}, {pipeline_mode = #tpu.pipeline_mode<synchronous>, transform_indices = @transform_2, window_bounds = array<i64: 16, 1>}, {transform_indices = @transform_3, window_bounds = array<i64: 16, 256>}]} {
    %c0 = arith.constant 0 : index
    %c0_0 = arith.constant 0 : index
    %0 = vector.load %arg1[%c0, %c0_0] : memref<16x16xbf16, #tpu.memory_space<vmem>>, vector<16x16xbf16>
    %c0_1 = arith.constant 0 : index
    %c0_2 = arith.constant 0 : index
    %1 = vector.load %arg2[%c0_1, %c0_2] : memref<16x256xbf16, #tpu.memory_space<vmem>>, vector<16x256xbf16>
    %cst = arith.constant dense<0.000000e+00> : vector<16x256xf32>
    %2 = tpu.matmul %0, %1, %cst {dimension_numbers = #tpu.dot_dimension_numbers<[1], [0], [0], [1], [0, 0, 1, 1], [], []>} : vector<16x16xbf16>, vector<16x256xbf16>, vector<16x256xf32> -> vector<16x256xf32>
    %c0_3 = arith.constant 0 : index
    %c0_4 = arith.constant 0 : index
    %3 = vector.load %arg3[%c0_3, %c0_4] : memref<16x1xf32, #tpu.memory_space<vmem>>, vector<16x1xf32>
    %4 = vector.broadcast %3 : vector<16x1xf32> to vector<16x256xf32>
    %5 = arith.addf %2, %4 : vector<16x256xf32>
    %cst_5 = arith.constant 0.000000e+00 : f32
    %6 = vector.broadcast %cst_5 : f32 to vector<16x256xf32>
    %7 = arith.maximumf %5, %6 : vector<16x256xf32>
    %c0_6 = arith.constant 0 : index
    %c0_7 = arith.constant 0 : index
    %8 = vector.load %arg4[%c0_6, %c0_7] : memref<16x256xf32, #tpu.memory_space<vmem>>, vector<16x256xf32>
    tpu.vector_store %arg4[%c0_6, %c0_7], %7 {strides = array<i32>} : memref<16x256xf32, #tpu.memory_space<vmem>>, vector<16x256xf32>,
    return
  }
  func.func @transform_0(%arg0: i32) -> (i32, i32) {
    %c0_i32 = arith.constant 0 : i32
    %c0_i32_0 = arith.constant 0 : i32
    %c0_i32_1 = arith.constant 0 : i32
    return %c0_i32, %c0_i32_0 : i32, i32
  }
  func.func @transform_1(%arg0: i32) -> (i32, i32) {
    %c0_i32 = arith.constant 0 : i32
    %c0_i32_0 = arith.constant 0 : i32
    return %c0_i32, %arg0 : i32, i32
  }
  func.func @transform_2(%arg0: i32) -> (i32, i32) {
    %c0_i32 = arith.constant 0 : i32
    %c0_i32_0 = arith.constant 0 : i32
    %c0_i32_1 = arith.constant 0 : i32
    return %c0_i32, %c0_i32_0 : i32, i32
  }
  func.func @transform_3(%arg0: i32) -> (i32, i32) {
    %c0_i32 = arith.constant 0 : i32
    %c0_i32_0 = arith.constant 0 : i32
    return %c0_i32, %arg0 : i32, i32
  }
}

module attributes {stable_mosaic.version = 11 : i64} {
  func.func @_mm_kernel(%arg0: i32, %arg1: memref<64x32xbf16, #tpu.memory_space<vmem>>, %arg2: memref<32x128xbf16, #tpu.memory_space<vmem>>, %arg3: memref<64x1xf32, #tpu.memory_space<vmem>>, %arg4: memref<64x128xf32, #tpu.memory_space<vmem>>) attributes {dimension_semantics = [#tpu.dimension_semantics<parallel>], iteration_bounds = array<i64: 1>, scalar_prefetch = 0 : i64, scratch_operands = 0 : i64, tpu.core_type = #tpu.core_type<tc>, window_params = [{pipeline_mode = #tpu.pipeline_mode<synchronous>, transform_indices = @transform_0, window_bounds = array<i64: 64, 32>}, {transform_indices = @transform_1, window_bounds = array<i64: 32, 128>}, {pipeline_mode = #tpu.pipeline_mode<synchronous>, transform_indices = @transform_2, window_bounds = array<i64: 64, 1>}, {transform_indices = @transform_3, window_bounds = array<i64: 64, 128>}]} {
    %c0 = arith.constant 0 : index
    %c0_0 = arith.constant 0 : index
    %0 = vector.load %arg1[%c0, %c0_0] : memref<64x32xbf16, #tpu.memory_space<vmem>>, vector<64x32xbf16>
    %c0_1 = arith.constant 0 : index
    %c0_2 = arith.constant 0 : index
    %1 = vector.load %arg2[%c0_1, %c0_2] : memref<32x128xbf16, #tpu.memory_space<vmem>>, vector<32x128xbf16>
    %cst = arith.constant dense<0.000000e+00> : vector<64x128xf32>
    %2 = tpu.matmul %0, %1, %cst {dimension_numbers = #tpu.dot_dimension_numbers<[1], [0], [0], [1], [0, 0, 1, 1], [], []>} : vector<64x32xbf16>, vector<32x128xbf16>, vector<64x128xf32> -> vector<64x128xf32>
    %c0_3 = arith.constant 0 : index
    %c0_4 = arith.constant 0 : index
    %3 = vector.load %arg3[%c0_3, %c0_4] : memref<64x1xf32, #tpu.memory_space<vmem>>, vector<64x1xf32>
    %4 = vector.broadcast %3 : vector<64x1xf32> to vector<64x128xf32>
    %5 = arith.addf %2, %4 : vector<64x128xf32>
    %cst_5 = arith.constant 0.000000e+00 : f32
    %6 = vector.broadcast %cst_5 : f32 to vector<64x128xf32>
    %7 = arith.maximumf %5, %6 : vector<64x128xf32>
    %c0_6 = arith.constant 0 : index
    %c0_7 = arith.constant 0 : index
    %8 = vector.load %arg4[%c0_6, %c0_7] : memref<64x128xf32, #tpu.memory_space<vmem>>, vector<64x128xf32>
    tpu.vector_store %arg4[%c0_6, %c0_7], %7 {strides = array<i32>} : memref<64x128xf32, #tpu.memory_space<vmem>>, vector<64x128xf32>,
    return
  }
  func.func @transform_0(%arg0: i32) -> (i32, i32) {
    %c0_i32 = arith.constant 0 : i32
    %c0_i32_0 = arith.constant 0 : i32
    %c0_i32_1 = arith.constant 0 : i32
    return %c0_i32, %c0_i32_0 : i32, i32
  }
  func.func @transform_1(%arg0: i32) -> (i32, i32) {
    %c0_i32 = arith.constant 0 : i32
    %c0_i32_0 = arith.constant 0 : i32
    return %c0_i32, %arg0 : i32, i32
  }
  func.func @transform_2(%arg0: i32) -> (i32, i32) {
    %c0_i32 = arith.constant 0 : i32
    %c0_i32_0 = arith.constant 0 : i32
    %c0_i32_1 = arith.constant 0 : i32
    return %c0_i32, %c0_i32_0 : i32, i32
  }
  func.func @transform_3(%arg0: i32) -> (i32, i32) {
    %c0_i32 = arith.constant 0 : i32
    %c0_i32_0 = arith.constant 0 : i32
    return %c0_i32, %arg0 : i32, i32
  }
}

module attributes {stable_mosaic.version = 11 : i64} {
  func.func @_mm_kernel(%arg0: i32, %arg1: memref<16x288xbf16, #tpu.memory_space<vmem>>, %arg2: memref<288x256xbf16, #tpu.memory_space<vmem>>, %arg3: memref<16x1xf32, #tpu.memory_space<vmem>>, %arg4: memref<16x256xf32, #tpu.memory_space<vmem>>) attributes {dimension_semantics = [#tpu.dimension_semantics<parallel>], iteration_bounds = array<i64: 2>, scalar_prefetch = 0 : i64, scratch_operands = 0 : i64, tpu.core_type = #tpu.core_type<tc>, window_params = [{pipeline_mode = #tpu.pipeline_mode<synchronous>, transform_indices = @transform_0, window_bounds = array<i64: 16, 288>}, {transform_indices = @transform_1, window_bounds = array<i64: 288, 256>}, {pipeline_mode = #tpu.pipeline_mode<synchronous>, transform_indices = @transform_2, window_bounds = array<i64: 16, 1>}, {transform_indices = @transform_3, window_bounds = array<i64: 16, 256>}]} {
    %c0 = arith.constant 0 : index
    %c0_0 = arith.constant 0 : index
    %0 = vector.load %arg1[%c0, %c0_0] : memref<16x288xbf16, #tpu.memory_space<vmem>>, vector<16x288xbf16>
    %c0_1 = arith.constant 0 : index
    %c0_2 = arith.constant 0 : index
    %1 = vector.load %arg2[%c0_1, %c0_2] : memref<288x256xbf16, #tpu.memory_space<vmem>>, vector<288x256xbf16>
    %cst = arith.constant dense<0.000000e+00> : vector<16x256xf32>
    %2 = tpu.matmul %0, %1, %cst {dimension_numbers = #tpu.dot_dimension_numbers<[1], [0], [0], [1], [0, 0, 1, 1], [], []>} : vector<16x288xbf16>, vector<288x256xbf16>, vector<16x256xf32> -> vector<16x256xf32>
    %c0_3 = arith.constant 0 : index
    %c0_4 = arith.constant 0 : index
    %3 = vector.load %arg3[%c0_3, %c0_4] : memref<16x1xf32, #tpu.memory_space<vmem>>, vector<16x1xf32>
    %4 = vector.broadcast %3 : vector<16x1xf32> to vector<16x256xf32>
    %5 = arith.addf %2, %4 : vector<16x256xf32>
    %cst_5 = arith.constant 0.000000e+00 : f32
    %6 = vector.broadcast %cst_5 : f32 to vector<16x256xf32>
    %7 = arith.maximumf %5, %6 : vector<16x256xf32>
    %c0_6 = arith.constant 0 : index
    %c0_7 = arith.constant 0 : index
    %8 = vector.load %arg4[%c0_6, %c0_7] : memref<16x256xf32, #tpu.memory_space<vmem>>, vector<16x256xf32>
    tpu.vector_store %arg4[%c0_6, %c0_7], %7 {strides = array<i32>} : memref<16x256xf32, #tpu.memory_space<vmem>>, vector<16x256xf32>,
    return
  }
  func.func @transform_0(%arg0: i32) -> (i32, i32) {
    %c0_i32 = arith.constant 0 : i32
    %c0_i32_0 = arith.constant 0 : i32
    %c0_i32_1 = arith.constant 0 : i32
    return %c0_i32, %c0_i32_0 : i32, i32
  }
  func.func @transform_1(%arg0: i32) -> (i32, i32) {
    %c0_i32 = arith.constant 0 : i32
    %c0_i32_0 = arith.constant 0 : i32
    return %c0_i32, %arg0 : i32, i32
  }
  func.func @transform_2(%arg0: i32) -> (i32, i32) {
    %c0_i32 = arith.constant 0 : i32
    %c0_i32_0 = arith.constant 0 : i32
    %c0_i32_1 = arith.constant 0 : i32
    return %c0_i32, %c0_i32_0 : i32, i32
  }
  func.func @transform_3(%arg0: i32) -> (i32, i32) {
    %c0_i32 = arith.constant 0 : i32
    %c0_i32_0 = arith.constant 0 : i32
    return %c0_i32, %arg0 : i32, i32
  }
}

module attributes {stable_mosaic.version = 11 : i64} {
  func.func @_mm_kernel(%arg0: i32, %arg1: memref<16x144xbf16, #tpu.memory_space<vmem>>, %arg2: memref<144x256xbf16, #tpu.memory_space<vmem>>, %arg3: memref<16x1xf32, #tpu.memory_space<vmem>>, %arg4: memref<16x256xf32, #tpu.memory_space<vmem>>) attributes {dimension_semantics = [#tpu.dimension_semantics<parallel>], iteration_bounds = array<i64: 2>, scalar_prefetch = 0 : i64, scratch_operands = 0 : i64, tpu.core_type = #tpu.core_type<tc>, window_params = [{pipeline_mode = #tpu.pipeline_mode<synchronous>, transform_indices = @transform_0, window_bounds = array<i64: 16, 144>}, {transform_indices = @transform_1, window_bounds = array<i64: 144, 256>}, {pipeline_mode = #tpu.pipeline_mode<synchronous>, transform_indices = @transform_2, window_bounds = array<i64: 16, 1>}, {transform_indices = @transform_3, window_bounds = array<i64: 16, 256>}]} {
    %c0 = arith.constant 0 : index
    %c0_0 = arith.constant 0 : index
    %0 = vector.load %arg1[%c0, %c0_0] : memref<16x144xbf16, #tpu.memory_space<vmem>>, vector<16x144xbf16>
    %c0_1 = arith.constant 0 : index
    %c0_2 = arith.constant 0 : index
    %1 = vector.load %arg2[%c0_1, %c0_2] : memref<144x256xbf16, #tpu.memory_space<vmem>>, vector<144x256xbf16>
    %cst = arith.constant dense<0.000000e+00> : vector<16x256xf32>
    %2 = tpu.matmul %0, %1, %cst {dimension_numbers = #tpu.dot_dimension_numbers<[1], [0], [0], [1], [0, 0, 1, 1], [], []>} : vector<16x144xbf16>, vector<144x256xbf16>, vector<16x256xf32> -> vector<16x256xf32>
    %c0_3 = arith.constant 0 : index
    %c0_4 = arith.constant 0 : index
    %3 = vector.load %arg3[%c0_3, %c0_4] : memref<16x1xf32, #tpu.memory_space<vmem>>, vector<16x1xf32>
    %4 = vector.broadcast %3 : vector<16x1xf32> to vector<16x256xf32>
    %5 = arith.addf %2, %4 : vector<16x256xf32>
    %cst_5 = arith.constant 0.000000e+00 : f32
    %6 = vector.broadcast %cst_5 : f32 to vector<16x256xf32>
    %7 = arith.maximumf %5, %6 : vector<16x256xf32>
    %c0_6 = arith.constant 0 : index
    %c0_7 = arith.constant 0 : index
    %8 = vector.load %arg4[%c0_6, %c0_7] : memref<16x256xf32, #tpu.memory_space<vmem>>, vector<16x256xf32>
    tpu.vector_store %arg4[%c0_6, %c0_7], %7 {strides = array<i32>} : memref<16x256xf32, #tpu.memory_space<vmem>>, vector<16x256xf32>,
    return
  }
  func.func @transform_0(%arg0: i32) -> (i32, i32) {
    %c0_i32 = arith.constant 0 : i32
    %c0_i32_0 = arith.constant 0 : i32
    %c0_i32_1 = arith.constant 0 : i32
    return %c0_i32, %c0_i32_0 : i32, i32
  }
  func.func @transform_1(%arg0: i32) -> (i32, i32) {
    %c0_i32 = arith.constant 0 : i32
    %c0_i32_0 = arith.constant 0 : i32
    return %c0_i32, %arg0 : i32, i32
  }
  func.func @transform_2(%arg0: i32) -> (i32, i32) {
    %c0_i32 = arith.constant 0 : i32
    %c0_i32_0 = arith.constant 0 : i32
    %c0_i32_1 = arith.constant 0 : i32
    return %c0_i32, %c0_i32_0 : i32, i32
  }
  func.func @transform_3(%arg0: i32) -> (i32, i32) {
    %c0_i32 = arith.constant 0 : i32
    %c0_i32_0 = arith.constant 0 : i32
    return %c0_i32, %arg0 : i32, i32
  }
}

module attributes {stable_mosaic.version = 11 : i64} {
  func.func @_mm_kernel(%arg0: i32, %arg1: memref<8x144xbf16, #tpu.memory_space<vmem>>, %arg2: memref<144x256xbf16, #tpu.memory_space<vmem>>, %arg3: memref<8x1xf32, #tpu.memory_space<vmem>>, %arg4: memref<8x256xf32, #tpu.memory_space<vmem>>) attributes {dimension_semantics = [#tpu.dimension_semantics<parallel>], iteration_bounds = array<i64: 2>, scalar_prefetch = 0 : i64, scratch_operands = 0 : i64, tpu.core_type = #tpu.core_type<tc>, window_params = [{pipeline_mode = #tpu.pipeline_mode<synchronous>, transform_indices = @transform_0, window_bounds = array<i64: 8, 144>}, {transform_indices = @transform_1, window_bounds = array<i64: 144, 256>}, {pipeline_mode = #tpu.pipeline_mode<synchronous>, transform_indices = @transform_2, window_bounds = array<i64: 8, 1>}, {transform_indices = @transform_3, window_bounds = array<i64: 8, 256>}]} {
    %c0 = arith.constant 0 : index
    %c0_0 = arith.constant 0 : index
    %0 = vector.load %arg1[%c0, %c0_0] : memref<8x144xbf16, #tpu.memory_space<vmem>>, vector<8x144xbf16>
    %c0_1 = arith.constant 0 : index
    %c0_2 = arith.constant 0 : index
    %1 = vector.load %arg2[%c0_1, %c0_2] : memref<144x256xbf16, #tpu.memory_space<vmem>>, vector<144x256xbf16>
    %cst = arith.constant dense<0.000000e+00> : vector<8x256xf32>
    %2 = tpu.matmul %0, %1, %cst {dimension_numbers = #tpu.dot_dimension_numbers<[1], [0], [0], [1], [0, 0, 1, 1], [], []>} : vector<8x144xbf16>, vector<144x256xbf16>, vector<8x256xf32> -> vector<8x256xf32>
    %c0_3 = arith.constant 0 : index
    %c0_4 = arith.constant 0 : index
    %3 = vector.load %arg3[%c0_3, %c0_4] : memref<8x1xf32, #tpu.memory_space<vmem>>, vector<8x1xf32>
    %4 = vector.broadcast %3 : vector<8x1xf32> to vector<8x256xf32>
    %5 = arith.addf %2, %4 : vector<8x256xf32>
    %cst_5 = arith.constant 0.000000e+00 : f32
    %6 = vector.broadcast %cst_5 : f32 to vector<8x256xf32>
    %7 = arith.maximumf %5, %6 : vector<8x256xf32>
    %c0_6 = arith.constant 0 : index
    %c0_7 = arith.constant 0 : index
    %8 = vector.load %arg4[%c0_6, %c0_7] : memref<8x256xf32, #tpu.memory_space<vmem>>, vector<8x256xf32>
    tpu.vector_store %arg4[%c0_6, %c0_7], %7 {strides = array<i32>} : memref<8x256xf32, #tpu.memory_space<vmem>>, vector<8x256xf32>,
    return
  }
  func.func @transform_0(%arg0: i32) -> (i32, i32) {
    %c0_i32 = arith.constant 0 : i32
    %c0_i32_0 = arith.constant 0 : i32
    %c0_i32_1 = arith.constant 0 : i32
    return %c0_i32, %c0_i32_0 : i32, i32
  }
  func.func @transform_1(%arg0: i32) -> (i32, i32) {
    %c0_i32 = arith.constant 0 : i32
    %c0_i32_0 = arith.constant 0 : i32
    return %c0_i32, %arg0 : i32, i32
  }
  func.func @transform_2(%arg0: i32) -> (i32, i32) {
    %c0_i32 = arith.constant 0 : i32
    %c0_i32_0 = arith.constant 0 : i32
    %c0_i32_1 = arith.constant 0 : i32
    return %c0_i32, %c0_i32_0 : i32, i32
  }
  func.func @transform_3(%arg0: i32) -> (i32, i32) {
    %c0_i32 = arith.constant 0 : i32
    %c0_i32_0 = arith.constant 0 : i32
    return %c0_i32, %arg0 : i32, i32
  }
}

module attributes {stable_mosaic.version = 11 : i64} {
  func.func @_mm_kernel(%arg0: i32, %arg1: memref<1x72xbf16, #tpu.memory_space<vmem>>, %arg2: memref<72x256xbf16, #tpu.memory_space<vmem>>, %arg3: memref<1x1xf32, #tpu.memory_space<vmem>>, %arg4: memref<1x256xf32, #tpu.memory_space<vmem>>) attributes {dimension_semantics = [#tpu.dimension_semantics<parallel>], iteration_bounds = array<i64: 2>, scalar_prefetch = 0 : i64, scratch_operands = 0 : i64, tpu.core_type = #tpu.core_type<tc>, window_params = [{pipeline_mode = #tpu.pipeline_mode<synchronous>, transform_indices = @transform_0, window_bounds = array<i64: 1, 72>}, {transform_indices = @transform_1, window_bounds = array<i64: 72, 256>}, {pipeline_mode = #tpu.pipeline_mode<synchronous>, transform_indices = @transform_2, window_bounds = array<i64: 1, 1>}, {transform_indices = @transform_3, window_bounds = array<i64: 1, 256>}]} {
    %c0 = arith.constant 0 : index
    %c0_0 = arith.constant 0 : index
    %0 = vector.load %arg1[%c0, %c0_0] : memref<1x72xbf16, #tpu.memory_space<vmem>>, vector<1x72xbf16>
    %c0_1 = arith.constant 0 : index
    %c0_2 = arith.constant 0 : index
    %1 = vector.load %arg2[%c0_1, %c0_2] : memref<72x256xbf16, #tpu.memory_space<vmem>>, vector<72x256xbf16>
    %cst = arith.constant dense<0.000000e+00> : vector<1x256xf32>
    %2 = tpu.matmul %0, %1, %cst {dimension_numbers = #tpu.dot_dimension_numbers<[1], [0], [0], [1], [0, 0, 1, 1], [], []>} : vector<1x72xbf16>, vector<72x256xbf16>, vector<1x256xf32> -> vector<1x256xf32>
    %c0_3 = arith.constant 0 : index
    %c0_4 = arith.constant 0 : index
    %3 = vector.load %arg3[%c0_3, %c0_4] : memref<1x1xf32, #tpu.memory_space<vmem>>, vector<1x1xf32>
    %4 = vector.broadcast %3 : vector<1x1xf32> to vector<1x256xf32>
    %5 = arith.addf %2, %4 : vector<1x256xf32>
    %c0_5 = arith.constant 0 : index
    %c0_6 = arith.constant 0 : index
    %6 = vector.load %arg4[%c0_5, %c0_6] : memref<1x256xf32, #tpu.memory_space<vmem>>, vector<1x256xf32>
    tpu.vector_store %arg4[%c0_5, %c0_6], %5 {strides = array<i32>} : memref<1x256xf32, #tpu.memory_space<vmem>>, vector<1x256xf32>,
    return
  }
  func.func @transform_0(%arg0: i32) -> (i32, i32) {
    %c0_i32 = arith.constant 0 : i32
    %c0_i32_0 = arith.constant 0 : i32
    %c0_i32_1 = arith.constant 0 : i32
    return %c0_i32, %c0_i32_0 : i32, i32
  }
  func.func @transform_1(%arg0: i32) -> (i32, i32) {
    %c0_i32 = arith.constant 0 : i32
    %c0_i32_0 = arith.constant 0 : i32
    return %c0_i32, %arg0 : i32, i32
  }
  func.func @transform_2(%arg0: i32) -> (i32, i32) {
    %c0_i32 = arith.constant 0 : i32
    %c0_i32_0 = arith.constant 0 : i32
    %c0_i32_1 = arith.constant 0 : i32
    return %c0_i32, %c0_i32_0 : i32, i32
  }
  func.func @transform_3(%arg0: i32) -> (i32, i32) {
    %c0_i32 = arith.constant 0 : i32
    %c0_i32_0 = arith.constant 0 : i32
    return %c0_i32, %arg0 : i32, i32
  }
}

</mosaic_0001>

<llo_original>
// kernel: utae_forward.11
$region0: #{utae_forward.11}
  #allocation0 [shape = 'u32[]', space=smem, size = 0x4, offset = 0x4, fixed_abs, tag = 'smem constant byte address 0x4 - core index']
  #allocation1 [shape = 'u32[72,128]{1,0:T(1,128)}', space=vmem, size = 0x9000, scoped, tag = 'internal scratch']
  %s0 = inlined_call_operand.vmem [shape: bf16[16,36], index: 0, kind: input, shape index: {}]
  %s1 = inlined_call_operand.vmem [shape: bf16[36,2048], index: 1, kind: input, shape index: {}]
  %s2 = inlined_call_operand.vmem [shape: f32[16,1], index: 2, kind: input, shape index: {}]
  %s3 = inlined_call_operand.vmem [shape: f32[16,2048], index: 3, kind: output, shape index: {}]
  %s4 = sld [smem:[#allocation0]]
  $region87: #{utae_forward.11} parent=0
    _
  %s6 = ssub.s32 1, %s4
  %s7 = scalar_select 0, %s6, %s4
  $region1: #{utae_forward.11} parent=0
    #allocation2 [shape = 'u8[81920]{0}', space=vmem, size = 0x14000, scoped, tag = 'input window, operand 1']
    #allocation3 [shape = 'u8[65536]{0}', space=vmem, size = 0x10000, scoped, tag = 'output window, operand 0']
    loop: start=0, step=1, limit=6
    $region2: #{utae_forward.11} parent=1 // loop_pre_header
      _
    $region3: #{utae_forward.11} parent=1 // loop_header
      %s9 = sphi 0, %s13
      %p10 = scmp.ge.s32.totalorder %s9, 6
      %s17 = sphi 0, %s17
      %s19 = sphi 0, %s17
      %s20 = sphi 0, %s19
      %s34 = sphi 0, %s20
      %s40 = sphi 0, %s42
      %s43 = sphi 0, %s40
      %s44 = sphi 0, %s43
      %s60 = sphi 0, %s44
      %s64 = sphi 0, %s64
      %s66 = sphi 0, %s64
      %s67 = sphi 0, %s66
      %s81 = sphi 0, %s67
      %s87 = sphi 0, %s89
      %s90 = sphi 0, %s87
      %s91 = sphi 0, %s90
      %s107 = sphi 0, %s91
    $region4: #{utae_forward.11} parent=1 // loop_header_branch
      %12 = sbr.rel (%p10) target = $region8
    $region5: #{utae_forward.11} parent=1 // loop_body
      %s14 = ssub.s32 %s9, 1
      %s15 = ssub.s32 %s9, 2
      %s16 = sadd.s32 %s9, 1
      %s18 = sadd.s32 %s17, 1
      %p21 = scmp.eq.s32.totalorder %s9, 3
      %p22 = scmp.ne.s32.totalorder %s17, %s19
      %p23 = scmp.eq.s32.totalorder %s9, 0
      %p24 = por %p22, %p23
      %p25 = scmp.ne.s32.totalorder %s17, %s19
      %p26 = scmp.eq.s32.totalorder %s14, 3
      %p27 = por %p25, %p26
      %p28 = scmp.ne.s32.totalorder %s19, %s20
      %p29 = scmp.eq.s32.totalorder %s14, 0
      %p30 = por %p28, %p29
      %p31 = scmp.ne.s32.totalorder %s19, %s20
      %p32 = scmp.eq.s32.totalorder %s15, 3
      %p33 = por %p31, %p32
      %p35 = scmp.ne.s32.totalorder %s20, %s34
      %p36 = scmp.eq.s32.totalorder %s15, 0
      %p37 = por %p35, %p36
      %s38 = ssub.s32 %s9, %s16
      %p39 = scmp.eq.s32.totalorder %s38, 0
      %s41 = sadd.s32 %s40, 1
      %s42 = scalar_select %p39, %s40, %s41
      %p45 = pneg %p39
      %p46 = scmp.eq.s32.totalorder %s9, 3
      %p47 = por %p45, %p46
      %p48 = scmp.ne.s32.totalorder %s40, %s43
      %p49 = scmp.eq.s32.totalorder %s9, 0
      %p50 = por %p48, %p49
      %p51 = scmp.ne.s32.totalorder %s40, %s43
      %p52 = scmp.eq.s32.totalorder %s14, 3
      %p53 = por %p51, %p52
      %p54 = scmp.ne.s32.totalorder %s43, %s44
      %p55 = scmp.eq.s32.totalorder %s14, 0
      %p56 = por %p54, %p55
      %p57 = scmp.ne.s32.totalorder %s43, %s44
      %p58 = scmp.eq.s32.totalorder %s15, 3
      %p59 = por %p57, %p58
      %p61 = scmp.ne.s32.totalorder %s44, %s60
      %p62 = scmp.eq.s32.totalorder %s15, 0
      %p63 = por %p61, %p62
      %s65 = sadd.s32 %s64, 1
      %p68 = scmp.eq.s32.totalorder %s9, 3
      %p69 = scmp.ne.s32.totalorder %s64, %s66
      %p70 = scmp.eq.s32.totalorder %s9, 0
      %p71 = por %p69, %p70
      %p72 = scmp.ne.s32.totalorder %s64, %s66
      %p73 = scmp.eq.s32.totalorder %s14, 3
      %p74 = por %p72, %p73
      %p75 = scmp.ne.s32.totalorder %s66, %s67
      %p76 = scmp.eq.s32.totalorder %s14, 0
      %p77 = por %p75, %p76
      %p78 = scmp.ne.s32.totalorder %s66, %s67
      %p79 = scmp.eq.s32.totalorder %s15, 3
      %p80 = por %p78, %p79
      %p82 = scmp.ne.s32.totalorder %s67, %s81
      %p83 = scmp.eq.s32.totalorder %s15, 0
      %p84 = por %p82, %p83
      %s85 = ssub.s32 %s9, %s16
      %p86 = scmp.eq.s32.totalorder %s85, 0
      %s88 = sadd.s32 %s87, 1
      %s89 = scalar_select %p86, %s87, %s88
      %p92 = pneg %p86
      %p93 = scmp.eq.s32.totalorder %s9, 3
      %p94 = por %p92, %p93
      %p95 = scmp.ne.s32.totalorder %s87, %s90
      %p96 = scmp.eq.s32.totalorder %s9, 0
      %p97 = por %p95, %p96
      %p98 = scmp.ne.s32.totalorder %s87, %s90
      %p99 = scmp.eq.s32.totalorder %s14, 3
      %p100 = por %p98, %p99
      %p101 = scmp.ne.s32.totalorder %s90, %s91
      %p102 = scmp.eq.s32.totalorder %s14, 0
      %p103 = por %p101, %p102
      %p104 = scmp.ne.s32.totalorder %s90, %s91
      %p105 = scmp.eq.s32.totalorder %s15, 3
      %p106 = por %p104, %p105
      %p108 = scmp.ne.s32.totalorder %s91, %s107
      %p109 = scmp.eq.s32.totalorder %s15, 0
      %p110 = por %p108, %p109
      %p111 = scmp.le.s32.totalorder 1, %s9
      %p112 = scmp.lt.s32.totalorder %s9, 5
      %p113 = pnand %p111, %p112
      %p114 = pneg %p113
      // Predicated region
      $region9: #{utae_forward.11} parent=5 // pred_check
        _
      $region10: #{utae_forward.11} parent=5 // pred_check_branch
        %116 = sbr.rel (%p113) target = $region12
      $region11: #{utae_forward.11} parent=5 // pred_region
        %s117 = ssub.s32 %s9, 1
        // Predicated region
        $region13: #{utae_forward.11} parent=11 // pred_check
          %p118 = pneg %p30
        $region14: #{utae_forward.11} parent=11 // pred_check_branch
          %120 = sbr.rel (%p118) target = $region16
        $region15: #{utae_forward.11} parent=11 // pred_region
          _
        $region16: #{utae_forward.11} parent=11 // pred_fallthru
          _
        // Predicated region
        $region17: #{utae_forward.11} parent=11 // pred_check
          %p121 = pneg %p77
        $region18: #{utae_forward.11} parent=11 // pred_check_branch
          %123 = sbr.rel (%p121) target = $region20
        $region19: #{utae_forward.11} parent=11 // pred_region
          _
        $region20: #{utae_forward.11} parent=11 // pred_fallthru
          _
      $region12: #{utae_forward.11} parent=5 // pred_fallthru
        _
      %p124 = scmp.lt.s32.totalorder %s9, 4
      // Predicated region
      $region21: #{utae_forward.11} parent=5 // pred_check
        %p125 = pneg %p124
      $region22: #{utae_forward.11} parent=5 // pred_check_branch
        %127 = sbr.rel (%p125) target = $region24
      $region23: #{utae_forward.11} parent=5 // pred_region
        // Predicated region
        $region25: #{utae_forward.11} parent=23 // pred_check
          %p128 = pneg %p50
        $region26: #{utae_forward.11} parent=23 // pred_check_branch
          %130 = sbr.rel (%p128) target = $region28
        $region27: #{utae_forward.11} parent=23 // pred_region
          %s131 = sand.u32 %s40, 1
          %s132 = sand.u32 %s40, 1
          %s133 = smul.addr %s132, 80
          %s134 = scalar_lea.vmem [#allocation2], %s133
          %s135 = smul.u32 4, %s9
          %s136 = smul.addr %s135, 4
          %s137 = scalar_lea.vmem %s1, %s136
          // Predicated region
          $region29: #{utae_forward.11} parent=27 // pred_check
            _
          $region30: #{utae_forward.11} parent=27 // pred_check_branch
            %139 = sbr.rel (0) target = $region32
          $region31: #{utae_forward.11} parent=27 // pred_region
            // Predicated region
            $region33: #{utae_forward.11} parent=31 // pred_check
              _
            $region34: #{utae_forward.11} parent=31 // pred_check_branch
              %141 = sbr.rel (0) target = $region36
            $region35: #{utae_forward.11} parent=31 // pred_region
              loop: start=0, step=1, limit=1
              $region37: #{utae_forward.11} parent=35 // loop_pre_header
                _
              $region38: #{utae_forward.11} parent=35 // loop_header
                %s143 = sphi 0, %s147
                %p144 = scmp.ge.s32.totalorder %s143, 1
                %s148 = sphi %s137, %s137
                %s149 = sphi %s134, %s134
              $region39: #{utae_forward.11} parent=35 // loop_header_branch
                %146 = sbr.rel (%p144) target = $region43
              $region40: #{utae_forward.11} parent=35 // loop_body
                %v150 = vld [vmem:[%s148] sm:$0xff]
                %151 = vst [vmem:[%s149] sm:$0xff] %v150
                %v152 = vld [vmem:[%s148 + $0x8] sm:$0xff]
                %153 = vst [vmem:[%s149 + $0x8] sm:$0xff] %v152
                %v154 = vld [vmem:[%s148 + $0x40] sm:$0xff]
                %155 = vst [vmem:[%s149 + $0x10] sm:$0xff] %v154
                %v156 = vld [vmem:[%s148 + $0x48] sm:$0xff]
                %157 = vst [vmem:[%s149 + $0x18] sm:$0xff] %v156
                %v158 = vld [vmem:[%s148 + $0x80] sm:$0xff]
                %159 = vst [vmem:[%s149 + $0x20] sm:$0xff] %v158
                %v160 = vld [vmem:[%s148 + $0x88] sm:$0xff]
                %161 = vst [vmem:[%s149 + $0x28] sm:$0xff] %v160
                %v162 = vld [vmem:[%s148 + $0xc0] sm:$0xff]
                %163 = vst [vmem:[%s149 + $0x30] sm:$0xff] %v162
                %v164 = vld [vmem:[%s148 + $0xc8] sm:$0xff]
                %165 = vst [vmem:[%s149 + $0x38] sm:$0xff] %v164
                %v166 = vld [vmem:[%s148 + $0x100] sm:$0xff]
                %167 = vst [vmem:[%s149 + $0x40] sm:$0xff] %v166
                %v168 = vld [vmem:[%s148 + $0x108] sm:$0xff]
                %169 = vst [vmem:[%s149 + $0x48] sm:$0xff] %v168
              $region41: #{utae_forward.11} parent=35 // loop_footer
                %s147 = sadd.s32 1, %s143
              $region42: #{utae_forward.11} parent=35 // loop_footer_branch
                %142 = sbr.rel target = $region38
              $region43: #{utae_forward.11} parent=35 // loop_exit
                _
            $region36: #{utae_forward.11} parent=31 // pred_fallthru
              _
            // Predicated region
            $region44: #{utae_forward.11} parent=31 // pred_check
              _
            $region45: #{utae_forward.11} parent=31 // pred_check_branch
              %171 = sbr.rel target = $region47
            $region46: #{utae_forward.11} parent=31 // pred_region
              _
            $region47: #{utae_forward.11} parent=31 // pred_fallthru
              _
          $region32: #{utae_forward.11} parent=27 // pred_fallthru
            _
          %172 = vnop
        $region28: #{utae_forward.11} parent=23 // pred_fallthru
          _
      $region24: #{utae_forward.11} parent=5 // pred_fallthru
        _
      %p173 = scmp.le.s32.totalorder 1, %s9
      %p174 = scmp.lt.s32.totalorder %s9, 5
      %p175 = pnand %p173, %p174
      %p176 = pneg %p175
      // Predicated region
      $region48: #{utae_forward.11} parent=5 // pred_check
        _
      $region49: #{utae_forward.11} parent=5 // pred_check_branch
        %178 = sbr.rel (%p175) target = $region51
      $region50: #{utae_forward.11} parent=5 // pred_region
        %s179 = ssub.s32 %s9, 1
        %s180 = sand.u32 %s43, 1
        %s181 = sand.u32 %s43, 1
        %s182 = smul.addr %s181, 80
        %s183 = scalar_lea.vmem [#allocation2], %s182
        // Predicated region
        $region52: #{utae_forward.11} parent=50 // pred_check
          %p184 = pneg %p56
        $region53: #{utae_forward.11} parent=50 // pred_check_branch
          %186 = sbr.rel (%p184) target = $region55
        $region54: #{utae_forward.11} parent=50 // pred_region
          _
        $region55: #{utae_forward.11} parent=50 // pred_fallthru
          _
        %p187 = pneg %p30
        %p188 = pneg %p27
        %s189 = sand.u32 %s43, 1
        %s190 = sand.u32 %s43, 1
        %s191 = smul.addr %s190, 80
        %s192 = scalar_lea.vmem [#allocation2], %s191
        %p193 = pneg %p56
        %p194 = pneg %p53
        %p195 = pneg %p77
        %p196 = pneg %p74
        %p197 = pneg %p103
        %p198 = pneg %p100
        %s199 = sand.u32 %s90, 1
        %s200 = sand.u32 %s90, 1
        %s201 = smul.addr %s200, 64
        %s202 = scalar_lea.vmem [#allocation3], %s201
        %s203 = smul.u32 4, %s14
        %s204 = smul.u32 4, %s14
        %v206 = vld [vmem:[%s0] sm:$0xf]
        %v207 = vld [vmem:[%s0 + $0x4] sm:$0xf]
        %v208 = vld [vmem:[%s183] sm:$0xff]
        %v209 = vld [vmem:[%s183 + $0x8] sm:$0xff]
        %v210 = vld [vmem:[%s183 + $0x10] sm:$0xff]
        %v211 = vld [vmem:[%s183 + $0x18] sm:$0xff]
        %v212 = vld [vmem:[%s183 + $0x20] sm:$0xff]
        %v213 = vld [vmem:[%s183 + $0x28] sm:$0xff]
        %v214 = vld [vmem:[%s183 + $0x30] sm:$0xff]
        %v215 = vld [vmem:[%s183 + $0x38] sm:$0xff]
        %v216 = vld [vmem:[%s183 + $0x40] sm:$0x33]
        %v217 = vld [vmem:[%s183 + $0x48] sm:$0x33]
        %v218 = vld [vmem:[%s2] sm:$0xff]
        %v219 = vld [vmem:[%s2 + $0x8] sm:$0xff]
        %221 = vset.pattern.permute.xlu0 0
        %222 = vperm.xlu0 %221, %v218
        %v223 = vpop.permute.xlu0 %222
        %226 = vset.pattern.permute.xlu0 0
        %227 = vperm.xlu0 %226, %v219
        %v228 = vpop.permute.xlu0 %227
        %v232 = vunpack.c.l.b16 %v206
        %v233 = vunpack.c.l.b16 %v207
        %v234 = vpack.c.b16 %v233, %v232
        %v245 = vunpack.c.l.b16 %v208
        %v246 = vunpack.c.h.b16 %v208
        %v247 = vunpack.c.l.b16 %v209
        %v248 = vunpack.c.h.b16 %v209
        %v249 = vunpack.c.l.b16 %v210
        %v250 = vunpack.c.h.b16 %v210
        %v251 = vunpack.c.l.b16 %v211
        %v252 = vunpack.c.h.b16 %v211
        %v253 = vunpack.c.l.b16 %v212
        %v254 = vunpack.c.h.b16 %v212
        %v255 = vunpack.c.l.b16 %v213
        %v256 = vunpack.c.h.b16 %v213
        %v257 = vunpack.c.l.b16 %v214
        %v258 = vunpack.c.h.b16 %v214
        %v259 = vunpack.c.l.b16 %v215
        %v260 = vunpack.c.h.b16 %v215
        %v261 = vunpack.c.l.b16 %v216
        %v262 = vunpack.c.h.b16 %v216
        %v263 = vunpack.c.l.b16 %v217
        %v264 = vunpack.c.h.b16 %v217
        %v265 = vpack.c.b16 %v249, %v245
        %v266 = vpack.c.b16 %v250, %v246
        %v267 = vpack.c.b16 %v251, %v247
        %v268 = vpack.c.b16 %v252, %v248
        %v269 = vpack.c.b16 %v257, %v253
        %v270 = vpack.c.b16 %v258, %v254
        %v271 = vpack.c.b16 %v259, %v255
        %v272 = vpack.c.b16 %v260, %v256
        %v273 = vpack.c.b16 %v261, %v261
        %v274 = vpack.c.b16 %v262, %v262
        %v275 = vpack.c.b16 %v263, %v263
        %v276 = vpack.c.b16 %v264, %v264
        %vm285 = vcmask 293888
        %v287 = vsel %vm285, %v234, 0
        %vm289 = vcmask 1041408
        %v291 = vsel %vm289, %v273, 0
        %v294 = vsel %vm289, %v274, 0
        %v297 = vsel %vm289, %v275, 0
        %v300 = vsel %vm289, %v276, 0
        %302 = vmatpush.bf16.msra.mxu0 0
        %303 = vmatpush.bf16.msra.mxu0 0
        %304 = vmatpush.bf16.msra.mxu0 0
        %305 = vmatpush.bf16.msra.mxu0 0
        %306 = vmatpush.bf16.msra.mxu0 0
        %307 = vmatpush.bf16.msra.mxu0 %v291
        %308 = vmatpush.bf16.msra.mxu0 %v269
        %309 = vmatpush.bf16.msra.mxu0 %v265
        %310 = vmatmul.bf16.gmra.mxu0 %v287
        %v311 = vpop.f32.mrf.mxu0
        %v312 = vadd.f32 %v223, %v311
        %v313 = vpop.f32.mrf.mxu0
        %v314 = vadd.f32 %v228, %v313
        %315 = vdwg.mxu0
        %316 = vmatpush.bf16.msra.mxu0 0
        %317 = vmatpush.bf16.msra.mxu0 0
        %318 = vmatpush.bf16.msra.mxu0 0
        %319 = vmatpush.bf16.msra.mxu0 0
        %320 = vmatpush.bf16.msra.mxu0 0
        %321 = vmatpush.bf16.msra.mxu0 %v294
        %322 = vmatpush.bf16.msra.mxu0 %v270
        %323 = vmatpush.bf16.msra.mxu0 %v266
        %324 = vmatmul.bf16.gmra.mxu0 %v287
        %v325 = vpop.f32.mrf.mxu0
        %v326 = vadd.f32 %v223, %v325
        %v327 = vpop.f32.mrf.mxu0
        %v328 = vadd.f32 %v228, %v327
        %329 = vdwg.mxu0
        %330 = vmatpush.bf16.msra.mxu0 0
        %331 = vmatpush.bf16.msra.mxu0 0
        %332 = vmatpush.bf16.msra.mxu0 0
        %333 = vmatpush.bf16.msra.mxu0 0
        %334 = vmatpush.bf16.msra.mxu0 0
        %335 = vmatpush.bf16.msra.mxu0 %v297
        %336 = vmatpush.bf16.msra.mxu0 %v271
        %337 = vmatpush.bf16.msra.mxu0 %v267
        %338 = vmatmul.bf16.gmra.mxu0 %v287
        %v339 = vpop.f32.mrf.mxu0
        %v340 = vadd.f32 %v223, %v339
        %v341 = vpop.f32.mrf.mxu0
        %v342 = vadd.f32 %v228, %v341
        %343 = vdwg.mxu0
        %344 = vmatpush.bf16.msra.mxu0 0
        %345 = vmatpush.bf16.msra.mxu0 0
        %346 = vmatpush.bf16.msra.mxu0 0
        %347 = vmatpush.bf16.msra.mxu0 0
        %348 = vmatpush.bf16.msra.mxu0 0
        %349 = vmatpush.bf16.msra.mxu0 %v300
        %350 = vmatpush.bf16.msra.mxu0 %v272
        %351 = vmatpush.bf16.msra.mxu0 %v268
        %352 = vmatmul.bf16.gmra.mxu0 %v287
        %v353 = vpop.f32.mrf.mxu0
        %v354 = vadd.f32 %v223, %v353
        %v355 = vpop.f32.mrf.mxu0
        %v356 = vadd.f32 %v228, %v355
        %357 = vdwg.mxu0
        %358 = vst [vmem:[%s202] sm:$0xff] %v312
        %359 = vst [vmem:[%s202 + $0x8] sm:$0xff] %v326
        %360 = vst [vmem:[%s202 + $0x10] sm:$0xff] %v340
        %361 = vst [vmem:[%s202 + $0x18] sm:$0xff] %v354
        %362 = vst [vmem:[%s202 + $0x20] sm:$0xff] %v314
        %363 = vst [vmem:[%s202 + $0x28] sm:$0xff] %v328
        %364 = vst [vmem:[%s202 + $0x30] sm:$0xff] %v342
        %365 = vst [vmem:[%s202 + $0x38] sm:$0xff] %v356
        %s366 = sand.u32 %s90, 1
        %s367 = sand.u32 %s90, 1
        %s368 = smul.addr %s367, 64
        %s369 = scalar_lea.vmem [#allocation3], %s368
        // Predicated region
        $region56: #{utae_forward.11} parent=50 // pred_check
          %p370 = pneg %p100
        $region57: #{utae_forward.11} parent=50 // pred_check_branch
          %372 = sbr.rel (%p370) target = $region59
        $region58: #{utae_forward.11} parent=50 // pred_region
          %s373 = smul.u32 4, %s14
          %s374 = smul.addr %s373, 8
          %s375 = scalar_lea.vmem %s3, %s374
          // Predicated region
          $region60: #{utae_forward.11} parent=58 // pred_check
            _
          $region61: #{utae_forward.11} parent=58 // pred_check_branch
            %377 = sbr.rel (0) target = $region63
          $region62: #{utae_forward.11} parent=58 // pred_region
            // Predicated region
            $region64: #{utae_forward.11} parent=62 // pred_check
              _
            $region65: #{utae_forward.11} parent=62 // pred_check_branch
              %379 = sbr.rel (0) target = $region67
            $region66: #{utae_forward.11} parent=62 // pred_region
              loop: start=0, step=1, limit=1
              $region68: #{utae_forward.11} parent=66 // loop_pre_header
                _
              $region69: #{utae_forward.11} parent=66 // loop_header
                %s381 = sphi 0, %s385
                %p382 = scmp.ge.s32.totalorder %s381, 1
                %s386 = sphi %s369, %s369
                %s387 = sphi %s375, %s375
              $region70: #{utae_forward.11} parent=66 // loop_header_branch
                %384 = sbr.rel (%p382) target = $region74
              $region71: #{utae_forward.11} parent=66 // loop_body
                %v388 = vld [vmem:[%s386] sm:$0xff]
                %389 = vst [vmem:[%s387] sm:$0xff] %v388
                %v390 = vld [vmem:[%s386 + $0x8] sm:$0xff]
                %391 = vst [vmem:[%s387 + $0x8] sm:$0xff] %v390
                %v392 = vld [vmem:[%s386 + $0x10] sm:$0xff]
                %393 = vst [vmem:[%s387 + $0x10] sm:$0xff] %v392
                %v394 = vld [vmem:[%s386 + $0x18] sm:$0xff]
                %395 = vst [vmem:[%s387 + $0x18] sm:$0xff] %v394
                %v396 = vld [vmem:[%s386 + $0x20] sm:$0xff]
                %397 = vst [vmem:[%s387 + $0x80] sm:$0xff] %v396
                %v398 = vld [vmem:[%s386 + $0x28] sm:$0xff]
                %399 = vst [vmem:[%s387 + $0x88] sm:$0xff] %v398
                %v400 = vld [vmem:[%s386 + $0x30] sm:$0xff]
                %401 = vst [vmem:[%s387 + $0x90] sm:$0xff] %v400
                %v402 = vld [vmem:[%s386 + $0x38] sm:$0xff]
                %403 = vst [vmem:[%s387 + $0x98] sm:$0xff] %v402
              $region72: #{utae_forward.11} parent=66 // loop_footer
                %s385 = sadd.s32 1, %s381
              $region73: #{utae_forward.11} parent=66 // loop_footer_branch
                %380 = sbr.rel target = $region69
              $region74: #{utae_forward.11} parent=66 // loop_exit
                _
            $region67: #{utae_forward.11} parent=62 // pred_fallthru
              _
            // Predicated region
            $region75: #{utae_forward.11} parent=62 // pred_check
              _
            $region76: #{utae_forward.11} parent=62 // pred_check_branch
              %405 = sbr.rel target = $region78
            $region77: #{utae_forward.11} parent=62 // pred_region
              _
            $region78: #{utae_forward.11} parent=62 // pred_fallthru
              _
          $region63: #{utae_forward.11} parent=58 // pred_fallthru
            _
          %406 = vnop
        $region59: #{utae_forward.11} parent=50 // pred_fallthru
          _
      $region51: #{utae_forward.11} parent=5 // pred_fallthru
        _
      %p407 = scmp.le.s32.totalorder 2, %s9
      // Predicated region
      $region79: #{utae_forward.11} parent=5 // pred_check
        %p408 = pneg %p407
      $region80: #{utae_forward.11} parent=5 // pred_check_branch
        %410 = sbr.rel (%p408) target = $region82
      $region81: #{utae_forward.11} parent=5 // pred_region
        %s411 = ssub.s32 %s9, 2
        // Predicated region
        $region83: #{utae_forward.11} parent=81 // pred_check
          %p412 = pneg %p106
        $region84: #{utae_forward.11} parent=81 // pred_check_branch
          %414 = sbr.rel (%p412) target = $region86
        $region85: #{utae_forward.11} parent=81 // pred_region
          %s415 = sand.u32 %s91, 1
          %s416 = sand.u32 %s91, 1
          %s417 = smul.addr %s416, 64
          %s418 = scalar_lea.vmem [#allocation3], %s417
        $region86: #{utae_forward.11} parent=81 // pred_fallthru
          _
      $region82: #{utae_forward.11} parent=5 // pred_fallthru
        _
    $region6: #{utae_forward.11} parent=1 // loop_footer
      %s13 = sadd.s32 1, %s9
    $region7: #{utae_forward.11} parent=1 // loop_footer_branch
      %8 = sbr.rel target = $region3
    $region8: #{utae_forward.11} parent=1 // loop_exit
      _

// kernel: utae_forward.12
$region0: #{utae_forward.12}
  #allocation0 [shape = 'u32[]', space=smem, size = 0x4, offset = 0x4, fixed_abs, tag = 'smem constant byte address 0x4 - core index']
  #allocation1 [shape = 'u32[72,128]{1,0:T(1,128)}', space=vmem, size = 0x9000, scoped, tag = 'internal scratch']
  %s0 = inlined_call_operand.vmem [shape: bf16[16,144], index: 0, kind: input, shape index: {}]
  %s1 = inlined_call_operand.vmem [shape: bf16[144,2048], index: 1, kind: input, shape index: {}]
  %s2 = inlined_call_operand.vmem [shape: f32[16,1], index: 2, kind: input, shape index: {}]
  %s3 = inlined_call_operand.vmem [shape: f32[16,2048], index: 3, kind: output, shape index: {}]
  %s4 = sld [smem:[#allocation0]]
  $region87: #{utae_forward.12} parent=0
    _
  %s6 = ssub.s32 1, %s4
  %s7 = scalar_select 0, %s6, %s4
  $region1: #{utae_forward.12} parent=0
    #allocation2 [shape = 'u8[294912]{0}', space=vmem, size = 0x48000, scoped, tag = 'input window, operand 1']
    #allocation3 [shape = 'u8[65536]{0}', space=vmem, size = 0x10000, scoped, tag = 'output window, operand 0']
    loop: start=0, step=1, limit=6
    $region2: #{utae_forward.12} parent=1 // loop_pre_header
      _
    $region3: #{utae_forward.12} parent=1 // loop_header
      %s9 = sphi 0, %s13
      %p10 = scmp.ge.s32.totalorder %s9, 6
      %s17 = sphi 0, %s17
      %s19 = sphi 0, %s17
      %s20 = sphi 0, %s19
      %s34 = sphi 0, %s20
      %s40 = sphi 0, %s42
      %s43 = sphi 0, %s40
      %s44 = sphi 0, %s43
      %s60 = sphi 0, %s44
      %s64 = sphi 0, %s64
      %s66 = sphi 0, %s64
      %s67 = sphi 0, %s66
      %s81 = sphi 0, %s67
      %s87 = sphi 0, %s89
      %s90 = sphi 0, %s87
      %s91 = sphi 0, %s90
      %s107 = sphi 0, %s91
    $region4: #{utae_forward.12} parent=1 // loop_header_branch
      %12 = sbr.rel (%p10) target = $region8
    $region5: #{utae_forward.12} parent=1 // loop_body
      %s14 = ssub.s32 %s9, 1
      %s15 = ssub.s32 %s9, 2
      %s16 = sadd.s32 %s9, 1
      %s18 = sadd.s32 %s17, 1
      %p21 = scmp.eq.s32.totalorder %s9, 3
      %p22 = scmp.ne.s32.totalorder %s17, %s19
      %p23 = scmp.eq.s32.totalorder %s9, 0
      %p24 = por %p22, %p23
      %p25 = scmp.ne.s32.totalorder %s17, %s19
      %p26 = scmp.eq.s32.totalorder %s14, 3
      %p27 = por %p25, %p26
      %p28 = scmp.ne.s32.totalorder %s19, %s20
      %p29 = scmp.eq.s32.totalorder %s14, 0
      %p30 = por %p28, %p29
      %p31 = scmp.ne.s32.totalorder %s19, %s20
      %p32 = scmp.eq.s32.totalorder %s15, 3
      %p33 = por %p31, %p32
      %p35 = scmp.ne.s32.totalorder %s20, %s34
      %p36 = scmp.eq.s32.totalorder %s15, 0
      %p37 = por %p35, %p36
      %s38 = ssub.s32 %s9, %s16
      %p39 = scmp.eq.s32.totalorder %s38, 0
      %s41 = sadd.s32 %s40, 1
      %s42 = scalar_select %p39, %s40, %s41
      %p45 = pneg %p39
      %p46 = scmp.eq.s32.totalorder %s9, 3
      %p47 = por %p45, %p46
      %p48 = scmp.ne.s32.totalorder %s40, %s43
      %p49 = scmp.eq.s32.totalorder %s9, 0
      %p50 = por %p48, %p49
      %p51 = scmp.ne.s32.totalorder %s40, %s43
      %p52 = scmp.eq.s32.totalorder %s14, 3
      %p53 = por %p51, %p52
      %p54 = scmp.ne.s32.totalorder %s43, %s44
      %p55 = scmp.eq.s32.totalorder %s14, 0
      %p56 = por %p54, %p55
      %p57 = scmp.ne.s32.totalorder %s43, %s44
      %p58 = scmp.eq.s32.totalorder %s15, 3
      %p59 = por %p57, %p58
      %p61 = scmp.ne.s32.totalorder %s44, %s60
      %p62 = scmp.eq.s32.totalorder %s15, 0
      %p63 = por %p61, %p62
      %s65 = sadd.s32 %s64, 1
      %p68 = scmp.eq.s32.totalorder %s9, 3
      %p69 = scmp.ne.s32.totalorder %s64, %s66
      %p70 = scmp.eq.s32.totalorder %s9, 0
      %p71 = por %p69, %p70
      %p72 = scmp.ne.s32.totalorder %s64, %s66
      %p73 = scmp.eq.s32.totalorder %s14, 3
      %p74 = por %p72, %p73
      %p75 = scmp.ne.s32.totalorder %s66, %s67
      %p76 = scmp.eq.s32.totalorder %s14, 0
      %p77 = por %p75, %p76
      %p78 = scmp.ne.s32.totalorder %s66, %s67
      %p79 = scmp.eq.s32.totalorder %s15, 3
      %p80 = por %p78, %p79
      %p82 = scmp.ne.s32.totalorder %s67, %s81
      %p83 = scmp.eq.s32.totalorder %s15, 0
      %p84 = por %p82, %p83
      %s85 = ssub.s32 %s9, %s16
      %p86 = scmp.eq.s32.totalorder %s85, 0
      %s88 = sadd.s32 %s87, 1
      %s89 = scalar_select %p86, %s87, %s88
      %p92 = pneg %p86
      %p93 = scmp.eq.s32.totalorder %s9, 3
      %p94 = por %p92, %p93
      %p95 = scmp.ne.s32.totalorder %s87, %s90
      %p96 = scmp.eq.s32.totalorder %s9, 0
      %p97 = por %p95, %p96
      %p98 = scmp.ne.s32.totalorder %s87, %s90
      %p99 = scmp.eq.s32.totalorder %s14, 3
      %p100 = por %p98, %p99
      %p101 = scmp.ne.s32.totalorder %s90, %s91
      %p102 = scmp.eq.s32.totalorder %s14, 0
      %p103 = por %p101, %p102
      %p104 = scmp.ne.s32.totalorder %s90, %s91
      %p105 = scmp.eq.s32.totalorder %s15, 3
      %p106 = por %p104, %p105
      %p108 = scmp.ne.s32.totalorder %s91, %s107
      %p109 = scmp.eq.s32.totalorder %s15, 0
      %p110 = por %p108, %p109
      %p111 = scmp.le.s32.totalorder 1, %s9
      %p112 = scmp.lt.s32.totalorder %s9, 5
      %p113 = pnand %p111, %p112
      %p114 = pneg %p113
      // Predicated region
      $region9: #{utae_forward.12} parent=5 // pred_check
        _
      $region10: #{utae_forward.12} parent=5 // pred_check_branch
        %116 = sbr.rel (%p113) target = $region12
      $region11: #{utae_forward.12} parent=5 // pred_region
        %s117 = ssub.s32 %s9, 1
        // Predicated region
        $region13: #{utae_forward.12} parent=11 // pred_check
          %p118 = pneg %p30
        $region14: #{utae_forward.12} parent=11 // pred_check_branch
          %120 = sbr.rel (%p118) target = $region16
        $region15: #{utae_forward.12} parent=11 // pred_region
          _
        $region16: #{utae_forward.12} parent=11 // pred_fallthru
          _
        // Predicated region
        $region17: #{utae_forward.12} parent=11 // pred_check
          %p121 = pneg %p77
        $region18: #{utae_forward.12} parent=11 // pred_check_branch
          %123 = sbr.rel (%p121) target = $region20
        $region19: #{utae_forward.12} parent=11 // pred_region
          _
        $region20: #{utae_forward.12} parent=11 // pred_fallthru
          _
      $region12: #{utae_forward.12} parent=5 // pred_fallthru
        _
      %p124 = scmp.lt.s32.totalorder %s9, 4
      // Predicated region
      $region21: #{utae_forward.12} parent=5 // pred_check
        %p125 = pneg %p124
      $region22: #{utae_forward.12} parent=5 // pred_check_branch
        %127 = sbr.rel (%p125) target = $region24
      $region23: #{utae_forward.12} parent=5 // pred_region
        // Predicated region
        $region25: #{utae_forward.12} parent=23 // pred_check
          %p128 = pneg %p50
        $region26: #{utae_forward.12} parent=23 // pred_check_branch
          %130 = sbr.rel (%p128) target = $region28
        $region27: #{utae_forward.12} parent=23 // pred_region
          %s131 = sand.u32 %s40, 1
          %s132 = sand.u32 %s40, 1
          %s133 = smul.addr %s132, 288
          %s134 = scalar_lea.vmem [#allocation2], %s133
          %s135 = smul.u32 4, %s9
          %s136 = smul.addr %s135, 4
          %s137 = scalar_lea.vmem %s1, %s136
          // Predicated region
          $region29: #{utae_forward.12} parent=27 // pred_check
            _
          $region30: #{utae_forward.12} parent=27 // pred_check_branch
            %139 = sbr.rel (0) target = $region32
          $region31: #{utae_forward.12} parent=27 // pred_region
            // Predicated region
            $region33: #{utae_forward.12} parent=31 // pred_check
              _
            $region34: #{utae_forward.12} parent=31 // pred_check_branch
              %141 = sbr.rel (0) target = $region36
            $region35: #{utae_forward.12} parent=31 // pred_region
              loop: start=0, step=1, limit=1
              $region37: #{utae_forward.12} parent=35 // loop_pre_header
                _
              $region38: #{utae_forward.12} parent=35 // loop_header
                %s143 = sphi 0, %s147
                %p144 = scmp.ge.s32.totalorder %s143, 1
                %s148 = sphi %s137, %s137
                %s149 = sphi %s134, %s134
              $region39: #{utae_forward.12} parent=35 // loop_header_branch
                %146 = sbr.rel (%p144) target = $region43
              $region40: #{utae_forward.12} parent=35 // loop_body
                %v150 = vld [vmem:[%s148] sm:$0xff]
                %151 = vst [vmem:[%s149] sm:$0xff] %v150
                %v152 = vld [vmem:[%s148 + $0x8] sm:$0xff]
                %153 = vst [vmem:[%s149 + $0x8] sm:$0xff] %v152
                %v154 = vld [vmem:[%s148 + $0x40] sm:$0xff]
                %155 = vst [vmem:[%s149 + $0x10] sm:$0xff] %v154
                %v156 = vld [vmem:[%s148 + $0x48] sm:$0xff]
                %157 = vst [vmem:[%s149 + $0x18] sm:$0xff] %v156
                %v158 = vld [vmem:[%s148 + $0x80] sm:$0xff]
                %159 = vst [vmem:[%s149 + $0x20] sm:$0xff] %v158
                %v160 = vld [vmem:[%s148 + $0x88] sm:$0xff]
                %161 = vst [vmem:[%s149 + $0x28] sm:$0xff] %v160
                %v162 = vld [vmem:[%s148 + $0xc0] sm:$0xff]
                %163 = vst [vmem:[%s149 + $0x30] sm:$0xff] %v162
                %v164 = vld [vmem:[%s148 + $0xc8] sm:$0xff]
                %165 = vst [vmem:[%s149 + $0x38] sm:$0xff] %v164
                %v166 = vld [vmem:[%s148 + $0x100] sm:$0xff]
                %167 = vst [vmem:[%s149 + $0x40] sm:$0xff] %v166
                %v168 = vld [vmem:[%s148 + $0x108] sm:$0xff]
                %169 = vst [vmem:[%s149 + $0x48] sm:$0xff] %v168
                %v170 = vld [vmem:[%s148 + $0x140] sm:$0xff]
                %171 = vst [vmem:[%s149 + $0x50] sm:$0xff] %v170
                %v172 = vld [vmem:[%s148 + $0x148] sm:$0xff]
                %173 = vst [vmem:[%s149 + $0x58] sm:$0xff] %v172
                %v174 = vld [vmem:[%s148 + $0x180] sm:$0xff]
                %175 = vst [vmem:[%s149 + $0x60] sm:$0xff] %v174
                %v176 = vld [vmem:[%s148 + $0x188] sm:$0xff]
                %177 = vst [vmem:[%s149 + $0x68] sm:$0xff] %v176
                %v178 = vld [vmem:[%s148 + $0x1c0] sm:$0xff]
                %179 = vst [vmem:[%s149 + $0x70] sm:$0xff] %v178
                %v180 = vld [vmem:[%s148 + $0x1c8] sm:$0xff]
                %181 = vst [vmem:[%s149 + $0x78] sm:$0xff] %v180
                %v182 = vld [vmem:[%s148 + $0x200] sm:$0xff]
                %183 = vst [vmem:[%s149 + $0x80] sm:$0xff] %v182
                %v184 = vld [vmem:[%s148 + $0x208] sm:$0xff]
                %185 = vst [vmem:[%s149 + $0x88] sm:$0xff] %v184
                %v186 = vld [vmem:[%s148 + $0x240] sm:$0xff]
                %187 = vst [vmem:[%s149 + $0x90] sm:$0xff] %v186
                %v188 = vld [vmem:[%s148 + $0x248] sm:$0xff]
                %189 = vst [vmem:[%s149 + $0x98] sm:$0xff] %v188
                %v190 = vld [vmem:[%s148 + $0x280] sm:$0xff]
                %191 = vst [vmem:[%s149 + $0xa0] sm:$0xff] %v190
                %v192 = vld [vmem:[%s148 + $0x288] sm:$0xff]
                %193 = vst [vmem:[%s149 + $0xa8] sm:$0xff] %v192
                %v194 = vld [vmem:[%s148 + $0x2c0] sm:$0xff]
                %195 = vst [vmem:[%s149 + $0xb0] sm:$0xff] %v194
                %v196 = vld [vmem:[%s148 + $0x2c8] sm:$0xff]
                %197 = vst [vmem:[%s149 + $0xb8] sm:$0xff] %v196
                %v198 = vld [vmem:[%s148 + $0x300] sm:$0xff]
                %199 = vst [vmem:[%s149 + $0xc0] sm:$0xff] %v198
                %v200 = vld [vmem:[%s148 + $0x308] sm:$0xff]
                %201 = vst [vmem:[%s149 + $0xc8] sm:$0xff] %v200
                %v202 = vld [vmem:[%s148 + $0x340] sm:$0xff]
                %203 = vst [vmem:[%s149 + $0xd0] sm:$0xff] %v202
                %v204 = vld [vmem:[%s148 + $0x348] sm:$0xff]
                %205 = vst [vmem:[%s149 + $0xd8] sm:$0xff] %v204
                %v206 = vld [vmem:[%s148 + $0x380] sm:$0xff]
                %207 = vst [vmem:[%s149 + $0xe0] sm:$0xff] %v206
                %v208 = vld [vmem:[%s148 + $0x388] sm:$0xff]
                %209 = vst [vmem:[%s149 + $0xe8] sm:$0xff] %v208
                %v210 = vld [vmem:[%s148 + $0x3c0] sm:$0xff]
                %211 = vst [vmem:[%s149 + $0xf0] sm:$0xff] %v210
                %v212 = vld [vmem:[%s148 + $0x3c8] sm:$0xff]
                %213 = vst [vmem:[%s149 + $0xf8] sm:$0xff] %v212
                %v214 = vld [vmem:[%s148 + $0x400] sm:$0xff]
                %215 = vst [vmem:[%s149 + $0x100] sm:$0xff] %v214
                %v216 = vld [vmem:[%s148 + $0x408] sm:$0xff]
                %217 = vst [vmem:[%s149 + $0x108] sm:$0xff] %v216
                %v218 = vld [vmem:[%s148 + $0x440] sm:$0xff]
                %219 = vst [vmem:[%s149 + $0x110] sm:$0xff] %v218
                %v220 = vld [vmem:[%s148 + $0x448] sm:$0xff]
                %221 = vst [vmem:[%s149 + $0x118] sm:$0xff] %v220
              $region41: #{utae_forward.12} parent=35 // loop_footer
                %s147 = sadd.s32 1, %s143
              $region42: #{utae_forward.12} parent=35 // loop_footer_branch
                %142 = sbr.rel target = $region38
              $region43: #{utae_forward.12} parent=35 // loop_exit
                _
            $region36: #{utae_forward.12} parent=31 // pred_fallthru
              _
            // Predicated region
            $region44: #{utae_forward.12} parent=31 // pred_check
              _
            $region45: #{utae_forward.12} parent=31 // pred_check_branch
              %223 = sbr.rel target = $region47
            $region46: #{utae_forward.12} parent=31 // pred_region
              _
            $region47: #{utae_forward.12} parent=31 // pred_fallthru
              _
          $region32: #{utae_forward.12} parent=27 // pred_fallthru
            _
          %224 = vnop
        $region28: #{utae_forward.12} parent=23 // pred_fallthru
          _
      $region24: #{utae_forward.12} parent=5 // pred_fallthru
        _
      %p225 = scmp.le.s32.totalorder 1, %s9
      %p226 = scmp.lt.s32.totalorder %s9, 5
      %p227 = pnand %p225, %p226
      %p228 = pneg %p227
      // Predicated region
      $region48: #{utae_forward.12} parent=5 // pred_check
        _
      $region49: #{utae_forward.12} parent=5 // pred_check_branch
        %230 = sbr.rel (%p227) target = $region51
      $region50: #{utae_forward.12} parent=5 // pred_region
        %s231 = ssub.s32 %s9, 1
        %s232 = sand.u32 %s43, 1
        %s233 = sand.u32 %s43, 1
        %s234 = smul.addr %s233, 288
        %s235 = scalar_lea.vmem [#allocation2], %s234
        // Predicated region
        $region52: #{utae_forward.12} parent=50 // pred_check
          %p236 = pneg %p56
        $region53: #{utae_forward.12} parent=50 // pred_check_branch
          %238 = sbr.rel (%p236) target = $region55
        $region54: #{utae_forward.12} parent=50 // pred_region
          _
        $region55: #{utae_forward.12} parent=50 // pred_fallthru
          _
        %p239 = pneg %p30
        %p240 = pneg %p27
        %s241 = sand.u32 %s43, 1
        %s242 = sand.u32 %s43, 1
        %s243 = smul.addr %s242, 288
        %s244 = scalar_lea.vmem [#allocation2], %s243
        %p245 = pneg %p56
        %p246 = pneg %p53
        %p247 = pneg %p77
        %p248 = pneg %p74
        %p249 = pneg %p103
        %p250 = pneg %p100
        %s251 = sand.u32 %s90, 1
        %s252 = sand.u32 %s90, 1
        %s253 = smul.addr %s252, 64
        %s254 = scalar_lea.vmem [#allocation3], %s253
        %s255 = smul.u32 4, %s14
        %s256 = smul.u32 4, %s14
        %v258 = vld [vmem:[%s0] sm:$0xff]
        %v259 = vld [vmem:[%s0 + $0x8] sm:$0xff]
        %v260 = vld [vmem:[%s235] sm:$0xff]
        %v261 = vld [vmem:[%s235 + $0x8] sm:$0xff]
        %v262 = vld [vmem:[%s235 + $0x10] sm:$0xff]
        %v263 = vld [vmem:[%s235 + $0x18] sm:$0xff]
        %v264 = vld [vmem:[%s235 + $0x20] sm:$0xff]
        %v265 = vld [vmem:[%s235 + $0x28] sm:$0xff]
        %v266 = vld [vmem:[%s235 + $0x30] sm:$0xff]
        %v267 = vld [vmem:[%s235 + $0x38] sm:$0xff]
        %v268 = vld [vmem:[%s235 + $0x40] sm:$0xff]
        %v269 = vld [vmem:[%s235 + $0x48] sm:$0xff]
        %v270 = vld [vmem:[%s235 + $0x50] sm:$0xff]
        %v271 = vld [vmem:[%s235 + $0x58] sm:$0xff]
        %v272 = vld [vmem:[%s235 + $0x60] sm:$0xff]
        %v273 = vld [vmem:[%s235 + $0x68] sm:$0xff]
        %v274 = vld [vmem:[%s235 + $0x70] sm:$0xff]
        %v275 = vld [vmem:[%s235 + $0x78] sm:$0xff]
        %v276 = vld [vmem:[%s235 + $0x80] sm:$0xff]
        %v277 = vld [vmem:[%s235 + $0x88] sm:$0xff]
        %v278 = vld [vmem:[%s235 + $0x90] sm:$0xff]
        %v279 = vld [vmem:[%s235 + $0x98] sm:$0xff]
        %v280 = vld [vmem:[%s235 + $0xa0] sm:$0xff]
        %v281 = vld [vmem:[%s235 + $0xa8] sm:$0xff]
        %v282 = vld [vmem:[%s235 + $0xb0] sm:$0xff]
        %v283 = vld [vmem:[%s235 + $0xb8] sm:$0xff]
        %v284 = vld [vmem:[%s235 + $0xc0] sm:$0xff]
        %v285 = vld [vmem:[%s235 + $0xc8] sm:$0xff]
        %v286 = vld [vmem:[%s235 + $0xd0] sm:$0xff]
        %v287 = vld [vmem:[%s235 + $0xd8] sm:$0xff]
        %v288 = vld [vmem:[%s235 + $0xe0] sm:$0xff]
        %v289 = vld [vmem:[%s235 + $0xe8] sm:$0xff]
        %v290 = vld [vmem:[%s235 + $0xf0] sm:$0xff]
        %v291 = vld [vmem:[%s235 + $0xf8] sm:$0xff]
        %v292 = vld [vmem:[%s235 + $0x100] sm:$0xff]
        %v293 = vld [vmem:[%s235 + $0x108] sm:$0xff]
        %v294 = vld [vmem:[%s235 + $0x110] sm:$0xff]
        %v295 = vld [vmem:[%s235 + $0x118] sm:$0xff]
        %v296 = vld [vmem:[%s2] sm:$0xff]
        %v297 = vld [vmem:[%s2 + $0x8] sm:$0xff]
        %299 = vset.pattern.permute.xlu0 0
        %300 = vperm.xlu0 %299, %v296
        %v301 = vpop.permute.xlu0 %300
        %304 = vset.pattern.permute.xlu0 0
        %305 = vperm.xlu0 %304, %v297
        %v306 = vpop.permute.xlu0 %305
        %v310 = vunpack.c.l.b16 %v258
        %v311 = vunpack.c.h.b16 %v258
        %v312 = vunpack.c.l.b16 %v259
        %v313 = vunpack.c.h.b16 %v259
        %v314 = vpack.c.b16 %v312, %v310
        %v315 = vpack.c.b16 %v313, %v311
        %v353 = vunpack.c.l.b16 %v260
        %v354 = vunpack.c.h.b16 %v260
        %v355 = vunpack.c.l.b16 %v261
        %v356 = vunpack.c.h.b16 %v261
        %v357 = vunpack.c.l.b16 %v262
        %v358 = vunpack.c.h.b16 %v262
        %v359 = vunpack.c.l.b16 %v263
        %v360 = vunpack.c.h.b16 %v263
        %v361 = vunpack.c.l.b16 %v264
        %v362 = vunpack.c.h.b16 %v264
        %v363 = vunpack.c.l.b16 %v265
        %v364 = vunpack.c.h.b16 %v265
        %v365 = vunpack.c.l.b16 %v266
        %v366 = vunpack.c.h.b16 %v266
        %v367 = vunpack.c.l.b16 %v267
        %v368 = vunpack.c.h.b16 %v267
        %v369 = vunpack.c.l.b16 %v268
        %v370 = vunpack.c.h.b16 %v268
        %v371 = vunpack.c.l.b16 %v269
        %v372 = vunpack.c.h.b16 %v269
        %v373 = vunpack.c.l.b16 %v270
        %v374 = vunpack.c.h.b16 %v270
        %v375 = vunpack.c.l.b16 %v271
        %v376 = vunpack.c.h.b16 %v271
        %v377 = vunpack.c.l.b16 %v272
        %v378 = vunpack.c.h.b16 %v272
        %v379 = vunpack.c.l.b16 %v273
        %v380 = vunpack.c.h.b16 %v273
        %v381 = vunpack.c.l.b16 %v274
        %v382 = vunpack.c.h.b16 %v274
        %v383 = vunpack.c.l.b16 %v275
        %v384 = vunpack.c.h.b16 %v275
        %v385 = vunpack.c.l.b16 %v276
        %v386 = vunpack.c.h.b16 %v276
        %v387 = vunpack.c.l.b16 %v277
        %v388 = vunpack.c.h.b16 %v277
        %v389 = vunpack.c.l.b16 %v278
        %v390 = vunpack.c.h.b16 %v278
        %v391 = vunpack.c.l.b16 %v279
        %v392 = vunpack.c.h.b16 %v279
        %v393 = vunpack.c.l.b16 %v280
        %v394 = vunpack.c.h.b16 %v280
        %v395 = vunpack.c.l.b16 %v281
        %v396 = vunpack.c.h.b16 %v281
        %v397 = vunpack.c.l.b16 %v282
        %v398 = vunpack.c.h.b16 %v282
        %v399 = vunpack.c.l.b16 %v283
        %v400 = vunpack.c.h.b16 %v283
        %v401 = vunpack.c.l.b16 %v284
        %v402 = vunpack.c.h.b16 %v284
        %v403 = vunpack.c.l.b16 %v285
        %v404 = vunpack.c.h.b16 %v285
        %v405 = vunpack.c.l.b16 %v286
        %v406 = vunpack.c.h.b16 %v286
        %v407 = vunpack.c.l.b16 %v287
        %v408 = vunpack.c.h.b16 %v287
        %v409 = vunpack.c.l.b16 %v288
        %v410 = vunpack.c.h.b16 %v288
        %v411 = vunpack.c.l.b16 %v289
        %v412 = vunpack.c.h.b16 %v289
        %v413 = vunpack.c.l.b16 %v290
        %v414 = vunpack.c.h.b16 %v290
        %v415 = vunpack.c.l.b16 %v291
        %v416 = vunpack.c.h.b16 %v291
        %v417 = vunpack.c.l.b16 %v292
        %v418 = vunpack.c.h.b16 %v292
        %v419 = vunpack.c.l.b16 %v293
        %v420 = vunpack.c.h.b16 %v293
        %v421 = vunpack.c.l.b16 %v294
        %v422 = vunpack.c.h.b16 %v294
        %v423 = vunpack.c.l.b16 %v295
        %v424 = vunpack.c.h.b16 %v295
        %v425 = vpack.c.b16 %v357, %v353
        %v426 = vpack.c.b16 %v358, %v354
        %v427 = vpack.c.b16 %v359, %v355
        %v428 = vpack.c.b16 %v360, %v356
        %v429 = vpack.c.b16 %v365, %v361
        %v430 = vpack.c.b16 %v366, %v362
        %v431 = vpack.c.b16 %v367, %v363
        %v432 = vpack.c.b16 %v368, %v364
        %v433 = vpack.c.b16 %v373, %v369
        %v434 = vpack.c.b16 %v374, %v370
        %v435 = vpack.c.b16 %v375, %v371
        %v436 = vpack.c.b16 %v376, %v372
        %v437 = vpack.c.b16 %v381, %v377
        %v438 = vpack.c.b16 %v382, %v378
        %v439 = vpack.c.b16 %v383, %v379
        %v440 = vpack.c.b16 %v384, %v380
        %v441 = vpack.c.b16 %v389, %v385
        %v442 = vpack.c.b16 %v390, %v386
        %v443 = vpack.c.b16 %v391, %v387
        %v444 = vpack.c.b16 %v392, %v388
        %v445 = vpack.c.b16 %v397, %v393
        %v446 = vpack.c.b16 %v398, %v394
        %v447 = vpack.c.b16 %v399, %v395
        %v448 = vpack.c.b16 %v400, %v396
        %v449 = vpack.c.b16 %v405, %v401
        %v450 = vpack.c.b16 %v406, %v402
        %v451 = vpack.c.b16 %v407, %v403
        %v452 = vpack.c.b16 %v408, %v404
        %v453 = vpack.c.b16 %v413, %v409
        %v454 = vpack.c.b16 %v414, %v410
        %v455 = vpack.c.b16 %v415, %v411
        %v456 = vpack.c.b16 %v416, %v412
        %v457 = vpack.c.b16 %v421, %v417
        %v458 = vpack.c.b16 %v422, %v418
        %v459 = vpack.c.b16 %v423, %v419
        %v460 = vpack.c.b16 %v424, %v420
        %vm497 = vcmask 130048
        %v499 = vsel %vm497, %v315, 0
        %501 = vmatpush.bf16.msra.mxu0 %v453
        %502 = vmatpush.bf16.msra.mxu0 %v449
        %503 = vmatpush.bf16.msra.mxu0 %v445
        %504 = vmatpush.bf16.msra.mxu0 %v441
        %505 = vmatpush.bf16.msra.mxu0 %v437
        %506 = vmatpush.bf16.msra.mxu0 %v433
        %507 = vmatpush.bf16.msra.mxu0 %v429
        %508 = vmatpush.bf16.msra.mxu0 %v425
        %509 = vmatmul.bf16.gmra.mxu0 %v314
        %v510 = vpop.f32.mrf.mxu0
        %v511 = vadd.f32 %v301, %v510
        %v512 = vpop.f32.mrf.mxu0
        %v513 = vadd.f32 %v306, %v512
        %514 = vdwg.mxu0
        %515 = vmatpush.bf16.msra.mxu0 0
        %516 = vmatpush.bf16.msra.mxu0 0
        %517 = vmatpush.bf16.msra.mxu0 0
        %518 = vmatpush.bf16.msra.mxu0 0
        %519 = vmatpush.bf16.msra.mxu0 0
        %520 = vmatpush.bf16.msra.mxu0 0
        %521 = vmatpush.bf16.msra.mxu0 0
        %522 = vmatpush.bf16.msra.mxu0 %v457
        %523 = vmatmul.bf16.gmra.mxu0 %v499
        %v524 = vpop.f32.mrf.mxu0
        %v525 = vadd.f32 %v511, %v524
        %v526 = vpop.f32.mrf.mxu0
        %v527 = vadd.f32 %v513, %v526
        %528 = vdwg.mxu0
        %529 = vmatpush.bf16.msra.mxu0 %v454
        %530 = vmatpush.bf16.msra.mxu0 %v450
        %531 = vmatpush.bf16.msra.mxu0 %v446
        %532 = vmatpush.bf16.msra.mxu0 %v442
        %533 = vmatpush.bf16.msra.mxu0 %v438
        %534 = vmatpush.bf16.msra.mxu0 %v434
        %535 = vmatpush.bf16.msra.mxu0 %v430
        %536 = vmatpush.bf16.msra.mxu0 %v426
        %537 = vmatmul.bf16.gmra.mxu0 %v314
        %v538 = vpop.f32.mrf.mxu0
        %v539 = vadd.f32 %v301, %v538
        %v540 = vpop.f32.mrf.mxu0
        %v541 = vadd.f32 %v306, %v540
        %542 = vdwg.mxu0
        %543 = vmatpush.bf16.msra.mxu0 0
        %544 = vmatpush.bf16.msra.mxu0 0
        %545 = vmatpush.bf16.msra.mxu0 0
        %546 = vmatpush.bf16.msra.mxu0 0
        %547 = vmatpush.bf16.msra.mxu0 0
        %548 = vmatpush.bf16.msra.mxu0 0
        %549 = vmatpush.bf16.msra.mxu0 0
        %550 = vmatpush.bf16.msra.mxu0 %v458
        %551 = vmatmul.bf16.gmra.mxu0 %v499
        %v552 = vpop.f32.mrf.mxu0
        %v553 = vadd.f32 %v539, %v552
        %v554 = vpop.f32.mrf.mxu0
        %v555 = vadd.f32 %v541, %v554
        %556 = vdwg.mxu0
        %557 = vmatpush.bf16.msra.mxu0 %v455
        %558 = vmatpush.bf16.msra.mxu0 %v451
        %559 = vmatpush.bf16.msra.mxu0 %v447
        %560 = vmatpush.bf16.msra.mxu0 %v443
        %561 = vmatpush.bf16.msra.mxu0 %v439
        %562 = vmatpush.bf16.msra.mxu0 %v435
        %563 = vmatpush.bf16.msra.mxu0 %v431
        %564 = vmatpush.bf16.msra.mxu0 %v427
        %565 = vmatmul.bf16.gmra.mxu0 %v314
        %v566 = vpop.f32.mrf.mxu0
        %v567 = vadd.f32 %v301, %v566
        %v568 = vpop.f32.mrf.mxu0
        %v569 = vadd.f32 %v306, %v568
        %570 = vdwg.mxu0
        %571 = vmatpush.bf16.msra.mxu0 0
        %572 = vmatpush.bf16.msra.mxu0 0
        %573 = vmatpush.bf16.msra.mxu0 0
        %574 = vmatpush.bf16.msra.mxu0 0
        %575 = vmatpush.bf16.msra.mxu0 0
        %576 = vmatpush.bf16.msra.mxu0 0
        %577 = vmatpush.bf16.msra.mxu0 0
        %578 = vmatpush.bf16.msra.mxu0 %v459
        %579 = vmatmul.bf16.gmra.mxu0 %v499
        %v580 = vpop.f32.mrf.mxu0
        %v581 = vadd.f32 %v567, %v580
        %v582 = vpop.f32.mrf.mxu0
        %v583 = vadd.f32 %v569, %v582
        %584 = vdwg.mxu0
        %585 = vmatpush.bf16.msra.mxu0 %v456
        %586 = vmatpush.bf16.msra.mxu0 %v452
        %587 = vmatpush.bf16.msra.mxu0 %v448
        %588 = vmatpush.bf16.msra.mxu0 %v444
        %589 = vmatpush.bf16.msra.mxu0 %v440
        %590 = vmatpush.bf16.msra.mxu0 %v436
        %591 = vmatpush.bf16.msra.mxu0 %v432
        %592 = vmatpush.bf16.msra.mxu0 %v428
        %593 = vmatmul.bf16.gmra.mxu0 %v314
        %v594 = vpop.f32.mrf.mxu0
        %v595 = vadd.f32 %v301, %v594
        %v596 = vpop.f32.mrf.mxu0
        %v597 = vadd.f32 %v306, %v596
        %598 = vdwg.mxu0
        %599 = vmatpush.bf16.msra.mxu0 0
        %600 = vmatpush.bf16.msra.mxu0 0
        %601 = vmatpush.bf16.msra.mxu0 0
        %602 = vmatpush.bf16.msra.mxu0 0
        %603 = vmatpush.bf16.msra.mxu0 0
        %604 = vmatpush.bf16.msra.mxu0 0
        %605 = vmatpush.bf16.msra.mxu0 0
        %606 = vmatpush.bf16.msra.mxu0 %v460
        %607 = vmatmul.bf16.gmra.mxu0 %v499
        %v608 = vpop.f32.mrf.mxu0
        %v609 = vadd.f32 %v595, %v608
        %v610 = vpop.f32.mrf.mxu0
        %v611 = vadd.f32 %v597, %v610
        %612 = vdwg.mxu0
        %613 = vst [vmem:[%s254] sm:$0xff] %v525
        %614 = vst [vmem:[%s254 + $0x8] sm:$0xff] %v553
        %615 = vst [vmem:[%s254 + $0x10] sm:$0xff] %v581
        %616 = vst [vmem:[%s254 + $0x18] sm:$0xff] %v609
        %617 = vst [vmem:[%s254 + $0x20] sm:$0xff] %v527
        %618 = vst [vmem:[%s254 + $0x28] sm:$0xff] %v555
        %619 = vst [vmem:[%s254 + $0x30] sm:$0xff] %v583
        %620 = vst [vmem:[%s254 + $0x38] sm:$0xff] %v611
        %s621 = sand.u32 %s90, 1
        %s622 = sand.u32 %s90, 1
        %s623 = smul.addr %s622, 64
        %s624 = scalar_lea.vmem [#allocation3], %s623
        // Predicated region
        $region56: #{utae_forward.12} parent=50 // pred_check
          %p625 = pneg %p100
        $region57: #{utae_forward.12} parent=50 // pred_check_branch
          %627 = sbr.rel (%p625) target = $region59
        $region58: #{utae_forward.12} parent=50 // pred_region
          %s628 = smul.u32 4, %s14
          %s629 = smul.addr %s628, 8
          %s630 = scalar_lea.vmem %s3, %s629
          // Predicated region
          $region60: #{utae_forward.12} parent=58 // pred_check
            _
          $region61: #{utae_forward.12} parent=58 // pred_check_branch
            %632 = sbr.rel (0) target = $region63
          $region62: #{utae_forward.12} parent=58 // pred_region
            // Predicated region
            $region64: #{utae_forward.12} parent=62 // pred_check
              _
            $region65: #{utae_forward.12} parent=62 // pred_check_branch
              %634 = sbr.rel (0) target = $region67
            $region66: #{utae_forward.12} parent=62 // pred_region
              loop: start=0, step=1, limit=1
              $region68: #{utae_forward.12} parent=66 // loop_pre_header
                _
              $region69: #{utae_forward.12} parent=66 // loop_header
                %s636 = sphi 0, %s640
                %p637 = scmp.ge.s32.totalorder %s636, 1
                %s641 = sphi %s624, %s624
                %s642 = sphi %s630, %s630
              $region70: #{utae_forward.12} parent=66 // loop_header_branch
                %639 = sbr.rel (%p637) target = $region74
              $region71: #{utae_forward.12} parent=66 // loop_body
                %v643 = vld [vmem:[%s641] sm:$0xff]
                %644 = vst [vmem:[%s642] sm:$0xff] %v643
                %v645 = vld [vmem:[%s641 + $0x8] sm:$0xff]
                %646 = vst [vmem:[%s642 + $0x8] sm:$0xff] %v645
                %v647 = vld [vmem:[%s641 + $0x10] sm:$0xff]
                %648 = vst [vmem:[%s642 + $0x10] sm:$0xff] %v647
                %v649 = vld [vmem:[%s641 + $0x18] sm:$0xff]
                %650 = vst [vmem:[%s642 + $0x18] sm:$0xff] %v649
                %v651 = vld [vmem:[%s641 + $0x20] sm:$0xff]
                %652 = vst [vmem:[%s642 + $0x80] sm:$0xff] %v651
                %v653 = vld [vmem:[%s641 + $0x28] sm:$0xff]
                %654 = vst [vmem:[%s642 + $0x88] sm:$0xff] %v653
                %v655 = vld [vmem:[%s641 + $0x30] sm:$0xff]
                %656 = vst [vmem:[%s642 + $0x90] sm:$0xff] %v655
                %v657 = vld [vmem:[%s641 + $0x38] sm:$0xff]
                %658 = vst [vmem:[%s642 + $0x98] sm:$0xff] %v657
              $region72: #{utae_forward.12} parent=66 // loop_footer
                %s640 = sadd.s32 1, %s636
              $region73: #{utae_forward.12} parent=66 // loop_footer_branch
                %635 = sbr.rel target = $region69
              $region74: #{utae_forward.12} parent=66 // loop_exit
                _
            $region67: #{utae_forward.12} parent=62 // pred_fallthru
              _
            // Predicated region
            $region75: #{utae_forward.12} parent=62 // pred_check
              _
            $region76: #{utae_forward.12} parent=62 // pred_check_branch
              %660 = sbr.rel target = $region78
            $region77: #{utae_forward.12} parent=62 // pred_region
              _
            $region78: #{utae_forward.12} parent=62 // pred_fallthru
              _
          $region63: #{utae_forward.12} parent=58 // pred_fallthru
            _
          %661 = vnop
        $region59: #{utae_forward.12} parent=50 // pred_fallthru
          _
      $region51: #{utae_forward.12} parent=5 // pred_fallthru
        _
      %p662 = scmp.le.s32.totalorder 2, %s9
      // Predicated region
      $region79: #{utae_forward.12} parent=5 // pred_check
        %p663 = pneg %p662
      $region80: #{utae_forward.12} parent=5 // pred_check_branch
        %665 = sbr.rel (%p663) target = $region82
      $region81: #{utae_forward.12} parent=5 // pred_region
        %s666 = ssub.s32 %s9, 2
        // Predicated region
        $region83: #{utae_forward.12} parent=81 // pred_check
          %p667 = pneg %p106
        $region84: #{utae_forward.12} parent=81 // pred_check_branch
          %669 = sbr.rel (%p667) target = $region86
        $region85: #{utae_forward.12} parent=81 // pred_region
          %s670 = sand.u32 %s91, 1
          %s671 = sand.u32 %s91, 1
          %s672 = smul.addr %s671, 64
          %s673 = scalar_lea.vmem [#allocation3], %s672
        $region86: #{utae_forward.12} parent=81 // pred_fallthru
          _
      $region82: #{utae_forward.12} parent=5 // pred_fallthru
        _
    $region6: #{utae_forward.12} parent=1 // loop_footer
      %s13 = sadd.s32 1, %s9
    $region7: #{utae_forward.12} parent=1 // loop_footer_branch
      %8 = sbr.rel target = $region3
    $region8: #{utae_forward.12} parent=1 // loop_exit
      _

// kernel: utae_forward.13
$region0: #{utae_forward.13}
  #allocation0 [shape = 'u32[]', space=smem, size = 0x4, offset = 0x4, fixed_abs, tag = 'smem constant byte address 0x4 - core index']
  #allocation1 [shape = 'u32[72,128]{1,0:T(1,128)}', space=vmem, size = 0x9000, scoped, tag = 'internal scratch']
  %s0 = inlined_call_operand.vmem [shape: bf16[16,64], index: 0, kind: input, shape index: {}]
  %s1 = inlined_call_operand.vmem [shape: bf16[64,512], index: 1, kind: input, shape index: {}]
  %s2 = inlined_call_operand.vmem [shape: f32[16,1], index: 2, kind: input, shape index: {}]
  %s3 = inlined_call_operand.vmem [shape: f32[16,512], index: 3, kind: output, shape index: {}]
  %s4 = sld [smem:[#allocation0]]
  $region102: #{utae_forward.13} parent=0
    _
  %s6 = ssub.s32 1, %s4
  %s7 = scalar_select 0, %s6, %s4
  $region1: #{utae_forward.13} parent=0
    #allocation2 [shape = 'u8[65536]{0}', space=vmem, size = 0x10000, scoped, tag = 'input window, operand 1']
    #allocation3 [shape = 'u8[32768]{0}', space=vmem, size = 0x8000, scoped, tag = 'output window, operand 0']
    loop: start=0, step=1, limit=4
    $region2: #{utae_forward.13} parent=1 // loop_pre_header
      _
    $region3: #{utae_forward.13} parent=1 // loop_header
      %s9 = sphi 0, %s13
      %p10 = scmp.ge.s32.totalorder %s9, 4
      %s17 = sphi 0, %s17
      %s19 = sphi 0, %s17
      %s20 = sphi 0, %s19
      %s34 = sphi 0, %s20
      %s40 = sphi 0, %s42
      %s43 = sphi 0, %s40
      %s44 = sphi 0, %s43
      %s60 = sphi 0, %s44
      %s64 = sphi 0, %s64
      %s66 = sphi 0, %s64
      %s67 = sphi 0, %s66
      %s81 = sphi 0, %s67
      %s87 = sphi 0, %s89
      %s90 = sphi 0, %s87
      %s91 = sphi 0, %s90
      %s107 = sphi 0, %s91
    $region4: #{utae_forward.13} parent=1 // loop_header_branch
      %12 = sbr.rel (%p10) target = $region8
    $region5: #{utae_forward.13} parent=1 // loop_body
      %s14 = ssub.s32 %s9, 1
      %s15 = ssub.s32 %s9, 2
      %s16 = sadd.s32 %s9, 1
      %s18 = sadd.s32 %s17, 1
      %p21 = scmp.eq.s32.totalorder %s9, 1
      %p22 = scmp.ne.s32.totalorder %s17, %s19
      %p23 = scmp.eq.s32.totalorder %s9, 0
      %p24 = por %p22, %p23
      %p25 = scmp.ne.s32.totalorder %s17, %s19
      %p26 = scmp.eq.s32.totalorder %s14, 1
      %p27 = por %p25, %p26
      %p28 = scmp.ne.s32.totalorder %s19, %s20
      %p29 = scmp.eq.s32.totalorder %s14, 0
      %p30 = por %p28, %p29
      %p31 = scmp.ne.s32.totalorder %s19, %s20
      %p32 = scmp.eq.s32.totalorder %s15, 1
      %p33 = por %p31, %p32
      %p35 = scmp.ne.s32.totalorder %s20, %s34
      %p36 = scmp.eq.s32.totalorder %s15, 0
      %p37 = por %p35, %p36
      %s38 = ssub.s32 %s9, %s16
      %p39 = scmp.eq.s32.totalorder %s38, 0
      %s41 = sadd.s32 %s40, 1
      %s42 = scalar_select %p39, %s40, %s41
      %p45 = pneg %p39
      %p46 = scmp.eq.s32.totalorder %s9, 1
      %p47 = por %p45, %p46
      %p48 = scmp.ne.s32.totalorder %s40, %s43
      %p49 = scmp.eq.s32.totalorder %s9, 0
      %p50 = por %p48, %p49
      %p51 = scmp.ne.s32.totalorder %s40, %s43
      %p52 = scmp.eq.s32.totalorder %s14, 1
      %p53 = por %p51, %p52
      %p54 = scmp.ne.s32.totalorder %s43, %s44
      %p55 = scmp.eq.s32.totalorder %s14, 0
      %p56 = por %p54, %p55
      %p57 = scmp.ne.s32.totalorder %s43, %s44
      %p58 = scmp.eq.s32.totalorder %s15, 1
      %p59 = por %p57, %p58
      %p61 = scmp.ne.s32.totalorder %s44, %s60
      %p62 = scmp.eq.s32.totalorder %s15, 0
      %p63 = por %p61, %p62
      %s65 = sadd.s32 %s64, 1
      %p68 = scmp.eq.s32.totalorder %s9, 1
      %p69 = scmp.ne.s32.totalorder %s64, %s66
      %p70 = scmp.eq.s32.totalorder %s9, 0
      %p71 = por %p69, %p70
      %p72 = scmp.ne.s32.totalorder %s64, %s66
      %p73 = scmp.eq.s32.totalorder %s14, 1
      %p74 = por %p72, %p73
      %p75 = scmp.ne.s32.totalorder %s66, %s67
      %p76 = scmp.eq.s32.totalorder %s14, 0
      %p77 = por %p75, %p76
      %p78 = scmp.ne.s32.totalorder %s66, %s67
      %p79 = scmp.eq.s32.totalorder %s15, 1
      %p80 = por %p78, %p79
      %p82 = scmp.ne.s32.totalorder %s67, %s81
      %p83 = scmp.eq.s32.totalorder %s15, 0
      %p84 = por %p82, %p83
      %s85 = ssub.s32 %s9, %s16
      %p86 = scmp.eq.s32.totalorder %s85, 0
      %s88 = sadd.s32 %s87, 1
      %s89 = scalar_select %p86, %s87, %s88
      %p92 = pneg %p86
      %p93 = scmp.eq.s32.totalorder %s9, 1
      %p94 = por %p92, %p93
      %p95 = scmp.ne.s32.totalorder %s87, %s90
      %p96 = scmp.eq.s32.totalorder %s9, 0
      %p97 = por %p95, %p96
      %p98 = scmp.ne.s32.totalorder %s87, %s90
      %p99 = scmp.eq.s32.totalorder %s14, 1
      %p100 = por %p98, %p99
      %p101 = scmp.ne.s32.totalorder %s90, %s91
      %p102 = scmp.eq.s32.totalorder %s14, 0
      %p103 = por %p101, %p102
      %p104 = scmp.ne.s32.totalorder %s90, %s91
      %p105 = scmp.eq.s32.totalorder %s15, 1
      %p106 = por %p104, %p105
      %p108 = scmp.ne.s32.totalorder %s91, %s107
      %p109 = scmp.eq.s32.totalorder %s15, 0
      %p110 = por %p108, %p109
      %p111 = scmp.le.s32.totalorder 1, %s9
      %p112 = scmp.lt.s32.totalorder %s9, 3
      %p113 = pnand %p111, %p112
      %p114 = pneg %p113
      // Predicated region
      $region9: #{utae_forward.13} parent=5 // pred_check
        _
      $region10: #{utae_forward.13} parent=5 // pred_check_branch
        %116 = sbr.rel (%p113) target = $region12
      $region11: #{utae_forward.13} parent=5 // pred_region
        %s117 = ssub.s32 %s9, 1
        // Predicated region
        $region13: #{utae_forward.13} parent=11 // pred_check
          %p118 = pneg %p30
        $region14: #{utae_forward.13} parent=11 // pred_check_branch
          %120 = sbr.rel (%p118) target = $region16
        $region15: #{utae_forward.13} parent=11 // pred_region
          _
        $region16: #{utae_forward.13} parent=11 // pred_fallthru
          _
        // Predicated region
        $region17: #{utae_forward.13} parent=11 // pred_check
          %p121 = pneg %p77
        $region18: #{utae_forward.13} parent=11 // pred_check_branch
          %123 = sbr.rel (%p121) target = $region20
        $region19: #{utae_forward.13} parent=11 // pred_region
          _
        $region20: #{utae_forward.13} parent=11 // pred_fallthru
          _
      $region12: #{utae_forward.13} parent=5 // pred_fallthru
        _
      %p124 = scmp.lt.s32.totalorder %s9, 2
      // Predicated region
      $region21: #{utae_forward.13} parent=5 // pred_check
        %p125 = pneg %p124
      $region22: #{utae_forward.13} parent=5 // pred_check_branch
        %127 = sbr.rel (%p125) target = $region24
      $region23: #{utae_forward.13} parent=5 // pred_region
        // Predicated region
        $region25: #{utae_forward.13} parent=23 // pred_check
          %p128 = pneg %p50
        $region26: #{utae_forward.13} parent=23 // pred_check_branch
          %130 = sbr.rel (%p128) target = $region28
        $region27: #{utae_forward.13} parent=23 // pred_region
          %s131 = sand.u32 %s40, 1
          %s132 = sand.u32 %s40, 1
          %s133 = smul.addr %s132, 64
          %s134 = scalar_lea.vmem [#allocation2], %s133
          %s135 = smul.u32 2, %s9
          %s136 = smul.addr %s135, 4
          %s137 = scalar_lea.vmem %s1, %s136
          // Predicated region
          $region29: #{utae_forward.13} parent=27 // pred_check
            _
          $region30: #{utae_forward.13} parent=27 // pred_check_branch
            %139 = sbr.rel (0) target = $region32
          $region31: #{utae_forward.13} parent=27 // pred_region
            // Predicated region
            $region33: #{utae_forward.13} parent=31 // pred_check
              _
            $region34: #{utae_forward.13} parent=31 // pred_check_branch
              %141 = sbr.rel (0) target = $region36
            $region35: #{utae_forward.13} parent=31 // pred_region
              // Predicated region
              $region48: #{utae_forward.13} parent=35 // pred_check
                _
              $region49: #{utae_forward.13} parent=35 // pred_check_branch
                %171 = sbr.rel (0) target = $region51
              $region50: #{utae_forward.13} parent=35 // pred_region
                loop: start=0, step=1, limit=1
                $region52: #{utae_forward.13} parent=50 // loop_pre_header
                  _
                $region53: #{utae_forward.13} parent=50 // loop_header
                  %s173 = sphi 0, %s177
                  %p174 = scmp.ge.s32.totalorder %s173, 1
                  %s178 = sphi %s137, %s137
                  %s179 = sphi %s134, %s134
                $region54: #{utae_forward.13} parent=50 // loop_header_branch
                  %176 = sbr.rel (%p174) target = $region58
                $region55: #{utae_forward.13} parent=50 // loop_body
                  %v180 = vld [vmem:[%s178] sm:$0xff]
                  %181 = vst [vmem:[%s179] sm:$0xff] %v180
                  %v182 = vld [vmem:[%s178 + $0x10] sm:$0xff]
                  %183 = vst [vmem:[%s179 + $0x8] sm:$0xff] %v182
                  %v184 = vld [vmem:[%s178 + $0x20] sm:$0xff]
                  %185 = vst [vmem:[%s179 + $0x10] sm:$0xff] %v184
                  %v186 = vld [vmem:[%s178 + $0x30] sm:$0xff]
                  %187 = vst [vmem:[%s179 + $0x18] sm:$0xff] %v186
                  %v188 = vld [vmem:[%s178 + $0x40] sm:$0xff]
                  %189 = vst [vmem:[%s179 + $0x20] sm:$0xff] %v188
                  %v190 = vld [vmem:[%s178 + $0x50] sm:$0xff]
                  %191 = vst [vmem:[%s179 + $0x28] sm:$0xff] %v190
                  %v192 = vld [vmem:[%s178 + $0x60] sm:$0xff]
                  %193 = vst [vmem:[%s179 + $0x30] sm:$0xff] %v192
                  %v194 = vld [vmem:[%s178 + $0x70] sm:$0xff]
                  %195 = vst [vmem:[%s179 + $0x38] sm:$0xff] %v194
                $region56: #{utae_forward.13} parent=50 // loop_footer
                  %s177 = sadd.s32 1, %s173
                $region57: #{utae_forward.13} parent=50 // loop_footer_branch
                  %172 = sbr.rel target = $region53
                $region58: #{utae_forward.13} parent=50 // loop_exit
                  _
              $region51: #{utae_forward.13} parent=35 // pred_fallthru
                _
              // Predicated region
              $region59: #{utae_forward.13} parent=35 // pred_check
                _
              $region60: #{utae_forward.13} parent=35 // pred_check_branch
                %197 = sbr.rel target = $region62
              $region61: #{utae_forward.13} parent=35 // pred_region
                _
              $region62: #{utae_forward.13} parent=35 // pred_fallthru
                _
            $region36: #{utae_forward.13} parent=31 // pred_fallthru
              _
            // Predicated region
            $region37: #{utae_forward.13} parent=31 // pred_check
              _
            $region38: #{utae_forward.13} parent=31 // pred_check_branch
              %143 = sbr.rel target = $region40
            $region39: #{utae_forward.13} parent=31 // pred_region
              %s145 = ssub.s32 256, 1
              loop: start=0, step=1, limit=1
              $region41: #{utae_forward.13} parent=39 // loop_pre_header
                _
              $region42: #{utae_forward.13} parent=39 // loop_header
                %s147 = sphi 0, %s151
                %p148 = scmp.ge.s32.totalorder %s147, 1
                %s152 = sphi %s137, %s137
                %s153 = sphi %s134, %s134
              $region43: #{utae_forward.13} parent=39 // loop_header_branch
                %150 = sbr.rel (%p148) target = $region47
              $region44: #{utae_forward.13} parent=39 // loop_body
                %v154 = vld [vmem:[%s152] sm:%s145]
                %155 = vst [vmem:[%s153] sm:%s145] %v154
                %v156 = vld [vmem:[%s152 + $0x10] sm:%s145]
                %157 = vst [vmem:[%s153 + $0x8] sm:%s145] %v156
                %v158 = vld [vmem:[%s152 + $0x20] sm:%s145]
                %159 = vst [vmem:[%s153 + $0x10] sm:%s145] %v158
                %v160 = vld [vmem:[%s152 + $0x30] sm:%s145]
                %161 = vst [vmem:[%s153 + $0x18] sm:%s145] %v160
                %v162 = vld [vmem:[%s152 + $0x40] sm:%s145]
                %163 = vst [vmem:[%s153 + $0x20] sm:%s145] %v162
                %v164 = vld [vmem:[%s152 + $0x50] sm:%s145]
                %165 = vst [vmem:[%s153 + $0x28] sm:%s145] %v164
                %v166 = vld [vmem:[%s152 + $0x60] sm:%s145]
                %167 = vst [vmem:[%s153 + $0x30] sm:%s145] %v166
                %v168 = vld [vmem:[%s152 + $0x70] sm:%s145]
                %169 = vst [vmem:[%s153 + $0x38] sm:%s145] %v168
              $region45: #{utae_forward.13} parent=39 // loop_footer
                %s151 = sadd.s32 1, %s147
              $region46: #{utae_forward.13} parent=39 // loop_footer_branch
                %146 = sbr.rel target = $region42
              $region47: #{utae_forward.13} parent=39 // loop_exit
                _
            $region40: #{utae_forward.13} parent=31 // pred_fallthru
              _
          $region32: #{utae_forward.13} parent=27 // pred_fallthru
            _
          %198 = vnop
        $region28: #{utae_forward.13} parent=23 // pred_fallthru
          _
      $region24: #{utae_forward.13} parent=5 // pred_fallthru
        _
      %p199 = scmp.le.s32.totalorder 1, %s9
      %p200 = scmp.lt.s32.totalorder %s9, 3
      %p201 = pnand %p199, %p200
      %p202 = pneg %p201
      // Predicated region
      $region63: #{utae_forward.13} parent=5 // pred_check
        _
      $region64: #{utae_forward.13} parent=5 // pred_check_branch
        %204 = sbr.rel (%p201) target = $region66
      $region65: #{utae_forward.13} parent=5 // pred_region
        %s205 = ssub.s32 %s9, 1
        %s206 = sand.u32 %s43, 1
        %s207 = sand.u32 %s43, 1
        %s208 = smul.addr %s207, 64
        %s209 = scalar_lea.vmem [#allocation2], %s208
        // Predicated region
        $region67: #{utae_forward.13} parent=65 // pred_check
          %p210 = pneg %p56
        $region68: #{utae_forward.13} parent=65 // pred_check_branch
          %212 = sbr.rel (%p210) target = $region70
        $region69: #{utae_forward.13} parent=65 // pred_region
          _
        $region70: #{utae_forward.13} parent=65 // pred_fallthru
          _
        %p213 = pneg %p30
        %p214 = pneg %p27
        %s215 = sand.u32 %s43, 1
        %s216 = sand.u32 %s43, 1
        %s217 = smul.addr %s216, 64
        %s218 = scalar_lea.vmem [#allocation2], %s217
        %p219 = pneg %p56
        %p220 = pneg %p53
        %p221 = pneg %p77
        %p222 = pneg %p74
        %p223 = pneg %p103
        %p224 = pneg %p100
        %s225 = sand.u32 %s90, 1
        %s226 = sand.u32 %s90, 1
        %s227 = smul.addr %s226, 32
        %s228 = scalar_lea.vmem [#allocation3], %s227
        %s229 = smul.u32 2, %s14
        %s230 = smul.u32 2, %s14
        %v232 = vld [vmem:[%s0] sm:$0xf]
        %v233 = vld [vmem:[%s0 + $0x4] sm:$0xf]
        %v234 = vld [vmem:[%s209] sm:$0xff]
        %v235 = vld [vmem:[%s209 + $0x8] sm:$0xff]
        %v236 = vld [vmem:[%s209 + $0x10] sm:$0xff]
        %v237 = vld [vmem:[%s209 + $0x18] sm:$0xff]
        %v238 = vld [vmem:[%s209 + $0x20] sm:$0xff]
        %v239 = vld [vmem:[%s209 + $0x28] sm:$0xff]
        %v240 = vld [vmem:[%s209 + $0x30] sm:$0xff]
        %v241 = vld [vmem:[%s209 + $0x38] sm:$0xff]
        %v242 = vld [vmem:[%s2] sm:$0xff]
        %v243 = vld [vmem:[%s2 + $0x8] sm:$0xff]
        %245 = vset.pattern.permute.xlu0 0
        %246 = vperm.xlu0 %245, %v242
        %v247 = vpop.permute.xlu0 %246
        %250 = vset.pattern.permute.xlu0 0
        %251 = vperm.xlu0 %250, %v243
        %v252 = vpop.permute.xlu0 %251
        %v256 = vunpack.c.l.b16 %v232
        %v257 = vunpack.c.l.b16 %v233
        %v258 = vpack.c.b16 %v257, %v256
        %v267 = vunpack.c.l.b16 %v234
        %v268 = vunpack.c.h.b16 %v234
        %v269 = vunpack.c.l.b16 %v235
        %v270 = vunpack.c.h.b16 %v235
        %v271 = vunpack.c.l.b16 %v236
        %v272 = vunpack.c.h.b16 %v236
        %v273 = vunpack.c.l.b16 %v237
        %v274 = vunpack.c.h.b16 %v237
        %v275 = vunpack.c.l.b16 %v238
        %v276 = vunpack.c.h.b16 %v238
        %v277 = vunpack.c.l.b16 %v239
        %v278 = vunpack.c.h.b16 %v239
        %v279 = vunpack.c.l.b16 %v240
        %v280 = vunpack.c.h.b16 %v240
        %v281 = vunpack.c.l.b16 %v241
        %v282 = vunpack.c.h.b16 %v241
        %v283 = vpack.c.b16 %v269, %v267
        %v284 = vpack.c.b16 %v270, %v268
        %v285 = vpack.c.b16 %v273, %v271
        %v286 = vpack.c.b16 %v274, %v272
        %v287 = vpack.c.b16 %v277, %v275
        %v288 = vpack.c.b16 %v278, %v276
        %v289 = vpack.c.b16 %v281, %v279
        %v290 = vpack.c.b16 %v282, %v280
        %vm299 = vcmask 523264
        %v301 = vsel %vm299, %v258, 0
        %303 = vmatpush.bf16.msra.mxu0 0
        %304 = vmatpush.bf16.msra.mxu0 0
        %305 = vmatpush.bf16.msra.mxu0 0
        %306 = vmatpush.bf16.msra.mxu0 0
        %307 = vmatpush.bf16.msra.mxu0 %v289
        %308 = vmatpush.bf16.msra.mxu0 %v287
        %309 = vmatpush.bf16.msra.mxu0 %v285
        %310 = vmatpush.bf16.msra.mxu0 %v283
        %311 = vmatmul.bf16.gmra.mxu0 %v301
        %v312 = vpop.f32.mrf.mxu0
        %v313 = vadd.f32 %v247, %v312
        %v314 = vpop.f32.mrf.mxu0
        %v315 = vadd.f32 %v252, %v314
        %316 = vdwg.mxu0
        %317 = vmatpush.bf16.msra.mxu0 0
        %318 = vmatpush.bf16.msra.mxu0 0
        %319 = vmatpush.bf16.msra.mxu0 0
        %320 = vmatpush.bf16.msra.mxu0 0
        %321 = vmatpush.bf16.msra.mxu0 %v290
        %322 = vmatpush.bf16.msra.mxu0 %v288
        %323 = vmatpush.bf16.msra.mxu0 %v286
        %324 = vmatpush.bf16.msra.mxu0 %v284
        %325 = vmatmul.bf16.gmra.mxu0 %v301
        %v326 = vpop.f32.mrf.mxu0
        %v327 = vadd.f32 %v247, %v326
        %v328 = vpop.f32.mrf.mxu0
        %v329 = vadd.f32 %v252, %v328
        %330 = vdwg.mxu0
        %331 = vst [vmem:[%s228] sm:$0xff] %v313
        %332 = vst [vmem:[%s228 + $0x8] sm:$0xff] %v327
        %333 = vst [vmem:[%s228 + $0x10] sm:$0xff] %v315
        %334 = vst [vmem:[%s228 + $0x18] sm:$0xff] %v329
        %s335 = sand.u32 %s90, 1
        %s336 = sand.u32 %s90, 1
        %s337 = smul.addr %s336, 32
        %s338 = scalar_lea.vmem [#allocation3], %s337
        // Predicated region
        $region71: #{utae_forward.13} parent=65 // pred_check
          %p339 = pneg %p100
        $region72: #{utae_forward.13} parent=65 // pred_check_branch
          %341 = sbr.rel (%p339) target = $region74
        $region73: #{utae_forward.13} parent=65 // pred_region
          %s342 = smul.u32 2, %s14
          %s343 = smul.addr %s342, 8
          %s344 = scalar_lea.vmem %s3, %s343
          // Predicated region
          $region75: #{utae_forward.13} parent=73 // pred_check
            _
          $region76: #{utae_forward.13} parent=73 // pred_check_branch
            %346 = sbr.rel (0) target = $region78
          $region77: #{utae_forward.13} parent=73 // pred_region
            // Predicated region
            $region79: #{utae_forward.13} parent=77 // pred_check
              _
            $region80: #{utae_forward.13} parent=77 // pred_check_branch
              %348 = sbr.rel (0) target = $region82
            $region81: #{utae_forward.13} parent=77 // pred_region
              loop: start=0, step=1, limit=1
              $region83: #{utae_forward.13} parent=81 // loop_pre_header
                _
              $region84: #{utae_forward.13} parent=81 // loop_header
                %s350 = sphi 0, %s354
                %p351 = scmp.ge.s32.totalorder %s350, 1
                %s355 = sphi %s338, %s338
                %s356 = sphi %s344, %s344
              $region85: #{utae_forward.13} parent=81 // loop_header_branch
                %353 = sbr.rel (%p351) target = $region89
              $region86: #{utae_forward.13} parent=81 // loop_body
                %v357 = vld [vmem:[%s355] sm:$0xff]
                %358 = vst [vmem:[%s356] sm:$0xff] %v357
                %v359 = vld [vmem:[%s355 + $0x8] sm:$0xff]
                %360 = vst [vmem:[%s356 + $0x8] sm:$0xff] %v359
                %v361 = vld [vmem:[%s355 + $0x10] sm:$0xff]
                %362 = vst [vmem:[%s356 + $0x20] sm:$0xff] %v361
                %v363 = vld [vmem:[%s355 + $0x18] sm:$0xff]
                %364 = vst [vmem:[%s356 + $0x28] sm:$0xff] %v363
              $region87: #{utae_forward.13} parent=81 // loop_footer
                %s354 = sadd.s32 1, %s350
              $region88: #{utae_forward.13} parent=81 // loop_footer_branch
                %349 = sbr.rel target = $region84
              $region89: #{utae_forward.13} parent=81 // loop_exit
                _
            $region82: #{utae_forward.13} parent=77 // pred_fallthru
              _
            // Predicated region
            $region90: #{utae_forward.13} parent=77 // pred_check
              _
            $region91: #{utae_forward.13} parent=77 // pred_check_branch
              %366 = sbr.rel target = $region93
            $region92: #{utae_forward.13} parent=77 // pred_region
              _
            $region93: #{utae_forward.13} parent=77 // pred_fallthru
              _
          $region78: #{utae_forward.13} parent=73 // pred_fallthru
            _
          %367 = vnop
        $region74: #{utae_forward.13} parent=65 // pred_fallthru
          _
      $region66: #{utae_forward.13} parent=5 // pred_fallthru
        _
      %p368 = scmp.le.s32.totalorder 2, %s9
      // Predicated region
      $region94: #{utae_forward.13} parent=5 // pred_check
        %p369 = pneg %p368
      $region95: #{utae_forward.13} parent=5 // pred_check_branch
        %371 = sbr.rel (%p369) target = $region97
      $region96: #{utae_forward.13} parent=5 // pred_region
        %s372 = ssub.s32 %s9, 2
        // Predicated region
        $region98: #{utae_forward.13} parent=96 // pred_check
          %p373 = pneg %p106
        $region99: #{utae_forward.13} parent=96 // pred_check_branch
          %375 = sbr.rel (%p373) target = $region101
        $region100: #{utae_forward.13} parent=96 // pred_region
          %s376 = sand.u32 %s91, 1
          %s377 = sand.u32 %s91, 1
          %s378 = smul.addr %s377, 32
          %s379 = scalar_lea.vmem [#allocation3], %s378
        $region101: #{utae_forward.13} parent=96 // pred_fallthru
          _
      $region97: #{utae_forward.13} parent=5 // pred_fallthru
        _
    $region6: #{utae_forward.13} parent=1 // loop_footer
      %s13 = sadd.s32 1, %s9
    $region7: #{utae_forward.13} parent=1 // loop_footer_branch
      %8 = sbr.rel target = $region3
    $region8: #{utae_forward.13} parent=1 // loop_exit
      _

// kernel: utae_forward.14
$region0: #{utae_forward.14}
  #allocation0 [shape = 'u32[]', space=smem, size = 0x4, offset = 0x4, fixed_abs, tag = 'smem constant byte address 0x4 - core index']
  #allocation1 [shape = 'u32[72,128]{1,0:T(1,128)}', space=vmem, size = 0x9000, scoped, tag = 'internal scratch']
  %s0 = inlined_call_operand.vmem [shape: bf16[32,144], index: 0, kind: input, shape index: {}]
  %s1 = inlined_call_operand.vmem [shape: bf16[144,512], index: 1, kind: input, shape index: {}]
  %s2 = inlined_call_operand.vmem [shape: f32[32,1], index: 2, kind: input, shape index: {}]
  %s3 = inlined_call_operand.vmem [shape: f32[32,512], index: 3, kind: output, shape index: {}]
  %s4 = sld [smem:[#allocation0]]
  $region102: #{utae_forward.14} parent=0
    _
  %s6 = ssub.s32 1, %s4
  %s7 = scalar_select 0, %s6, %s4
  $region1: #{utae_forward.14} parent=0
    #allocation2 [shape = 'u8[147456]{0}', space=vmem, size = 0x24000, scoped, tag = 'input window, operand 1']
    #allocation3 [shape = 'u8[65536]{0}', space=vmem, size = 0x10000, scoped, tag = 'output window, operand 0']
    loop: start=0, step=1, limit=4
    $region2: #{utae_forward.14} parent=1 // loop_pre_header
      _
    $region3: #{utae_forward.14} parent=1 // loop_header
      %s9 = sphi 0, %s13
      %p10 = scmp.ge.s32.totalorder %s9, 4
      %s17 = sphi 0, %s17
      %s19 = sphi 0, %s17
      %s20 = sphi 0, %s19
      %s34 = sphi 0, %s20
      %s40 = sphi 0, %s42
      %s43 = sphi 0, %s40
      %s44 = sphi 0, %s43
      %s60 = sphi 0, %s44
      %s64 = sphi 0, %s64
      %s66 = sphi 0, %s64
      %s67 = sphi 0, %s66
      %s81 = sphi 0, %s67
      %s87 = sphi 0, %s89
      %s90 = sphi 0, %s87
      %s91 = sphi 0, %s90
      %s107 = sphi 0, %s91
    $region4: #{utae_forward.14} parent=1 // loop_header_branch
      %12 = sbr.rel (%p10) target = $region8
    $region5: #{utae_forward.14} parent=1 // loop_body
      %s14 = ssub.s32 %s9, 1
      %s15 = ssub.s32 %s9, 2
      %s16 = sadd.s32 %s9, 1
      %s18 = sadd.s32 %s17, 1
      %p21 = scmp.eq.s32.totalorder %s9, 1
      %p22 = scmp.ne.s32.totalorder %s17, %s19
      %p23 = scmp.eq.s32.totalorder %s9, 0
      %p24 = por %p22, %p23
      %p25 = scmp.ne.s32.totalorder %s17, %s19
      %p26 = scmp.eq.s32.totalorder %s14, 1
      %p27 = por %p25, %p26
      %p28 = scmp.ne.s32.totalorder %s19, %s20
      %p29 = scmp.eq.s32.totalorder %s14, 0
      %p30 = por %p28, %p29
      %p31 = scmp.ne.s32.totalorder %s19, %s20
      %p32 = scmp.eq.s32.totalorder %s15, 1
      %p33 = por %p31, %p32
      %p35 = scmp.ne.s32.totalorder %s20, %s34
      %p36 = scmp.eq.s32.totalorder %s15, 0
      %p37 = por %p35, %p36
      %s38 = ssub.s32 %s9, %s16
      %p39 = scmp.eq.s32.totalorder %s38, 0
      %s41 = sadd.s32 %s40, 1
      %s42 = scalar_select %p39, %s40, %s41
      %p45 = pneg %p39
      %p46 = scmp.eq.s32.totalorder %s9, 1
      %p47 = por %p45, %p46
      %p48 = scmp.ne.s32.totalorder %s40, %s43
      %p49 = scmp.eq.s32.totalorder %s9, 0
      %p50 = por %p48, %p49
      %p51 = scmp.ne.s32.totalorder %s40, %s43
      %p52 = scmp.eq.s32.totalorder %s14, 1
      %p53 = por %p51, %p52
      %p54 = scmp.ne.s32.totalorder %s43, %s44
      %p55 = scmp.eq.s32.totalorder %s14, 0
      %p56 = por %p54, %p55
      %p57 = scmp.ne.s32.totalorder %s43, %s44
      %p58 = scmp.eq.s32.totalorder %s15, 1
      %p59 = por %p57, %p58
      %p61 = scmp.ne.s32.totalorder %s44, %s60
      %p62 = scmp.eq.s32.totalorder %s15, 0
      %p63 = por %p61, %p62
      %s65 = sadd.s32 %s64, 1
      %p68 = scmp.eq.s32.totalorder %s9, 1
      %p69 = scmp.ne.s32.totalorder %s64, %s66
      %p70 = scmp.eq.s32.totalorder %s9, 0
      %p71 = por %p69, %p70
      %p72 = scmp.ne.s32.totalorder %s64, %s66
      %p73 = scmp.eq.s32.totalorder %s14, 1
      %p74 = por %p72, %p73
      %p75 = scmp.ne.s32.totalorder %s66, %s67
      %p76 = scmp.eq.s32.totalorder %s14, 0
      %p77 = por %p75, %p76
      %p78 = scmp.ne.s32.totalorder %s66, %s67
      %p79 = scmp.eq.s32.totalorder %s15, 1
      %p80 = por %p78, %p79
      %p82 = scmp.ne.s32.totalorder %s67, %s81
      %p83 = scmp.eq.s32.totalorder %s15, 0
      %p84 = por %p82, %p83
      %s85 = ssub.s32 %s9, %s16
      %p86 = scmp.eq.s32.totalorder %s85, 0
      %s88 = sadd.s32 %s87, 1
      %s89 = scalar_select %p86, %s87, %s88
      %p92 = pneg %p86
      %p93 = scmp.eq.s32.totalorder %s9, 1
      %p94 = por %p92, %p93
      %p95 = scmp.ne.s32.totalorder %s87, %s90
      %p96 = scmp.eq.s32.totalorder %s9, 0
      %p97 = por %p95, %p96
      %p98 = scmp.ne.s32.totalorder %s87, %s90
      %p99 = scmp.eq.s32.totalorder %s14, 1
      %p100 = por %p98, %p99
      %p101 = scmp.ne.s32.totalorder %s90, %s91
      %p102 = scmp.eq.s32.totalorder %s14, 0
      %p103 = por %p101, %p102
      %p104 = scmp.ne.s32.totalorder %s90, %s91
      %p105 = scmp.eq.s32.totalorder %s15, 1
      %p106 = por %p104, %p105
      %p108 = scmp.ne.s32.totalorder %s91, %s107
      %p109 = scmp.eq.s32.totalorder %s15, 0
      %p110 = por %p108, %p109
      %p111 = scmp.le.s32.totalorder 1, %s9
      %p112 = scmp.lt.s32.totalorder %s9, 3
      %p113 = pnand %p111, %p112
      %p114 = pneg %p113
      // Predicated region
      $region9: #{utae_forward.14} parent=5 // pred_check
        _
      $region10: #{utae_forward.14} parent=5 // pred_check_branch
        %116 = sbr.rel (%p113) target = $region12
      $region11: #{utae_forward.14} parent=5 // pred_region
        %s117 = ssub.s32 %s9, 1
        // Predicated region
        $region13: #{utae_forward.14} parent=11 // pred_check
          %p118 = pneg %p30
        $region14: #{utae_forward.14} parent=11 // pred_check_branch
          %120 = sbr.rel (%p118) target = $region16
        $region15: #{utae_forward.14} parent=11 // pred_region
          _
        $region16: #{utae_forward.14} parent=11 // pred_fallthru
          _
        // Predicated region
        $region17: #{utae_forward.14} parent=11 // pred_check
          %p121 = pneg %p77
        $region18: #{utae_forward.14} parent=11 // pred_check_branch
          %123 = sbr.rel (%p121) target = $region20
        $region19: #{utae_forward.14} parent=11 // pred_region
          _
        $region20: #{utae_forward.14} parent=11 // pred_fallthru
          _
      $region12: #{utae_forward.14} parent=5 // pred_fallthru
        _
      %p124 = scmp.lt.s32.totalorder %s9, 2
      // Predicated region
      $region21: #{utae_forward.14} parent=5 // pred_check
        %p125 = pneg %p124
      $region22: #{utae_forward.14} parent=5 // pred_check_branch
        %127 = sbr.rel (%p125) target = $region24
      $region23: #{utae_forward.14} parent=5 // pred_region
        // Predicated region
        $region25: #{utae_forward.14} parent=23 // pred_check
          %p128 = pneg %p50
        $region26: #{utae_forward.14} parent=23 // pred_check_branch
          %130 = sbr.rel (%p128) target = $region28
        $region27: #{utae_forward.14} parent=23 // pred_region
          %s131 = sand.u32 %s40, 1
          %s132 = sand.u32 %s40, 1
          %s133 = smul.addr %s132, 144
          %s134 = scalar_lea.vmem [#allocation2], %s133
          %s135 = smul.u32 2, %s9
          %s136 = smul.addr %s135, 4
          %s137 = scalar_lea.vmem %s1, %s136
          // Predicated region
          $region29: #{utae_forward.14} parent=27 // pred_check
            _
          $region30: #{utae_forward.14} parent=27 // pred_check_branch
            %139 = sbr.rel (0) target = $region32
          $region31: #{utae_forward.14} parent=27 // pred_region
            // Predicated region
            $region33: #{utae_forward.14} parent=31 // pred_check
              _
            $region34: #{utae_forward.14} parent=31 // pred_check_branch
              %141 = sbr.rel (0) target = $region36
            $region35: #{utae_forward.14} parent=31 // pred_region
              // Predicated region
              $region48: #{utae_forward.14} parent=35 // pred_check
                _
              $region49: #{utae_forward.14} parent=35 // pred_check_branch
                %191 = sbr.rel (0) target = $region51
              $region50: #{utae_forward.14} parent=35 // pred_region
                loop: start=0, step=1, limit=1
                $region52: #{utae_forward.14} parent=50 // loop_pre_header
                  _
                $region53: #{utae_forward.14} parent=50 // loop_header
                  %s193 = sphi 0, %s197
                  %p194 = scmp.ge.s32.totalorder %s193, 1
                  %s198 = sphi %s137, %s137
                  %s199 = sphi %s134, %s134
                $region54: #{utae_forward.14} parent=50 // loop_header_branch
                  %196 = sbr.rel (%p194) target = $region58
                $region55: #{utae_forward.14} parent=50 // loop_body
                  %v200 = vld [vmem:[%s198] sm:$0xff]
                  %201 = vst [vmem:[%s199] sm:$0xff] %v200
                  %v202 = vld [vmem:[%s198 + $0x10] sm:$0xff]
                  %203 = vst [vmem:[%s199 + $0x8] sm:$0xff] %v202
                  %v204 = vld [vmem:[%s198 + $0x20] sm:$0xff]
                  %205 = vst [vmem:[%s199 + $0x10] sm:$0xff] %v204
                  %v206 = vld [vmem:[%s198 + $0x30] sm:$0xff]
                  %207 = vst [vmem:[%s199 + $0x18] sm:$0xff] %v206
                  %v208 = vld [vmem:[%s198 + $0x40] sm:$0xff]
                  %209 = vst [vmem:[%s199 + $0x20] sm:$0xff] %v208
                  %v210 = vld [vmem:[%s198 + $0x50] sm:$0xff]
                  %211 = vst [vmem:[%s199 + $0x28] sm:$0xff] %v210
                  %v212 = vld [vmem:[%s198 + $0x60] sm:$0xff]
                  %213 = vst [vmem:[%s199 + $0x30] sm:$0xff] %v212
                  %v214 = vld [vmem:[%s198 + $0x70] sm:$0xff]
                  %215 = vst [vmem:[%s199 + $0x38] sm:$0xff] %v214
                  %v216 = vld [vmem:[%s198 + $0x80] sm:$0xff]
                  %217 = vst [vmem:[%s199 + $0x40] sm:$0xff] %v216
                  %v218 = vld [vmem:[%s198 + $0x90] sm:$0xff]
                  %219 = vst [vmem:[%s199 + $0x48] sm:$0xff] %v218
                  %v220 = vld [vmem:[%s198 + $0xa0] sm:$0xff]
                  %221 = vst [vmem:[%s199 + $0x50] sm:$0xff] %v220
                  %v222 = vld [vmem:[%s198 + $0xb0] sm:$0xff]
                  %223 = vst [vmem:[%s199 + $0x58] sm:$0xff] %v222
                  %v224 = vld [vmem:[%s198 + $0xc0] sm:$0xff]
                  %225 = vst [vmem:[%s199 + $0x60] sm:$0xff] %v224
                  %v226 = vld [vmem:[%s198 + $0xd0] sm:$0xff]
                  %227 = vst [vmem:[%s199 + $0x68] sm:$0xff] %v226
                  %v228 = vld [vmem:[%s198 + $0xe0] sm:$0xff]
                  %229 = vst [vmem:[%s199 + $0x70] sm:$0xff] %v228
                  %v230 = vld [vmem:[%s198 + $0xf0] sm:$0xff]
                  %231 = vst [vmem:[%s199 + $0x78] sm:$0xff] %v230
                  %v232 = vld [vmem:[%s198 + $0x100] sm:$0xff]
                  %233 = vst [vmem:[%s199 + $0x80] sm:$0xff] %v232
                  %v234 = vld [vmem:[%s198 + $0x110] sm:$0xff]
                  %235 = vst [vmem:[%s199 + $0x88] sm:$0xff] %v234
                $region56: #{utae_forward.14} parent=50 // loop_footer
                  %s197 = sadd.s32 1, %s193
                $region57: #{utae_forward.14} parent=50 // loop_footer_branch
                  %192 = sbr.rel target = $region53
                $region58: #{utae_forward.14} parent=50 // loop_exit
                  _
              $region51: #{utae_forward.14} parent=35 // pred_fallthru
                _
              // Predicated region
              $region59: #{utae_forward.14} parent=35 // pred_check
                _
              $region60: #{utae_forward.14} parent=35 // pred_check_branch
                %237 = sbr.rel target = $region62
              $region61: #{utae_forward.14} parent=35 // pred_region
                _
              $region62: #{utae_forward.14} parent=35 // pred_fallthru
                _
            $region36: #{utae_forward.14} parent=31 // pred_fallthru
              _
            // Predicated region
            $region37: #{utae_forward.14} parent=31 // pred_check
              _
            $region38: #{utae_forward.14} parent=31 // pred_check_branch
              %143 = sbr.rel target = $region40
            $region39: #{utae_forward.14} parent=31 // pred_region
              %s145 = ssub.s32 256, 1
              loop: start=0, step=1, limit=1
              $region41: #{utae_forward.14} parent=39 // loop_pre_header
                _
              $region42: #{utae_forward.14} parent=39 // loop_header
                %s147 = sphi 0, %s151
                %p148 = scmp.ge.s32.totalorder %s147, 1
                %s152 = sphi %s137, %s137
                %s153 = sphi %s134, %s134
              $region43: #{utae_forward.14} parent=39 // loop_header_branch
                %150 = sbr.rel (%p148) target = $region47
              $region44: #{utae_forward.14} parent=39 // loop_body
                %v154 = vld [vmem:[%s152] sm:%s145]
                %155 = vst [vmem:[%s153] sm:%s145] %v154
                %v156 = vld [vmem:[%s152 + $0x10] sm:%s145]
                %157 = vst [vmem:[%s153 + $0x8] sm:%s145] %v156
                %v158 = vld [vmem:[%s152 + $0x20] sm:%s145]
                %159 = vst [vmem:[%s153 + $0x10] sm:%s145] %v158
                %v160 = vld [vmem:[%s152 + $0x30] sm:%s145]
                %161 = vst [vmem:[%s153 + $0x18] sm:%s145] %v160
                %v162 = vld [vmem:[%s152 + $0x40] sm:%s145]
                %163 = vst [vmem:[%s153 + $0x20] sm:%s145] %v162
                %v164 = vld [vmem:[%s152 + $0x50] sm:%s145]
                %165 = vst [vmem:[%s153 + $0x28] sm:%s145] %v164
                %v166 = vld [vmem:[%s152 + $0x60] sm:%s145]
                %167 = vst [vmem:[%s153 + $0x30] sm:%s145] %v166
                %v168 = vld [vmem:[%s152 + $0x70] sm:%s145]
                %169 = vst [vmem:[%s153 + $0x38] sm:%s145] %v168
                %v170 = vld [vmem:[%s152 + $0x80] sm:%s145]
                %171 = vst [vmem:[%s153 + $0x40] sm:%s145] %v170
                %v172 = vld [vmem:[%s152 + $0x90] sm:%s145]
                %173 = vst [vmem:[%s153 + $0x48] sm:%s145] %v172
                %v174 = vld [vmem:[%s152 + $0xa0] sm:%s145]
                %175 = vst [vmem:[%s153 + $0x50] sm:%s145] %v174
                %v176 = vld [vmem:[%s152 + $0xb0] sm:%s145]
                %177 = vst [vmem:[%s153 + $0x58] sm:%s145] %v176
                %v178 = vld [vmem:[%s152 + $0xc0] sm:%s145]
                %179 = vst [vmem:[%s153 + $0x60] sm:%s145] %v178
                %v180 = vld [vmem:[%s152 + $0xd0] sm:%s145]
                %181 = vst [vmem:[%s153 + $0x68] sm:%s145] %v180
                %v182 = vld [vmem:[%s152 + $0xe0] sm:%s145]
                %183 = vst [vmem:[%s153 + $0x70] sm:%s145] %v182
                %v184 = vld [vmem:[%s152 + $0xf0] sm:%s145]
                %185 = vst [vmem:[%s153 + $0x78] sm:%s145] %v184
                %v186 = vld [vmem:[%s152 + $0x100] sm:%s145]
                %187 = vst [vmem:[%s153 + $0x80] sm:%s145] %v186
                %v188 = vld [vmem:[%s152 + $0x110] sm:%s145]
                %189 = vst [vmem:[%s153 + $0x88] sm:%s145] %v188
              $region45: #{utae_forward.14} parent=39 // loop_footer
                %s151 = sadd.s32 1, %s147
              $region46: #{utae_forward.14} parent=39 // loop_footer_branch
                %146 = sbr.rel target = $region42
              $region47: #{utae_forward.14} parent=39 // loop_exit
                _
            $region40: #{utae_forward.14} parent=31 // pred_fallthru
              _
          $region32: #{utae_forward.14} parent=27 // pred_fallthru
            _
          %238 = vnop
        $region28: #{utae_forward.14} parent=23 // pred_fallthru
          _
      $region24: #{utae_forward.14} parent=5 // pred_fallthru
        _
      %p239 = scmp.le.s32.totalorder 1, %s9
      %p240 = scmp.lt.s32.totalorder %s9, 3
      %p241 = pnand %p239, %p240
      %p242 = pneg %p241
      // Predicated region
      $region63: #{utae_forward.14} parent=5 // pred_check
        _
      $region64: #{utae_forward.14} parent=5 // pred_check_branch
        %244 = sbr.rel (%p241) target = $region66
      $region65: #{utae_forward.14} parent=5 // pred_region
        %s245 = ssub.s32 %s9, 1
        %s246 = sand.u32 %s43, 1
        %s247 = sand.u32 %s43, 1
        %s248 = smul.addr %s247, 144
        %s249 = scalar_lea.vmem [#allocation2], %s248
        // Predicated region
        $region67: #{utae_forward.14} parent=65 // pred_check
          %p250 = pneg %p56
        $region68: #{utae_forward.14} parent=65 // pred_check_branch
          %252 = sbr.rel (%p250) target = $region70
        $region69: #{utae_forward.14} parent=65 // pred_region
          _
        $region70: #{utae_forward.14} parent=65 // pred_fallthru
          _
        %p253 = pneg %p30
        %p254 = pneg %p27
        %s255 = sand.u32 %s43, 1
        %s256 = sand.u32 %s43, 1
        %s257 = smul.addr %s256, 144
        %s258 = scalar_lea.vmem [#allocation2], %s257
        %p259 = pneg %p56
        %p260 = pneg %p53
        %p261 = pneg %p77
        %p262 = pneg %p74
        %p263 = pneg %p103
        %p264 = pneg %p100
        %s265 = sand.u32 %s90, 1
        %s266 = sand.u32 %s90, 1
        %s267 = smul.addr %s266, 64
        %s268 = scalar_lea.vmem [#allocation3], %s267
        %s269 = smul.u32 2, %s14
        %s270 = smul.u32 2, %s14
        %v272 = vld [vmem:[%s0] sm:$0xff]
        %v273 = vld [vmem:[%s0 + $0x8] sm:$0xff]
        %v274 = vld [vmem:[%s0 + $0x10] sm:$0xff]
        %v275 = vld [vmem:[%s0 + $0x18] sm:$0xff]
        %v276 = vld [vmem:[%s249] sm:$0xff]
        %v277 = vld [vmem:[%s249 + $0x8] sm:$0xff]
        %v278 = vld [vmem:[%s249 + $0x10] sm:$0xff]
        %v279 = vld [vmem:[%s249 + $0x18] sm:$0xff]
        %v280 = vld [vmem:[%s249 + $0x20] sm:$0xff]
        %v281 = vld [vmem:[%s249 + $0x28] sm:$0xff]
        %v282 = vld [vmem:[%s249 + $0x30] sm:$0xff]
        %v283 = vld [vmem:[%s249 + $0x38] sm:$0xff]
        %v284 = vld [vmem:[%s249 + $0x40] sm:$0xff]
        %v285 = vld [vmem:[%s249 + $0x48] sm:$0xff]
        %v286 = vld [vmem:[%s249 + $0x50] sm:$0xff]
        %v287 = vld [vmem:[%s249 + $0x58] sm:$0xff]
        %v288 = vld [vmem:[%s249 + $0x60] sm:$0xff]
        %v289 = vld [vmem:[%s249 + $0x68] sm:$0xff]
        %v290 = vld [vmem:[%s249 + $0x70] sm:$0xff]
        %v291 = vld [vmem:[%s249 + $0x78] sm:$0xff]
        %v292 = vld [vmem:[%s249 + $0x80] sm:$0xff]
        %v293 = vld [vmem:[%s249 + $0x88] sm:$0xff]
        %v294 = vld [vmem:[%s2] sm:$0xff]
        %v295 = vld [vmem:[%s2 + $0x8] sm:$0xff]
        %v296 = vld [vmem:[%s2 + $0x10] sm:$0xff]
        %v297 = vld [vmem:[%s2 + $0x18] sm:$0xff]
        %299 = vset.pattern.permute.xlu0 0
        %300 = vperm.xlu0 %299, %v294
        %v301 = vpop.permute.xlu0 %300
        %304 = vset.pattern.permute.xlu0 0
        %305 = vperm.xlu0 %304, %v295
        %v306 = vpop.permute.xlu0 %305
        %309 = vset.pattern.permute.xlu0 0
        %310 = vperm.xlu0 %309, %v296
        %v311 = vpop.permute.xlu0 %310
        %314 = vset.pattern.permute.xlu0 0
        %315 = vperm.xlu0 %314, %v297
        %v316 = vpop.permute.xlu0 %315
        %v322 = vunpack.c.l.b16 %v272
        %v323 = vunpack.c.h.b16 %v272
        %v324 = vunpack.c.l.b16 %v273
        %v325 = vunpack.c.h.b16 %v273
        %v326 = vunpack.c.l.b16 %v274
        %v327 = vunpack.c.h.b16 %v274
        %v328 = vunpack.c.l.b16 %v275
        %v329 = vunpack.c.h.b16 %v275
        %v330 = vpack.c.b16 %v324, %v322
        %v331 = vpack.c.b16 %v325, %v323
        %v332 = vpack.c.b16 %v328, %v326
        %v333 = vpack.c.b16 %v329, %v327
        %v354 = vunpack.c.l.b16 %v276
        %v355 = vunpack.c.h.b16 %v276
        %v356 = vunpack.c.l.b16 %v277
        %v357 = vunpack.c.h.b16 %v277
        %v358 = vunpack.c.l.b16 %v278
        %v359 = vunpack.c.h.b16 %v278
        %v360 = vunpack.c.l.b16 %v279
        %v361 = vunpack.c.h.b16 %v279
        %v362 = vunpack.c.l.b16 %v280
        %v363 = vunpack.c.h.b16 %v280
        %v364 = vunpack.c.l.b16 %v281
        %v365 = vunpack.c.h.b16 %v281
        %v366 = vunpack.c.l.b16 %v282
        %v367 = vunpack.c.h.b16 %v282
        %v368 = vunpack.c.l.b16 %v283
        %v369 = vunpack.c.h.b16 %v283
        %v370 = vunpack.c.l.b16 %v284
        %v371 = vunpack.c.h.b16 %v284
        %v372 = vunpack.c.l.b16 %v285
        %v373 = vunpack.c.h.b16 %v285
        %v374 = vunpack.c.l.b16 %v286
        %v375 = vunpack.c.h.b16 %v286
        %v376 = vunpack.c.l.b16 %v287
        %v377 = vunpack.c.h.b16 %v287
        %v378 = vunpack.c.l.b16 %v288
        %v379 = vunpack.c.h.b16 %v288
        %v380 = vunpack.c.l.b16 %v289
        %v381 = vunpack.c.h.b16 %v289
        %v382 = vunpack.c.l.b16 %v290
        %v383 = vunpack.c.h.b16 %v290
        %v384 = vunpack.c.l.b16 %v291
        %v385 = vunpack.c.h.b16 %v291
        %v386 = vunpack.c.l.b16 %v292
        %v387 = vunpack.c.h.b16 %v292
        %v388 = vunpack.c.l.b16 %v293
        %v389 = vunpack.c.h.b16 %v293
        %v390 = vpack.c.b16 %v356, %v354
        %v391 = vpack.c.b16 %v357, %v355
        %v392 = vpack.c.b16 %v360, %v358
        %v393 = vpack.c.b16 %v361, %v359
        %v394 = vpack.c.b16 %v364, %v362
        %v395 = vpack.c.b16 %v365, %v363
        %v396 = vpack.c.b16 %v368, %v366
        %v397 = vpack.c.b16 %v369, %v367
        %v398 = vpack.c.b16 %v372, %v370
        %v399 = vpack.c.b16 %v373, %v371
        %v400 = vpack.c.b16 %v376, %v374
        %v401 = vpack.c.b16 %v377, %v375
        %v402 = vpack.c.b16 %v380, %v378
        %v403 = vpack.c.b16 %v381, %v379
        %v404 = vpack.c.b16 %v384, %v382
        %v405 = vpack.c.b16 %v385, %v383
        %v406 = vpack.c.b16 %v388, %v386
        %v407 = vpack.c.b16 %v389, %v387
        %vm426 = vcmask 130048
        %v428 = vsel %vm426, %v331, 0
        %v431 = vsel %vm426, %v333, 0
        %433 = vmatpush.bf16.msra.mxu0 %v404
        %434 = vmatpush.bf16.msra.mxu0 %v402
        %435 = vmatpush.bf16.msra.mxu0 %v400
        %436 = vmatpush.bf16.msra.mxu0 %v398
        %437 = vmatpush.bf16.msra.mxu0 %v396
        %438 = vmatpush.bf16.msra.mxu0 %v394
        %439 = vmatpush.bf16.msra.mxu0 %v392
        %440 = vmatpush.bf16.msra.mxu0 %v390
        %441 = vmatmul.bf16.gmra.mxu0 %v330
        %v442 = vpop.f32.mrf.mxu0
        %v443 = vadd.f32 %v301, %v442
        %v444 = vpop.f32.mrf.mxu0
        %v445 = vadd.f32 %v306, %v444
        %446 = vmatmul.bf16.gmra.mxu0 %v332
        %v447 = vpop.f32.mrf.mxu0
        %v448 = vadd.f32 %v311, %v447
        %v449 = vpop.f32.mrf.mxu0
        %v450 = vadd.f32 %v316, %v449
        %451 = vdwg.mxu0
        %452 = vmatpush.bf16.msra.mxu0 0
        %453 = vmatpush.bf16.msra.mxu0 0
        %454 = vmatpush.bf16.msra.mxu0 0
        %455 = vmatpush.bf16.msra.mxu0 0
        %456 = vmatpush.bf16.msra.mxu0 0
        %457 = vmatpush.bf16.msra.mxu0 0
        %458 = vmatpush.bf16.msra.mxu0 0
        %459 = vmatpush.bf16.msra.mxu0 %v406
        %460 = vmatmul.bf16.gmra.mxu0 %v428
        %v461 = vpop.f32.mrf.mxu0
        %v462 = vadd.f32 %v443, %v461
        %v463 = vpop.f32.mrf.mxu0
        %v464 = vadd.f32 %v445, %v463
        %465 = vmatmul.bf16.gmra.mxu0 %v431
        %v466 = vpop.f32.mrf.mxu0
        %v467 = vadd.f32 %v448, %v466
        %v468 = vpop.f32.mrf.mxu0
        %v469 = vadd.f32 %v450, %v468
        %470 = vdwg.mxu0
        %471 = vmatpush.bf16.msra.mxu0 %v405
        %472 = vmatpush.bf16.msra.mxu0 %v403
        %473 = vmatpush.bf16.msra.mxu0 %v401
        %474 = vmatpush.bf16.msra.mxu0 %v399
        %475 = vmatpush.bf16.msra.mxu0 %v397
        %476 = vmatpush.bf16.msra.mxu0 %v395
        %477 = vmatpush.bf16.msra.mxu0 %v393
        %478 = vmatpush.bf16.msra.mxu0 %v391
        %479 = vmatmul.bf16.gmra.mxu0 %v330
        %v480 = vpop.f32.mrf.mxu0
        %v481 = vadd.f32 %v301, %v480
        %v482 = vpop.f32.mrf.mxu0
        %v483 = vadd.f32 %v306, %v482
        %484 = vmatmul.bf16.gmra.mxu0 %v332
        %v485 = vpop.f32.mrf.mxu0
        %v486 = vadd.f32 %v311, %v485
        %v487 = vpop.f32.mrf.mxu0
        %v488 = vadd.f32 %v316, %v487
        %489 = vdwg.mxu0
        %490 = vmatpush.bf16.msra.mxu0 0
        %491 = vmatpush.bf16.msra.mxu0 0
        %492 = vmatpush.bf16.msra.mxu0 0
        %493 = vmatpush.bf16.msra.mxu0 0
        %494 = vmatpush.bf16.msra.mxu0 0
        %495 = vmatpush.bf16.msra.mxu0 0
        %496 = vmatpush.bf16.msra.mxu0 0
        %497 = vmatpush.bf16.msra.mxu0 %v407
        %498 = vmatmul.bf16.gmra.mxu0 %v428
        %v499 = vpop.f32.mrf.mxu0
        %v500 = vadd.f32 %v481, %v499
        %v501 = vpop.f32.mrf.mxu0
        %v502 = vadd.f32 %v483, %v501
        %503 = vmatmul.bf16.gmra.mxu0 %v431
        %v504 = vpop.f32.mrf.mxu0
        %v505 = vadd.f32 %v486, %v504
        %v506 = vpop.f32.mrf.mxu0
        %v507 = vadd.f32 %v488, %v506
        %508 = vdwg.mxu0
        %509 = vst [vmem:[%s268] sm:$0xff] %v462
        %510 = vst [vmem:[%s268 + $0x8] sm:$0xff] %v500
        %511 = vst [vmem:[%s268 + $0x10] sm:$0xff] %v464
        %512 = vst [vmem:[%s268 + $0x18] sm:$0xff] %v502
        %513 = vst [vmem:[%s268 + $0x20] sm:$0xff] %v467
        %514 = vst [vmem:[%s268 + $0x28] sm:$0xff] %v505
        %515 = vst [vmem:[%s268 + $0x30] sm:$0xff] %v469
        %516 = vst [vmem:[%s268 + $0x38] sm:$0xff] %v507
        %s517 = sand.u32 %s90, 1
        %s518 = sand.u32 %s90, 1
        %s519 = smul.addr %s518, 64
        %s520 = scalar_lea.vmem [#allocation3], %s519
        // Predicated region
        $region71: #{utae_forward.14} parent=65 // pred_check
          %p521 = pneg %p100
        $region72: #{utae_forward.14} parent=65 // pred_check_branch
          %523 = sbr.rel (%p521) target = $region74
        $region73: #{utae_forward.14} parent=65 // pred_region
          %s524 = smul.u32 2, %s14
          %s525 = smul.addr %s524, 8
          %s526 = scalar_lea.vmem %s3, %s525
          // Predicated region
          $region75: #{utae_forward.14} parent=73 // pred_check
            _
          $region76: #{utae_forward.14} parent=73 // pred_check_branch
            %528 = sbr.rel (0) target = $region78
          $region77: #{utae_forward.14} parent=73 // pred_region
            // Predicated region
            $region79: #{utae_forward.14} parent=77 // pred_check
              _
            $region80: #{utae_forward.14} parent=77 // pred_check_branch
              %530 = sbr.rel (0) target = $region82
            $region81: #{utae_forward.14} parent=77 // pred_region
              loop: start=0, step=1, limit=1
              $region83: #{utae_forward.14} parent=81 // loop_pre_header
                _
              $region84: #{utae_forward.14} parent=81 // loop_header
                %s532 = sphi 0, %s536
                %p533 = scmp.ge.s32.totalorder %s532, 1
                %s537 = sphi %s520, %s520
                %s538 = sphi %s526, %s526
              $region85: #{utae_forward.14} parent=81 // loop_header_branch
                %535 = sbr.rel (%p533) target = $region89
              $region86: #{utae_forward.14} parent=81 // loop_body
                %v539 = vld [vmem:[%s537] sm:$0xff]
                %540 = vst [vmem:[%s538] sm:$0xff] %v539
                %v541 = vld [vmem:[%s537 + $0x8] sm:$0xff]
                %542 = vst [vmem:[%s538 + $0x8] sm:$0xff] %v541
                %v543 = vld [vmem:[%s537 + $0x10] sm:$0xff]
                %544 = vst [vmem:[%s538 + $0x20] sm:$0xff] %v543
                %v545 = vld [vmem:[%s537 + $0x18] sm:$0xff]
                %546 = vst [vmem:[%s538 + $0x28] sm:$0xff] %v545
                %v547 = vld [vmem:[%s537 + $0x20] sm:$0xff]
                %548 = vst [vmem:[%s538 + $0x40] sm:$0xff] %v547
                %v549 = vld [vmem:[%s537 + $0x28] sm:$0xff]
                %550 = vst [vmem:[%s538 + $0x48] sm:$0xff] %v549
                %v551 = vld [vmem:[%s537 + $0x30] sm:$0xff]
                %552 = vst [vmem:[%s538 + $0x60] sm:$0xff] %v551
                %v553 = vld [vmem:[%s537 + $0x38] sm:$0xff]
                %554 = vst [vmem:[%s538 + $0x68] sm:$0xff] %v553
              $region87: #{utae_forward.14} parent=81 // loop_footer
                %s536 = sadd.s32 1, %s532
              $region88: #{utae_forward.14} parent=81 // loop_footer_branch
                %531 = sbr.rel target = $region84
              $region89: #{utae_forward.14} parent=81 // loop_exit
                _
            $region82: #{utae_forward.14} parent=77 // pred_fallthru
              _
            // Predicated region
            $region90: #{utae_forward.14} parent=77 // pred_check
              _
            $region91: #{utae_forward.14} parent=77 // pred_check_branch
              %556 = sbr.rel target = $region93
            $region92: #{utae_forward.14} parent=77 // pred_region
              _
            $region93: #{utae_forward.14} parent=77 // pred_fallthru
              _
          $region78: #{utae_forward.14} parent=73 // pred_fallthru
            _
          %557 = vnop
        $region74: #{utae_forward.14} parent=65 // pred_fallthru
          _
      $region66: #{utae_forward.14} parent=5 // pred_fallthru
        _
      %p558 = scmp.le.s32.totalorder 2, %s9
      // Predicated region
      $region94: #{utae_forward.14} parent=5 // pred_check
        %p559 = pneg %p558
      $region95: #{utae_forward.14} parent=5 // pred_check_branch
        %561 = sbr.rel (%p559) target = $region97
      $region96: #{utae_forward.14} parent=5 // pred_region
        %s562 = ssub.s32 %s9, 2
        // Predicated region
        $region98: #{utae_forward.14} parent=96 // pred_check
          %p563 = pneg %p106
        $region99: #{utae_forward.14} parent=96 // pred_check_branch
          %565 = sbr.rel (%p563) target = $region101
        $region100: #{utae_forward.14} parent=96 // pred_region
          %s566 = sand.u32 %s91, 1
          %s567 = sand.u32 %s91, 1
          %s568 = smul.addr %s567, 64
          %s569 = scalar_lea.vmem [#allocation3], %s568
        $region101: #{utae_forward.14} parent=96 // pred_fallthru
          _
      $region97: #{utae_forward.14} parent=5 // pred_fallthru
        _
    $region6: #{utae_forward.14} parent=1 // loop_footer
      %s13 = sadd.s32 1, %s9
    $region7: #{utae_forward.14} parent=1 // loop_footer_branch
      %8 = sbr.rel target = $region3
    $region8: #{utae_forward.14} parent=1 // loop_exit
      _

// kernel: utae_forward.15
$region0: #{utae_forward.15}
  #allocation0 [shape = 'u32[]', space=smem, size = 0x4, offset = 0x4, fixed_abs, tag = 'smem constant byte address 0x4 - core index']
  #allocation1 [shape = 'u32[72,128]{1,0:T(1,128)}', space=vmem, size = 0x9000, scoped, tag = 'internal scratch']
  %s0 = inlined_call_operand.vmem [shape: bf16[32,288], index: 0, kind: input, shape index: {}]
  %s1 = inlined_call_operand.vmem [shape: bf16[288,512], index: 1, kind: input, shape index: {}]
  %s2 = inlined_call_operand.vmem [shape: f32[32,1], index: 2, kind: input, shape index: {}]
  %s3 = inlined_call_operand.vmem [shape: f32[32,512], index: 3, kind: output, shape index: {}]
  %s4 = sld [smem:[#allocation0]]
  $region102: #{utae_forward.15} parent=0
    _
  %s6 = ssub.s32 1, %s4
  %s7 = scalar_select 0, %s6, %s4
  $region1: #{utae_forward.15} parent=0
    #allocation2 [shape = 'u8[294912]{0}', space=vmem, size = 0x48000, scoped, tag = 'input window, operand 1']
    #allocation3 [shape = 'u8[65536]{0}', space=vmem, size = 0x10000, scoped, tag = 'output window, operand 0']
    loop: start=0, step=1, limit=4
    $region2: #{utae_forward.15} parent=1 // loop_pre_header
      _
    $region3: #{utae_forward.15} parent=1 // loop_header
      %s9 = sphi 0, %s13
      %p10 = scmp.ge.s32.totalorder %s9, 4
      %s17 = sphi 0, %s17
      %s19 = sphi 0, %s17
      %s20 = sphi 0, %s19
      %s34 = sphi 0, %s20
      %s40 = sphi 0, %s42
      %s43 = sphi 0, %s40
      %s44 = sphi 0, %s43
      %s60 = sphi 0, %s44
      %s64 = sphi 0, %s64
      %s66 = sphi 0, %s64
      %s67 = sphi 0, %s66
      %s81 = sphi 0, %s67
      %s87 = sphi 0, %s89
      %s90 = sphi 0, %s87
      %s91 = sphi 0, %s90
      %s107 = sphi 0, %s91
    $region4: #{utae_forward.15} parent=1 // loop_header_branch
      %12 = sbr.rel (%p10) target = $region8
    $region5: #{utae_forward.15} parent=1 // loop_body
      %s14 = ssub.s32 %s9, 1
      %s15 = ssub.s32 %s9, 2
      %s16 = sadd.s32 %s9, 1
      %s18 = sadd.s32 %s17, 1
      %p21 = scmp.eq.s32.totalorder %s9, 1
      %p22 = scmp.ne.s32.totalorder %s17, %s19
      %p23 = scmp.eq.s32.totalorder %s9, 0
      %p24 = por %p22, %p23
      %p25 = scmp.ne.s32.totalorder %s17, %s19
      %p26 = scmp.eq.s32.totalorder %s14, 1
      %p27 = por %p25, %p26
      %p28 = scmp.ne.s32.totalorder %s19, %s20
      %p29 = scmp.eq.s32.totalorder %s14, 0
      %p30 = por %p28, %p29
      %p31 = scmp.ne.s32.totalorder %s19, %s20
      %p32 = scmp.eq.s32.totalorder %s15, 1
      %p33 = por %p31, %p32
      %p35 = scmp.ne.s32.totalorder %s20, %s34
      %p36 = scmp.eq.s32.totalorder %s15, 0
      %p37 = por %p35, %p36
      %s38 = ssub.s32 %s9, %s16
      %p39 = scmp.eq.s32.totalorder %s38, 0
      %s41 = sadd.s32 %s40, 1
      %s42 = scalar_select %p39, %s40, %s41
      %p45 = pneg %p39
      %p46 = scmp.eq.s32.totalorder %s9, 1
      %p47 = por %p45, %p46
      %p48 = scmp.ne.s32.totalorder %s40, %s43
      %p49 = scmp.eq.s32.totalorder %s9, 0
      %p50 = por %p48, %p49
      %p51 = scmp.ne.s32.totalorder %s40, %s43
      %p52 = scmp.eq.s32.totalorder %s14, 1
      %p53 = por %p51, %p52
      %p54 = scmp.ne.s32.totalorder %s43, %s44
      %p55 = scmp.eq.s32.totalorder %s14, 0
      %p56 = por %p54, %p55
      %p57 = scmp.ne.s32.totalorder %s43, %s44
      %p58 = scmp.eq.s32.totalorder %s15, 1
      %p59 = por %p57, %p58
      %p61 = scmp.ne.s32.totalorder %s44, %s60
      %p62 = scmp.eq.s32.totalorder %s15, 0
      %p63 = por %p61, %p62
      %s65 = sadd.s32 %s64, 1
      %p68 = scmp.eq.s32.totalorder %s9, 1
      %p69 = scmp.ne.s32.totalorder %s64, %s66
      %p70 = scmp.eq.s32.totalorder %s9, 0
      %p71 = por %p69, %p70
      %p72 = scmp.ne.s32.totalorder %s64, %s66
      %p73 = scmp.eq.s32.totalorder %s14, 1
      %p74 = por %p72, %p73
      %p75 = scmp.ne.s32.totalorder %s66, %s67
      %p76 = scmp.eq.s32.totalorder %s14, 0
      %p77 = por %p75, %p76
      %p78 = scmp.ne.s32.totalorder %s66, %s67
      %p79 = scmp.eq.s32.totalorder %s15, 1
      %p80 = por %p78, %p79
      %p82 = scmp.ne.s32.totalorder %s67, %s81
      %p83 = scmp.eq.s32.totalorder %s15, 0
      %p84 = por %p82, %p83
      %s85 = ssub.s32 %s9, %s16
      %p86 = scmp.eq.s32.totalorder %s85, 0
      %s88 = sadd.s32 %s87, 1
      %s89 = scalar_select %p86, %s87, %s88
      %p92 = pneg %p86
      %p93 = scmp.eq.s32.totalorder %s9, 1
      %p94 = por %p92, %p93
      %p95 = scmp.ne.s32.totalorder %s87, %s90
      %p96 = scmp.eq.s32.totalorder %s9, 0
      %p97 = por %p95, %p96
      %p98 = scmp.ne.s32.totalorder %s87, %s90
      %p99 = scmp.eq.s32.totalorder %s14, 1
      %p100 = por %p98, %p99
      %p101 = scmp.ne.s32.totalorder %s90, %s91
      %p102 = scmp.eq.s32.totalorder %s14, 0
      %p103 = por %p101, %p102
      %p104 = scmp.ne.s32.totalorder %s90, %s91
      %p105 = scmp.eq.s32.totalorder %s15, 1
      %p106 = por %p104, %p105
      %p108 = scmp.ne.s32.totalorder %s91, %s107
      %p109 = scmp.eq.s32.totalorder %s15, 0
      %p110 = por %p108, %p109
      %p111 = scmp.le.s32.totalorder 1, %s9
      %p112 = scmp.lt.s32.totalorder %s9, 3
      %p113 = pnand %p111, %p112
      %p114 = pneg %p113
      // Predicated region
      $region9: #{utae_forward.15} parent=5 // pred_check
        _
      $region10: #{utae_forward.15} parent=5 // pred_check_branch
        %116 = sbr.rel (%p113) target = $region12
      $region11: #{utae_forward.15} parent=5 // pred_region
        %s117 = ssub.s32 %s9, 1
        // Predicated region
        $region13: #{utae_forward.15} parent=11 // pred_check
          %p118 = pneg %p30
        $region14: #{utae_forward.15} parent=11 // pred_check_branch
          %120 = sbr.rel (%p118) target = $region16
        $region15: #{utae_forward.15} parent=11 // pred_region
          _
        $region16: #{utae_forward.15} parent=11 // pred_fallthru
          _
        // Predicated region
        $region17: #{utae_forward.15} parent=11 // pred_check
          %p121 = pneg %p77
        $region18: #{utae_forward.15} parent=11 // pred_check_branch
          %123 = sbr.rel (%p121) target = $region20
        $region19: #{utae_forward.15} parent=11 // pred_region
          _
        $region20: #{utae_forward.15} parent=11 // pred_fallthru
          _
      $region12: #{utae_forward.15} parent=5 // pred_fallthru
        _
      %p124 = scmp.lt.s32.totalorder %s9, 2
      // Predicated region
      $region21: #{utae_forward.15} parent=5 // pred_check
        %p125 = pneg %p124
      $region22: #{utae_forward.15} parent=5 // pred_check_branch
        %127 = sbr.rel (%p125) target = $region24
      $region23: #{utae_forward.15} parent=5 // pred_region
        // Predicated region
        $region25: #{utae_forward.15} parent=23 // pred_check
          %p128 = pneg %p50
        $region26: #{utae_forward.15} parent=23 // pred_check_branch
          %130 = sbr.rel (%p128) target = $region28
        $region27: #{utae_forward.15} parent=23 // pred_region
          %s131 = sand.u32 %s40, 1
          %s132 = sand.u32 %s40, 1
          %s133 = smul.addr %s132, 288
          %s134 = scalar_lea.vmem [#allocation2], %s133
          %s135 = smul.u32 2, %s9
          %s136 = smul.addr %s135, 4
          %s137 = scalar_lea.vmem %s1, %s136
          // Predicated region
          $region29: #{utae_forward.15} parent=27 // pred_check
            _
          $region30: #{utae_forward.15} parent=27 // pred_check_branch
            %139 = sbr.rel (0) target = $region32
          $region31: #{utae_forward.15} parent=27 // pred_region
            // Predicated region
            $region33: #{utae_forward.15} parent=31 // pred_check
              _
            $region34: #{utae_forward.15} parent=31 // pred_check_branch
              %141 = sbr.rel (0) target = $region36
            $region35: #{utae_forward.15} parent=31 // pred_region
              // Predicated region
              $region48: #{utae_forward.15} parent=35 // pred_check
                _
              $region49: #{utae_forward.15} parent=35 // pred_check_branch
                %227 = sbr.rel (0) target = $region51
              $region50: #{utae_forward.15} parent=35 // pred_region
                loop: start=0, step=1, limit=1
                $region52: #{utae_forward.15} parent=50 // loop_pre_header
                  _
                $region53: #{utae_forward.15} parent=50 // loop_header
                  %s229 = sphi 0, %s233
                  %p230 = scmp.ge.s32.totalorder %s229, 1
                  %s234 = sphi %s137, %s137
                  %s235 = sphi %s134, %s134
                $region54: #{utae_forward.15} parent=50 // loop_header_branch
                  %232 = sbr.rel (%p230) target = $region58
                $region55: #{utae_forward.15} parent=50 // loop_body
                  %v236 = vld [vmem:[%s234] sm:$0xff]
                  %237 = vst [vmem:[%s235] sm:$0xff] %v236
                  %v238 = vld [vmem:[%s234 + $0x10] sm:$0xff]
                  %239 = vst [vmem:[%s235 + $0x8] sm:$0xff] %v238
                  %v240 = vld [vmem:[%s234 + $0x20] sm:$0xff]
                  %241 = vst [vmem:[%s235 + $0x10] sm:$0xff] %v240
                  %v242 = vld [vmem:[%s234 + $0x30] sm:$0xff]
                  %243 = vst [vmem:[%s235 + $0x18] sm:$0xff] %v242
                  %v244 = vld [vmem:[%s234 + $0x40] sm:$0xff]
                  %245 = vst [vmem:[%s235 + $0x20] sm:$0xff] %v244
                  %v246 = vld [vmem:[%s234 + $0x50] sm:$0xff]
                  %247 = vst [vmem:[%s235 + $0x28] sm:$0xff] %v246
                  %v248 = vld [vmem:[%s234 + $0x60] sm:$0xff]
                  %249 = vst [vmem:[%s235 + $0x30] sm:$0xff] %v248
                  %v250 = vld [vmem:[%s234 + $0x70] sm:$0xff]
                  %251 = vst [vmem:[%s235 + $0x38] sm:$0xff] %v250
                  %v252 = vld [vmem:[%s234 + $0x80] sm:$0xff]
                  %253 = vst [vmem:[%s235 + $0x40] sm:$0xff] %v252
                  %v254 = vld [vmem:[%s234 + $0x90] sm:$0xff]
                  %255 = vst [vmem:[%s235 + $0x48] sm:$0xff] %v254
                  %v256 = vld [vmem:[%s234 + $0xa0] sm:$0xff]
                  %257 = vst [vmem:[%s235 + $0x50] sm:$0xff] %v256
                  %v258 = vld [vmem:[%s234 + $0xb0] sm:$0xff]
                  %259 = vst [vmem:[%s235 + $0x58] sm:$0xff] %v258
                  %v260 = vld [vmem:[%s234 + $0xc0] sm:$0xff]
                  %261 = vst [vmem:[%s235 + $0x60] sm:$0xff] %v260
                  %v262 = vld [vmem:[%s234 + $0xd0] sm:$0xff]
                  %263 = vst [vmem:[%s235 + $0x68] sm:$0xff] %v262
                  %v264 = vld [vmem:[%s234 + $0xe0] sm:$0xff]
                  %265 = vst [vmem:[%s235 + $0x70] sm:$0xff] %v264
                  %v266 = vld [vmem:[%s234 + $0xf0] sm:$0xff]
                  %267 = vst [vmem:[%s235 + $0x78] sm:$0xff] %v266
                  %v268 = vld [vmem:[%s234 + $0x100] sm:$0xff]
                  %269 = vst [vmem:[%s235 + $0x80] sm:$0xff] %v268
                  %v270 = vld [vmem:[%s234 + $0x110] sm:$0xff]
                  %271 = vst [vmem:[%s235 + $0x88] sm:$0xff] %v270
                  %v272 = vld [vmem:[%s234 + $0x120] sm:$0xff]
                  %273 = vst [vmem:[%s235 + $0x90] sm:$0xff] %v272
                  %v274 = vld [vmem:[%s234 + $0x130] sm:$0xff]
                  %275 = vst [vmem:[%s235 + $0x98] sm:$0xff] %v274
                  %v276 = vld [vmem:[%s234 + $0x140] sm:$0xff]
                  %277 = vst [vmem:[%s235 + $0xa0] sm:$0xff] %v276
                  %v278 = vld [vmem:[%s234 + $0x150] sm:$0xff]
                  %279 = vst [vmem:[%s235 + $0xa8] sm:$0xff] %v278
                  %v280 = vld [vmem:[%s234 + $0x160] sm:$0xff]
                  %281 = vst [vmem:[%s235 + $0xb0] sm:$0xff] %v280
                  %v282 = vld [vmem:[%s234 + $0x170] sm:$0xff]
                  %283 = vst [vmem:[%s235 + $0xb8] sm:$0xff] %v282
                  %v284 = vld [vmem:[%s234 + $0x180] sm:$0xff]
                  %285 = vst [vmem:[%s235 + $0xc0] sm:$0xff] %v284
                  %v286 = vld [vmem:[%s234 + $0x190] sm:$0xff]
                  %287 = vst [vmem:[%s235 + $0xc8] sm:$0xff] %v286
                  %v288 = vld [vmem:[%s234 + $0x1a0] sm:$0xff]
                  %289 = vst [vmem:[%s235 + $0xd0] sm:$0xff] %v288
                  %v290 = vld [vmem:[%s234 + $0x1b0] sm:$0xff]
                  %291 = vst [vmem:[%s235 + $0xd8] sm:$0xff] %v290
                  %v292 = vld [vmem:[%s234 + $0x1c0] sm:$0xff]
                  %293 = vst [vmem:[%s235 + $0xe0] sm:$0xff] %v292
                  %v294 = vld [vmem:[%s234 + $0x1d0] sm:$0xff]
                  %295 = vst [vmem:[%s235 + $0xe8] sm:$0xff] %v294
                  %v296 = vld [vmem:[%s234 + $0x1e0] sm:$0xff]
                  %297 = vst [vmem:[%s235 + $0xf0] sm:$0xff] %v296
                  %v298 = vld [vmem:[%s234 + $0x1f0] sm:$0xff]
                  %299 = vst [vmem:[%s235 + $0xf8] sm:$0xff] %v298
                  %v300 = vld [vmem:[%s234 + $0x200] sm:$0xff]
                  %301 = vst [vmem:[%s235 + $0x100] sm:$0xff] %v300
                  %v302 = vld [vmem:[%s234 + $0x210] sm:$0xff]
                  %303 = vst [vmem:[%s235 + $0x108] sm:$0xff] %v302
                  %v304 = vld [vmem:[%s234 + $0x220] sm:$0xff]
                  %305 = vst [vmem:[%s235 + $0x110] sm:$0xff] %v304
                  %v306 = vld [vmem:[%s234 + $0x230] sm:$0xff]
                  %307 = vst [vmem:[%s235 + $0x118] sm:$0xff] %v306
                $region56: #{utae_forward.15} parent=50 // loop_footer
                  %s233 = sadd.s32 1, %s229
                $region57: #{utae_forward.15} parent=50 // loop_footer_branch
                  %228 = sbr.rel target = $region53
                $region58: #{utae_forward.15} parent=50 // loop_exit
                  _
              $region51: #{utae_forward.15} parent=35 // pred_fallthru
                _
              // Predicated region
              $region59: #{utae_forward.15} parent=35 // pred_check
                _
              $region60: #{utae_forward.15} parent=35 // pred_check_branch
                %309 = sbr.rel target = $region62
              $region61: #{utae_forward.15} parent=35 // pred_region
                _
              $region62: #{utae_forward.15} parent=35 // pred_fallthru
                _
            $region36: #{utae_forward.15} parent=31 // pred_fallthru
              _
            // Predicated region
            $region37: #{utae_forward.15} parent=31 // pred_check
              _
            $region38: #{utae_forward.15} parent=31 // pred_check_branch
              %143 = sbr.rel target = $region40
            $region39: #{utae_forward.15} parent=31 // pred_region
              %s145 = ssub.s32 256, 1
              loop: start=0, step=1, limit=1
              $region41: #{utae_forward.15} parent=39 // loop_pre_header
                _
              $region42: #{utae_forward.15} parent=39 // loop_header
                %s147 = sphi 0, %s151
                %p148 = scmp.ge.s32.totalorder %s147, 1
                %s152 = sphi %s137, %s137
                %s153 = sphi %s134, %s134
              $region43: #{utae_forward.15} parent=39 // loop_header_branch
                %150 = sbr.rel (%p148) target = $region47
              $region44: #{utae_forward.15} parent=39 // loop_body
                %v154 = vld [vmem:[%s152] sm:%s145]
                %155 = vst [vmem:[%s153] sm:%s145] %v154
                %v156 = vld [vmem:[%s152 + $0x10] sm:%s145]
                %157 = vst [vmem:[%s153 + $0x8] sm:%s145] %v156
                %v158 = vld [vmem:[%s152 + $0x20] sm:%s145]
                %159 = vst [vmem:[%s153 + $0x10] sm:%s145] %v158
                %v160 = vld [vmem:[%s152 + $0x30] sm:%s145]
                %161 = vst [vmem:[%s153 + $0x18] sm:%s145] %v160
                %v162 = vld [vmem:[%s152 + $0x40] sm:%s145]
                %163 = vst [vmem:[%s153 + $0x20] sm:%s145] %v162
                %v164 = vld [vmem:[%s152 + $0x50] sm:%s145]
                %165 = vst [vmem:[%s153 + $0x28] sm:%s145] %v164
                %v166 = vld [vmem:[%s152 + $0x60] sm:%s145]
                %167 = vst [vmem:[%s153 + $0x30] sm:%s145] %v166
                %v168 = vld [vmem:[%s152 + $0x70] sm:%s145]
                %169 = vst [vmem:[%s153 + $0x38] sm:%s145] %v168
                %v170 = vld [vmem:[%s152 + $0x80] sm:%s145]
                %171 = vst [vmem:[%s153 + $0x40] sm:%s145] %v170
                %v172 = vld [vmem:[%s152 + $0x90] sm:%s145]
                %173 = vst [vmem:[%s153 + $0x48] sm:%s145] %v172
                %v174 = vld [vmem:[%s152 + $0xa0] sm:%s145]
                %175 = vst [vmem:[%s153 + $0x50] sm:%s145] %v174
                %v176 = vld [vmem:[%s152 + $0xb0] sm:%s145]
                %177 = vst [vmem:[%s153 + $0x58] sm:%s145] %v176
                %v178 = vld [vmem:[%s152 + $0xc0] sm:%s145]
                %179 = vst [vmem:[%s153 + $0x60] sm:%s145] %v178
                %v180 = vld [vmem:[%s152 + $0xd0] sm:%s145]
                %181 = vst [vmem:[%s153 + $0x68] sm:%s145] %v180
                %v182 = vld [vmem:[%s152 + $0xe0] sm:%s145]
                %183 = vst [vmem:[%s153 + $0x70] sm:%s145] %v182
                %v184 = vld [vmem:[%s152 + $0xf0] sm:%s145]
                %185 = vst [vmem:[%s153 + $0x78] sm:%s145] %v184
                %v186 = vld [vmem:[%s152 + $0x100] sm:%s145]
                %187 = vst [vmem:[%s153 + $0x80] sm:%s145] %v186
                %v188 = vld [vmem:[%s152 + $0x110] sm:%s145]
                %189 = vst [vmem:[%s153 + $0x88] sm:%s145] %v188
                %v190 = vld [vmem:[%s152 + $0x120] sm:%s145]
                %191 = vst [vmem:[%s153 + $0x90] sm:%s145] %v190
                %v192 = vld [vmem:[%s152 + $0x130] sm:%s145]
                %193 = vst [vmem:[%s153 + $0x98] sm:%s145] %v192
                %v194 = vld [vmem:[%s152 + $0x140] sm:%s145]
                %195 = vst [vmem:[%s153 + $0xa0] sm:%s145] %v194
                %v196 = vld [vmem:[%s152 + $0x150] sm:%s145]
                %197 = vst [vmem:[%s153 + $0xa8] sm:%s145] %v196
                %v198 = vld [vmem:[%s152 + $0x160] sm:%s145]
                %199 = vst [vmem:[%s153 + $0xb0] sm:%s145] %v198
                %v200 = vld [vmem:[%s152 + $0x170] sm:%s145]
                %201 = vst [vmem:[%s153 + $0xb8] sm:%s145] %v200
                %v202 = vld [vmem:[%s152 + $0x180] sm:%s145]
                %203 = vst [vmem:[%s153 + $0xc0] sm:%s145] %v202
                %v204 = vld [vmem:[%s152 + $0x190] sm:%s145]
                %205 = vst [vmem:[%s153 + $0xc8] sm:%s145] %v204
                %v206 = vld [vmem:[%s152 + $0x1a0] sm:%s145]
                %207 = vst [vmem:[%s153 + $0xd0] sm:%s145] %v206
                %v208 = vld [vmem:[%s152 + $0x1b0] sm:%s145]
                %209 = vst [vmem:[%s153 + $0xd8] sm:%s145] %v208
                %v210 = vld [vmem:[%s152 + $0x1c0] sm:%s145]
                %211 = vst [vmem:[%s153 + $0xe0] sm:%s145] %v210
                %v212 = vld [vmem:[%s152 + $0x1d0] sm:%s145]
                %213 = vst [vmem:[%s153 + $0xe8] sm:%s145] %v212
                %v214 = vld [vmem:[%s152 + $0x1e0] sm:%s145]
                %215 = vst [vmem:[%s153 + $0xf0] sm:%s145] %v214
                %v216 = vld [vmem:[%s152 + $0x1f0] sm:%s145]
                %217 = vst [vmem:[%s153 + $0xf8] sm:%s145] %v216
                %v218 = vld [vmem:[%s152 + $0x200] sm:%s145]
                %219 = vst [vmem:[%s153 + $0x100] sm:%s145] %v218
                %v220 = vld [vmem:[%s152 + $0x210] sm:%s145]
                %221 = vst [vmem:[%s153 + $0x108] sm:%s145] %v220
                %v222 = vld [vmem:[%s152 + $0x220] sm:%s145]
                %223 = vst [vmem:[%s153 + $0x110] sm:%s145] %v222
                %v224 = vld [vmem:[%s152 + $0x230] sm:%s145]
                %225 = vst [vmem:[%s153 + $0x118] sm:%s145] %v224
              $region45: #{utae_forward.15} parent=39 // loop_footer
                %s151 = sadd.s32 1, %s147
              $region46: #{utae_forward.15} parent=39 // loop_footer_branch
                %146 = sbr.rel target = $region42
              $region47: #{utae_forward.15} parent=39 // loop_exit
                _
            $region40: #{utae_forward.15} parent=31 // pred_fallthru
              _
          $region32: #{utae_forward.15} parent=27 // pred_fallthru
            _
          %310 = vnop
        $region28: #{utae_forward.15} parent=23 // pred_fallthru
          _
      $region24: #{utae_forward.15} parent=5 // pred_fallthru
        _
      %p311 = scmp.le.s32.totalorder 1, %s9
      %p312 = scmp.lt.s32.totalorder %s9, 3
      %p313 = pnand %p311, %p312
      %p314 = pneg %p313
      // Predicated region
      $region63: #{utae_forward.15} parent=5 // pred_check
        _
      $region64: #{utae_forward.15} parent=5 // pred_check_branch
        %316 = sbr.rel (%p313) target = $region66
      $region65: #{utae_forward.15} parent=5 // pred_region
        %s317 = ssub.s32 %s9, 1
        %s318 = sand.u32 %s43, 1
        %s319 = sand.u32 %s43, 1
        %s320 = smul.addr %s319, 288
        %s321 = scalar_lea.vmem [#allocation2], %s320
        // Predicated region
        $region67: #{utae_forward.15} parent=65 // pred_check
          %p322 = pneg %p56
        $region68: #{utae_forward.15} parent=65 // pred_check_branch
          %324 = sbr.rel (%p322) target = $region70
        $region69: #{utae_forward.15} parent=65 // pred_region
          _
        $region70: #{utae_forward.15} parent=65 // pred_fallthru
          _
        %p325 = pneg %p30
        %p326 = pneg %p27
        %s327 = sand.u32 %s43, 1
        %s328 = sand.u32 %s43, 1
        %s329 = smul.addr %s328, 288
        %s330 = scalar_lea.vmem [#allocation2], %s329
        %p331 = pneg %p56
        %p332 = pneg %p53
        %p333 = pneg %p77
        %p334 = pneg %p74
        %p335 = pneg %p103
        %p336 = pneg %p100
        %s337 = sand.u32 %s90, 1
        %s338 = sand.u32 %s90, 1
        %s339 = smul.addr %s338, 64
        %s340 = scalar_lea.vmem [#allocation3], %s339
        %s341 = smul.u32 2, %s14
        %s342 = smul.u32 2, %s14
        %v344 = vld [vmem:[%s0] sm:$0xff]
        %v345 = vld [vmem:[%s0 + $0x8] sm:$0xf]
        %v346 = vld [vmem:[%s0 + $0xc] sm:$0xff]
        %v347 = vld [vmem:[%s0 + $0x14] sm:$0xf]
        %v348 = vld [vmem:[%s0 + $0x18] sm:$0xff]
        %v349 = vld [vmem:[%s0 + $0x20] sm:$0xf]
        %v350 = vld [vmem:[%s0 + $0x24] sm:$0xff]
        %v351 = vld [vmem:[%s0 + $0x2c] sm:$0xf]
        %v352 = vld [vmem:[%s321] sm:$0xff]
        %v353 = vld [vmem:[%s321 + $0x8] sm:$0xff]
        %v354 = vld [vmem:[%s321 + $0x10] sm:$0xff]
        %v355 = vld [vmem:[%s321 + $0x18] sm:$0xff]
        %v356 = vld [vmem:[%s321 + $0x20] sm:$0xff]
        %v357 = vld [vmem:[%s321 + $0x28] sm:$0xff]
        %v358 = vld [vmem:[%s321 + $0x30] sm:$0xff]
        %v359 = vld [vmem:[%s321 + $0x38] sm:$0xff]
        %v360 = vld [vmem:[%s321 + $0x40] sm:$0xff]
        %v361 = vld [vmem:[%s321 + $0x48] sm:$0xff]
        %v362 = vld [vmem:[%s321 + $0x50] sm:$0xff]
        %v363 = vld [vmem:[%s321 + $0x58] sm:$0xff]
        %v364 = vld [vmem:[%s321 + $0x60] sm:$0xff]
        %v365 = vld [vmem:[%s321 + $0x68] sm:$0xff]
        %v366 = vld [vmem:[%s321 + $0x70] sm:$0xff]
        %v367 = vld [vmem:[%s321 + $0x78] sm:$0xff]
        %v368 = vld [vmem:[%s321 + $0x80] sm:$0xff]
        %v369 = vld [vmem:[%s321 + $0x88] sm:$0xff]
        %v370 = vld [vmem:[%s321 + $0x90] sm:$0xff]
        %v371 = vld [vmem:[%s321 + $0x98] sm:$0xff]
        %v372 = vld [vmem:[%s321 + $0xa0] sm:$0xff]
        %v373 = vld [vmem:[%s321 + $0xa8] sm:$0xff]
        %v374 = vld [vmem:[%s321 + $0xb0] sm:$0xff]
        %v375 = vld [vmem:[%s321 + $0xb8] sm:$0xff]
        %v376 = vld [vmem:[%s321 + $0xc0] sm:$0xff]
        %v377 = vld [vmem:[%s321 + $0xc8] sm:$0xff]
        %v378 = vld [vmem:[%s321 + $0xd0] sm:$0xff]
        %v379 = vld [vmem:[%s321 + $0xd8] sm:$0xff]
        %v380 = vld [vmem:[%s321 + $0xe0] sm:$0xff]
        %v381 = vld [vmem:[%s321 + $0xe8] sm:$0xff]
        %v382 = vld [vmem:[%s321 + $0xf0] sm:$0xff]
        %v383 = vld [vmem:[%s321 + $0xf8] sm:$0xff]
        %v384 = vld [vmem:[%s321 + $0x100] sm:$0xff]
        %v385 = vld [vmem:[%s321 + $0x108] sm:$0xff]
        %v386 = vld [vmem:[%s321 + $0x110] sm:$0xff]
        %v387 = vld [vmem:[%s321 + $0x118] sm:$0xff]
        %v388 = vld [vmem:[%s2] sm:$0xff]
        %v389 = vld [vmem:[%s2 + $0x8] sm:$0xff]
        %v390 = vld [vmem:[%s2 + $0x10] sm:$0xff]
        %v391 = vld [vmem:[%s2 + $0x18] sm:$0xff]
        %393 = vset.pattern.permute.xlu0 0
        %394 = vperm.xlu0 %393, %v388
        %v395 = vpop.permute.xlu0 %394
        %398 = vset.pattern.permute.xlu0 0
        %399 = vperm.xlu0 %398, %v389
        %v400 = vpop.permute.xlu0 %399
        %403 = vset.pattern.permute.xlu0 0
        %404 = vperm.xlu0 %403, %v390
        %v405 = vpop.permute.xlu0 %404
        %408 = vset.pattern.permute.xlu0 0
        %409 = vperm.xlu0 %408, %v391
        %v410 = vpop.permute.xlu0 %409
        %v420 = vunpack.c.l.b16 %v344
        %v421 = vunpack.c.h.b16 %v344
        %v422 = vunpack.c.l.b16 %v345
        %v423 = vunpack.c.l.b16 %v346
        %v424 = vunpack.c.h.b16 %v346
        %v425 = vunpack.c.l.b16 %v347
        %v426 = vunpack.c.l.b16 %v348
        %v427 = vunpack.c.h.b16 %v348
        %v428 = vunpack.c.l.b16 %v349
        %v429 = vunpack.c.l.b16 %v350
        %v430 = vunpack.c.h.b16 %v350
        %v431 = vunpack.c.l.b16 %v351
        %v432 = vpack.c.b16 %v423, %v420
        %v433 = vpack.c.b16 %v424, %v421
        %v434 = vpack.c.b16 %v425, %v422
        %v435 = vpack.c.b16 %v429, %v426
        %v436 = vpack.c.b16 %v430, %v427
        %v437 = vpack.c.b16 %v431, %v428
        %v478 = vunpack.c.l.b16 %v352
        %v479 = vunpack.c.h.b16 %v352
        %v480 = vunpack.c.l.b16 %v353
        %v481 = vunpack.c.h.b16 %v353
        %v482 = vunpack.c.l.b16 %v354
        %v483 = vunpack.c.h.b16 %v354
        %v484 = vunpack.c.l.b16 %v355
        %v485 = vunpack.c.h.b16 %v355
        %v486 = vunpack.c.l.b16 %v356
        %v487 = vunpack.c.h.b16 %v356
        %v488 = vunpack.c.l.b16 %v357
        %v489 = vunpack.c.h.b16 %v357
        %v490 = vunpack.c.l.b16 %v358
        %v491 = vunpack.c.h.b16 %v358
        %v492 = vunpack.c.l.b16 %v359
        %v493 = vunpack.c.h.b16 %v359
        %v494 = vunpack.c.l.b16 %v360
        %v495 = vunpack.c.h.b16 %v360
        %v496 = vunpack.c.l.b16 %v361
        %v497 = vunpack.c.h.b16 %v361
        %v498 = vunpack.c.l.b16 %v362
        %v499 = vunpack.c.h.b16 %v362
        %v500 = vunpack.c.l.b16 %v363
        %v501 = vunpack.c.h.b16 %v363
        %v502 = vunpack.c.l.b16 %v364
        %v503 = vunpack.c.h.b16 %v364
        %v504 = vunpack.c.l.b16 %v365
        %v505 = vunpack.c.h.b16 %v365
        %v506 = vunpack.c.l.b16 %v366
        %v507 = vunpack.c.h.b16 %v366
        %v508 = vunpack.c.l.b16 %v367
        %v509 = vunpack.c.h.b16 %v367
        %v510 = vunpack.c.l.b16 %v368
        %v511 = vunpack.c.h.b16 %v368
        %v512 = vunpack.c.l.b16 %v369
        %v513 = vunpack.c.h.b16 %v369
        %v514 = vunpack.c.l.b16 %v370
        %v515 = vunpack.c.h.b16 %v370
        %v516 = vunpack.c.l.b16 %v371
        %v517 = vunpack.c.h.b16 %v371
        %v518 = vunpack.c.l.b16 %v372
        %v519 = vunpack.c.h.b16 %v372
        %v520 = vunpack.c.l.b16 %v373
        %v521 = vunpack.c.h.b16 %v373
        %v522 = vunpack.c.l.b16 %v374
        %v523 = vunpack.c.h.b16 %v374
        %v524 = vunpack.c.l.b16 %v375
        %v525 = vunpack.c.h.b16 %v375
        %v526 = vunpack.c.l.b16 %v376
        %v527 = vunpack.c.h.b16 %v376
        %v528 = vunpack.c.l.b16 %v377
        %v529 = vunpack.c.h.b16 %v377
        %v530 = vunpack.c.l.b16 %v378
        %v531 = vunpack.c.h.b16 %v378
        %v532 = vunpack.c.l.b16 %v379
        %v533 = vunpack.c.h.b16 %v379
        %v534 = vunpack.c.l.b16 %v380
        %v535 = vunpack.c.h.b16 %v380
        %v536 = vunpack.c.l.b16 %v381
        %v537 = vunpack.c.h.b16 %v381
        %v538 = vunpack.c.l.b16 %v382
        %v539 = vunpack.c.h.b16 %v382
        %v540 = vunpack.c.l.b16 %v383
        %v541 = vunpack.c.h.b16 %v383
        %v542 = vunpack.c.l.b16 %v384
        %v543 = vunpack.c.h.b16 %v384
        %v544 = vunpack.c.l.b16 %v385
        %v545 = vunpack.c.h.b16 %v385
        %v546 = vunpack.c.l.b16 %v386
        %v547 = vunpack.c.h.b16 %v386
        %v548 = vunpack.c.l.b16 %v387
        %v549 = vunpack.c.h.b16 %v387
        %v550 = vpack.c.b16 %v480, %v478
        %v551 = vpack.c.b16 %v481, %v479
        %v552 = vpack.c.b16 %v484, %v482
        %v553 = vpack.c.b16 %v485, %v483
        %v554 = vpack.c.b16 %v488, %v486
        %v555 = vpack.c.b16 %v489, %v487
        %v556 = vpack.c.b16 %v492, %v490
        %v557 = vpack.c.b16 %v493, %v491
        %v558 = vpack.c.b16 %v496, %v494
        %v559 = vpack.c.b16 %v497, %v495
        %v560 = vpack.c.b16 %v500, %v498
        %v561 = vpack.c.b16 %v501, %v499
        %v562 = vpack.c.b16 %v504, %v502
        %v563 = vpack.c.b16 %v505, %v503
        %v564 = vpack.c.b16 %v508, %v506
        %v565 = vpack.c.b16 %v509, %v507
        %v566 = vpack.c.b16 %v512, %v510
        %v567 = vpack.c.b16 %v513, %v511
        %v568 = vpack.c.b16 %v516, %v514
        %v569 = vpack.c.b16 %v517, %v515
        %v570 = vpack.c.b16 %v520, %v518
        %v571 = vpack.c.b16 %v521, %v519
        %v572 = vpack.c.b16 %v524, %v522
        %v573 = vpack.c.b16 %v525, %v523
        %v574 = vpack.c.b16 %v528, %v526
        %v575 = vpack.c.b16 %v529, %v527
        %v576 = vpack.c.b16 %v532, %v530
        %v577 = vpack.c.b16 %v533, %v531
        %v578 = vpack.c.b16 %v536, %v534
        %v579 = vpack.c.b16 %v537, %v535
        %v580 = vpack.c.b16 %v540, %v538
        %v581 = vpack.c.b16 %v541, %v539
        %v582 = vpack.c.b16 %v544, %v542
        %v583 = vpack.c.b16 %v545, %v543
        %v584 = vpack.c.b16 %v548, %v546
        %v585 = vpack.c.b16 %v549, %v547
        %vm622 = vcmask 261120
        %v624 = vsel %vm622, %v434, 0
        %v627 = vsel %vm622, %v437, 0
        %629 = vmatpush.bf16.msra.mxu0 %v564
        %630 = vmatpush.bf16.msra.mxu0 %v562
        %631 = vmatpush.bf16.msra.mxu0 %v560
        %632 = vmatpush.bf16.msra.mxu0 %v558
        %633 = vmatpush.bf16.msra.mxu0 %v556
        %634 = vmatpush.bf16.msra.mxu0 %v554
        %635 = vmatpush.bf16.msra.mxu0 %v552
        %636 = vmatpush.bf16.msra.mxu0 %v550
        %637 = vmatmul.bf16.gmra.mxu0 %v432
        %v638 = vpop.f32.mrf.mxu0
        %v639 = vadd.f32 %v395, %v638
        %v640 = vpop.f32.mrf.mxu0
        %v641 = vadd.f32 %v400, %v640
        %642 = vmatmul.bf16.gmra.mxu0 %v435
        %v643 = vpop.f32.mrf.mxu0
        %v644 = vadd.f32 %v405, %v643
        %v645 = vpop.f32.mrf.mxu0
        %v646 = vadd.f32 %v410, %v645
        %647 = vdwg.mxu0
        %648 = vmatpush.bf16.msra.mxu0 %v580
        %649 = vmatpush.bf16.msra.mxu0 %v578
        %650 = vmatpush.bf16.msra.mxu0 %v576
        %651 = vmatpush.bf16.msra.mxu0 %v574
        %652 = vmatpush.bf16.msra.mxu0 %v572
        %653 = vmatpush.bf16.msra.mxu0 %v570
        %654 = vmatpush.bf16.msra.mxu0 %v568
        %655 = vmatpush.bf16.msra.mxu0 %v566
        %656 = vmatmul.bf16.gmra.mxu0 %v433
        %v657 = vpop.f32.mrf.mxu0
        %v658 = vadd.f32 %v639, %v657
        %v659 = vpop.f32.mrf.mxu0
        %v660 = vadd.f32 %v641, %v659
        %661 = vmatmul.bf16.gmra.mxu0 %v436
        %v662 = vpop.f32.mrf.mxu0
        %v663 = vadd.f32 %v644, %v662
        %v664 = vpop.f32.mrf.mxu0
        %v665 = vadd.f32 %v646, %v664
        %666 = vdwg.mxu0
        %667 = vmatpush.bf16.msra.mxu0 0
        %668 = vmatpush.bf16.msra.mxu0 0
        %669 = vmatpush.bf16.msra.mxu0 0
        %670 = vmatpush.bf16.msra.mxu0 0
        %671 = vmatpush.bf16.msra.mxu0 0
        %672 = vmatpush.bf16.msra.mxu0 0
        %673 = vmatpush.bf16.msra.mxu0 %v584
        %674 = vmatpush.bf16.msra.mxu0 %v582
        %675 = vmatmul.bf16.gmra.mxu0 %v624
        %v676 = vpop.f32.mrf.mxu0
        %v677 = vadd.f32 %v658, %v676
        %v678 = vpop.f32.mrf.mxu0
        %v679 = vadd.f32 %v660, %v678
        %680 = vmatmul.bf16.gmra.mxu0 %v627
        %v681 = vpop.f32.mrf.mxu0
        %v682 = vadd.f32 %v663, %v681
        %v683 = vpop.f32.mrf.mxu0
        %v684 = vadd.f32 %v665, %v683
        %685 = vdwg.mxu0
        %686 = vmatpush.bf16.msra.mxu0 %v565
        %687 = vmatpush.bf16.msra.mxu0 %v563
        %688 = vmatpush.bf16.msra.mxu0 %v561
        %689 = vmatpush.bf16.msra.mxu0 %v559
        %690 = vmatpush.bf16.msra.mxu0 %v557
        %691 = vmatpush.bf16.msra.mxu0 %v555
        %692 = vmatpush.bf16.msra.mxu0 %v553
        %693 = vmatpush.bf16.msra.mxu0 %v551
        %694 = vmatmul.bf16.gmra.mxu0 %v432
        %v695 = vpop.f32.mrf.mxu0
        %v696 = vadd.f32 %v395, %v695
        %v697 = vpop.f32.mrf.mxu0
        %v698 = vadd.f32 %v400, %v697
        %699 = vmatmul.bf16.gmra.mxu0 %v435
        %v700 = vpop.f32.mrf.mxu0
        %v701 = vadd.f32 %v405, %v700
        %v702 = vpop.f32.mrf.mxu0
        %v703 = vadd.f32 %v410, %v702
        %704 = vdwg.mxu0
        %705 = vmatpush.bf16.msra.mxu0 %v581
        %706 = vmatpush.bf16.msra.mxu0 %v579
        %707 = vmatpush.bf16.msra.mxu0 %v577
        %708 = vmatpush.bf16.msra.mxu0 %v575
        %709 = vmatpush.bf16.msra.mxu0 %v573
        %710 = vmatpush.bf16.msra.mxu0 %v571
        %711 = vmatpush.bf16.msra.mxu0 %v569
        %712 = vmatpush.bf16.msra.mxu0 %v567
        %713 = vmatmul.bf16.gmra.mxu0 %v433
        %v714 = vpop.f32.mrf.mxu0
        %v715 = vadd.f32 %v696, %v714
        %v716 = vpop.f32.mrf.mxu0
        %v717 = vadd.f32 %v698, %v716
        %718 = vmatmul.bf16.gmra.mxu0 %v436
        %v719 = vpop.f32.mrf.mxu0
        %v720 = vadd.f32 %v701, %v719
        %v721 = vpop.f32.mrf.mxu0
        %v722 = vadd.f32 %v703, %v721
        %723 = vdwg.mxu0
        %724 = vmatpush.bf16.msra.mxu0 0
        %725 = vmatpush.bf16.msra.mxu0 0
        %726 = vmatpush.bf16.msra.mxu0 0
        %727 = vmatpush.bf16.msra.mxu0 0
        %728 = vmatpush.bf16.msra.mxu0 0
        %729 = vmatpush.bf16.msra.mxu0 0
        %730 = vmatpush.bf16.msra.mxu0 %v585
        %731 = vmatpush.bf16.msra.mxu0 %v583
        %732 = vmatmul.bf16.gmra.mxu0 %v624
        %v733 = vpop.f32.mrf.mxu0
        %v734 = vadd.f32 %v715, %v733
        %v735 = vpop.f32.mrf.mxu0
        %v736 = vadd.f32 %v717, %v735
        %737 = vmatmul.bf16.gmra.mxu0 %v627
        %v738 = vpop.f32.mrf.mxu0
        %v739 = vadd.f32 %v720, %v738
        %v740 = vpop.f32.mrf.mxu0
        %v741 = vadd.f32 %v722, %v740
        %742 = vdwg.mxu0
        %743 = vst [vmem:[%s340] sm:$0xff] %v677
        %744 = vst [vmem:[%s340 + $0x8] sm:$0xff] %v734
        %745 = vst [vmem:[%s340 + $0x10] sm:$0xff] %v679
        %746 = vst [vmem:[%s340 + $0x18] sm:$0xff] %v736
        %747 = vst [vmem:[%s340 + $0x20] sm:$0xff] %v682
        %748 = vst [vmem:[%s340 + $0x28] sm:$0xff] %v739
        %749 = vst [vmem:[%s340 + $0x30] sm:$0xff] %v684
        %750 = vst [vmem:[%s340 + $0x38] sm:$0xff] %v741
        %s751 = sand.u32 %s90, 1
        %s752 = sand.u32 %s90, 1
        %s753 = smul.addr %s752, 64
        %s754 = scalar_lea.vmem [#allocation3], %s753
        // Predicated region
        $region71: #{utae_forward.15} parent=65 // pred_check
          %p755 = pneg %p100
        $region72: #{utae_forward.15} parent=65 // pred_check_branch
          %757 = sbr.rel (%p755) target = $region74
        $region73: #{utae_forward.15} parent=65 // pred_region
          %s758 = smul.u32 2, %s14
          %s759 = smul.addr %s758, 8
          %s760 = scalar_lea.vmem %s3, %s759
          // Predicated region
          $region75: #{utae_forward.15} parent=73 // pred_check
            _
          $region76: #{utae_forward.15} parent=73 // pred_check_branch
            %762 = sbr.rel (0) target = $region78
          $region77: #{utae_forward.15} parent=73 // pred_region
            // Predicated region
            $region79: #{utae_forward.15} parent=77 // pred_check
              _
            $region80: #{utae_forward.15} parent=77 // pred_check_branch
              %764 = sbr.rel (0) target = $region82
            $region81: #{utae_forward.15} parent=77 // pred_region
              loop: start=0, step=1, limit=1
              $region83: #{utae_forward.15} parent=81 // loop_pre_header
                _
              $region84: #{utae_forward.15} parent=81 // loop_header
                %s766 = sphi 0, %s770
                %p767 = scmp.ge.s32.totalorder %s766, 1
                %s771 = sphi %s754, %s754
                %s772 = sphi %s760, %s760
              $region85: #{utae_forward.15} parent=81 // loop_header_branch
                %769 = sbr.rel (%p767) target = $region89
              $region86: #{utae_forward.15} parent=81 // loop_body
                %v773 = vld [vmem:[%s771] sm:$0xff]
                %774 = vst [vmem:[%s772] sm:$0xff] %v773
                %v775 = vld [vmem:[%s771 + $0x8] sm:$0xff]
                %776 = vst [vmem:[%s772 + $0x8] sm:$0xff] %v775
                %v777 = vld [vmem:[%s771 + $0x10] sm:$0xff]
                %778 = vst [vmem:[%s772 + $0x20] sm:$0xff] %v777
                %v779 = vld [vmem:[%s771 + $0x18] sm:$0xff]
                %780 = vst [vmem:[%s772 + $0x28] sm:$0xff] %v779
                %v781 = vld [vmem:[%s771 + $0x20] sm:$0xff]
                %782 = vst [vmem:[%s772 + $0x40] sm:$0xff] %v781
                %v783 = vld [vmem:[%s771 + $0x28] sm:$0xff]
                %784 = vst [vmem:[%s772 + $0x48] sm:$0xff] %v783
                %v785 = vld [vmem:[%s771 + $0x30] sm:$0xff]
                %786 = vst [vmem:[%s772 + $0x60] sm:$0xff] %v785
                %v787 = vld [vmem:[%s771 + $0x38] sm:$0xff]
                %788 = vst [vmem:[%s772 + $0x68] sm:$0xff] %v787
              $region87: #{utae_forward.15} parent=81 // loop_footer
                %s770 = sadd.s32 1, %s766
              $region88: #{utae_forward.15} parent=81 // loop_footer_branch
                %765 = sbr.rel target = $region84
              $region89: #{utae_forward.15} parent=81 // loop_exit
                _
            $region82: #{utae_forward.15} parent=77 // pred_fallthru
              _
            // Predicated region
            $region90: #{utae_forward.15} parent=77 // pred_check
              _
            $region91: #{utae_forward.15} parent=77 // pred_check_branch
              %790 = sbr.rel target = $region93
            $region92: #{utae_forward.15} parent=77 // pred_region
              _
            $region93: #{utae_forward.15} parent=77 // pred_fallthru
              _
          $region78: #{utae_forward.15} parent=73 // pred_fallthru
            _
          %791 = vnop
        $region74: #{utae_forward.15} parent=65 // pred_fallthru
          _
      $region66: #{utae_forward.15} parent=5 // pred_fallthru
        _
      %p792 = scmp.le.s32.totalorder 2, %s9
      // Predicated region
      $region94: #{utae_forward.15} parent=5 // pred_check
        %p793 = pneg %p792
      $region95: #{utae_forward.15} parent=5 // pred_check_branch
        %795 = sbr.rel (%p793) target = $region97
      $region96: #{utae_forward.15} parent=5 // pred_region
        %s796 = ssub.s32 %s9, 2
        // Predicated region
        $region98: #{utae_forward.15} parent=96 // pred_check
          %p797 = pneg %p106
        $region99: #{utae_forward.15} parent=96 // pred_check_branch
          %799 = sbr.rel (%p797) target = $region101
        $region100: #{utae_forward.15} parent=96 // pred_region
          %s800 = sand.u32 %s91, 1
          %s801 = sand.u32 %s91, 1
          %s802 = smul.addr %s801, 64
          %s803 = scalar_lea.vmem [#allocation3], %s802
        $region101: #{utae_forward.15} parent=96 // pred_fallthru
          _
      $region97: #{utae_forward.15} parent=5 // pred_fallthru
        _
    $region6: #{utae_forward.15} parent=1 // loop_footer
      %s13 = sadd.s32 1, %s9
    $region7: #{utae_forward.15} parent=1 // loop_footer_branch
      %8 = sbr.rel target = $region3
    $region8: #{utae_forward.15} parent=1 // loop_exit
      _

// kernel: utae_forward.17
$region0: #{utae_forward.17}
  #allocation0 [shape = 'u32[]', space=smem, size = 0x4, offset = 0x4, fixed_abs, tag = 'smem constant byte address 0x4 - core index']
  #allocation1 [shape = 'u32[72,128]{1,0:T(1,128)}', space=vmem, size = 0x9000, scoped, tag = 'internal scratch']
  %s0 = inlined_call_operand.vmem [shape: bf16[16,16], index: 0, kind: input, shape index: {}]
  %s1 = inlined_call_operand.vmem [shape: bf16[16,512], index: 1, kind: input, shape index: {}]
  %s2 = inlined_call_operand.vmem [shape: f32[16,1], index: 2, kind: input, shape index: {}]
  %s3 = inlined_call_operand.vmem [shape: f32[16,512], index: 3, kind: output, shape index: {}]
  %s4 = sld [smem:[#allocation0]]
  $region102: #{utae_forward.17} parent=0
    _
  %s6 = ssub.s32 1, %s4
  %s7 = scalar_select 0, %s6, %s4
  $region1: #{utae_forward.17} parent=0
    #allocation2 [shape = 'u8[16384]{0}', space=vmem, size = 0x4000, scoped, tag = 'input window, operand 1']
    #allocation3 [shape = 'u8[32768]{0}', space=vmem, size = 0x8000, scoped, tag = 'output window, operand 0']
    loop: start=0, step=1, limit=4
    $region2: #{utae_forward.17} parent=1 // loop_pre_header
      _
    $region3: #{utae_forward.17} parent=1 // loop_header
      %s9 = sphi 0, %s13
      %p10 = scmp.ge.s32.totalorder %s9, 4
      %s17 = sphi 0, %s17
      %s19 = sphi 0, %s17
      %s20 = sphi 0, %s19
      %s34 = sphi 0, %s20
      %s40 = sphi 0, %s42
      %s43 = sphi 0, %s40
      %s44 = sphi 0, %s43
      %s60 = sphi 0, %s44
      %s64 = sphi 0, %s64
      %s66 = sphi 0, %s64
      %s67 = sphi 0, %s66
      %s81 = sphi 0, %s67
      %s87 = sphi 0, %s89
      %s90 = sphi 0, %s87
      %s91 = sphi 0, %s90
      %s107 = sphi 0, %s91
    $region4: #{utae_forward.17} parent=1 // loop_header_branch
      %12 = sbr.rel (%p10) target = $region8
    $region5: #{utae_forward.17} parent=1 // loop_body
      %s14 = ssub.s32 %s9, 1
      %s15 = ssub.s32 %s9, 2
      %s16 = sadd.s32 %s9, 1
      %s18 = sadd.s32 %s17, 1
      %p21 = scmp.eq.s32.totalorder %s9, 1
      %p22 = scmp.ne.s32.totalorder %s17, %s19
      %p23 = scmp.eq.s32.totalorder %s9, 0
      %p24 = por %p22, %p23
      %p25 = scmp.ne.s32.totalorder %s17, %s19
      %p26 = scmp.eq.s32.totalorder %s14, 1
      %p27 = por %p25, %p26
      %p28 = scmp.ne.s32.totalorder %s19, %s20
      %p29 = scmp.eq.s32.totalorder %s14, 0
      %p30 = por %p28, %p29
      %p31 = scmp.ne.s32.totalorder %s19, %s20
      %p32 = scmp.eq.s32.totalorder %s15, 1
      %p33 = por %p31, %p32
      %p35 = scmp.ne.s32.totalorder %s20, %s34
      %p36 = scmp.eq.s32.totalorder %s15, 0
      %p37 = por %p35, %p36
      %s38 = ssub.s32 %s9, %s16
      %p39 = scmp.eq.s32.totalorder %s38, 0
      %s41 = sadd.s32 %s40, 1
      %s42 = scalar_select %p39, %s40, %s41
      %p45 = pneg %p39
      %p46 = scmp.eq.s32.totalorder %s9, 1
      %p47 = por %p45, %p46
      %p48 = scmp.ne.s32.totalorder %s40, %s43
      %p49 = scmp.eq.s32.totalorder %s9, 0
      %p50 = por %p48, %p49
      %p51 = scmp.ne.s32.totalorder %s40, %s43
      %p52 = scmp.eq.s32.totalorder %s14, 1
      %p53 = por %p51, %p52
      %p54 = scmp.ne.s32.totalorder %s43, %s44
      %p55 = scmp.eq.s32.totalorder %s14, 0
      %p56 = por %p54, %p55
      %p57 = scmp.ne.s32.totalorder %s43, %s44
      %p58 = scmp.eq.s32.totalorder %s15, 1
      %p59 = por %p57, %p58
      %p61 = scmp.ne.s32.totalorder %s44, %s60
      %p62 = scmp.eq.s32.totalorder %s15, 0
      %p63 = por %p61, %p62
      %s65 = sadd.s32 %s64, 1
      %p68 = scmp.eq.s32.totalorder %s9, 1
      %p69 = scmp.ne.s32.totalorder %s64, %s66
      %p70 = scmp.eq.s32.totalorder %s9, 0
      %p71 = por %p69, %p70
      %p72 = scmp.ne.s32.totalorder %s64, %s66
      %p73 = scmp.eq.s32.totalorder %s14, 1
      %p74 = por %p72, %p73
      %p75 = scmp.ne.s32.totalorder %s66, %s67
      %p76 = scmp.eq.s32.totalorder %s14, 0
      %p77 = por %p75, %p76
      %p78 = scmp.ne.s32.totalorder %s66, %s67
      %p79 = scmp.eq.s32.totalorder %s15, 1
      %p80 = por %p78, %p79
      %p82 = scmp.ne.s32.totalorder %s67, %s81
      %p83 = scmp.eq.s32.totalorder %s15, 0
      %p84 = por %p82, %p83
      %s85 = ssub.s32 %s9, %s16
      %p86 = scmp.eq.s32.totalorder %s85, 0
      %s88 = sadd.s32 %s87, 1
      %s89 = scalar_select %p86, %s87, %s88
      %p92 = pneg %p86
      %p93 = scmp.eq.s32.totalorder %s9, 1
      %p94 = por %p92, %p93
      %p95 = scmp.ne.s32.totalorder %s87, %s90
      %p96 = scmp.eq.s32.totalorder %s9, 0
      %p97 = por %p95, %p96
      %p98 = scmp.ne.s32.totalorder %s87, %s90
      %p99 = scmp.eq.s32.totalorder %s14, 1
      %p100 = por %p98, %p99
      %p101 = scmp.ne.s32.totalorder %s90, %s91
      %p102 = scmp.eq.s32.totalorder %s14, 0
      %p103 = por %p101, %p102
      %p104 = scmp.ne.s32.totalorder %s90, %s91
      %p105 = scmp.eq.s32.totalorder %s15, 1
      %p106 = por %p104, %p105
      %p108 = scmp.ne.s32.totalorder %s91, %s107
      %p109 = scmp.eq.s32.totalorder %s15, 0
      %p110 = por %p108, %p109
      %p111 = scmp.le.s32.totalorder 1, %s9
      %p112 = scmp.lt.s32.totalorder %s9, 3
      %p113 = pnand %p111, %p112
      %p114 = pneg %p113
      // Predicated region
      $region9: #{utae_forward.17} parent=5 // pred_check
        _
      $region10: #{utae_forward.17} parent=5 // pred_check_branch
        %116 = sbr.rel (%p113) target = $region12
      $region11: #{utae_forward.17} parent=5 // pred_region
        %s117 = ssub.s32 %s9, 1
        // Predicated region
        $region13: #{utae_forward.17} parent=11 // pred_check
          %p118 = pneg %p30
        $region14: #{utae_forward.17} parent=11 // pred_check_branch
          %120 = sbr.rel (%p118) target = $region16
        $region15: #{utae_forward.17} parent=11 // pred_region
          _
        $region16: #{utae_forward.17} parent=11 // pred_fallthru
          _
        // Predicated region
        $region17: #{utae_forward.17} parent=11 // pred_check
          %p121 = pneg %p77
        $region18: #{utae_forward.17} parent=11 // pred_check_branch
          %123 = sbr.rel (%p121) target = $region20
        $region19: #{utae_forward.17} parent=11 // pred_region
          _
        $region20: #{utae_forward.17} parent=11 // pred_fallthru
          _
      $region12: #{utae_forward.17} parent=5 // pred_fallthru
        _
      %p124 = scmp.lt.s32.totalorder %s9, 2
      // Predicated region
      $region21: #{utae_forward.17} parent=5 // pred_check
        %p125 = pneg %p124
      $region22: #{utae_forward.17} parent=5 // pred_check_branch
        %127 = sbr.rel (%p125) target = $region24
      $region23: #{utae_forward.17} parent=5 // pred_region
        // Predicated region
        $region25: #{utae_forward.17} parent=23 // pred_check
          %p128 = pneg %p50
        $region26: #{utae_forward.17} parent=23 // pred_check_branch
          %130 = sbr.rel (%p128) target = $region28
        $region27: #{utae_forward.17} parent=23 // pred_region
          %s131 = sand.u32 %s40, 1
          %s132 = sand.u32 %s40, 1
          %s133 = smul.addr %s132, 16
          %s134 = scalar_lea.vmem [#allocation2], %s133
          %s135 = smul.u32 2, %s9
          %s136 = smul.addr %s135, 4
          %s137 = scalar_lea.vmem %s1, %s136
          // Predicated region
          $region29: #{utae_forward.17} parent=27 // pred_check
            _
          $region30: #{utae_forward.17} parent=27 // pred_check_branch
            %139 = sbr.rel (0) target = $region32
          $region31: #{utae_forward.17} parent=27 // pred_region
            // Predicated region
            $region33: #{utae_forward.17} parent=31 // pred_check
              _
            $region34: #{utae_forward.17} parent=31 // pred_check_branch
              %141 = sbr.rel (0) target = $region36
            $region35: #{utae_forward.17} parent=31 // pred_region
              // Predicated region
              $region48: #{utae_forward.17} parent=35 // pred_check
                _
              $region49: #{utae_forward.17} parent=35 // pred_check_branch
                %159 = sbr.rel (0) target = $region51
              $region50: #{utae_forward.17} parent=35 // pred_region
                loop: start=0, step=1, limit=1
                $region52: #{utae_forward.17} parent=50 // loop_pre_header
                  _
                $region53: #{utae_forward.17} parent=50 // loop_header
                  %s161 = sphi 0, %s165
                  %p162 = scmp.ge.s32.totalorder %s161, 1
                  %s166 = sphi %s137, %s137
                  %s167 = sphi %s134, %s134
                $region54: #{utae_forward.17} parent=50 // loop_header_branch
                  %164 = sbr.rel (%p162) target = $region58
                $region55: #{utae_forward.17} parent=50 // loop_body
                  %v168 = vld [vmem:[%s166] sm:$0xff]
                  %169 = vst [vmem:[%s167] sm:$0xff] %v168
                  %v170 = vld [vmem:[%s166 + $0x10] sm:$0xff]
                  %171 = vst [vmem:[%s167 + $0x8] sm:$0xff] %v170
                $region56: #{utae_forward.17} parent=50 // loop_footer
                  %s165 = sadd.s32 1, %s161
                $region57: #{utae_forward.17} parent=50 // loop_footer_branch
                  %160 = sbr.rel target = $region53
                $region58: #{utae_forward.17} parent=50 // loop_exit
                  _
              $region51: #{utae_forward.17} parent=35 // pred_fallthru
                _
              // Predicated region
              $region59: #{utae_forward.17} parent=35 // pred_check
                _
              $region60: #{utae_forward.17} parent=35 // pred_check_branch
                %173 = sbr.rel target = $region62
              $region61: #{utae_forward.17} parent=35 // pred_region
                _
              $region62: #{utae_forward.17} parent=35 // pred_fallthru
                _
            $region36: #{utae_forward.17} parent=31 // pred_fallthru
              _
            // Predicated region
            $region37: #{utae_forward.17} parent=31 // pred_check
              _
            $region38: #{utae_forward.17} parent=31 // pred_check_branch
              %143 = sbr.rel target = $region40
            $region39: #{utae_forward.17} parent=31 // pred_region
              %s145 = ssub.s32 256, 1
              loop: start=0, step=1, limit=1
              $region41: #{utae_forward.17} parent=39 // loop_pre_header
                _
              $region42: #{utae_forward.17} parent=39 // loop_header
                %s147 = sphi 0, %s151
                %p148 = scmp.ge.s32.totalorder %s147, 1
                %s152 = sphi %s137, %s137
                %s153 = sphi %s134, %s134
              $region43: #{utae_forward.17} parent=39 // loop_header_branch
                %150 = sbr.rel (%p148) target = $region47
              $region44: #{utae_forward.17} parent=39 // loop_body
                %v154 = vld [vmem:[%s152] sm:%s145]
                %155 = vst [vmem:[%s153] sm:%s145] %v154
                %v156 = vld [vmem:[%s152 + $0x10] sm:%s145]
                %157 = vst [vmem:[%s153 + $0x8] sm:%s145] %v156
              $region45: #{utae_forward.17} parent=39 // loop_footer
                %s151 = sadd.s32 1, %s147
              $region46: #{utae_forward.17} parent=39 // loop_footer_branch
                %146 = sbr.rel target = $region42
              $region47: #{utae_forward.17} parent=39 // loop_exit
                _
            $region40: #{utae_forward.17} parent=31 // pred_fallthru
              _
          $region32: #{utae_forward.17} parent=27 // pred_fallthru
            _
          %174 = vnop
        $region28: #{utae_forward.17} parent=23 // pred_fallthru
          _
      $region24: #{utae_forward.17} parent=5 // pred_fallthru
        _
      %p175 = scmp.le.s32.totalorder 1, %s9
      %p176 = scmp.lt.s32.totalorder %s9, 3
      %p177 = pnand %p175, %p176
      %p178 = pneg %p177
      // Predicated region
      $region63: #{utae_forward.17} parent=5 // pred_check
        _
      $region64: #{utae_forward.17} parent=5 // pred_check_branch
        %180 = sbr.rel (%p177) target = $region66
      $region65: #{utae_forward.17} parent=5 // pred_region
        %s181 = ssub.s32 %s9, 1
        %s182 = sand.u32 %s43, 1
        %s183 = sand.u32 %s43, 1
        %s184 = smul.addr %s183, 16
        %s185 = scalar_lea.vmem [#allocation2], %s184
        // Predicated region
        $region67: #{utae_forward.17} parent=65 // pred_check
          %p186 = pneg %p56
        $region68: #{utae_forward.17} parent=65 // pred_check_branch
          %188 = sbr.rel (%p186) target = $region70
        $region69: #{utae_forward.17} parent=65 // pred_region
          _
        $region70: #{utae_forward.17} parent=65 // pred_fallthru
          _
        %p189 = pneg %p30
        %p190 = pneg %p27
        %s191 = sand.u32 %s43, 1
        %s192 = sand.u32 %s43, 1
        %s193 = smul.addr %s192, 16
        %s194 = scalar_lea.vmem [#allocation2], %s193
        %p195 = pneg %p56
        %p196 = pneg %p53
        %p197 = pneg %p77
        %p198 = pneg %p74
        %p199 = pneg %p103
        %p200 = pneg %p100
        %s201 = sand.u32 %s90, 1
        %s202 = sand.u32 %s90, 1
        %s203 = smul.addr %s202, 32
        %s204 = scalar_lea.vmem [#allocation3], %s203
        %s205 = smul.u32 2, %s14
        %s206 = smul.u32 2, %s14
        %v208 = vld [vmem:[%s0] sm:$0xf]
        %v209 = vld [vmem:[%s0 + $0x4] sm:$0xf]
        %v210 = vld [vmem:[%s185] sm:$0xff]
        %v211 = vld [vmem:[%s185 + $0x8] sm:$0xff]
        %v212 = vld [vmem:[%s2] sm:$0xff]
        %v213 = vld [vmem:[%s2 + $0x8] sm:$0xff]
        %215 = vset.pattern.permute.xlu0 0
        %216 = vperm.xlu0 %215, %v212
        %v217 = vpop.permute.xlu0 %216
        %220 = vset.pattern.permute.xlu0 0
        %221 = vperm.xlu0 %220, %v213
        %v222 = vpop.permute.xlu0 %221
        %v226 = vunpack.c.l.b16 %v208
        %v227 = vunpack.c.l.b16 %v209
        %v228 = vpack.c.b16 %v227, %v226
        %v231 = vunpack.c.l.b16 %v210
        %v232 = vunpack.c.h.b16 %v210
        %v233 = vunpack.c.l.b16 %v211
        %v234 = vunpack.c.h.b16 %v211
        %v235 = vpack.c.b16 %v233, %v231
        %v236 = vpack.c.b16 %v234, %v232
        %vm239 = vcmask 130048
        %v241 = vsel %vm239, %v228, 0
        %243 = vmatpush.bf16.msra.mxu0 0
        %244 = vmatpush.bf16.msra.mxu0 0
        %245 = vmatpush.bf16.msra.mxu0 0
        %246 = vmatpush.bf16.msra.mxu0 0
        %247 = vmatpush.bf16.msra.mxu0 0
        %248 = vmatpush.bf16.msra.mxu0 0
        %249 = vmatpush.bf16.msra.mxu0 0
        %250 = vmatpush.bf16.msra.mxu0 %v235
        %251 = vmatmul.bf16.gmra.mxu0 %v241
        %v252 = vpop.f32.mrf.mxu0
        %v253 = vadd.f32 %v217, %v252
        %v254 = vpop.f32.mrf.mxu0
        %v255 = vadd.f32 %v222, %v254
        %256 = vdwg.mxu0
        %257 = vmatpush.bf16.msra.mxu0 0
        %258 = vmatpush.bf16.msra.mxu0 0
        %259 = vmatpush.bf16.msra.mxu0 0
        %260 = vmatpush.bf16.msra.mxu0 0
        %261 = vmatpush.bf16.msra.mxu0 0
        %262 = vmatpush.bf16.msra.mxu0 0
        %263 = vmatpush.bf16.msra.mxu0 0
        %264 = vmatpush.bf16.msra.mxu0 %v236
        %265 = vmatmul.bf16.gmra.mxu0 %v241
        %v266 = vpop.f32.mrf.mxu0
        %v267 = vadd.f32 %v217, %v266
        %v268 = vpop.f32.mrf.mxu0
        %v269 = vadd.f32 %v222, %v268
        %270 = vdwg.mxu0
        %v271 = vmax.f32 %v253, 0.0
        %v272 = vmax.f32 %v267, 0.0
        %v273 = vmax.f32 %v255, 0.0
        %v274 = vmax.f32 %v269, 0.0
        %275 = vst [vmem:[%s204] sm:$0xff] %v271
        %276 = vst [vmem:[%s204 + $0x8] sm:$0xff] %v272
        %277 = vst [vmem:[%s204 + $0x10] sm:$0xff] %v273
        %278 = vst [vmem:[%s204 + $0x18] sm:$0xff] %v274
        %s279 = sand.u32 %s90, 1
        %s280 = sand.u32 %s90, 1
        %s281 = smul.addr %s280, 32
        %s282 = scalar_lea.vmem [#allocation3], %s281
        // Predicated region
        $region71: #{utae_forward.17} parent=65 // pred_check
          %p283 = pneg %p100
        $region72: #{utae_forward.17} parent=65 // pred_check_branch
          %285 = sbr.rel (%p283) target = $region74
        $region73: #{utae_forward.17} parent=65 // pred_region
          %s286 = smul.u32 2, %s14
          %s287 = smul.addr %s286, 8
          %s288 = scalar_lea.vmem %s3, %s287
          // Predicated region
          $region75: #{utae_forward.17} parent=73 // pred_check
            _
          $region76: #{utae_forward.17} parent=73 // pred_check_branch
            %290 = sbr.rel (0) target = $region78
          $region77: #{utae_forward.17} parent=73 // pred_region
            // Predicated region
            $region79: #{utae_forward.17} parent=77 // pred_check
              _
            $region80: #{utae_forward.17} parent=77 // pred_check_branch
              %292 = sbr.rel (0) target = $region82
            $region81: #{utae_forward.17} parent=77 // pred_region
              loop: start=0, step=1, limit=1
              $region83: #{utae_forward.17} parent=81 // loop_pre_header
                _
              $region84: #{utae_forward.17} parent=81 // loop_header
                %s294 = sphi 0, %s298
                %p295 = scmp.ge.s32.totalorder %s294, 1
                %s299 = sphi %s282, %s282
                %s300 = sphi %s288, %s288
              $region85: #{utae_forward.17} parent=81 // loop_header_branch
                %297 = sbr.rel (%p295) target = $region89
              $region86: #{utae_forward.17} parent=81 // loop_body
                %v301 = vld [vmem:[%s299] sm:$0xff]
                %302 = vst [vmem:[%s300] sm:$0xff] %v301
                %v303 = vld [vmem:[%s299 + $0x8] sm:$0xff]
                %304 = vst [vmem:[%s300 + $0x8] sm:$0xff] %v303
                %v305 = vld [vmem:[%s299 + $0x10] sm:$0xff]
                %306 = vst [vmem:[%s300 + $0x20] sm:$0xff] %v305
                %v307 = vld [vmem:[%s299 + $0x18] sm:$0xff]
                %308 = vst [vmem:[%s300 + $0x28] sm:$0xff] %v307
              $region87: #{utae_forward.17} parent=81 // loop_footer
                %s298 = sadd.s32 1, %s294
              $region88: #{utae_forward.17} parent=81 // loop_footer_branch
                %293 = sbr.rel target = $region84
              $region89: #{utae_forward.17} parent=81 // loop_exit
                _
            $region82: #{utae_forward.17} parent=77 // pred_fallthru
              _
            // Predicated region
            $region90: #{utae_forward.17} parent=77 // pred_check
              _
            $region91: #{utae_forward.17} parent=77 // pred_check_branch
              %310 = sbr.rel target = $region93
            $region92: #{utae_forward.17} parent=77 // pred_region
              _
            $region93: #{utae_forward.17} parent=77 // pred_fallthru
              _
          $region78: #{utae_forward.17} parent=73 // pred_fallthru
            _
          %311 = vnop
        $region74: #{utae_forward.17} parent=65 // pred_fallthru
          _
      $region66: #{utae_forward.17} parent=5 // pred_fallthru
        _
      %p312 = scmp.le.s32.totalorder 2, %s9
      // Predicated region
      $region94: #{utae_forward.17} parent=5 // pred_check
        %p313 = pneg %p312
      $region95: #{utae_forward.17} parent=5 // pred_check_branch
        %315 = sbr.rel (%p313) target = $region97
      $region96: #{utae_forward.17} parent=5 // pred_region
        %s316 = ssub.s32 %s9, 2
        // Predicated region
        $region98: #{utae_forward.17} parent=96 // pred_check
          %p317 = pneg %p106
        $region99: #{utae_forward.17} parent=96 // pred_check_branch
          %319 = sbr.rel (%p317) target = $region101
        $region100: #{utae_forward.17} parent=96 // pred_region
          %s320 = sand.u32 %s91, 1
          %s321 = sand.u32 %s91, 1
          %s322 = smul.addr %s321, 32
          %s323 = scalar_lea.vmem [#allocation3], %s322
        $region101: #{utae_forward.17} parent=96 // pred_fallthru
          _
      $region97: #{utae_forward.17} parent=5 // pred_fallthru
        _
    $region6: #{utae_forward.17} parent=1 // loop_footer
      %s13 = sadd.s32 1, %s9
    $region7: #{utae_forward.17} parent=1 // loop_footer_branch
      %8 = sbr.rel target = $region3
    $region8: #{utae_forward.17} parent=1 // loop_exit
      _

// kernel: utae_forward.16
$region0: #{utae_forward.16}
  #allocation0 [shape = 'u32[]', space=smem, size = 0x4, offset = 0x4, fixed_abs, tag = 'smem constant byte address 0x4 - core index']
  #allocation1 [shape = 'u32[72,128]{1,0:T(1,128)}', space=vmem, size = 0x9000, scoped, tag = 'internal scratch']
  %s0 = inlined_call_operand.vmem [shape: bf16[64,32], index: 0, kind: input, shape index: {}]
  %s1 = inlined_call_operand.vmem [shape: bf16[32,128], index: 1, kind: input, shape index: {}]
  %s2 = inlined_call_operand.vmem [shape: f32[64,1], index: 2, kind: input, shape index: {}]
  %s3 = inlined_call_operand.vmem [shape: f32[64,128], index: 3, kind: output, shape index: {}]
  %s4 = sld [smem:[#allocation0]]
  $region22: #{utae_forward.16} parent=0
    _
  %s6 = ssub.s32 1, %s4
  %s7 = scalar_select 0, %s6, %s4
  // Predicated region
  $region2: #{utae_forward.16} parent=0 // pred_check
    _
  $region3: #{utae_forward.16} parent=0 // pred_check_branch
    %9 = sbr.rel (0) target = $region5
  $region4: #{utae_forward.16} parent=0 // pred_region
    _
  $region5: #{utae_forward.16} parent=0 // pred_fallthru
    _
  // Predicated region
  $region6: #{utae_forward.16} parent=0 // pred_check
    _
  $region7: #{utae_forward.16} parent=0 // pred_check_branch
    %11 = sbr.rel (0) target = $region9
  $region8: #{utae_forward.16} parent=0 // pred_region
    _
  $region9: #{utae_forward.16} parent=0 // pred_fallthru
    _
  // Predicated region
  $region10: #{utae_forward.16} parent=0 // pred_check
    _
  $region11: #{utae_forward.16} parent=0 // pred_check_branch
    %13 = sbr.rel (0) target = $region13
  $region12: #{utae_forward.16} parent=0 // pred_region
    _
  $region13: #{utae_forward.16} parent=0 // pred_fallthru
    _
  %v15 = vld [vmem:[%s0] sm:$0xf]
  %v16 = vld [vmem:[%s0 + $0x4] sm:$0xf]
  %v17 = vld [vmem:[%s0 + $0x8] sm:$0xf]
  %v18 = vld [vmem:[%s0 + $0xc] sm:$0xf]
  %v19 = vld [vmem:[%s0 + $0x10] sm:$0xf]
  %v20 = vld [vmem:[%s0 + $0x14] sm:$0xf]
  %v21 = vld [vmem:[%s0 + $0x18] sm:$0xf]
  %v22 = vld [vmem:[%s0 + $0x1c] sm:$0xf]
  %v23 = vld [vmem:[%s1] sm:$0xf]
  %v24 = vld [vmem:[%s1 + $0x4] sm:$0xf]
  %v25 = vld [vmem:[%s1 + $0x8] sm:$0xf]
  %v26 = vld [vmem:[%s1 + $0xc] sm:$0xf]
  %v27 = vld [vmem:[%s2] sm:$0xff]
  %v28 = vld [vmem:[%s2 + $0x8] sm:$0xff]
  %v29 = vld [vmem:[%s2 + $0x10] sm:$0xff]
  %v30 = vld [vmem:[%s2 + $0x18] sm:$0xff]
  %v31 = vld [vmem:[%s2 + $0x20] sm:$0xff]
  %v32 = vld [vmem:[%s2 + $0x28] sm:$0xff]
  %v33 = vld [vmem:[%s2 + $0x30] sm:$0xff]
  %v34 = vld [vmem:[%s2 + $0x38] sm:$0xff]
  %36 = vset.pattern.permute.xlu0 0
  %37 = vperm.xlu0 %36, %v27
  %v38 = vpop.permute.xlu0 %37
  %41 = vset.pattern.permute.xlu0 0
  %42 = vperm.xlu0 %41, %v28
  %v43 = vpop.permute.xlu0 %42
  %46 = vset.pattern.permute.xlu0 0
  %47 = vperm.xlu0 %46, %v29
  %v48 = vpop.permute.xlu0 %47
  %51 = vset.pattern.permute.xlu0 0
  %52 = vperm.xlu0 %51, %v30
  %v53 = vpop.permute.xlu0 %52
  %56 = vset.pattern.permute.xlu0 0
  %57 = vperm.xlu0 %56, %v31
  %v58 = vpop.permute.xlu0 %57
  %61 = vset.pattern.permute.xlu0 0
  %62 = vperm.xlu0 %61, %v32
  %v63 = vpop.permute.xlu0 %62
  %66 = vset.pattern.permute.xlu0 0
  %67 = vperm.xlu0 %66, %v33
  %v68 = vpop.permute.xlu0 %67
  %71 = vset.pattern.permute.xlu0 0
  %72 = vperm.xlu0 %71, %v34
  %v73 = vpop.permute.xlu0 %72
  %v83 = vunpack.c.l.b16 %v15
  %v84 = vunpack.c.l.b16 %v16
  %v85 = vunpack.c.l.b16 %v17
  %v86 = vunpack.c.l.b16 %v18
  %v87 = vunpack.c.l.b16 %v19
  %v88 = vunpack.c.l.b16 %v20
  %v89 = vunpack.c.l.b16 %v21
  %v90 = vunpack.c.l.b16 %v22
  %v91 = vpack.c.b16 %v84, %v83
  %v92 = vpack.c.b16 %v86, %v85
  %v93 = vpack.c.b16 %v88, %v87
  %v94 = vpack.c.b16 %v90, %v89
  %v99 = vunpack.c.l.b16 %v23
  %v100 = vunpack.c.l.b16 %v24
  %v101 = vunpack.c.l.b16 %v25
  %v102 = vunpack.c.l.b16 %v26
  %v103 = vpack.c.b16 %v100, %v99
  %v104 = vpack.c.b16 %v102, %v101
  %vm107 = vcmask 261120
  %v109 = vsel %vm107, %v91, 0
  %v112 = vsel %vm107, %v92, 0
  %v115 = vsel %vm107, %v93, 0
  %v118 = vsel %vm107, %v94, 0
  %120 = vmatpush.bf16.msra.mxu0 0
  %121 = vmatpush.bf16.msra.mxu0 0
  %122 = vmatpush.bf16.msra.mxu0 0
  %123 = vmatpush.bf16.msra.mxu0 0
  %124 = vmatpush.bf16.msra.mxu0 0
  %125 = vmatpush.bf16.msra.mxu0 0
  %126 = vmatpush.bf16.msra.mxu0 %v104
  %127 = vmatpush.bf16.msra.mxu0 %v103
  %128 = vmatmul.bf16.gmra.mxu0 %v109
  %v129 = vpop.f32.mrf.mxu0
  %v130 = vadd.f32 %v38, %v129
  %v131 = vpop.f32.mrf.mxu0
  %v132 = vadd.f32 %v43, %v131
  %133 = vmatmul.bf16.gmra.mxu0 %v112
  %v134 = vpop.f32.mrf.mxu0
  %v135 = vadd.f32 %v48, %v134
  %v136 = vpop.f32.mrf.mxu0
  %v137 = vadd.f32 %v53, %v136
  %138 = vmatmul.bf16.gmra.mxu0 %v115
  %v139 = vpop.f32.mrf.mxu0
  %v140 = vadd.f32 %v58, %v139
  %v141 = vpop.f32.mrf.mxu0
  %v142 = vadd.f32 %v63, %v141
  %143 = vmatmul.bf16.gmra.mxu0 %v118
  %v144 = vpop.f32.mrf.mxu0
  %v145 = vadd.f32 %v68, %v144
  %v146 = vpop.f32.mrf.mxu0
  %v147 = vadd.f32 %v73, %v146
  %148 = vdwg.mxu0
  %v149 = vmax.f32 %v130, 0.0
  %v150 = vmax.f32 %v132, 0.0
  %v151 = vmax.f32 %v135, 0.0
  %v152 = vmax.f32 %v137, 0.0
  %v153 = vmax.f32 %v140, 0.0
  %v154 = vmax.f32 %v142, 0.0
  %v155 = vmax.f32 %v145, 0.0
  %v156 = vmax.f32 %v147, 0.0
  %157 = vst [vmem:[%s3] sm:$0xff] %v149
  %158 = vst [vmem:[%s3 + $0x8] sm:$0xff] %v150
  %159 = vst [vmem:[%s3 + $0x10] sm:$0xff] %v151
  %160 = vst [vmem:[%s3 + $0x18] sm:$0xff] %v152
  %161 = vst [vmem:[%s3 + $0x20] sm:$0xff] %v153
  %162 = vst [vmem:[%s3 + $0x28] sm:$0xff] %v154
  %163 = vst [vmem:[%s3 + $0x30] sm:$0xff] %v155
  %164 = vst [vmem:[%s3 + $0x38] sm:$0xff] %v156
  // Predicated region
  $region14: #{utae_forward.16} parent=0 // pred_check
    _
  $region15: #{utae_forward.16} parent=0 // pred_check_branch
    %166 = sbr.rel (0) target = $region17
  $region16: #{utae_forward.16} parent=0 // pred_region
    _
  $region17: #{utae_forward.16} parent=0 // pred_fallthru
    _
  // Predicated region
  $region18: #{utae_forward.16} parent=0 // pred_check
    _
  $region19: #{utae_forward.16} parent=0 // pred_check_branch
    %168 = sbr.rel (0) target = $region21
  $region20: #{utae_forward.16} parent=0 // pred_region
    _
  $region21: #{utae_forward.16} parent=0 // pred_fallthru
    _

// kernel: utae_forward.18
$region0: #{utae_forward.18}
  #allocation0 [shape = 'u32[]', space=smem, size = 0x4, offset = 0x4, fixed_abs, tag = 'smem constant byte address 0x4 - core index']
  #allocation1 [shape = 'u32[72,128]{1,0:T(1,128)}', space=vmem, size = 0x9000, scoped, tag = 'internal scratch']
  %s0 = inlined_call_operand.vmem [shape: bf16[16,288], index: 0, kind: input, shape index: {}]
  %s1 = inlined_call_operand.vmem [shape: bf16[288,512], index: 1, kind: input, shape index: {}]
  %s2 = inlined_call_operand.vmem [shape: f32[16,1], index: 2, kind: input, shape index: {}]
  %s3 = inlined_call_operand.vmem [shape: f32[16,512], index: 3, kind: output, shape index: {}]
  %s4 = sld [smem:[#allocation0]]
  $region102: #{utae_forward.18} parent=0
    _
  %s6 = ssub.s32 1, %s4
  %s7 = scalar_select 0, %s6, %s4
  $region1: #{utae_forward.18} parent=0
    #allocation2 [shape = 'u8[294912]{0}', space=vmem, size = 0x48000, scoped, tag = 'input window, operand 1']
    #allocation3 [shape = 'u8[32768]{0}', space=vmem, size = 0x8000, scoped, tag = 'output window, operand 0']
    loop: start=0, step=1, limit=4
    $region2: #{utae_forward.18} parent=1 // loop_pre_header
      _
    $region3: #{utae_forward.18} parent=1 // loop_header
      %s9 = sphi 0, %s13
      %p10 = scmp.ge.s32.totalorder %s9, 4
      %s17 = sphi 0, %s17
      %s19 = sphi 0, %s17
      %s20 = sphi 0, %s19
      %s34 = sphi 0, %s20
      %s40 = sphi 0, %s42
      %s43 = sphi 0, %s40
      %s44 = sphi 0, %s43
      %s60 = sphi 0, %s44
      %s64 = sphi 0, %s64
      %s66 = sphi 0, %s64
      %s67 = sphi 0, %s66
      %s81 = sphi 0, %s67
      %s87 = sphi 0, %s89
      %s90 = sphi 0, %s87
      %s91 = sphi 0, %s90
      %s107 = sphi 0, %s91
    $region4: #{utae_forward.18} parent=1 // loop_header_branch
      %12 = sbr.rel (%p10) target = $region8
    $region5: #{utae_forward.18} parent=1 // loop_body
      %s14 = ssub.s32 %s9, 1
      %s15 = ssub.s32 %s9, 2
      %s16 = sadd.s32 %s9, 1
      %s18 = sadd.s32 %s17, 1
      %p21 = scmp.eq.s32.totalorder %s9, 1
      %p22 = scmp.ne.s32.totalorder %s17, %s19
      %p23 = scmp.eq.s32.totalorder %s9, 0
      %p24 = por %p22, %p23
      %p25 = scmp.ne.s32.totalorder %s17, %s19
      %p26 = scmp.eq.s32.totalorder %s14, 1
      %p27 = por %p25, %p26
      %p28 = scmp.ne.s32.totalorder %s19, %s20
      %p29 = scmp.eq.s32.totalorder %s14, 0
      %p30 = por %p28, %p29
      %p31 = scmp.ne.s32.totalorder %s19, %s20
      %p32 = scmp.eq.s32.totalorder %s15, 1
      %p33 = por %p31, %p32
      %p35 = scmp.ne.s32.totalorder %s20, %s34
      %p36 = scmp.eq.s32.totalorder %s15, 0
      %p37 = por %p35, %p36
      %s38 = ssub.s32 %s9, %s16
      %p39 = scmp.eq.s32.totalorder %s38, 0
      %s41 = sadd.s32 %s40, 1
      %s42 = scalar_select %p39, %s40, %s41
      %p45 = pneg %p39
      %p46 = scmp.eq.s32.totalorder %s9, 1
      %p47 = por %p45, %p46
      %p48 = scmp.ne.s32.totalorder %s40, %s43
      %p49 = scmp.eq.s32.totalorder %s9, 0
      %p50 = por %p48, %p49
      %p51 = scmp.ne.s32.totalorder %s40, %s43
      %p52 = scmp.eq.s32.totalorder %s14, 1
      %p53 = por %p51, %p52
      %p54 = scmp.ne.s32.totalorder %s43, %s44
      %p55 = scmp.eq.s32.totalorder %s14, 0
      %p56 = por %p54, %p55
      %p57 = scmp.ne.s32.totalorder %s43, %s44
      %p58 = scmp.eq.s32.totalorder %s15, 1
      %p59 = por %p57, %p58
      %p61 = scmp.ne.s32.totalorder %s44, %s60
      %p62 = scmp.eq.s32.totalorder %s15, 0
      %p63 = por %p61, %p62
      %s65 = sadd.s32 %s64, 1
      %p68 = scmp.eq.s32.totalorder %s9, 1
      %p69 = scmp.ne.s32.totalorder %s64, %s66
      %p70 = scmp.eq.s32.totalorder %s9, 0
      %p71 = por %p69, %p70
      %p72 = scmp.ne.s32.totalorder %s64, %s66
      %p73 = scmp.eq.s32.totalorder %s14, 1
      %p74 = por %p72, %p73
      %p75 = scmp.ne.s32.totalorder %s66, %s67
      %p76 = scmp.eq.s32.totalorder %s14, 0
      %p77 = por %p75, %p76
      %p78 = scmp.ne.s32.totalorder %s66, %s67
      %p79 = scmp.eq.s32.totalorder %s15, 1
      %p80 = por %p78, %p79
      %p82 = scmp.ne.s32.totalorder %s67, %s81
      %p83 = scmp.eq.s32.totalorder %s15, 0
      %p84 = por %p82, %p83
      %s85 = ssub.s32 %s9, %s16
      %p86 = scmp.eq.s32.totalorder %s85, 0
      %s88 = sadd.s32 %s87, 1
      %s89 = scalar_select %p86, %s87, %s88
      %p92 = pneg %p86
      %p93 = scmp.eq.s32.totalorder %s9, 1
      %p94 = por %p92, %p93
      %p95 = scmp.ne.s32.totalorder %s87, %s90
      %p96 = scmp.eq.s32.totalorder %s9, 0
      %p97 = por %p95, %p96
      %p98 = scmp.ne.s32.totalorder %s87, %s90
      %p99 = scmp.eq.s32.totalorder %s14, 1
      %p100 = por %p98, %p99
      %p101 = scmp.ne.s32.totalorder %s90, %s91
      %p102 = scmp.eq.s32.totalorder %s14, 0
      %p103 = por %p101, %p102
      %p104 = scmp.ne.s32.totalorder %s90, %s91
      %p105 = scmp.eq.s32.totalorder %s15, 1
      %p106 = por %p104, %p105
      %p108 = scmp.ne.s32.totalorder %s91, %s107
      %p109 = scmp.eq.s32.totalorder %s15, 0
      %p110 = por %p108, %p109
      %p111 = scmp.le.s32.totalorder 1, %s9
      %p112 = scmp.lt.s32.totalorder %s9, 3
      %p113 = pnand %p111, %p112
      %p114 = pneg %p113
      // Predicated region
      $region9: #{utae_forward.18} parent=5 // pred_check
        _
      $region10: #{utae_forward.18} parent=5 // pred_check_branch
        %116 = sbr.rel (%p113) target = $region12
      $region11: #{utae_forward.18} parent=5 // pred_region
        %s117 = ssub.s32 %s9, 1
        // Predicated region
        $region13: #{utae_forward.18} parent=11 // pred_check
          %p118 = pneg %p30
        $region14: #{utae_forward.18} parent=11 // pred_check_branch
          %120 = sbr.rel (%p118) target = $region16
        $region15: #{utae_forward.18} parent=11 // pred_region
          _
        $region16: #{utae_forward.18} parent=11 // pred_fallthru
          _
        // Predicated region
        $region17: #{utae_forward.18} parent=11 // pred_check
          %p121 = pneg %p77
        $region18: #{utae_forward.18} parent=11 // pred_check_branch
          %123 = sbr.rel (%p121) target = $region20
        $region19: #{utae_forward.18} parent=11 // pred_region
          _
        $region20: #{utae_forward.18} parent=11 // pred_fallthru
          _
      $region12: #{utae_forward.18} parent=5 // pred_fallthru
        _
      %p124 = scmp.lt.s32.totalorder %s9, 2
      // Predicated region
      $region21: #{utae_forward.18} parent=5 // pred_check
        %p125 = pneg %p124
      $region22: #{utae_forward.18} parent=5 // pred_check_branch
        %127 = sbr.rel (%p125) target = $region24
      $region23: #{utae_forward.18} parent=5 // pred_region
        // Predicated region
        $region25: #{utae_forward.18} parent=23 // pred_check
          %p128 = pneg %p50
        $region26: #{utae_forward.18} parent=23 // pred_check_branch
          %130 = sbr.rel (%p128) target = $region28
        $region27: #{utae_forward.18} parent=23 // pred_region
          %s131 = sand.u32 %s40, 1
          %s132 = sand.u32 %s40, 1
          %s133 = smul.addr %s132, 288
          %s134 = scalar_lea.vmem [#allocation2], %s133
          %s135 = smul.u32 2, %s9
          %s136 = smul.addr %s135, 4
          %s137 = scalar_lea.vmem %s1, %s136
          // Predicated region
          $region29: #{utae_forward.18} parent=27 // pred_check
            _
          $region30: #{utae_forward.18} parent=27 // pred_check_branch
            %139 = sbr.rel (0) target = $region32
          $region31: #{utae_forward.18} parent=27 // pred_region
            // Predicated region
            $region33: #{utae_forward.18} parent=31 // pred_check
              _
            $region34: #{utae_forward.18} parent=31 // pred_check_branch
              %141 = sbr.rel (0) target = $region36
            $region35: #{utae_forward.18} parent=31 // pred_region
              // Predicated region
              $region48: #{utae_forward.18} parent=35 // pred_check
                _
              $region49: #{utae_forward.18} parent=35 // pred_check_branch
                %227 = sbr.rel (0) target = $region51
              $region50: #{utae_forward.18} parent=35 // pred_region
                loop: start=0, step=1, limit=1
                $region52: #{utae_forward.18} parent=50 // loop_pre_header
                  _
                $region53: #{utae_forward.18} parent=50 // loop_header
                  %s229 = sphi 0, %s233
                  %p230 = scmp.ge.s32.totalorder %s229, 1
                  %s234 = sphi %s137, %s137
                  %s235 = sphi %s134, %s134
                $region54: #{utae_forward.18} parent=50 // loop_header_branch
                  %232 = sbr.rel (%p230) target = $region58
                $region55: #{utae_forward.18} parent=50 // loop_body
                  %v236 = vld [vmem:[%s234] sm:$0xff]
                  %237 = vst [vmem:[%s235] sm:$0xff] %v236
                  %v238 = vld [vmem:[%s234 + $0x10] sm:$0xff]
                  %239 = vst [vmem:[%s235 + $0x8] sm:$0xff] %v238
                  %v240 = vld [vmem:[%s234 + $0x20] sm:$0xff]
                  %241 = vst [vmem:[%s235 + $0x10] sm:$0xff] %v240
                  %v242 = vld [vmem:[%s234 + $0x30] sm:$0xff]
                  %243 = vst [vmem:[%s235 + $0x18] sm:$0xff] %v242
                  %v244 = vld [vmem:[%s234 + $0x40] sm:$0xff]
                  %245 = vst [vmem:[%s235 + $0x20] sm:$0xff] %v244
                  %v246 = vld [vmem:[%s234 + $0x50] sm:$0xff]
                  %247 = vst [vmem:[%s235 + $0x28] sm:$0xff] %v246
                  %v248 = vld [vmem:[%s234 + $0x60] sm:$0xff]
                  %249 = vst [vmem:[%s235 + $0x30] sm:$0xff] %v248
                  %v250 = vld [vmem:[%s234 + $0x70] sm:$0xff]
                  %251 = vst [vmem:[%s235 + $0x38] sm:$0xff] %v250
                  %v252 = vld [vmem:[%s234 + $0x80] sm:$0xff]
                  %253 = vst [vmem:[%s235 + $0x40] sm:$0xff] %v252
                  %v254 = vld [vmem:[%s234 + $0x90] sm:$0xff]
                  %255 = vst [vmem:[%s235 + $0x48] sm:$0xff] %v254
                  %v256 = vld [vmem:[%s234 + $0xa0] sm:$0xff]
                  %257 = vst [vmem:[%s235 + $0x50] sm:$0xff] %v256
                  %v258 = vld [vmem:[%s234 + $0xb0] sm:$0xff]
                  %259 = vst [vmem:[%s235 + $0x58] sm:$0xff] %v258
                  %v260 = vld [vmem:[%s234 + $0xc0] sm:$0xff]
                  %261 = vst [vmem:[%s235 + $0x60] sm:$0xff] %v260
                  %v262 = vld [vmem:[%s234 + $0xd0] sm:$0xff]
                  %263 = vst [vmem:[%s235 + $0x68] sm:$0xff] %v262
                  %v264 = vld [vmem:[%s234 + $0xe0] sm:$0xff]
                  %265 = vst [vmem:[%s235 + $0x70] sm:$0xff] %v264
                  %v266 = vld [vmem:[%s234 + $0xf0] sm:$0xff]
                  %267 = vst [vmem:[%s235 + $0x78] sm:$0xff] %v266
                  %v268 = vld [vmem:[%s234 + $0x100] sm:$0xff]
                  %269 = vst [vmem:[%s235 + $0x80] sm:$0xff] %v268
                  %v270 = vld [vmem:[%s234 + $0x110] sm:$0xff]
                  %271 = vst [vmem:[%s235 + $0x88] sm:$0xff] %v270
                  %v272 = vld [vmem:[%s234 + $0x120] sm:$0xff]
                  %273 = vst [vmem:[%s235 + $0x90] sm:$0xff] %v272
                  %v274 = vld [vmem:[%s234 + $0x130] sm:$0xff]
                  %275 = vst [vmem:[%s235 + $0x98] sm:$0xff] %v274
                  %v276 = vld [vmem:[%s234 + $0x140] sm:$0xff]
                  %277 = vst [vmem:[%s235 + $0xa0] sm:$0xff] %v276
                  %v278 = vld [vmem:[%s234 + $0x150] sm:$0xff]
                  %279 = vst [vmem:[%s235 + $0xa8] sm:$0xff] %v278
                  %v280 = vld [vmem:[%s234 + $0x160] sm:$0xff]
                  %281 = vst [vmem:[%s235 + $0xb0] sm:$0xff] %v280
                  %v282 = vld [vmem:[%s234 + $0x170] sm:$0xff]
                  %283 = vst [vmem:[%s235 + $0xb8] sm:$0xff] %v282
                  %v284 = vld [vmem:[%s234 + $0x180] sm:$0xff]
                  %285 = vst [vmem:[%s235 + $0xc0] sm:$0xff] %v284
                  %v286 = vld [vmem:[%s234 + $0x190] sm:$0xff]
                  %287 = vst [vmem:[%s235 + $0xc8] sm:$0xff] %v286
                  %v288 = vld [vmem:[%s234 + $0x1a0] sm:$0xff]
                  %289 = vst [vmem:[%s235 + $0xd0] sm:$0xff] %v288
                  %v290 = vld [vmem:[%s234 + $0x1b0] sm:$0xff]
                  %291 = vst [vmem:[%s235 + $0xd8] sm:$0xff] %v290
                  %v292 = vld [vmem:[%s234 + $0x1c0] sm:$0xff]
                  %293 = vst [vmem:[%s235 + $0xe0] sm:$0xff] %v292
                  %v294 = vld [vmem:[%s234 + $0x1d0] sm:$0xff]
                  %295 = vst [vmem:[%s235 + $0xe8] sm:$0xff] %v294
                  %v296 = vld [vmem:[%s234 + $0x1e0] sm:$0xff]
                  %297 = vst [vmem:[%s235 + $0xf0] sm:$0xff] %v296
                  %v298 = vld [vmem:[%s234 + $0x1f0] sm:$0xff]
                  %299 = vst [vmem:[%s235 + $0xf8] sm:$0xff] %v298
                  %v300 = vld [vmem:[%s234 + $0x200] sm:$0xff]
                  %301 = vst [vmem:[%s235 + $0x100] sm:$0xff] %v300
                  %v302 = vld [vmem:[%s234 + $0x210] sm:$0xff]
                  %303 = vst [vmem:[%s235 + $0x108] sm:$0xff] %v302
                  %v304 = vld [vmem:[%s234 + $0x220] sm:$0xff]
                  %305 = vst [vmem:[%s235 + $0x110] sm:$0xff] %v304
                  %v306 = vld [vmem:[%s234 + $0x230] sm:$0xff]
                  %307 = vst [vmem:[%s235 + $0x118] sm:$0xff] %v306
                $region56: #{utae_forward.18} parent=50 // loop_footer
                  %s233 = sadd.s32 1, %s229
                $region57: #{utae_forward.18} parent=50 // loop_footer_branch
                  %228 = sbr.rel target = $region53
                $region58: #{utae_forward.18} parent=50 // loop_exit
                  _
              $region51: #{utae_forward.18} parent=35 // pred_fallthru
                _
              // Predicated region
              $region59: #{utae_forward.18} parent=35 // pred_check
                _
              $region60: #{utae_forward.18} parent=35 // pred_check_branch
                %309 = sbr.rel target = $region62
              $region61: #{utae_forward.18} parent=35 // pred_region
                _
              $region62: #{utae_forward.18} parent=35 // pred_fallthru
                _
            $region36: #{utae_forward.18} parent=31 // pred_fallthru
              _
            // Predicated region
            $region37: #{utae_forward.18} parent=31 // pred_check
              _
            $region38: #{utae_forward.18} parent=31 // pred_check_branch
              %143 = sbr.rel target = $region40
            $region39: #{utae_forward.18} parent=31 // pred_region
              %s145 = ssub.s32 256, 1
              loop: start=0, step=1, limit=1
              $region41: #{utae_forward.18} parent=39 // loop_pre_header
                _
              $region42: #{utae_forward.18} parent=39 // loop_header
                %s147 = sphi 0, %s151
                %p148 = scmp.ge.s32.totalorder %s147, 1
                %s152 = sphi %s137, %s137
                %s153 = sphi %s134, %s134
              $region43: #{utae_forward.18} parent=39 // loop_header_branch
                %150 = sbr.rel (%p148) target = $region47
              $region44: #{utae_forward.18} parent=39 // loop_body
                %v154 = vld [vmem:[%s152] sm:%s145]
                %155 = vst [vmem:[%s153] sm:%s145] %v154
                %v156 = vld [vmem:[%s152 + $0x10] sm:%s145]
                %157 = vst [vmem:[%s153 + $0x8] sm:%s145] %v156
                %v158 = vld [vmem:[%s152 + $0x20] sm:%s145]
                %159 = vst [vmem:[%s153 + $0x10] sm:%s145] %v158
                %v160 = vld [vmem:[%s152 + $0x30] sm:%s145]
                %161 = vst [vmem:[%s153 + $0x18] sm:%s145] %v160
                %v162 = vld [vmem:[%s152 + $0x40] sm:%s145]
                %163 = vst [vmem:[%s153 + $0x20] sm:%s145] %v162
                %v164 = vld [vmem:[%s152 + $0x50] sm:%s145]
                %165 = vst [vmem:[%s153 + $0x28] sm:%s145] %v164
                %v166 = vld [vmem:[%s152 + $0x60] sm:%s145]
                %167 = vst [vmem:[%s153 + $0x30] sm:%s145] %v166
                %v168 = vld [vmem:[%s152 + $0x70] sm:%s145]
                %169 = vst [vmem:[%s153 + $0x38] sm:%s145] %v168
                %v170 = vld [vmem:[%s152 + $0x80] sm:%s145]
                %171 = vst [vmem:[%s153 + $0x40] sm:%s145] %v170
                %v172 = vld [vmem:[%s152 + $0x90] sm:%s145]
                %173 = vst [vmem:[%s153 + $0x48] sm:%s145] %v172
                %v174 = vld [vmem:[%s152 + $0xa0] sm:%s145]
                %175 = vst [vmem:[%s153 + $0x50] sm:%s145] %v174
                %v176 = vld [vmem:[%s152 + $0xb0] sm:%s145]
                %177 = vst [vmem:[%s153 + $0x58] sm:%s145] %v176
                %v178 = vld [vmem:[%s152 + $0xc0] sm:%s145]
                %179 = vst [vmem:[%s153 + $0x60] sm:%s145] %v178
                %v180 = vld [vmem:[%s152 + $0xd0] sm:%s145]
                %181 = vst [vmem:[%s153 + $0x68] sm:%s145] %v180
                %v182 = vld [vmem:[%s152 + $0xe0] sm:%s145]
                %183 = vst [vmem:[%s153 + $0x70] sm:%s145] %v182
                %v184 = vld [vmem:[%s152 + $0xf0] sm:%s145]
                %185 = vst [vmem:[%s153 + $0x78] sm:%s145] %v184
                %v186 = vld [vmem:[%s152 + $0x100] sm:%s145]
                %187 = vst [vmem:[%s153 + $0x80] sm:%s145] %v186
                %v188 = vld [vmem:[%s152 + $0x110] sm:%s145]
                %189 = vst [vmem:[%s153 + $0x88] sm:%s145] %v188
                %v190 = vld [vmem:[%s152 + $0x120] sm:%s145]
                %191 = vst [vmem:[%s153 + $0x90] sm:%s145] %v190
                %v192 = vld [vmem:[%s152 + $0x130] sm:%s145]
                %193 = vst [vmem:[%s153 + $0x98] sm:%s145] %v192
                %v194 = vld [vmem:[%s152 + $0x140] sm:%s145]
                %195 = vst [vmem:[%s153 + $0xa0] sm:%s145] %v194
                %v196 = vld [vmem:[%s152 + $0x150] sm:%s145]
                %197 = vst [vmem:[%s153 + $0xa8] sm:%s145] %v196
                %v198 = vld [vmem:[%s152 + $0x160] sm:%s145]
                %199 = vst [vmem:[%s153 + $0xb0] sm:%s145] %v198
                %v200 = vld [vmem:[%s152 + $0x170] sm:%s145]
                %201 = vst [vmem:[%s153 + $0xb8] sm:%s145] %v200
                %v202 = vld [vmem:[%s152 + $0x180] sm:%s145]
                %203 = vst [vmem:[%s153 + $0xc0] sm:%s145] %v202
                %v204 = vld [vmem:[%s152 + $0x190] sm:%s145]
                %205 = vst [vmem:[%s153 + $0xc8] sm:%s145] %v204
                %v206 = vld [vmem:[%s152 + $0x1a0] sm:%s145]
                %207 = vst [vmem:[%s153 + $0xd0] sm:%s145] %v206
                %v208 = vld [vmem:[%s152 + $0x1b0] sm:%s145]
                %209 = vst [vmem:[%s153 + $0xd8] sm:%s145] %v208
                %v210 = vld [vmem:[%s152 + $0x1c0] sm:%s145]
                %211 = vst [vmem:[%s153 + $0xe0] sm:%s145] %v210
                %v212 = vld [vmem:[%s152 + $0x1d0] sm:%s145]
                %213 = vst [vmem:[%s153 + $0xe8] sm:%s145] %v212
                %v214 = vld [vmem:[%s152 + $0x1e0] sm:%s145]
                %215 = vst [vmem:[%s153 + $0xf0] sm:%s145] %v214
                %v216 = vld [vmem:[%s152 + $0x1f0] sm:%s145]
                %217 = vst [vmem:[%s153 + $0xf8] sm:%s145] %v216
                %v218 = vld [vmem:[%s152 + $0x200] sm:%s145]
                %219 = vst [vmem:[%s153 + $0x100] sm:%s145] %v218
                %v220 = vld [vmem:[%s152 + $0x210] sm:%s145]
                %221 = vst [vmem:[%s153 + $0x108] sm:%s145] %v220
                %v222 = vld [vmem:[%s152 + $0x220] sm:%s145]
                %223 = vst [vmem:[%s153 + $0x110] sm:%s145] %v222
                %v224 = vld [vmem:[%s152 + $0x230] sm:%s145]
                %225 = vst [vmem:[%s153 + $0x118] sm:%s145] %v224
              $region45: #{utae_forward.18} parent=39 // loop_footer
                %s151 = sadd.s32 1, %s147
              $region46: #{utae_forward.18} parent=39 // loop_footer_branch
                %146 = sbr.rel target = $region42
              $region47: #{utae_forward.18} parent=39 // loop_exit
                _
            $region40: #{utae_forward.18} parent=31 // pred_fallthru
              _
          $region32: #{utae_forward.18} parent=27 // pred_fallthru
            _
          %310 = vnop
        $region28: #{utae_forward.18} parent=23 // pred_fallthru
          _
      $region24: #{utae_forward.18} parent=5 // pred_fallthru
        _
      %p311 = scmp.le.s32.totalorder 1, %s9
      %p312 = scmp.lt.s32.totalorder %s9, 3
      %p313 = pnand %p311, %p312
      %p314 = pneg %p313
      // Predicated region
      $region63: #{utae_forward.18} parent=5 // pred_check
        _
      $region64: #{utae_forward.18} parent=5 // pred_check_branch
        %316 = sbr.rel (%p313) target = $region66
      $region65: #{utae_forward.18} parent=5 // pred_region
        %s317 = ssub.s32 %s9, 1
        %s318 = sand.u32 %s43, 1
        %s319 = sand.u32 %s43, 1
        %s320 = smul.addr %s319, 288
        %s321 = scalar_lea.vmem [#allocation2], %s320
        // Predicated region
        $region67: #{utae_forward.18} parent=65 // pred_check
          %p322 = pneg %p56
        $region68: #{utae_forward.18} parent=65 // pred_check_branch
          %324 = sbr.rel (%p322) target = $region70
        $region69: #{utae_forward.18} parent=65 // pred_region
          _
        $region70: #{utae_forward.18} parent=65 // pred_fallthru
          _
        %p325 = pneg %p30
        %p326 = pneg %p27
        %s327 = sand.u32 %s43, 1
        %s328 = sand.u32 %s43, 1
        %s329 = smul.addr %s328, 288
        %s330 = scalar_lea.vmem [#allocation2], %s329
        %p331 = pneg %p56
        %p332 = pneg %p53
        %p333 = pneg %p77
        %p334 = pneg %p74
        %p335 = pneg %p103
        %p336 = pneg %p100
        %s337 = sand.u32 %s90, 1
        %s338 = sand.u32 %s90, 1
        %s339 = smul.addr %s338, 32
        %s340 = scalar_lea.vmem [#allocation3], %s339
        %s341 = smul.u32 2, %s14
        %s342 = smul.u32 2, %s14
        %v344 = vld [vmem:[%s0] sm:$0xff]
        %v345 = vld [vmem:[%s0 + $0x8] sm:$0xf]
        %v346 = vld [vmem:[%s0 + $0xc] sm:$0xff]
        %v347 = vld [vmem:[%s0 + $0x14] sm:$0xf]
        %v348 = vld [vmem:[%s321] sm:$0xff]
        %v349 = vld [vmem:[%s321 + $0x8] sm:$0xff]
        %v350 = vld [vmem:[%s321 + $0x10] sm:$0xff]
        %v351 = vld [vmem:[%s321 + $0x18] sm:$0xff]
        %v352 = vld [vmem:[%s321 + $0x20] sm:$0xff]
        %v353 = vld [vmem:[%s321 + $0x28] sm:$0xff]
        %v354 = vld [vmem:[%s321 + $0x30] sm:$0xff]
        %v355 = vld [vmem:[%s321 + $0x38] sm:$0xff]
        %v356 = vld [vmem:[%s321 + $0x40] sm:$0xff]
        %v357 = vld [vmem:[%s321 + $0x48] sm:$0xff]
        %v358 = vld [vmem:[%s321 + $0x50] sm:$0xff]
        %v359 = vld [vmem:[%s321 + $0x58] sm:$0xff]
        %v360 = vld [vmem:[%s321 + $0x60] sm:$0xff]
        %v361 = vld [vmem:[%s321 + $0x68] sm:$0xff]
        %v362 = vld [vmem:[%s321 + $0x70] sm:$0xff]
        %v363 = vld [vmem:[%s321 + $0x78] sm:$0xff]
        %v364 = vld [vmem:[%s321 + $0x80] sm:$0xff]
        %v365 = vld [vmem:[%s321 + $0x88] sm:$0xff]
        %v366 = vld [vmem:[%s321 + $0x90] sm:$0xff]
        %v367 = vld [vmem:[%s321 + $0x98] sm:$0xff]
        %v368 = vld [vmem:[%s321 + $0xa0] sm:$0xff]
        %v369 = vld [vmem:[%s321 + $0xa8] sm:$0xff]
        %v370 = vld [vmem:[%s321 + $0xb0] sm:$0xff]
        %v371 = vld [vmem:[%s321 + $0xb8] sm:$0xff]
        %v372 = vld [vmem:[%s321 + $0xc0] sm:$0xff]
        %v373 = vld [vmem:[%s321 + $0xc8] sm:$0xff]
        %v374 = vld [vmem:[%s321 + $0xd0] sm:$0xff]
        %v375 = vld [vmem:[%s321 + $0xd8] sm:$0xff]
        %v376 = vld [vmem:[%s321 + $0xe0] sm:$0xff]
        %v377 = vld [vmem:[%s321 + $0xe8] sm:$0xff]
        %v378 = vld [vmem:[%s321 + $0xf0] sm:$0xff]
        %v379 = vld [vmem:[%s321 + $0xf8] sm:$0xff]
        %v380 = vld [vmem:[%s321 + $0x100] sm:$0xff]
        %v381 = vld [vmem:[%s321 + $0x108] sm:$0xff]
        %v382 = vld [vmem:[%s321 + $0x110] sm:$0xff]
        %v383 = vld [vmem:[%s321 + $0x118] sm:$0xff]
        %v384 = vld [vmem:[%s2] sm:$0xff]
        %v385 = vld [vmem:[%s2 + $0x8] sm:$0xff]
        %387 = vset.pattern.permute.xlu0 0
        %388 = vperm.xlu0 %387, %v384
        %v389 = vpop.permute.xlu0 %388
        %392 = vset.pattern.permute.xlu0 0
        %393 = vperm.xlu0 %392, %v385
        %v394 = vpop.permute.xlu0 %393
        %v400 = vunpack.c.l.b16 %v344
        %v401 = vunpack.c.h.b16 %v344
        %v402 = vunpack.c.l.b16 %v345
        %v403 = vunpack.c.l.b16 %v346
        %v404 = vunpack.c.h.b16 %v346
        %v405 = vunpack.c.l.b16 %v347
        %v406 = vpack.c.b16 %v403, %v400
        %v407 = vpack.c.b16 %v404, %v401
        %v408 = vpack.c.b16 %v405, %v402
        %v447 = vunpack.c.l.b16 %v348
        %v448 = vunpack.c.h.b16 %v348
        %v449 = vunpack.c.l.b16 %v349
        %v450 = vunpack.c.h.b16 %v349
        %v451 = vunpack.c.l.b16 %v350
        %v452 = vunpack.c.h.b16 %v350
        %v453 = vunpack.c.l.b16 %v351
        %v454 = vunpack.c.h.b16 %v351
        %v455 = vunpack.c.l.b16 %v352
        %v456 = vunpack.c.h.b16 %v352
        %v457 = vunpack.c.l.b16 %v353
        %v458 = vunpack.c.h.b16 %v353
        %v459 = vunpack.c.l.b16 %v354
        %v460 = vunpack.c.h.b16 %v354
        %v461 = vunpack.c.l.b16 %v355
        %v462 = vunpack.c.h.b16 %v355
        %v463 = vunpack.c.l.b16 %v356
        %v464 = vunpack.c.h.b16 %v356
        %v465 = vunpack.c.l.b16 %v357
        %v466 = vunpack.c.h.b16 %v357
        %v467 = vunpack.c.l.b16 %v358
        %v468 = vunpack.c.h.b16 %v358
        %v469 = vunpack.c.l.b16 %v359
        %v470 = vunpack.c.h.b16 %v359
        %v471 = vunpack.c.l.b16 %v360
        %v472 = vunpack.c.h.b16 %v360
        %v473 = vunpack.c.l.b16 %v361
        %v474 = vunpack.c.h.b16 %v361
        %v475 = vunpack.c.l.b16 %v362
        %v476 = vunpack.c.h.b16 %v362
        %v477 = vunpack.c.l.b16 %v363
        %v478 = vunpack.c.h.b16 %v363
        %v479 = vunpack.c.l.b16 %v364
        %v480 = vunpack.c.h.b16 %v364
        %v481 = vunpack.c.l.b16 %v365
        %v482 = vunpack.c.h.b16 %v365
        %v483 = vunpack.c.l.b16 %v366
        %v484 = vunpack.c.h.b16 %v366
        %v485 = vunpack.c.l.b16 %v367
        %v486 = vunpack.c.h.b16 %v367
        %v487 = vunpack.c.l.b16 %v368
        %v488 = vunpack.c.h.b16 %v368
        %v489 = vunpack.c.l.b16 %v369
        %v490 = vunpack.c.h.b16 %v369
        %v491 = vunpack.c.l.b16 %v370
        %v492 = vunpack.c.h.b16 %v370
        %v493 = vunpack.c.l.b16 %v371
        %v494 = vunpack.c.h.b16 %v371
        %v495 = vunpack.c.l.b16 %v372
        %v496 = vunpack.c.h.b16 %v372
        %v497 = vunpack.c.l.b16 %v373
        %v498 = vunpack.c.h.b16 %v373
        %v499 = vunpack.c.l.b16 %v374
        %v500 = vunpack.c.h.b16 %v374
        %v501 = vunpack.c.l.b16 %v375
        %v502 = vunpack.c.h.b16 %v375
        %v503 = vunpack.c.l.b16 %v376
        %v504 = vunpack.c.h.b16 %v376
        %v505 = vunpack.c.l.b16 %v377
        %v506 = vunpack.c.h.b16 %v377
        %v507 = vunpack.c.l.b16 %v378
        %v508 = vunpack.c.h.b16 %v378
        %v509 = vunpack.c.l.b16 %v379
        %v510 = vunpack.c.h.b16 %v379
        %v511 = vunpack.c.l.b16 %v380
        %v512 = vunpack.c.h.b16 %v380
        %v513 = vunpack.c.l.b16 %v381
        %v514 = vunpack.c.h.b16 %v381
        %v515 = vunpack.c.l.b16 %v382
        %v516 = vunpack.c.h.b16 %v382
        %v517 = vunpack.c.l.b16 %v383
        %v518 = vunpack.c.h.b16 %v383
        %v519 = vpack.c.b16 %v449, %v447
        %v520 = vpack.c.b16 %v450, %v448
        %v521 = vpack.c.b16 %v453, %v451
        %v522 = vpack.c.b16 %v454, %v452
        %v523 = vpack.c.b16 %v457, %v455
        %v524 = vpack.c.b16 %v458, %v456
        %v525 = vpack.c.b16 %v461, %v459
        %v526 = vpack.c.b16 %v462, %v460
        %v527 = vpack.c.b16 %v465, %v463
        %v528 = vpack.c.b16 %v466, %v464
        %v529 = vpack.c.b16 %v469, %v467
        %v530 = vpack.c.b16 %v470, %v468
        %v531 = vpack.c.b16 %v473, %v471
        %v532 = vpack.c.b16 %v474, %v472
        %v533 = vpack.c.b16 %v477, %v475
        %v534 = vpack.c.b16 %v478, %v476
        %v535 = vpack.c.b16 %v481, %v479
        %v536 = vpack.c.b16 %v482, %v480
        %v537 = vpack.c.b16 %v485, %v483
        %v538 = vpack.c.b16 %v486, %v484
        %v539 = vpack.c.b16 %v489, %v487
        %v540 = vpack.c.b16 %v490, %v488
        %v541 = vpack.c.b16 %v493, %v491
        %v542 = vpack.c.b16 %v494, %v492
        %v543 = vpack.c.b16 %v497, %v495
        %v544 = vpack.c.b16 %v498, %v496
        %v545 = vpack.c.b16 %v501, %v499
        %v546 = vpack.c.b16 %v502, %v500
        %v547 = vpack.c.b16 %v505, %v503
        %v548 = vpack.c.b16 %v506, %v504
        %v549 = vpack.c.b16 %v509, %v507
        %v550 = vpack.c.b16 %v510, %v508
        %v551 = vpack.c.b16 %v513, %v511
        %v552 = vpack.c.b16 %v514, %v512
        %v553 = vpack.c.b16 %v517, %v515
        %v554 = vpack.c.b16 %v518, %v516
        %vm591 = vcmask 261120
        %v593 = vsel %vm591, %v408, 0
        %595 = vmatpush.bf16.msra.mxu0 %v533
        %596 = vmatpush.bf16.msra.mxu0 %v531
        %597 = vmatpush.bf16.msra.mxu0 %v529
        %598 = vmatpush.bf16.msra.mxu0 %v527
        %599 = vmatpush.bf16.msra.mxu0 %v525
        %600 = vmatpush.bf16.msra.mxu0 %v523
        %601 = vmatpush.bf16.msra.mxu0 %v521
        %602 = vmatpush.bf16.msra.mxu0 %v519
        %603 = vmatmul.bf16.gmra.mxu0 %v406
        %v604 = vpop.f32.mrf.mxu0
        %v605 = vadd.f32 %v389, %v604
        %v606 = vpop.f32.mrf.mxu0
        %v607 = vadd.f32 %v394, %v606
        %608 = vdwg.mxu0
        %609 = vmatpush.bf16.msra.mxu0 %v549
        %610 = vmatpush.bf16.msra.mxu0 %v547
        %611 = vmatpush.bf16.msra.mxu0 %v545
        %612 = vmatpush.bf16.msra.mxu0 %v543
        %613 = vmatpush.bf16.msra.mxu0 %v541
        %614 = vmatpush.bf16.msra.mxu0 %v539
        %615 = vmatpush.bf16.msra.mxu0 %v537
        %616 = vmatpush.bf16.msra.mxu0 %v535
        %617 = vmatmul.bf16.gmra.mxu0 %v407
        %v618 = vpop.f32.mrf.mxu0
        %v619 = vadd.f32 %v605, %v618
        %v620 = vpop.f32.mrf.mxu0
        %v621 = vadd.f32 %v607, %v620
        %622 = vdwg.mxu0
        %623 = vmatpush.bf16.msra.mxu0 0
        %624 = vmatpush.bf16.msra.mxu0 0
        %625 = vmatpush.bf16.msra.mxu0 0
        %626 = vmatpush.bf16.msra.mxu0 0
        %627 = vmatpush.bf16.msra.mxu0 0
        %628 = vmatpush.bf16.msra.mxu0 0
        %629 = vmatpush.bf16.msra.mxu0 %v553
        %630 = vmatpush.bf16.msra.mxu0 %v551
        %631 = vmatmul.bf16.gmra.mxu0 %v593
        %v632 = vpop.f32.mrf.mxu0
        %v633 = vadd.f32 %v619, %v632
        %v634 = vpop.f32.mrf.mxu0
        %v635 = vadd.f32 %v621, %v634
        %636 = vdwg.mxu0
        %637 = vmatpush.bf16.msra.mxu0 %v534
        %638 = vmatpush.bf16.msra.mxu0 %v532
        %639 = vmatpush.bf16.msra.mxu0 %v530
        %640 = vmatpush.bf16.msra.mxu0 %v528
        %641 = vmatpush.bf16.msra.mxu0 %v526
        %642 = vmatpush.bf16.msra.mxu0 %v524
        %643 = vmatpush.bf16.msra.mxu0 %v522
        %644 = vmatpush.bf16.msra.mxu0 %v520
        %645 = vmatmul.bf16.gmra.mxu0 %v406
        %v646 = vpop.f32.mrf.mxu0
        %v647 = vadd.f32 %v389, %v646
        %v648 = vpop.f32.mrf.mxu0
        %v649 = vadd.f32 %v394, %v648
        %650 = vdwg.mxu0
        %651 = vmatpush.bf16.msra.mxu0 %v550
        %652 = vmatpush.bf16.msra.mxu0 %v548
        %653 = vmatpush.bf16.msra.mxu0 %v546
        %654 = vmatpush.bf16.msra.mxu0 %v544
        %655 = vmatpush.bf16.msra.mxu0 %v542
        %656 = vmatpush.bf16.msra.mxu0 %v540
        %657 = vmatpush.bf16.msra.mxu0 %v538
        %658 = vmatpush.bf16.msra.mxu0 %v536
        %659 = vmatmul.bf16.gmra.mxu0 %v407
        %v660 = vpop.f32.mrf.mxu0
        %v661 = vadd.f32 %v647, %v660
        %v662 = vpop.f32.mrf.mxu0
        %v663 = vadd.f32 %v649, %v662
        %664 = vdwg.mxu0
        %665 = vmatpush.bf16.msra.mxu0 0
        %666 = vmatpush.bf16.msra.mxu0 0
        %667 = vmatpush.bf16.msra.mxu0 0
        %668 = vmatpush.bf16.msra.mxu0 0
        %669 = vmatpush.bf16.msra.mxu0 0
        %670 = vmatpush.bf16.msra.mxu0 0
        %671 = vmatpush.bf16.msra.mxu0 %v554
        %672 = vmatpush.bf16.msra.mxu0 %v552
        %673 = vmatmul.bf16.gmra.mxu0 %v593
        %v674 = vpop.f32.mrf.mxu0
        %v675 = vadd.f32 %v661, %v674
        %v676 = vpop.f32.mrf.mxu0
        %v677 = vadd.f32 %v663, %v676
        %678 = vdwg.mxu0
        %v679 = vmax.f32 %v633, 0.0
        %v680 = vmax.f32 %v675, 0.0
        %v681 = vmax.f32 %v635, 0.0
        %v682 = vmax.f32 %v677, 0.0
        %683 = vst [vmem:[%s340] sm:$0xff] %v679
        %684 = vst [vmem:[%s340 + $0x8] sm:$0xff] %v680
        %685 = vst [vmem:[%s340 + $0x10] sm:$0xff] %v681
        %686 = vst [vmem:[%s340 + $0x18] sm:$0xff] %v682
        %s687 = sand.u32 %s90, 1
        %s688 = sand.u32 %s90, 1
        %s689 = smul.addr %s688, 32
        %s690 = scalar_lea.vmem [#allocation3], %s689
        // Predicated region
        $region71: #{utae_forward.18} parent=65 // pred_check
          %p691 = pneg %p100
        $region72: #{utae_forward.18} parent=65 // pred_check_branch
          %693 = sbr.rel (%p691) target = $region74
        $region73: #{utae_forward.18} parent=65 // pred_region
          %s694 = smul.u32 2, %s14
          %s695 = smul.addr %s694, 8
          %s696 = scalar_lea.vmem %s3, %s695
          // Predicated region
          $region75: #{utae_forward.18} parent=73 // pred_check
            _
          $region76: #{utae_forward.18} parent=73 // pred_check_branch
            %698 = sbr.rel (0) target = $region78
          $region77: #{utae_forward.18} parent=73 // pred_region
            // Predicated region
            $region79: #{utae_forward.18} parent=77 // pred_check
              _
            $region80: #{utae_forward.18} parent=77 // pred_check_branch
              %700 = sbr.rel (0) target = $region82
            $region81: #{utae_forward.18} parent=77 // pred_region
              loop: start=0, step=1, limit=1
              $region83: #{utae_forward.18} parent=81 // loop_pre_header
                _
              $region84: #{utae_forward.18} parent=81 // loop_header
                %s702 = sphi 0, %s706
                %p703 = scmp.ge.s32.totalorder %s702, 1
                %s707 = sphi %s690, %s690
                %s708 = sphi %s696, %s696
              $region85: #{utae_forward.18} parent=81 // loop_header_branch
                %705 = sbr.rel (%p703) target = $region89
              $region86: #{utae_forward.18} parent=81 // loop_body
                %v709 = vld [vmem:[%s707] sm:$0xff]
                %710 = vst [vmem:[%s708] sm:$0xff] %v709
                %v711 = vld [vmem:[%s707 + $0x8] sm:$0xff]
                %712 = vst [vmem:[%s708 + $0x8] sm:$0xff] %v711
                %v713 = vld [vmem:[%s707 + $0x10] sm:$0xff]
                %714 = vst [vmem:[%s708 + $0x20] sm:$0xff] %v713
                %v715 = vld [vmem:[%s707 + $0x18] sm:$0xff]
                %716 = vst [vmem:[%s708 + $0x28] sm:$0xff] %v715
              $region87: #{utae_forward.18} parent=81 // loop_footer
                %s706 = sadd.s32 1, %s702
              $region88: #{utae_forward.18} parent=81 // loop_footer_branch
                %701 = sbr.rel target = $region84
              $region89: #{utae_forward.18} parent=81 // loop_exit
                _
            $region82: #{utae_forward.18} parent=77 // pred_fallthru
              _
            // Predicated region
            $region90: #{utae_forward.18} parent=77 // pred_check
              _
            $region91: #{utae_forward.18} parent=77 // pred_check_branch
              %718 = sbr.rel target = $region93
            $region92: #{utae_forward.18} parent=77 // pred_region
              _
            $region93: #{utae_forward.18} parent=77 // pred_fallthru
              _
          $region78: #{utae_forward.18} parent=73 // pred_fallthru
            _
          %719 = vnop
        $region74: #{utae_forward.18} parent=65 // pred_fallthru
          _
      $region66: #{utae_forward.18} parent=5 // pred_fallthru
        _
      %p720 = scmp.le.s32.totalorder 2, %s9
      // Predicated region
      $region94: #{utae_forward.18} parent=5 // pred_check
        %p721 = pneg %p720
      $region95: #{utae_forward.18} parent=5 // pred_check_branch
        %723 = sbr.rel (%p721) target = $region97
      $region96: #{utae_forward.18} parent=5 // pred_region
        %s724 = ssub.s32 %s9, 2
        // Predicated region
        $region98: #{utae_forward.18} parent=96 // pred_check
          %p725 = pneg %p106
        $region99: #{utae_forward.18} parent=96 // pred_check_branch
          %727 = sbr.rel (%p725) target = $region101
        $region100: #{utae_forward.18} parent=96 // pred_region
          %s728 = sand.u32 %s91, 1
          %s729 = sand.u32 %s91, 1
          %s730 = smul.addr %s729, 32
          %s731 = scalar_lea.vmem [#allocation3], %s730
        $region101: #{utae_forward.18} parent=96 // pred_fallthru
          _
      $region97: #{utae_forward.18} parent=5 // pred_fallthru
        _
    $region6: #{utae_forward.18} parent=1 // loop_footer
      %s13 = sadd.s32 1, %s9
    $region7: #{utae_forward.18} parent=1 // loop_footer_branch
      %8 = sbr.rel target = $region3
    $region8: #{utae_forward.18} parent=1 // loop_exit
      _

// kernel: utae_forward.19
$region0: #{utae_forward.19}
  #allocation0 [shape = 'u32[]', space=smem, size = 0x4, offset = 0x4, fixed_abs, tag = 'smem constant byte address 0x4 - core index']
  #allocation1 [shape = 'u32[72,128]{1,0:T(1,128)}', space=vmem, size = 0x9000, scoped, tag = 'internal scratch']
  %s0 = inlined_call_operand.vmem [shape: bf16[16,144], index: 0, kind: input, shape index: {}]
  %s1 = inlined_call_operand.vmem [shape: bf16[144,512], index: 1, kind: input, shape index: {}]
  %s2 = inlined_call_operand.vmem [shape: f32[16,1], index: 2, kind: input, shape index: {}]
  %s3 = inlined_call_operand.vmem [shape: f32[16,512], index: 3, kind: output, shape index: {}]
  %s4 = sld [smem:[#allocation0]]
  $region102: #{utae_forward.19} parent=0
    _
  %s6 = ssub.s32 1, %s4
  %s7 = scalar_select 0, %s6, %s4
  $region1: #{utae_forward.19} parent=0
    #allocation2 [shape = 'u8[147456]{0}', space=vmem, size = 0x24000, scoped, tag = 'input window, operand 1']
    #allocation3 [shape = 'u8[32768]{0}', space=vmem, size = 0x8000, scoped, tag = 'output window, operand 0']
    loop: start=0, step=1, limit=4
    $region2: #{utae_forward.19} parent=1 // loop_pre_header
      _
    $region3: #{utae_forward.19} parent=1 // loop_header
      %s9 = sphi 0, %s13
      %p10 = scmp.ge.s32.totalorder %s9, 4
      %s17 = sphi 0, %s17
      %s19 = sphi 0, %s17
      %s20 = sphi 0, %s19
      %s34 = sphi 0, %s20
      %s40 = sphi 0, %s42
      %s43 = sphi 0, %s40
      %s44 = sphi 0, %s43
      %s60 = sphi 0, %s44
      %s64 = sphi 0, %s64
      %s66 = sphi 0, %s64
      %s67 = sphi 0, %s66
      %s81 = sphi 0, %s67
      %s87 = sphi 0, %s89
      %s90 = sphi 0, %s87
      %s91 = sphi 0, %s90
      %s107 = sphi 0, %s91
    $region4: #{utae_forward.19} parent=1 // loop_header_branch
      %12 = sbr.rel (%p10) target = $region8
    $region5: #{utae_forward.19} parent=1 // loop_body
      %s14 = ssub.s32 %s9, 1
      %s15 = ssub.s32 %s9, 2
      %s16 = sadd.s32 %s9, 1
      %s18 = sadd.s32 %s17, 1
      %p21 = scmp.eq.s32.totalorder %s9, 1
      %p22 = scmp.ne.s32.totalorder %s17, %s19
      %p23 = scmp.eq.s32.totalorder %s9, 0
      %p24 = por %p22, %p23
      %p25 = scmp.ne.s32.totalorder %s17, %s19
      %p26 = scmp.eq.s32.totalorder %s14, 1
      %p27 = por %p25, %p26
      %p28 = scmp.ne.s32.totalorder %s19, %s20
      %p29 = scmp.eq.s32.totalorder %s14, 0
      %p30 = por %p28, %p29
      %p31 = scmp.ne.s32.totalorder %s19, %s20
      %p32 = scmp.eq.s32.totalorder %s15, 1
      %p33 = por %p31, %p32
      %p35 = scmp.ne.s32.totalorder %s20, %s34
      %p36 = scmp.eq.s32.totalorder %s15, 0
      %p37 = por %p35, %p36
      %s38 = ssub.s32 %s9, %s16
      %p39 = scmp.eq.s32.totalorder %s38, 0
      %s41 = sadd.s32 %s40, 1
      %s42 = scalar_select %p39, %s40, %s41
      %p45 = pneg %p39
      %p46 = scmp.eq.s32.totalorder %s9, 1
      %p47 = por %p45, %p46
      %p48 = scmp.ne.s32.totalorder %s40, %s43
      %p49 = scmp.eq.s32.totalorder %s9, 0
      %p50 = por %p48, %p49
      %p51 = scmp.ne.s32.totalorder %s40, %s43
      %p52 = scmp.eq.s32.totalorder %s14, 1
      %p53 = por %p51, %p52
      %p54 = scmp.ne.s32.totalorder %s43, %s44
      %p55 = scmp.eq.s32.totalorder %s14, 0
      %p56 = por %p54, %p55
      %p57 = scmp.ne.s32.totalorder %s43, %s44
      %p58 = scmp.eq.s32.totalorder %s15, 1
      %p59 = por %p57, %p58
      %p61 = scmp.ne.s32.totalorder %s44, %s60
      %p62 = scmp.eq.s32.totalorder %s15, 0
      %p63 = por %p61, %p62
      %s65 = sadd.s32 %s64, 1
      %p68 = scmp.eq.s32.totalorder %s9, 1
      %p69 = scmp.ne.s32.totalorder %s64, %s66
      %p70 = scmp.eq.s32.totalorder %s9, 0
      %p71 = por %p69, %p70
      %p72 = scmp.ne.s32.totalorder %s64, %s66
      %p73 = scmp.eq.s32.totalorder %s14, 1
      %p74 = por %p72, %p73
      %p75 = scmp.ne.s32.totalorder %s66, %s67
      %p76 = scmp.eq.s32.totalorder %s14, 0
      %p77 = por %p75, %p76
      %p78 = scmp.ne.s32.totalorder %s66, %s67
      %p79 = scmp.eq.s32.totalorder %s15, 1
      %p80 = por %p78, %p79
      %p82 = scmp.ne.s32.totalorder %s67, %s81
      %p83 = scmp.eq.s32.totalorder %s15, 0
      %p84 = por %p82, %p83
      %s85 = ssub.s32 %s9, %s16
      %p86 = scmp.eq.s32.totalorder %s85, 0
      %s88 = sadd.s32 %s87, 1
      %s89 = scalar_select %p86, %s87, %s88
      %p92 = pneg %p86
      %p93 = scmp.eq.s32.totalorder %s9, 1
      %p94 = por %p92, %p93
      %p95 = scmp.ne.s32.totalorder %s87, %s90
      %p96 = scmp.eq.s32.totalorder %s9, 0
      %p97 = por %p95, %p96
      %p98 = scmp.ne.s32.totalorder %s87, %s90
      %p99 = scmp.eq.s32.totalorder %s14, 1
      %p100 = por %p98, %p99
      %p101 = scmp.ne.s32.totalorder %s90, %s91
      %p102 = scmp.eq.s32.totalorder %s14, 0
      %p103 = por %p101, %p102
      %p104 = scmp.ne.s32.totalorder %s90, %s91
      %p105 = scmp.eq.s32.totalorder %s15, 1
      %p106 = por %p104, %p105
      %p108 = scmp.ne.s32.totalorder %s91, %s107
      %p109 = scmp.eq.s32.totalorder %s15, 0
      %p110 = por %p108, %p109
      %p111 = scmp.le.s32.totalorder 1, %s9
      %p112 = scmp.lt.s32.totalorder %s9, 3
      %p113 = pnand %p111, %p112
      %p114 = pneg %p113
      // Predicated region
      $region9: #{utae_forward.19} parent=5 // pred_check
        _
      $region10: #{utae_forward.19} parent=5 // pred_check_branch
        %116 = sbr.rel (%p113) target = $region12
      $region11: #{utae_forward.19} parent=5 // pred_region
        %s117 = ssub.s32 %s9, 1
        // Predicated region
        $region13: #{utae_forward.19} parent=11 // pred_check
          %p118 = pneg %p30
        $region14: #{utae_forward.19} parent=11 // pred_check_branch
          %120 = sbr.rel (%p118) target = $region16
        $region15: #{utae_forward.19} parent=11 // pred_region
          _
        $region16: #{utae_forward.19} parent=11 // pred_fallthru
          _
        // Predicated region
        $region17: #{utae_forward.19} parent=11 // pred_check
          %p121 = pneg %p77
        $region18: #{utae_forward.19} parent=11 // pred_check_branch
          %123 = sbr.rel (%p121) target = $region20
        $region19: #{utae_forward.19} parent=11 // pred_region
          _
        $region20: #{utae_forward.19} parent=11 // pred_fallthru
          _
      $region12: #{utae_forward.19} parent=5 // pred_fallthru
        _
      %p124 = scmp.lt.s32.totalorder %s9, 2
      // Predicated region
      $region21: #{utae_forward.19} parent=5 // pred_check
        %p125 = pneg %p124
      $region22: #{utae_forward.19} parent=5 // pred_check_branch
        %127 = sbr.rel (%p125) target = $region24
      $region23: #{utae_forward.19} parent=5 // pred_region
        // Predicated region
        $region25: #{utae_forward.19} parent=23 // pred_check
          %p128 = pneg %p50
        $region26: #{utae_forward.19} parent=23 // pred_check_branch
          %130 = sbr.rel (%p128) target = $region28
        $region27: #{utae_forward.19} parent=23 // pred_region
          %s131 = sand.u32 %s40, 1
          %s132 = sand.u32 %s40, 1
          %s133 = smul.addr %s132, 144
          %s134 = scalar_lea.vmem [#allocation2], %s133
          %s135 = smul.u32 2, %s9
          %s136 = smul.addr %s135, 4
          %s137 = scalar_lea.vmem %s1, %s136
          // Predicated region
          $region29: #{utae_forward.19} parent=27 // pred_check
            _
          $region30: #{utae_forward.19} parent=27 // pred_check_branch
            %139 = sbr.rel (0) target = $region32
          $region31: #{utae_forward.19} parent=27 // pred_region
            // Predicated region
            $region33: #{utae_forward.19} parent=31 // pred_check
              _
            $region34: #{utae_forward.19} parent=31 // pred_check_branch
              %141 = sbr.rel (0) target = $region36
            $region35: #{utae_forward.19} parent=31 // pred_region
              // Predicated region
              $region48: #{utae_forward.19} parent=35 // pred_check
                _
              $region49: #{utae_forward.19} parent=35 // pred_check_branch
                %191 = sbr.rel (0) target = $region51
              $region50: #{utae_forward.19} parent=35 // pred_region
                loop: start=0, step=1, limit=1
                $region52: #{utae_forward.19} parent=50 // loop_pre_header
                  _
                $region53: #{utae_forward.19} parent=50 // loop_header
                  %s193 = sphi 0, %s197
                  %p194 = scmp.ge.s32.totalorder %s193, 1
                  %s198 = sphi %s137, %s137
                  %s199 = sphi %s134, %s134
                $region54: #{utae_forward.19} parent=50 // loop_header_branch
                  %196 = sbr.rel (%p194) target = $region58
                $region55: #{utae_forward.19} parent=50 // loop_body
                  %v200 = vld [vmem:[%s198] sm:$0xff]
                  %201 = vst [vmem:[%s199] sm:$0xff] %v200
                  %v202 = vld [vmem:[%s198 + $0x10] sm:$0xff]
                  %203 = vst [vmem:[%s199 + $0x8] sm:$0xff] %v202
                  %v204 = vld [vmem:[%s198 + $0x20] sm:$0xff]
                  %205 = vst [vmem:[%s199 + $0x10] sm:$0xff] %v204
                  %v206 = vld [vmem:[%s198 + $0x30] sm:$0xff]
                  %207 = vst [vmem:[%s199 + $0x18] sm:$0xff] %v206
                  %v208 = vld [vmem:[%s198 + $0x40] sm:$0xff]
                  %209 = vst [vmem:[%s199 + $0x20] sm:$0xff] %v208
                  %v210 = vld [vmem:[%s198 + $0x50] sm:$0xff]
                  %211 = vst [vmem:[%s199 + $0x28] sm:$0xff] %v210
                  %v212 = vld [vmem:[%s198 + $0x60] sm:$0xff]
                  %213 = vst [vmem:[%s199 + $0x30] sm:$0xff] %v212
                  %v214 = vld [vmem:[%s198 + $0x70] sm:$0xff]
                  %215 = vst [vmem:[%s199 + $0x38] sm:$0xff] %v214
                  %v216 = vld [vmem:[%s198 + $0x80] sm:$0xff]
                  %217 = vst [vmem:[%s199 + $0x40] sm:$0xff] %v216
                  %v218 = vld [vmem:[%s198 + $0x90] sm:$0xff]
                  %219 = vst [vmem:[%s199 + $0x48] sm:$0xff] %v218
                  %v220 = vld [vmem:[%s198 + $0xa0] sm:$0xff]
                  %221 = vst [vmem:[%s199 + $0x50] sm:$0xff] %v220
                  %v222 = vld [vmem:[%s198 + $0xb0] sm:$0xff]
                  %223 = vst [vmem:[%s199 + $0x58] sm:$0xff] %v222
                  %v224 = vld [vmem:[%s198 + $0xc0] sm:$0xff]
                  %225 = vst [vmem:[%s199 + $0x60] sm:$0xff] %v224
                  %v226 = vld [vmem:[%s198 + $0xd0] sm:$0xff]
                  %227 = vst [vmem:[%s199 + $0x68] sm:$0xff] %v226
                  %v228 = vld [vmem:[%s198 + $0xe0] sm:$0xff]
                  %229 = vst [vmem:[%s199 + $0x70] sm:$0xff] %v228
                  %v230 = vld [vmem:[%s198 + $0xf0] sm:$0xff]
                  %231 = vst [vmem:[%s199 + $0x78] sm:$0xff] %v230
                  %v232 = vld [vmem:[%s198 + $0x100] sm:$0xff]
                  %233 = vst [vmem:[%s199 + $0x80] sm:$0xff] %v232
                  %v234 = vld [vmem:[%s198 + $0x110] sm:$0xff]
                  %235 = vst [vmem:[%s199 + $0x88] sm:$0xff] %v234
                $region56: #{utae_forward.19} parent=50 // loop_footer
                  %s197 = sadd.s32 1, %s193
                $region57: #{utae_forward.19} parent=50 // loop_footer_branch
                  %192 = sbr.rel target = $region53
                $region58: #{utae_forward.19} parent=50 // loop_exit
                  _
              $region51: #{utae_forward.19} parent=35 // pred_fallthru
                _
              // Predicated region
              $region59: #{utae_forward.19} parent=35 // pred_check
                _
              $region60: #{utae_forward.19} parent=35 // pred_check_branch
                %237 = sbr.rel target = $region62
              $region61: #{utae_forward.19} parent=35 // pred_region
                _
              $region62: #{utae_forward.19} parent=35 // pred_fallthru
                _
            $region36: #{utae_forward.19} parent=31 // pred_fallthru
              _
            // Predicated region
            $region37: #{utae_forward.19} parent=31 // pred_check
              _
            $region38: #{utae_forward.19} parent=31 // pred_check_branch
              %143 = sbr.rel target = $region40
            $region39: #{utae_forward.19} parent=31 // pred_region
              %s145 = ssub.s32 256, 1
              loop: start=0, step=1, limit=1
              $region41: #{utae_forward.19} parent=39 // loop_pre_header
                _
              $region42: #{utae_forward.19} parent=39 // loop_header
                %s147 = sphi 0, %s151
                %p148 = scmp.ge.s32.totalorder %s147, 1
                %s152 = sphi %s137, %s137
                %s153 = sphi %s134, %s134
              $region43: #{utae_forward.19} parent=39 // loop_header_branch
                %150 = sbr.rel (%p148) target = $region47
              $region44: #{utae_forward.19} parent=39 // loop_body
                %v154 = vld [vmem:[%s152] sm:%s145]
                %155 = vst [vmem:[%s153] sm:%s145] %v154
                %v156 = vld [vmem:[%s152 + $0x10] sm:%s145]
                %157 = vst [vmem:[%s153 + $0x8] sm:%s145] %v156
                %v158 = vld [vmem:[%s152 + $0x20] sm:%s145]
                %159 = vst [vmem:[%s153 + $0x10] sm:%s145] %v158
                %v160 = vld [vmem:[%s152 + $0x30] sm:%s145]
                %161 = vst [vmem:[%s153 + $0x18] sm:%s145] %v160
                %v162 = vld [vmem:[%s152 + $0x40] sm:%s145]
                %163 = vst [vmem:[%s153 + $0x20] sm:%s145] %v162
                %v164 = vld [vmem:[%s152 + $0x50] sm:%s145]
                %165 = vst [vmem:[%s153 + $0x28] sm:%s145] %v164
                %v166 = vld [vmem:[%s152 + $0x60] sm:%s145]
                %167 = vst [vmem:[%s153 + $0x30] sm:%s145] %v166
                %v168 = vld [vmem:[%s152 + $0x70] sm:%s145]
                %169 = vst [vmem:[%s153 + $0x38] sm:%s145] %v168
                %v170 = vld [vmem:[%s152 + $0x80] sm:%s145]
                %171 = vst [vmem:[%s153 + $0x40] sm:%s145] %v170
                %v172 = vld [vmem:[%s152 + $0x90] sm:%s145]
                %173 = vst [vmem:[%s153 + $0x48] sm:%s145] %v172
                %v174 = vld [vmem:[%s152 + $0xa0] sm:%s145]
                %175 = vst [vmem:[%s153 + $0x50] sm:%s145] %v174
                %v176 = vld [vmem:[%s152 + $0xb0] sm:%s145]
                %177 = vst [vmem:[%s153 + $0x58] sm:%s145] %v176
                %v178 = vld [vmem:[%s152 + $0xc0] sm:%s145]
                %179 = vst [vmem:[%s153 + $0x60] sm:%s145] %v178
                %v180 = vld [vmem:[%s152 + $0xd0] sm:%s145]
                %181 = vst [vmem:[%s153 + $0x68] sm:%s145] %v180
                %v182 = vld [vmem:[%s152 + $0xe0] sm:%s145]
                %183 = vst [vmem:[%s153 + $0x70] sm:%s145] %v182
                %v184 = vld [vmem:[%s152 + $0xf0] sm:%s145]
                %185 = vst [vmem:[%s153 + $0x78] sm:%s145] %v184
                %v186 = vld [vmem:[%s152 + $0x100] sm:%s145]
                %187 = vst [vmem:[%s153 + $0x80] sm:%s145] %v186
                %v188 = vld [vmem:[%s152 + $0x110] sm:%s145]
                %189 = vst [vmem:[%s153 + $0x88] sm:%s145] %v188
              $region45: #{utae_forward.19} parent=39 // loop_footer
                %s151 = sadd.s32 1, %s147
              $region46: #{utae_forward.19} parent=39 // loop_footer_branch
                %146 = sbr.rel target = $region42
              $region47: #{utae_forward.19} parent=39 // loop_exit
                _
            $region40: #{utae_forward.19} parent=31 // pred_fallthru
              _
          $region32: #{utae_forward.19} parent=27 // pred_fallthru
            _
          %238 = vnop
        $region28: #{utae_forward.19} parent=23 // pred_fallthru
          _
      $region24: #{utae_forward.19} parent=5 // pred_fallthru
        _
      %p239 = scmp.le.s32.totalorder 1, %s9
      %p240 = scmp.lt.s32.totalorder %s9, 3
      %p241 = pnand %p239, %p240
      %p242 = pneg %p241
      // Predicated region
      $region63: #{utae_forward.19} parent=5 // pred_check
        _
      $region64: #{utae_forward.19} parent=5 // pred_check_branch
        %244 = sbr.rel (%p241) target = $region66
      $region65: #{utae_forward.19} parent=5 // pred_region
        %s245 = ssub.s32 %s9, 1
        %s246 = sand.u32 %s43, 1
        %s247 = sand.u32 %s43, 1
        %s248 = smul.addr %s247, 144
        %s249 = scalar_lea.vmem [#allocation2], %s248
        // Predicated region
        $region67: #{utae_forward.19} parent=65 // pred_check
          %p250 = pneg %p56
        $region68: #{utae_forward.19} parent=65 // pred_check_branch
          %252 = sbr.rel (%p250) target = $region70
        $region69: #{utae_forward.19} parent=65 // pred_region
          _
        $region70: #{utae_forward.19} parent=65 // pred_fallthru
          _
        %p253 = pneg %p30
        %p254 = pneg %p27
        %s255 = sand.u32 %s43, 1
        %s256 = sand.u32 %s43, 1
        %s257 = smul.addr %s256, 144
        %s258 = scalar_lea.vmem [#allocation2], %s257
        %p259 = pneg %p56
        %p260 = pneg %p53
        %p261 = pneg %p77
        %p262 = pneg %p74
        %p263 = pneg %p103
        %p264 = pneg %p100
        %s265 = sand.u32 %s90, 1
        %s266 = sand.u32 %s90, 1
        %s267 = smul.addr %s266, 32
        %s268 = scalar_lea.vmem [#allocation3], %s267
        %s269 = smul.u32 2, %s14
        %s270 = smul.u32 2, %s14
        %v272 = vld [vmem:[%s0] sm:$0xff]
        %v273 = vld [vmem:[%s0 + $0x8] sm:$0xff]
        %v274 = vld [vmem:[%s249] sm:$0xff]
        %v275 = vld [vmem:[%s249 + $0x8] sm:$0xff]
        %v276 = vld [vmem:[%s249 + $0x10] sm:$0xff]
        %v277 = vld [vmem:[%s249 + $0x18] sm:$0xff]
        %v278 = vld [vmem:[%s249 + $0x20] sm:$0xff]
        %v279 = vld [vmem:[%s249 + $0x28] sm:$0xff]
        %v280 = vld [vmem:[%s249 + $0x30] sm:$0xff]
        %v281 = vld [vmem:[%s249 + $0x38] sm:$0xff]
        %v282 = vld [vmem:[%s249 + $0x40] sm:$0xff]
        %v283 = vld [vmem:[%s249 + $0x48] sm:$0xff]
        %v284 = vld [vmem:[%s249 + $0x50] sm:$0xff]
        %v285 = vld [vmem:[%s249 + $0x58] sm:$0xff]
        %v286 = vld [vmem:[%s249 + $0x60] sm:$0xff]
        %v287 = vld [vmem:[%s249 + $0x68] sm:$0xff]
        %v288 = vld [vmem:[%s249 + $0x70] sm:$0xff]
        %v289 = vld [vmem:[%s249 + $0x78] sm:$0xff]
        %v290 = vld [vmem:[%s249 + $0x80] sm:$0xff]
        %v291 = vld [vmem:[%s249 + $0x88] sm:$0xff]
        %v292 = vld [vmem:[%s2] sm:$0xff]
        %v293 = vld [vmem:[%s2 + $0x8] sm:$0xff]
        %295 = vset.pattern.permute.xlu0 0
        %296 = vperm.xlu0 %295, %v292
        %v297 = vpop.permute.xlu0 %296
        %300 = vset.pattern.permute.xlu0 0
        %301 = vperm.xlu0 %300, %v293
        %v302 = vpop.permute.xlu0 %301
        %v306 = vunpack.c.l.b16 %v272
        %v307 = vunpack.c.h.b16 %v272
        %v308 = vunpack.c.l.b16 %v273
        %v309 = vunpack.c.h.b16 %v273
        %v310 = vpack.c.b16 %v308, %v306
        %v311 = vpack.c.b16 %v309, %v307
        %v331 = vunpack.c.l.b16 %v274
        %v332 = vunpack.c.h.b16 %v274
        %v333 = vunpack.c.l.b16 %v275
        %v334 = vunpack.c.h.b16 %v275
        %v335 = vunpack.c.l.b16 %v276
        %v336 = vunpack.c.h.b16 %v276
        %v337 = vunpack.c.l.b16 %v277
        %v338 = vunpack.c.h.b16 %v277
        %v339 = vunpack.c.l.b16 %v278
        %v340 = vunpack.c.h.b16 %v278
        %v341 = vunpack.c.l.b16 %v279
        %v342 = vunpack.c.h.b16 %v279
        %v343 = vunpack.c.l.b16 %v280
        %v344 = vunpack.c.h.b16 %v280
        %v345 = vunpack.c.l.b16 %v281
        %v346 = vunpack.c.h.b16 %v281
        %v347 = vunpack.c.l.b16 %v282
        %v348 = vunpack.c.h.b16 %v282
        %v349 = vunpack.c.l.b16 %v283
        %v350 = vunpack.c.h.b16 %v283
        %v351 = vunpack.c.l.b16 %v284
        %v352 = vunpack.c.h.b16 %v284
        %v353 = vunpack.c.l.b16 %v285
        %v354 = vunpack.c.h.b16 %v285
        %v355 = vunpack.c.l.b16 %v286
        %v356 = vunpack.c.h.b16 %v286
        %v357 = vunpack.c.l.b16 %v287
        %v358 = vunpack.c.h.b16 %v287
        %v359 = vunpack.c.l.b16 %v288
        %v360 = vunpack.c.h.b16 %v288
        %v361 = vunpack.c.l.b16 %v289
        %v362 = vunpack.c.h.b16 %v289
        %v363 = vunpack.c.l.b16 %v290
        %v364 = vunpack.c.h.b16 %v290
        %v365 = vunpack.c.l.b16 %v291
        %v366 = vunpack.c.h.b16 %v291
        %v367 = vpack.c.b16 %v333, %v331
        %v368 = vpack.c.b16 %v334, %v332
        %v369 = vpack.c.b16 %v337, %v335
        %v370 = vpack.c.b16 %v338, %v336
        %v371 = vpack.c.b16 %v341, %v339
        %v372 = vpack.c.b16 %v342, %v340
        %v373 = vpack.c.b16 %v345, %v343
        %v374 = vpack.c.b16 %v346, %v344
        %v375 = vpack.c.b16 %v349, %v347
        %v376 = vpack.c.b16 %v350, %v348
        %v377 = vpack.c.b16 %v353, %v351
        %v378 = vpack.c.b16 %v354, %v352
        %v379 = vpack.c.b16 %v357, %v355
        %v380 = vpack.c.b16 %v358, %v356
        %v381 = vpack.c.b16 %v361, %v359
        %v382 = vpack.c.b16 %v362, %v360
        %v383 = vpack.c.b16 %v365, %v363
        %v384 = vpack.c.b16 %v366, %v364
        %vm403 = vcmask 130048
        %v405 = vsel %vm403, %v311, 0
        %407 = vmatpush.bf16.msra.mxu0 %v381
        %408 = vmatpush.bf16.msra.mxu0 %v379
        %409 = vmatpush.bf16.msra.mxu0 %v377
        %410 = vmatpush.bf16.msra.mxu0 %v375
        %411 = vmatpush.bf16.msra.mxu0 %v373
        %412 = vmatpush.bf16.msra.mxu0 %v371
        %413 = vmatpush.bf16.msra.mxu0 %v369
        %414 = vmatpush.bf16.msra.mxu0 %v367
        %415 = vmatmul.bf16.gmra.mxu0 %v310
        %v416 = vpop.f32.mrf.mxu0
        %v417 = vadd.f32 %v297, %v416
        %v418 = vpop.f32.mrf.mxu0
        %v419 = vadd.f32 %v302, %v418
        %420 = vdwg.mxu0
        %421 = vmatpush.bf16.msra.mxu0 0
        %422 = vmatpush.bf16.msra.mxu0 0
        %423 = vmatpush.bf16.msra.mxu0 0
        %424 = vmatpush.bf16.msra.mxu0 0
        %425 = vmatpush.bf16.msra.mxu0 0
        %426 = vmatpush.bf16.msra.mxu0 0
        %427 = vmatpush.bf16.msra.mxu0 0
        %428 = vmatpush.bf16.msra.mxu0 %v383
        %429 = vmatmul.bf16.gmra.mxu0 %v405
        %v430 = vpop.f32.mrf.mxu0
        %v431 = vadd.f32 %v417, %v430
        %v432 = vpop.f32.mrf.mxu0
        %v433 = vadd.f32 %v419, %v432
        %434 = vdwg.mxu0
        %435 = vmatpush.bf16.msra.mxu0 %v382
        %436 = vmatpush.bf16.msra.mxu0 %v380
        %437 = vmatpush.bf16.msra.mxu0 %v378
        %438 = vmatpush.bf16.msra.mxu0 %v376
        %439 = vmatpush.bf16.msra.mxu0 %v374
        %440 = vmatpush.bf16.msra.mxu0 %v372
        %441 = vmatpush.bf16.msra.mxu0 %v370
        %442 = vmatpush.bf16.msra.mxu0 %v368
        %443 = vmatmul.bf16.gmra.mxu0 %v310
        %v444 = vpop.f32.mrf.mxu0
        %v445 = vadd.f32 %v297, %v444
        %v446 = vpop.f32.mrf.mxu0
        %v447 = vadd.f32 %v302, %v446
        %448 = vdwg.mxu0
        %449 = vmatpush.bf16.msra.mxu0 0
        %450 = vmatpush.bf16.msra.mxu0 0
        %451 = vmatpush.bf16.msra.mxu0 0
        %452 = vmatpush.bf16.msra.mxu0 0
        %453 = vmatpush.bf16.msra.mxu0 0
        %454 = vmatpush.bf16.msra.mxu0 0
        %455 = vmatpush.bf16.msra.mxu0 0
        %456 = vmatpush.bf16.msra.mxu0 %v384
        %457 = vmatmul.bf16.gmra.mxu0 %v405
        %v458 = vpop.f32.mrf.mxu0
        %v459 = vadd.f32 %v445, %v458
        %v460 = vpop.f32.mrf.mxu0
        %v461 = vadd.f32 %v447, %v460
        %462 = vdwg.mxu0
        %v463 = vmax.f32 %v431, 0.0
        %v464 = vmax.f32 %v459, 0.0
        %v465 = vmax.f32 %v433, 0.0
        %v466 = vmax.f32 %v461, 0.0
        %467 = vst [vmem:[%s268] sm:$0xff] %v463
        %468 = vst [vmem:[%s268 + $0x8] sm:$0xff] %v464
        %469 = vst [vmem:[%s268 + $0x10] sm:$0xff] %v465
        %470 = vst [vmem:[%s268 + $0x18] sm:$0xff] %v466
        %s471 = sand.u32 %s90, 1
        %s472 = sand.u32 %s90, 1
        %s473 = smul.addr %s472, 32
        %s474 = scalar_lea.vmem [#allocation3], %s473
        // Predicated region
        $region71: #{utae_forward.19} parent=65 // pred_check
          %p475 = pneg %p100
        $region72: #{utae_forward.19} parent=65 // pred_check_branch
          %477 = sbr.rel (%p475) target = $region74
        $region73: #{utae_forward.19} parent=65 // pred_region
          %s478 = smul.u32 2, %s14
          %s479 = smul.addr %s478, 8
          %s480 = scalar_lea.vmem %s3, %s479
          // Predicated region
          $region75: #{utae_forward.19} parent=73 // pred_check
            _
          $region76: #{utae_forward.19} parent=73 // pred_check_branch
            %482 = sbr.rel (0) target = $region78
          $region77: #{utae_forward.19} parent=73 // pred_region
            // Predicated region
            $region79: #{utae_forward.19} parent=77 // pred_check
              _
            $region80: #{utae_forward.19} parent=77 // pred_check_branch
              %484 = sbr.rel (0) target = $region82
            $region81: #{utae_forward.19} parent=77 // pred_region
              loop: start=0, step=1, limit=1
              $region83: #{utae_forward.19} parent=81 // loop_pre_header
                _
              $region84: #{utae_forward.19} parent=81 // loop_header
                %s486 = sphi 0, %s490
                %p487 = scmp.ge.s32.totalorder %s486, 1
                %s491 = sphi %s474, %s474
                %s492 = sphi %s480, %s480
              $region85: #{utae_forward.19} parent=81 // loop_header_branch
                %489 = sbr.rel (%p487) target = $region89
              $region86: #{utae_forward.19} parent=81 // loop_body
                %v493 = vld [vmem:[%s491] sm:$0xff]
                %494 = vst [vmem:[%s492] sm:$0xff] %v493
                %v495 = vld [vmem:[%s491 + $0x8] sm:$0xff]
                %496 = vst [vmem:[%s492 + $0x8] sm:$0xff] %v495
                %v497 = vld [vmem:[%s491 + $0x10] sm:$0xff]
                %498 = vst [vmem:[%s492 + $0x20] sm:$0xff] %v497
                %v499 = vld [vmem:[%s491 + $0x18] sm:$0xff]
                %500 = vst [vmem:[%s492 + $0x28] sm:$0xff] %v499
              $region87: #{utae_forward.19} parent=81 // loop_footer
                %s490 = sadd.s32 1, %s486
              $region88: #{utae_forward.19} parent=81 // loop_footer_branch
                %485 = sbr.rel target = $region84
              $region89: #{utae_forward.19} parent=81 // loop_exit
                _
            $region82: #{utae_forward.19} parent=77 // pred_fallthru
              _
            // Predicated region
            $region90: #{utae_forward.19} parent=77 // pred_check
              _
            $region91: #{utae_forward.19} parent=77 // pred_check_branch
              %502 = sbr.rel target = $region93
            $region92: #{utae_forward.19} parent=77 // pred_region
              _
            $region93: #{utae_forward.19} parent=77 // pred_fallthru
              _
          $region78: #{utae_forward.19} parent=73 // pred_fallthru
            _
          %503 = vnop
        $region74: #{utae_forward.19} parent=65 // pred_fallthru
          _
      $region66: #{utae_forward.19} parent=5 // pred_fallthru
        _
      %p504 = scmp.le.s32.totalorder 2, %s9
      // Predicated region
      $region94: #{utae_forward.19} parent=5 // pred_check
        %p505 = pneg %p504
      $region95: #{utae_forward.19} parent=5 // pred_check_branch
        %507 = sbr.rel (%p505) target = $region97
      $region96: #{utae_forward.19} parent=5 // pred_region
        %s508 = ssub.s32 %s9, 2
        // Predicated region
        $region98: #{utae_forward.19} parent=96 // pred_check
          %p509 = pneg %p106
        $region99: #{utae_forward.19} parent=96 // pred_check_branch
          %511 = sbr.rel (%p509) target = $region101
        $region100: #{utae_forward.19} parent=96 // pred_region
          %s512 = sand.u32 %s91, 1
          %s513 = sand.u32 %s91, 1
          %s514 = smul.addr %s513, 32
          %s515 = scalar_lea.vmem [#allocation3], %s514
        $region101: #{utae_forward.19} parent=96 // pred_fallthru
          _
      $region97: #{utae_forward.19} parent=5 // pred_fallthru
        _
    $region6: #{utae_forward.19} parent=1 // loop_footer
      %s13 = sadd.s32 1, %s9
    $region7: #{utae_forward.19} parent=1 // loop_footer_branch
      %8 = sbr.rel target = $region3
    $region8: #{utae_forward.19} parent=1 // loop_exit
      _

// kernel: utae_forward.20
$region0: #{utae_forward.20}
  #allocation0 [shape = 'u32[]', space=smem, size = 0x4, offset = 0x4, fixed_abs, tag = 'smem constant byte address 0x4 - core index']
  #allocation1 [shape = 'u32[72,128]{1,0:T(1,128)}', space=vmem, size = 0x9000, scoped, tag = 'internal scratch']
  %s0 = inlined_call_operand.vmem [shape: bf16[8,144], index: 0, kind: input, shape index: {}]
  %s1 = inlined_call_operand.vmem [shape: bf16[144,512], index: 1, kind: input, shape index: {}]
  %s2 = inlined_call_operand.vmem [shape: f32[8,1], index: 2, kind: input, shape index: {}]
  %s3 = inlined_call_operand.vmem [shape: f32[8,512], index: 3, kind: output, shape index: {}]
  %s4 = sld [smem:[#allocation0]]
  $region83: #{utae_forward.20} parent=0
    _
  %s6 = ssub.s32 1, %s4
  %s7 = scalar_select 0, %s6, %s4
  $region1: #{utae_forward.20} parent=0
    #allocation2 [shape = 'u8[147456]{0}', space=vmem, size = 0x24000, scoped, tag = 'input window, operand 1']
    loop: start=0, step=1, limit=4
    $region2: #{utae_forward.20} parent=1 // loop_pre_header
      _
    $region3: #{utae_forward.20} parent=1 // loop_header
      %s9 = sphi 0, %s13
      %p10 = scmp.ge.s32.totalorder %s9, 4
      %s17 = sphi 0, %s17
      %s19 = sphi 0, %s17
      %s20 = sphi 0, %s19
      %s34 = sphi 0, %s20
      %s40 = sphi 0, %s42
      %s43 = sphi 0, %s40
      %s44 = sphi 0, %s43
      %s60 = sphi 0, %s44
      %s64 = sphi 0, %s64
      %s66 = sphi 0, %s64
      %s67 = sphi 0, %s66
      %s81 = sphi 0, %s67
      %s87 = sphi 0, %s89
      %s90 = sphi 0, %s87
      %s91 = sphi 0, %s90
      %s107 = sphi 0, %s91
    $region4: #{utae_forward.20} parent=1 // loop_header_branch
      %12 = sbr.rel (%p10) target = $region8
    $region5: #{utae_forward.20} parent=1 // loop_body
      %s14 = ssub.s32 %s9, 1
      %s15 = ssub.s32 %s9, 2
      %s16 = sadd.s32 %s9, 1
      %s18 = sadd.s32 %s17, 1
      %p21 = scmp.eq.s32.totalorder %s9, 1
      %p22 = scmp.ne.s32.totalorder %s17, %s19
      %p23 = scmp.eq.s32.totalorder %s9, 0
      %p24 = por %p22, %p23
      %p25 = scmp.ne.s32.totalorder %s17, %s19
      %p26 = scmp.eq.s32.totalorder %s14, 1
      %p27 = por %p25, %p26
      %p28 = scmp.ne.s32.totalorder %s19, %s20
      %p29 = scmp.eq.s32.totalorder %s14, 0
      %p30 = por %p28, %p29
      %p31 = scmp.ne.s32.totalorder %s19, %s20
      %p32 = scmp.eq.s32.totalorder %s15, 1
      %p33 = por %p31, %p32
      %p35 = scmp.ne.s32.totalorder %s20, %s34
      %p36 = scmp.eq.s32.totalorder %s15, 0
      %p37 = por %p35, %p36
      %s38 = ssub.s32 %s9, %s16
      %p39 = scmp.eq.s32.totalorder %s38, 0
      %s41 = sadd.s32 %s40, 1
      %s42 = scalar_select %p39, %s40, %s41
      %p45 = pneg %p39
      %p46 = scmp.eq.s32.totalorder %s9, 1
      %p47 = por %p45, %p46
      %p48 = scmp.ne.s32.totalorder %s40, %s43
      %p49 = scmp.eq.s32.totalorder %s9, 0
      %p50 = por %p48, %p49
      %p51 = scmp.ne.s32.totalorder %s40, %s43
      %p52 = scmp.eq.s32.totalorder %s14, 1
      %p53 = por %p51, %p52
      %p54 = scmp.ne.s32.totalorder %s43, %s44
      %p55 = scmp.eq.s32.totalorder %s14, 0
      %p56 = por %p54, %p55
      %p57 = scmp.ne.s32.totalorder %s43, %s44
      %p58 = scmp.eq.s32.totalorder %s15, 1
      %p59 = por %p57, %p58
      %p61 = scmp.ne.s32.totalorder %s44, %s60
      %p62 = scmp.eq.s32.totalorder %s15, 0
      %p63 = por %p61, %p62
      %s65 = sadd.s32 %s64, 1
      %p68 = scmp.eq.s32.totalorder %s9, 1
      %p69 = scmp.ne.s32.totalorder %s64, %s66
      %p70 = scmp.eq.s32.totalorder %s9, 0
      %p71 = por %p69, %p70
      %p72 = scmp.ne.s32.totalorder %s64, %s66
      %p73 = scmp.eq.s32.totalorder %s14, 1
      %p74 = por %p72, %p73
      %p75 = scmp.ne.s32.totalorder %s66, %s67
      %p76 = scmp.eq.s32.totalorder %s14, 0
      %p77 = por %p75, %p76
      %p78 = scmp.ne.s32.totalorder %s66, %s67
      %p79 = scmp.eq.s32.totalorder %s15, 1
      %p80 = por %p78, %p79
      %p82 = scmp.ne.s32.totalorder %s67, %s81
      %p83 = scmp.eq.s32.totalorder %s15, 0
      %p84 = por %p82, %p83
      %s85 = ssub.s32 %s9, %s16
      %p86 = scmp.eq.s32.totalorder %s85, 0
      %s88 = sadd.s32 %s87, 1
      %s89 = scalar_select %p86, %s87, %s88
      %p92 = pneg %p86
      %p93 = scmp.eq.s32.totalorder %s9, 1
      %p94 = por %p92, %p93
      %p95 = scmp.ne.s32.totalorder %s87, %s90
      %p96 = scmp.eq.s32.totalorder %s9, 0
      %p97 = por %p95, %p96
      %p98 = scmp.ne.s32.totalorder %s87, %s90
      %p99 = scmp.eq.s32.totalorder %s14, 1
      %p100 = por %p98, %p99
      %p101 = scmp.ne.s32.totalorder %s90, %s91
      %p102 = scmp.eq.s32.totalorder %s14, 0
      %p103 = por %p101, %p102
      %p104 = scmp.ne.s32.totalorder %s90, %s91
      %p105 = scmp.eq.s32.totalorder %s15, 1
      %p106 = por %p104, %p105
      %p108 = scmp.ne.s32.totalorder %s91, %s107
      %p109 = scmp.eq.s32.totalorder %s15, 0
      %p110 = por %p108, %p109
      %p111 = scmp.le.s32.totalorder 1, %s9
      %p112 = scmp.lt.s32.totalorder %s9, 3
      %p113 = pnand %p111, %p112
      %p114 = pneg %p113
      // Predicated region
      $region9: #{utae_forward.20} parent=5 // pred_check
        _
      $region10: #{utae_forward.20} parent=5 // pred_check_branch
        %116 = sbr.rel (%p113) target = $region12
      $region11: #{utae_forward.20} parent=5 // pred_region
        %s117 = ssub.s32 %s9, 1
        // Predicated region
        $region13: #{utae_forward.20} parent=11 // pred_check
          %p118 = pneg %p30
        $region14: #{utae_forward.20} parent=11 // pred_check_branch
          %120 = sbr.rel (%p118) target = $region16
        $region15: #{utae_forward.20} parent=11 // pred_region
          _
        $region16: #{utae_forward.20} parent=11 // pred_fallthru
          _
        // Predicated region
        $region17: #{utae_forward.20} parent=11 // pred_check
          %p121 = pneg %p77
        $region18: #{utae_forward.20} parent=11 // pred_check_branch
          %123 = sbr.rel (%p121) target = $region20
        $region19: #{utae_forward.20} parent=11 // pred_region
          _
        $region20: #{utae_forward.20} parent=11 // pred_fallthru
          _
      $region12: #{utae_forward.20} parent=5 // pred_fallthru
        _
      %p124 = scmp.lt.s32.totalorder %s9, 2
      // Predicated region
      $region21: #{utae_forward.20} parent=5 // pred_check
        %p125 = pneg %p124
      $region22: #{utae_forward.20} parent=5 // pred_check_branch
        %127 = sbr.rel (%p125) target = $region24
      $region23: #{utae_forward.20} parent=5 // pred_region
        // Predicated region
        $region25: #{utae_forward.20} parent=23 // pred_check
          %p128 = pneg %p50
        $region26: #{utae_forward.20} parent=23 // pred_check_branch
          %130 = sbr.rel (%p128) target = $region28
        $region27: #{utae_forward.20} parent=23 // pred_region
          %s131 = sand.u32 %s40, 1
          %s132 = sand.u32 %s40, 1
          %s133 = smul.addr %s132, 144
          %s134 = scalar_lea.vmem [#allocation2], %s133
          %s135 = smul.u32 2, %s9
          %s136 = smul.addr %s135, 4
          %s137 = scalar_lea.vmem %s1, %s136
          // Predicated region
          $region29: #{utae_forward.20} parent=27 // pred_check
            _
          $region30: #{utae_forward.20} parent=27 // pred_check_branch
            %139 = sbr.rel (0) target = $region32
          $region31: #{utae_forward.20} parent=27 // pred_region
            // Predicated region
            $region33: #{utae_forward.20} parent=31 // pred_check
              _
            $region34: #{utae_forward.20} parent=31 // pred_check_branch
              %141 = sbr.rel (0) target = $region36
            $region35: #{utae_forward.20} parent=31 // pred_region
              // Predicated region
              $region48: #{utae_forward.20} parent=35 // pred_check
                _
              $region49: #{utae_forward.20} parent=35 // pred_check_branch
                %191 = sbr.rel (0) target = $region51
              $region50: #{utae_forward.20} parent=35 // pred_region
                loop: start=0, step=1, limit=1
                $region52: #{utae_forward.20} parent=50 // loop_pre_header
                  _
                $region53: #{utae_forward.20} parent=50 // loop_header
                  %s193 = sphi 0, %s197
                  %p194 = scmp.ge.s32.totalorder %s193, 1
                  %s198 = sphi %s137, %s137
                  %s199 = sphi %s134, %s134
                $region54: #{utae_forward.20} parent=50 // loop_header_branch
                  %196 = sbr.rel (%p194) target = $region58
                $region55: #{utae_forward.20} parent=50 // loop_body
                  %v200 = vld [vmem:[%s198] sm:$0xff]
                  %201 = vst [vmem:[%s199] sm:$0xff] %v200
                  %v202 = vld [vmem:[%s198 + $0x10] sm:$0xff]
                  %203 = vst [vmem:[%s199 + $0x8] sm:$0xff] %v202
                  %v204 = vld [vmem:[%s198 + $0x20] sm:$0xff]
                  %205 = vst [vmem:[%s199 + $0x10] sm:$0xff] %v204
                  %v206 = vld [vmem:[%s198 + $0x30] sm:$0xff]
                  %207 = vst [vmem:[%s199 + $0x18] sm:$0xff] %v206
                  %v208 = vld [vmem:[%s198 + $0x40] sm:$0xff]
                  %209 = vst [vmem:[%s199 + $0x20] sm:$0xff] %v208
                  %v210 = vld [vmem:[%s198 + $0x50] sm:$0xff]
                  %211 = vst [vmem:[%s199 + $0x28] sm:$0xff] %v210
                  %v212 = vld [vmem:[%s198 + $0x60] sm:$0xff]
                  %213 = vst [vmem:[%s199 + $0x30] sm:$0xff] %v212
                  %v214 = vld [vmem:[%s198 + $0x70] sm:$0xff]
                  %215 = vst [vmem:[%s199 + $0x38] sm:$0xff] %v214
                  %v216 = vld [vmem:[%s198 + $0x80] sm:$0xff]
                  %217 = vst [vmem:[%s199 + $0x40] sm:$0xff] %v216
                  %v218 = vld [vmem:[%s198 + $0x90] sm:$0xff]
                  %219 = vst [vmem:[%s199 + $0x48] sm:$0xff] %v218
                  %v220 = vld [vmem:[%s198 + $0xa0] sm:$0xff]
                  %221 = vst [vmem:[%s199 + $0x50] sm:$0xff] %v220
                  %v222 = vld [vmem:[%s198 + $0xb0] sm:$0xff]
                  %223 = vst [vmem:[%s199 + $0x58] sm:$0xff] %v222
                  %v224 = vld [vmem:[%s198 + $0xc0] sm:$0xff]
                  %225 = vst [vmem:[%s199 + $0x60] sm:$0xff] %v224
                  %v226 = vld [vmem:[%s198 + $0xd0] sm:$0xff]
                  %227 = vst [vmem:[%s199 + $0x68] sm:$0xff] %v226
                  %v228 = vld [vmem:[%s198 + $0xe0] sm:$0xff]
                  %229 = vst [vmem:[%s199 + $0x70] sm:$0xff] %v228
                  %v230 = vld [vmem:[%s198 + $0xf0] sm:$0xff]
                  %231 = vst [vmem:[%s199 + $0x78] sm:$0xff] %v230
                  %v232 = vld [vmem:[%s198 + $0x100] sm:$0xff]
                  %233 = vst [vmem:[%s199 + $0x80] sm:$0xff] %v232
                  %v234 = vld [vmem:[%s198 + $0x110] sm:$0xff]
                  %235 = vst [vmem:[%s199 + $0x88] sm:$0xff] %v234
                $region56: #{utae_forward.20} parent=50 // loop_footer
                  %s197 = sadd.s32 1, %s193
                $region57: #{utae_forward.20} parent=50 // loop_footer_branch
                  %192 = sbr.rel target = $region53
                $region58: #{utae_forward.20} parent=50 // loop_exit
                  _
              $region51: #{utae_forward.20} parent=35 // pred_fallthru
                _
              // Predicated region
              $region59: #{utae_forward.20} parent=35 // pred_check
                _
              $region60: #{utae_forward.20} parent=35 // pred_check_branch
                %237 = sbr.rel target = $region62
              $region61: #{utae_forward.20} parent=35 // pred_region
                _
              $region62: #{utae_forward.20} parent=35 // pred_fallthru
                _
            $region36: #{utae_forward.20} parent=31 // pred_fallthru
              _
            // Predicated region
            $region37: #{utae_forward.20} parent=31 // pred_check
              _
            $region38: #{utae_forward.20} parent=31 // pred_check_branch
              %143 = sbr.rel target = $region40
            $region39: #{utae_forward.20} parent=31 // pred_region
              %s145 = ssub.s32 256, 1
              loop: start=0, step=1, limit=1
              $region41: #{utae_forward.20} parent=39 // loop_pre_header
                _
              $region42: #{utae_forward.20} parent=39 // loop_header
                %s147 = sphi 0, %s151
                %p148 = scmp.ge.s32.totalorder %s147, 1
                %s152 = sphi %s137, %s137
                %s153 = sphi %s134, %s134
              $region43: #{utae_forward.20} parent=39 // loop_header_branch
                %150 = sbr.rel (%p148) target = $region47
              $region44: #{utae_forward.20} parent=39 // loop_body
                %v154 = vld [vmem:[%s152] sm:%s145]
                %155 = vst [vmem:[%s153] sm:%s145] %v154
                %v156 = vld [vmem:[%s152 + $0x10] sm:%s145]
                %157 = vst [vmem:[%s153 + $0x8] sm:%s145] %v156
                %v158 = vld [vmem:[%s152 + $0x20] sm:%s145]
                %159 = vst [vmem:[%s153 + $0x10] sm:%s145] %v158
                %v160 = vld [vmem:[%s152 + $0x30] sm:%s145]
                %161 = vst [vmem:[%s153 + $0x18] sm:%s145] %v160
                %v162 = vld [vmem:[%s152 + $0x40] sm:%s145]
                %163 = vst [vmem:[%s153 + $0x20] sm:%s145] %v162
                %v164 = vld [vmem:[%s152 + $0x50] sm:%s145]
                %165 = vst [vmem:[%s153 + $0x28] sm:%s145] %v164
                %v166 = vld [vmem:[%s152 + $0x60] sm:%s145]
                %167 = vst [vmem:[%s153 + $0x30] sm:%s145] %v166
                %v168 = vld [vmem:[%s152 + $0x70] sm:%s145]
                %169 = vst [vmem:[%s153 + $0x38] sm:%s145] %v168
                %v170 = vld [vmem:[%s152 + $0x80] sm:%s145]
                %171 = vst [vmem:[%s153 + $0x40] sm:%s145] %v170
                %v172 = vld [vmem:[%s152 + $0x90] sm:%s145]
                %173 = vst [vmem:[%s153 + $0x48] sm:%s145] %v172
                %v174 = vld [vmem:[%s152 + $0xa0] sm:%s145]
                %175 = vst [vmem:[%s153 + $0x50] sm:%s145] %v174
                %v176 = vld [vmem:[%s152 + $0xb0] sm:%s145]
                %177 = vst [vmem:[%s153 + $0x58] sm:%s145] %v176
                %v178 = vld [vmem:[%s152 + $0xc0] sm:%s145]
                %179 = vst [vmem:[%s153 + $0x60] sm:%s145] %v178
                %v180 = vld [vmem:[%s152 + $0xd0] sm:%s145]
                %181 = vst [vmem:[%s153 + $0x68] sm:%s145] %v180
                %v182 = vld [vmem:[%s152 + $0xe0] sm:%s145]
                %183 = vst [vmem:[%s153 + $0x70] sm:%s145] %v182
                %v184 = vld [vmem:[%s152 + $0xf0] sm:%s145]
                %185 = vst [vmem:[%s153 + $0x78] sm:%s145] %v184
                %v186 = vld [vmem:[%s152 + $0x100] sm:%s145]
                %187 = vst [vmem:[%s153 + $0x80] sm:%s145] %v186
                %v188 = vld [vmem:[%s152 + $0x110] sm:%s145]
                %189 = vst [vmem:[%s153 + $0x88] sm:%s145] %v188
              $region45: #{utae_forward.20} parent=39 // loop_footer
                %s151 = sadd.s32 1, %s147
              $region46: #{utae_forward.20} parent=39 // loop_footer_branch
                %146 = sbr.rel target = $region42
              $region47: #{utae_forward.20} parent=39 // loop_exit
                _
            $region40: #{utae_forward.20} parent=31 // pred_fallthru
              _
          $region32: #{utae_forward.20} parent=27 // pred_fallthru
            _
          %238 = vnop
        $region28: #{utae_forward.20} parent=23 // pred_fallthru
          _
      $region24: #{utae_forward.20} parent=5 // pred_fallthru
        _
      %p239 = scmp.le.s32.totalorder 1, %s9
      %p240 = scmp.lt.s32.totalorder %s9, 3
      %p241 = pnand %p239, %p240
      %p242 = pneg %p241
      // Predicated region
      $region63: #{utae_forward.20} parent=5 // pred_check
        _
      $region64: #{utae_forward.20} parent=5 // pred_check_branch
        %244 = sbr.rel (%p241) target = $region66
      $region65: #{utae_forward.20} parent=5 // pred_region
        %s245 = ssub.s32 %s9, 1
        %s246 = sand.u32 %s43, 1
        %s247 = sand.u32 %s43, 1
        %s248 = smul.addr %s247, 144
        %s249 = scalar_lea.vmem [#allocation2], %s248
        // Predicated region
        $region67: #{utae_forward.20} parent=65 // pred_check
          %p250 = pneg %p56
        $region68: #{utae_forward.20} parent=65 // pred_check_branch
          %252 = sbr.rel (%p250) target = $region70
        $region69: #{utae_forward.20} parent=65 // pred_region
          _
        $region70: #{utae_forward.20} parent=65 // pred_fallthru
          _
        %p253 = pneg %p30
        %p254 = pneg %p27
        %s255 = sand.u32 %s43, 1
        %s256 = sand.u32 %s43, 1
        %s257 = smul.addr %s256, 144
        %s258 = scalar_lea.vmem [#allocation2], %s257
        %p259 = pneg %p56
        %p260 = pneg %p53
        %p261 = pneg %p77
        %p262 = pneg %p74
        %p263 = pneg %p103
        %p264 = pneg %p100
        %s265 = smul.u32 2, %s14
        %p266 = scmp.lt.s32.totalorder %s265, 3
        %s267 = scalar_select %p266, %s265, 3
        %s268 = smul.addr %s267, 8
        %s269 = scalar_lea.vmem %s3, %s268
        %s270 = smul.u32 2, %s14
        %s271 = smul.u32 2, %s14
        %p272 = scmp.lt.s32.totalorder %s271, 3
        %s273 = scalar_select %p272, %s271, 3
        %s274 = smul.addr %s273, 8
        %s275 = scalar_lea.vmem %s3, %s274
        %s276 = smul.u32 2, %s14
        %v278 = vld [vmem:[%s0] sm:$0xff]
        %v279 = vld [vmem:[%s249] sm:$0xff]
        %v280 = vld [vmem:[%s249 + $0x8] sm:$0xff]
        %v281 = vld [vmem:[%s249 + $0x10] sm:$0xff]
        %v282 = vld [vmem:[%s249 + $0x18] sm:$0xff]
        %v283 = vld [vmem:[%s249 + $0x20] sm:$0xff]
        %v284 = vld [vmem:[%s249 + $0x28] sm:$0xff]
        %v285 = vld [vmem:[%s249 + $0x30] sm:$0xff]
        %v286 = vld [vmem:[%s249 + $0x38] sm:$0xff]
        %v287 = vld [vmem:[%s249 + $0x40] sm:$0xff]
        %v288 = vld [vmem:[%s249 + $0x48] sm:$0xff]
        %v289 = vld [vmem:[%s249 + $0x50] sm:$0xff]
        %v290 = vld [vmem:[%s249 + $0x58] sm:$0xff]
        %v291 = vld [vmem:[%s249 + $0x60] sm:$0xff]
        %v292 = vld [vmem:[%s249 + $0x68] sm:$0xff]
        %v293 = vld [vmem:[%s249 + $0x70] sm:$0xff]
        %v294 = vld [vmem:[%s249 + $0x78] sm:$0xff]
        %v295 = vld [vmem:[%s249 + $0x80] sm:$0xff]
        %v296 = vld [vmem:[%s249 + $0x88] sm:$0xff]
        %v297 = vld [vmem:[%s2] sm:$0xff]
        %299 = vset.pattern.permute.xlu0 0
        %300 = vperm.xlu0 %299, %v297
        %v301 = vpop.permute.xlu0 %300
        %v304 = vunpack.c.l.b16 %v278
        %v305 = vunpack.c.h.b16 %v278
        %v306 = vpack.c.b16 %v304, %v304
        %v307 = vpack.c.b16 %v305, %v305
        %v327 = vunpack.c.l.b16 %v279
        %v328 = vunpack.c.h.b16 %v279
        %v329 = vunpack.c.l.b16 %v280
        %v330 = vunpack.c.h.b16 %v280
        %v331 = vunpack.c.l.b16 %v281
        %v332 = vunpack.c.h.b16 %v281
        %v333 = vunpack.c.l.b16 %v282
        %v334 = vunpack.c.h.b16 %v282
        %v335 = vunpack.c.l.b16 %v283
        %v336 = vunpack.c.h.b16 %v283
        %v337 = vunpack.c.l.b16 %v284
        %v338 = vunpack.c.h.b16 %v284
        %v339 = vunpack.c.l.b16 %v285
        %v340 = vunpack.c.h.b16 %v285
        %v341 = vunpack.c.l.b16 %v286
        %v342 = vunpack.c.h.b16 %v286
        %v343 = vunpack.c.l.b16 %v287
        %v344 = vunpack.c.h.b16 %v287
        %v345 = vunpack.c.l.b16 %v288
        %v346 = vunpack.c.h.b16 %v288
        %v347 = vunpack.c.l.b16 %v289
        %v348 = vunpack.c.h.b16 %v289
        %v349 = vunpack.c.l.b16 %v290
        %v350 = vunpack.c.h.b16 %v290
        %v351 = vunpack.c.l.b16 %v291
        %v352 = vunpack.c.h.b16 %v291
        %v353 = vunpack.c.l.b16 %v292
        %v354 = vunpack.c.h.b16 %v292
        %v355 = vunpack.c.l.b16 %v293
        %v356 = vunpack.c.h.b16 %v293
        %v357 = vunpack.c.l.b16 %v294
        %v358 = vunpack.c.h.b16 %v294
        %v359 = vunpack.c.l.b16 %v295
        %v360 = vunpack.c.h.b16 %v295
        %v361 = vunpack.c.l.b16 %v296
        %v362 = vunpack.c.h.b16 %v296
        %v363 = vpack.c.b16 %v329, %v327
        %v364 = vpack.c.b16 %v330, %v328
        %v365 = vpack.c.b16 %v333, %v331
        %v366 = vpack.c.b16 %v334, %v332
        %v367 = vpack.c.b16 %v337, %v335
        %v368 = vpack.c.b16 %v338, %v336
        %v369 = vpack.c.b16 %v341, %v339
        %v370 = vpack.c.b16 %v342, %v340
        %v371 = vpack.c.b16 %v345, %v343
        %v372 = vpack.c.b16 %v346, %v344
        %v373 = vpack.c.b16 %v349, %v347
        %v374 = vpack.c.b16 %v350, %v348
        %v375 = vpack.c.b16 %v353, %v351
        %v376 = vpack.c.b16 %v354, %v352
        %v377 = vpack.c.b16 %v357, %v355
        %v378 = vpack.c.b16 %v358, %v356
        %v379 = vpack.c.b16 %v361, %v359
        %v380 = vpack.c.b16 %v362, %v360
        %vm399 = vcmask 130048
        %v401 = vsel %vm399, %v307, 0
        %403 = vmatpush.bf16.msra.mxu0 %v377
        %404 = vmatpush.bf16.msra.mxu0 %v375
        %405 = vmatpush.bf16.msra.mxu0 %v373
        %406 = vmatpush.bf16.msra.mxu0 %v371
        %407 = vmatpush.bf16.msra.mxu0 %v369
        %408 = vmatpush.bf16.msra.mxu0 %v367
        %409 = vmatpush.bf16.msra.mxu0 %v365
        %410 = vmatpush.bf16.msra.mxu0 %v363
        %411 = vmatmul.bf16.gmra.mxu0 %v306
        %v412 = vpop.f32.mrf.mxu0
        %v413 = vadd.f32 %v301, %v412
        %v414 = vpop.f32.mrf.mxu0
        %415 = vdwg.mxu0
        %416 = vmatpush.bf16.msra.mxu0 0
        %417 = vmatpush.bf16.msra.mxu0 0
        %418 = vmatpush.bf16.msra.mxu0 0
        %419 = vmatpush.bf16.msra.mxu0 0
        %420 = vmatpush.bf16.msra.mxu0 0
        %421 = vmatpush.bf16.msra.mxu0 0
        %422 = vmatpush.bf16.msra.mxu0 0
        %423 = vmatpush.bf16.msra.mxu0 %v379
        %424 = vmatmul.bf16.gmra.mxu0 %v401
        %v425 = vpop.f32.mrf.mxu0
        %v426 = vadd.f32 %v413, %v425
        %v427 = vpop.f32.mrf.mxu0
        %428 = vdwg.mxu0
        %429 = vmatpush.bf16.msra.mxu0 %v378
        %430 = vmatpush.bf16.msra.mxu0 %v376
        %431 = vmatpush.bf16.msra.mxu0 %v374
        %432 = vmatpush.bf16.msra.mxu0 %v372
        %433 = vmatpush.bf16.msra.mxu0 %v370
        %434 = vmatpush.bf16.msra.mxu0 %v368
        %435 = vmatpush.bf16.msra.mxu0 %v366
        %436 = vmatpush.bf16.msra.mxu0 %v364
        %437 = vmatmul.bf16.gmra.mxu0 %v306
        %v438 = vpop.f32.mrf.mxu0
        %v439 = vadd.f32 %v301, %v438
        %v440 = vpop.f32.mrf.mxu0
        %441 = vdwg.mxu0
        %442 = vmatpush.bf16.msra.mxu0 0
        %443 = vmatpush.bf16.msra.mxu0 0
        %444 = vmatpush.bf16.msra.mxu0 0
        %445 = vmatpush.bf16.msra.mxu0 0
        %446 = vmatpush.bf16.msra.mxu0 0
        %447 = vmatpush.bf16.msra.mxu0 0
        %448 = vmatpush.bf16.msra.mxu0 0
        %449 = vmatpush.bf16.msra.mxu0 %v380
        %450 = vmatmul.bf16.gmra.mxu0 %v401
        %v451 = vpop.f32.mrf.mxu0
        %v452 = vadd.f32 %v439, %v451
        %v453 = vpop.f32.mrf.mxu0
        %454 = vdwg.mxu0
        %v455 = vmax.f32 %v426, 0.0
        %v456 = vmax.f32 %v452, 0.0
        %457 = vst [vmem:[%s275] sm:$0xff] %v455
        %458 = vst [vmem:[%s275 + $0x8] sm:$0xff] %v456
        %s459 = smul.u32 2, %s14
        %p460 = scmp.lt.s32.totalorder %s459, 3
        %s461 = scalar_select %p460, %s459, 3
        %s462 = smul.addr %s461, 8
        %s463 = scalar_lea.vmem %s3, %s462
        // Predicated region
        $region71: #{utae_forward.20} parent=65 // pred_check
          %p464 = pneg %p100
        $region72: #{utae_forward.20} parent=65 // pred_check_branch
          %466 = sbr.rel (%p464) target = $region74
        $region73: #{utae_forward.20} parent=65 // pred_region
          %s467 = smul.u32 2, %s14
        $region74: #{utae_forward.20} parent=65 // pred_fallthru
          _
      $region66: #{utae_forward.20} parent=5 // pred_fallthru
        _
      %p468 = scmp.le.s32.totalorder 2, %s9
      // Predicated region
      $region75: #{utae_forward.20} parent=5 // pred_check
        %p469 = pneg %p468
      $region76: #{utae_forward.20} parent=5 // pred_check_branch
        %471 = sbr.rel (%p469) target = $region78
      $region77: #{utae_forward.20} parent=5 // pred_region
        %s472 = ssub.s32 %s9, 2
        // Predicated region
        $region79: #{utae_forward.20} parent=77 // pred_check
          %p473 = pneg %p106
        $region80: #{utae_forward.20} parent=77 // pred_check_branch
          %475 = sbr.rel (%p473) target = $region82
        $region81: #{utae_forward.20} parent=77 // pred_region
          %s476 = smul.u32 2, %s15
          %p477 = scmp.lt.s32.totalorder %s476, 3
          %s478 = scalar_select %p477, %s476, 3
          %s479 = smul.addr %s478, 8
          %s480 = scalar_lea.vmem %s3, %s479
        $region82: #{utae_forward.20} parent=77 // pred_fallthru
          _
      $region78: #{utae_forward.20} parent=5 // pred_fallthru
        _
    $region6: #{utae_forward.20} parent=1 // loop_footer
      %s13 = sadd.s32 1, %s9
    $region7: #{utae_forward.20} parent=1 // loop_footer_branch
      %8 = sbr.rel target = $region3
    $region8: #{utae_forward.20} parent=1 // loop_exit
      _

// kernel: utae_forward.21
$region0: #{utae_forward.21}
  #allocation0 [shape = 'u32[]', space=smem, size = 0x4, offset = 0x4, fixed_abs, tag = 'smem constant byte address 0x4 - core index']
  #allocation1 [shape = 'u32[72,128]{1,0:T(1,128)}', space=vmem, size = 0x9000, scoped, tag = 'internal scratch']
  #allocation2 [shape = 'f32[1,1]{1,0:T(1,128)S(1)}', space=vmem, size = 0x200, scoped, tag = 'scoped memory for utae_forward.21']
  %s0 = inlined_call_operand.vmem [shape: bf16[1,72], index: 0, kind: input, shape index: {}]
  %s1 = inlined_call_operand.vmem [shape: bf16[72,512], index: 1, kind: input, shape index: {}]
  %s2 = inlined_call_operand.<no memory space> [shape: f32[1,1], index: 2, kind: input, shape index: {}]
  %s3 = inlined_call_operand.vmem [shape: f32[1,512], index: 3, kind: output, shape index: {}]
  %s4 = sld [smem:[#allocation0]]
  $region83: #{utae_forward.21} parent=0
    _
  %s6 = ssub.s32 1, %s4
  %s7 = scalar_select 0, %s6, %s4
  %v8 = vstv %s2
  %9 = vst [vmem:[#allocation2] sm:$0x1] %v8
  $region1: #{utae_forward.21} parent=0
    #allocation3 [shape = 'u8[73728]{0}', space=vmem, size = 0x12000, scoped, tag = 'input window, operand 1']
    loop: start=0, step=1, limit=4
    $region2: #{utae_forward.21} parent=1 // loop_pre_header
      _
    $region3: #{utae_forward.21} parent=1 // loop_header
      %s11 = sphi 0, %s15
      %p12 = scmp.ge.s32.totalorder %s11, 4
      %s19 = sphi 0, %s19
      %s21 = sphi 0, %s19
      %s22 = sphi 0, %s21
      %s36 = sphi 0, %s22
      %s42 = sphi 0, %s44
      %s45 = sphi 0, %s42
      %s46 = sphi 0, %s45
      %s62 = sphi 0, %s46
      %s66 = sphi 0, %s66
      %s68 = sphi 0, %s66
      %s69 = sphi 0, %s68
      %s83 = sphi 0, %s69
      %s89 = sphi 0, %s91
      %s92 = sphi 0, %s89
      %s93 = sphi 0, %s92
      %s109 = sphi 0, %s93
    $region4: #{utae_forward.21} parent=1 // loop_header_branch
      %14 = sbr.rel (%p12) target = $region8
    $region5: #{utae_forward.21} parent=1 // loop_body
      %s16 = ssub.s32 %s11, 1
      %s17 = ssub.s32 %s11, 2
      %s18 = sadd.s32 %s11, 1
      %s20 = sadd.s32 %s19, 1
      %p23 = scmp.eq.s32.totalorder %s11, 1
      %p24 = scmp.ne.s32.totalorder %s19, %s21
      %p25 = scmp.eq.s32.totalorder %s11, 0
      %p26 = por %p24, %p25
      %p27 = scmp.ne.s32.totalorder %s19, %s21
      %p28 = scmp.eq.s32.totalorder %s16, 1
      %p29 = por %p27, %p28
      %p30 = scmp.ne.s32.totalorder %s21, %s22
      %p31 = scmp.eq.s32.totalorder %s16, 0
      %p32 = por %p30, %p31
      %p33 = scmp.ne.s32.totalorder %s21, %s22
      %p34 = scmp.eq.s32.totalorder %s17, 1
      %p35 = por %p33, %p34
      %p37 = scmp.ne.s32.totalorder %s22, %s36
      %p38 = scmp.eq.s32.totalorder %s17, 0
      %p39 = por %p37, %p38
      %s40 = ssub.s32 %s11, %s18
      %p41 = scmp.eq.s32.totalorder %s40, 0
      %s43 = sadd.s32 %s42, 1
      %s44 = scalar_select %p41, %s42, %s43
      %p47 = pneg %p41
      %p48 = scmp.eq.s32.totalorder %s11, 1
      %p49 = por %p47, %p48
      %p50 = scmp.ne.s32.totalorder %s42, %s45
      %p51 = scmp.eq.s32.totalorder %s11, 0
      %p52 = por %p50, %p51
      %p53 = scmp.ne.s32.totalorder %s42, %s45
      %p54 = scmp.eq.s32.totalorder %s16, 1
      %p55 = por %p53, %p54
      %p56 = scmp.ne.s32.totalorder %s45, %s46
      %p57 = scmp.eq.s32.totalorder %s16, 0
      %p58 = por %p56, %p57
      %p59 = scmp.ne.s32.totalorder %s45, %s46
      %p60 = scmp.eq.s32.totalorder %s17, 1
      %p61 = por %p59, %p60
      %p63 = scmp.ne.s32.totalorder %s46, %s62
      %p64 = scmp.eq.s32.totalorder %s17, 0
      %p65 = por %p63, %p64
      %s67 = sadd.s32 %s66, 1
      %p70 = scmp.eq.s32.totalorder %s11, 1
      %p71 = scmp.ne.s32.totalorder %s66, %s68
      %p72 = scmp.eq.s32.totalorder %s11, 0
      %p73 = por %p71, %p72
      %p74 = scmp.ne.s32.totalorder %s66, %s68
      %p75 = scmp.eq.s32.totalorder %s16, 1
      %p76 = por %p74, %p75
      %p77 = scmp.ne.s32.totalorder %s68, %s69
      %p78 = scmp.eq.s32.totalorder %s16, 0
      %p79 = por %p77, %p78
      %p80 = scmp.ne.s32.totalorder %s68, %s69
      %p81 = scmp.eq.s32.totalorder %s17, 1
      %p82 = por %p80, %p81
      %p84 = scmp.ne.s32.totalorder %s69, %s83
      %p85 = scmp.eq.s32.totalorder %s17, 0
      %p86 = por %p84, %p85
      %s87 = ssub.s32 %s11, %s18
      %p88 = scmp.eq.s32.totalorder %s87, 0
      %s90 = sadd.s32 %s89, 1
      %s91 = scalar_select %p88, %s89, %s90
      %p94 = pneg %p88
      %p95 = scmp.eq.s32.totalorder %s11, 1
      %p96 = por %p94, %p95
      %p97 = scmp.ne.s32.totalorder %s89, %s92
      %p98 = scmp.eq.s32.totalorder %s11, 0
      %p99 = por %p97, %p98
      %p100 = scmp.ne.s32.totalorder %s89, %s92
      %p101 = scmp.eq.s32.totalorder %s16, 1
      %p102 = por %p100, %p101
      %p103 = scmp.ne.s32.totalorder %s92, %s93
      %p104 = scmp.eq.s32.totalorder %s16, 0
      %p105 = por %p103, %p104
      %p106 = scmp.ne.s32.totalorder %s92, %s93
      %p107 = scmp.eq.s32.totalorder %s17, 1
      %p108 = por %p106, %p107
      %p110 = scmp.ne.s32.totalorder %s93, %s109
      %p111 = scmp.eq.s32.totalorder %s17, 0
      %p112 = por %p110, %p111
      %p113 = scmp.le.s32.totalorder 1, %s11
      %p114 = scmp.lt.s32.totalorder %s11, 3
      %p115 = pnand %p113, %p114
      %p116 = pneg %p115
      // Predicated region
      $region9: #{utae_forward.21} parent=5 // pred_check
        _
      $region10: #{utae_forward.21} parent=5 // pred_check_branch
        %118 = sbr.rel (%p115) target = $region12
      $region11: #{utae_forward.21} parent=5 // pred_region
        %s119 = ssub.s32 %s11, 1
        // Predicated region
        $region13: #{utae_forward.21} parent=11 // pred_check
          %p120 = pneg %p32
        $region14: #{utae_forward.21} parent=11 // pred_check_branch
          %122 = sbr.rel (%p120) target = $region16
        $region15: #{utae_forward.21} parent=11 // pred_region
          _
        $region16: #{utae_forward.21} parent=11 // pred_fallthru
          _
        // Predicated region
        $region17: #{utae_forward.21} parent=11 // pred_check
          %p123 = pneg %p79
        $region18: #{utae_forward.21} parent=11 // pred_check_branch
          %125 = sbr.rel (%p123) target = $region20
        $region19: #{utae_forward.21} parent=11 // pred_region
          _
        $region20: #{utae_forward.21} parent=11 // pred_fallthru
          _
      $region12: #{utae_forward.21} parent=5 // pred_fallthru
        _
      %p126 = scmp.lt.s32.totalorder %s11, 2
      // Predicated region
      $region21: #{utae_forward.21} parent=5 // pred_check
        %p127 = pneg %p126
      $region22: #{utae_forward.21} parent=5 // pred_check_branch
        %129 = sbr.rel (%p127) target = $region24
      $region23: #{utae_forward.21} parent=5 // pred_region
        // Predicated region
        $region25: #{utae_forward.21} parent=23 // pred_check
          %p130 = pneg %p52
        $region26: #{utae_forward.21} parent=23 // pred_check_branch
          %132 = sbr.rel (%p130) target = $region28
        $region27: #{utae_forward.21} parent=23 // pred_region
          %s133 = sand.u32 %s42, 1
          %s134 = sand.u32 %s42, 1
          %s135 = smul.addr %s134, 72
          %s136 = scalar_lea.vmem [#allocation3], %s135
          %s137 = smul.u32 2, %s11
          %s138 = smul.addr %s137, 4
          %s139 = scalar_lea.vmem %s1, %s138
          // Predicated region
          $region29: #{utae_forward.21} parent=27 // pred_check
            _
          $region30: #{utae_forward.21} parent=27 // pred_check_branch
            %141 = sbr.rel (0) target = $region32
          $region31: #{utae_forward.21} parent=27 // pred_region
            // Predicated region
            $region33: #{utae_forward.21} parent=31 // pred_check
              _
            $region34: #{utae_forward.21} parent=31 // pred_check_branch
              %143 = sbr.rel (0) target = $region36
            $region35: #{utae_forward.21} parent=31 // pred_region
              // Predicated region
              $region48: #{utae_forward.21} parent=35 // pred_check
                _
              $region49: #{utae_forward.21} parent=35 // pred_check_branch
                %175 = sbr.rel (0) target = $region51
              $region50: #{utae_forward.21} parent=35 // pred_region
                loop: start=0, step=1, limit=1
                $region52: #{utae_forward.21} parent=50 // loop_pre_header
                  _
                $region53: #{utae_forward.21} parent=50 // loop_header
                  %s177 = sphi 0, %s181
                  %p178 = scmp.ge.s32.totalorder %s177, 1
                  %s182 = sphi %s139, %s139
                  %s183 = sphi %s136, %s136
                $region54: #{utae_forward.21} parent=50 // loop_header_branch
                  %180 = sbr.rel (%p178) target = $region58
                $region55: #{utae_forward.21} parent=50 // loop_body
                  %v184 = vld [vmem:[%s182] sm:$0xff]
                  %185 = vst [vmem:[%s183] sm:$0xff] %v184
                  %v186 = vld [vmem:[%s182 + $0x10] sm:$0xff]
                  %187 = vst [vmem:[%s183 + $0x8] sm:$0xff] %v186
                  %v188 = vld [vmem:[%s182 + $0x20] sm:$0xff]
                  %189 = vst [vmem:[%s183 + $0x10] sm:$0xff] %v188
                  %v190 = vld [vmem:[%s182 + $0x30] sm:$0xff]
                  %191 = vst [vmem:[%s183 + $0x18] sm:$0xff] %v190
                  %v192 = vld [vmem:[%s182 + $0x40] sm:$0xff]
                  %193 = vst [vmem:[%s183 + $0x20] sm:$0xff] %v192
                  %v194 = vld [vmem:[%s182 + $0x50] sm:$0xff]
                  %195 = vst [vmem:[%s183 + $0x28] sm:$0xff] %v194
                  %v196 = vld [vmem:[%s182 + $0x60] sm:$0xff]
                  %197 = vst [vmem:[%s183 + $0x30] sm:$0xff] %v196
                  %v198 = vld [vmem:[%s182 + $0x70] sm:$0xff]
                  %199 = vst [vmem:[%s183 + $0x38] sm:$0xff] %v198
                  %v200 = vld [vmem:[%s182 + $0x80] sm:$0xff]
                  %201 = vst [vmem:[%s183 + $0x40] sm:$0xff] %v200
                $region56: #{utae_forward.21} parent=50 // loop_footer
                  %s181 = sadd.s32 1, %s177
                $region57: #{utae_forward.21} parent=50 // loop_footer_branch
                  %176 = sbr.rel target = $region53
                $region58: #{utae_forward.21} parent=50 // loop_exit
                  _
              $region51: #{utae_forward.21} parent=35 // pred_fallthru
                _
              // Predicated region
              $region59: #{utae_forward.21} parent=35 // pred_check
                _
              $region60: #{utae_forward.21} parent=35 // pred_check_branch
                %203 = sbr.rel target = $region62
              $region61: #{utae_forward.21} parent=35 // pred_region
                _
              $region62: #{utae_forward.21} parent=35 // pred_fallthru
                _
            $region36: #{utae_forward.21} parent=31 // pred_fallthru
              _
            // Predicated region
            $region37: #{utae_forward.21} parent=31 // pred_check
              _
            $region38: #{utae_forward.21} parent=31 // pred_check_branch
              %145 = sbr.rel target = $region40
            $region39: #{utae_forward.21} parent=31 // pred_region
              %s147 = ssub.s32 256, 1
              loop: start=0, step=1, limit=1
              $region41: #{utae_forward.21} parent=39 // loop_pre_header
                _
              $region42: #{utae_forward.21} parent=39 // loop_header
                %s149 = sphi 0, %s153
                %p150 = scmp.ge.s32.totalorder %s149, 1
                %s154 = sphi %s139, %s139
                %s155 = sphi %s136, %s136
              $region43: #{utae_forward.21} parent=39 // loop_header_branch
                %152 = sbr.rel (%p150) target = $region47
              $region44: #{utae_forward.21} parent=39 // loop_body
                %v156 = vld [vmem:[%s154] sm:%s147]
                %157 = vst [vmem:[%s155] sm:%s147] %v156
                %v158 = vld [vmem:[%s154 + $0x10] sm:%s147]
                %159 = vst [vmem:[%s155 + $0x8] sm:%s147] %v158
                %v160 = vld [vmem:[%s154 + $0x20] sm:%s147]
                %161 = vst [vmem:[%s155 + $0x10] sm:%s147] %v160
                %v162 = vld [vmem:[%s154 + $0x30] sm:%s147]
                %163 = vst [vmem:[%s155 + $0x18] sm:%s147] %v162
                %v164 = vld [vmem:[%s154 + $0x40] sm:%s147]
                %165 = vst [vmem:[%s155 + $0x20] sm:%s147] %v164
                %v166 = vld [vmem:[%s154 + $0x50] sm:%s147]
                %167 = vst [vmem:[%s155 + $0x28] sm:%s147] %v166
                %v168 = vld [vmem:[%s154 + $0x60] sm:%s147]
                %169 = vst [vmem:[%s155 + $0x30] sm:%s147] %v168
                %v170 = vld [vmem:[%s154 + $0x70] sm:%s147]
                %171 = vst [vmem:[%s155 + $0x38] sm:%s147] %v170
                %v172 = vld [vmem:[%s154 + $0x80] sm:%s147]
                %173 = vst [vmem:[%s155 + $0x40] sm:%s147] %v172
              $region45: #{utae_forward.21} parent=39 // loop_footer
                %s153 = sadd.s32 1, %s149
              $region46: #{utae_forward.21} parent=39 // loop_footer_branch
                %148 = sbr.rel target = $region42
              $region47: #{utae_forward.21} parent=39 // loop_exit
                _
            $region40: #{utae_forward.21} parent=31 // pred_fallthru
              _
          $region32: #{utae_forward.21} parent=27 // pred_fallthru
            _
          %204 = vnop
        $region28: #{utae_forward.21} parent=23 // pred_fallthru
          _
      $region24: #{utae_forward.21} parent=5 // pred_fallthru
        _
      %p205 = scmp.le.s32.totalorder 1, %s11
      %p206 = scmp.lt.s32.totalorder %s11, 3
      %p207 = pnand %p205, %p206
      %p208 = pneg %p207
      // Predicated region
      $region63: #{utae_forward.21} parent=5 // pred_check
        _
      $region64: #{utae_forward.21} parent=5 // pred_check_branch
        %210 = sbr.rel (%p207) target = $region66
      $region65: #{utae_forward.21} parent=5 // pred_region
        %s211 = ssub.s32 %s11, 1
        %s212 = sand.u32 %s45, 1
        %s213 = sand.u32 %s45, 1
        %s214 = smul.addr %s213, 72
        %s215 = scalar_lea.vmem [#allocation3], %s214
        // Predicated region
        $region67: #{utae_forward.21} parent=65 // pred_check
          %p216 = pneg %p58
        $region68: #{utae_forward.21} parent=65 // pred_check_branch
          %218 = sbr.rel (%p216) target = $region70
        $region69: #{utae_forward.21} parent=65 // pred_region
          _
        $region70: #{utae_forward.21} parent=65 // pred_fallthru
          _
        %p219 = pneg %p32
        %p220 = pneg %p29
        %s221 = sand.u32 %s45, 1
        %s222 = sand.u32 %s45, 1
        %s223 = smul.addr %s222, 72
        %s224 = scalar_lea.vmem [#allocation3], %s223
        %p225 = pneg %p58
        %p226 = pneg %p55
        %p227 = pneg %p79
        %p228 = pneg %p76
        %p229 = pneg %p105
        %p230 = pneg %p102
        %s231 = smul.u32 2, %s16
        %p232 = scmp.lt.s32.totalorder %s231, 3
        %s233 = scalar_select %p232, %s231, 3
        %s234 = scalar_lea.vmem %s3, %s233
        %s235 = smul.u32 2, %s16
        %s236 = smul.u32 2, %s16
        %p237 = scmp.lt.s32.totalorder %s236, 3
        %s238 = scalar_select %p237, %s236, 3
        %s239 = scalar_lea.vmem %s3, %s238
        %s240 = smul.u32 2, %s16
        %v242 = vld [vmem:[%s0] sm:$0x1]
        %v243 = vld [vmem:[%s215] sm:$0xff]
        %v244 = vld [vmem:[%s215 + $0x8] sm:$0xff]
        %v245 = vld [vmem:[%s215 + $0x10] sm:$0xff]
        %v246 = vld [vmem:[%s215 + $0x18] sm:$0xff]
        %v247 = vld [vmem:[%s215 + $0x20] sm:$0xff]
        %v248 = vld [vmem:[%s215 + $0x28] sm:$0xff]
        %v249 = vld [vmem:[%s215 + $0x30] sm:$0xff]
        %v250 = vld [vmem:[%s215 + $0x38] sm:$0xff]
        %v251 = vld [vmem:[%s215 + $0x40] sm:$0xff]
        %v252 = vld [vmem:[#allocation2] sm:$0x1]
        %254 = vset.pattern.permute.xlu0 0
        %255 = vperm.xlu0 %254, %v252
        %v256 = vpop.permute.xlu0 %255
        %v258 = vperm.slane %v256, 0
        %v268 = vunpack.c.l.b16 %v243
        %v269 = vunpack.c.h.b16 %v243
        %v270 = vunpack.c.l.b16 %v244
        %v271 = vunpack.c.h.b16 %v244
        %v272 = vunpack.c.l.b16 %v245
        %v273 = vunpack.c.h.b16 %v245
        %v274 = vunpack.c.l.b16 %v246
        %v275 = vunpack.c.h.b16 %v246
        %v276 = vunpack.c.l.b16 %v247
        %v277 = vunpack.c.h.b16 %v247
        %v278 = vunpack.c.l.b16 %v248
        %v279 = vunpack.c.h.b16 %v248
        %v280 = vunpack.c.l.b16 %v249
        %v281 = vunpack.c.h.b16 %v249
        %v282 = vunpack.c.l.b16 %v250
        %v283 = vunpack.c.h.b16 %v250
        %v284 = vunpack.c.l.b16 %v251
        %v285 = vunpack.c.h.b16 %v251
        %v286 = vpack.c.b16 %v270, %v268
        %v287 = vpack.c.b16 %v271, %v269
        %v288 = vpack.c.b16 %v274, %v272
        %v289 = vpack.c.b16 %v275, %v273
        %v290 = vpack.c.b16 %v278, %v276
        %v291 = vpack.c.b16 %v279, %v277
        %v292 = vpack.c.b16 %v282, %v280
        %v293 = vpack.c.b16 %v283, %v281
        %v294 = vpack.c.b16 %v284, %v284
        %v295 = vpack.c.b16 %v285, %v285
        %vm304 = vcmask 588800
        %v306 = vsel %vm304, %v242, 0
        %vm308 = vcmask 1043456
        %v310 = vsel %vm308, %v294, 0
        %v313 = vsel %vm308, %v295, 0
        %315 = vmatpush.bf16.msra.mxu0 0
        %316 = vmatpush.bf16.msra.mxu0 0
        %317 = vmatpush.bf16.msra.mxu0 0
        %318 = vmatpush.bf16.msra.mxu0 %v310
        %319 = vmatpush.bf16.msra.mxu0 %v292
        %320 = vmatpush.bf16.msra.mxu0 %v290
        %321 = vmatpush.bf16.msra.mxu0 %v288
        %322 = vmatpush.bf16.msra.mxu0 %v286
        %323 = vmatmul.bf16.gmra.mxu0 %v306
        %v324 = vpop.f32.mrf.mxu0
        %v325 = vadd.f32 %v258, %v324
        %v326 = vpop.f32.mrf.mxu0
        %327 = vdwg.mxu0
        %328 = vmatpush.bf16.msra.mxu0 0
        %329 = vmatpush.bf16.msra.mxu0 0
        %330 = vmatpush.bf16.msra.mxu0 0
        %331 = vmatpush.bf16.msra.mxu0 %v313
        %332 = vmatpush.bf16.msra.mxu0 %v293
        %333 = vmatpush.bf16.msra.mxu0 %v291
        %334 = vmatpush.bf16.msra.mxu0 %v289
        %335 = vmatpush.bf16.msra.mxu0 %v287
        %336 = vmatmul.bf16.gmra.mxu0 %v306
        %v337 = vpop.f32.mrf.mxu0
        %v338 = vadd.f32 %v258, %v337
        %v339 = vpop.f32.mrf.mxu0
        %340 = vdwg.mxu0
        %v343 = vrot.slane %v338, 7
        %vm344 = vcmask 1040384
        %v345 = vsel %vm344, %v325, %v343
        %v347 = vlaneseq
        %vm348 = vcmp.ge.s32.totalorder %v347, 0
        %vm349 = vcmp.lt.s32.totalorder %v347, 256
        %vm350 = vmand %vm348, %vm349
        %351 = vst.msk [vmem:[%s239] sm:$0x3] %vm350, %v345
        %s352 = smul.u32 2, %s16
        %p353 = scmp.lt.s32.totalorder %s352, 3
        %s354 = scalar_select %p353, %s352, 3
        %s355 = scalar_lea.vmem %s3, %s354
        // Predicated region
        $region71: #{utae_forward.21} parent=65 // pred_check
          %p356 = pneg %p102
        $region72: #{utae_forward.21} parent=65 // pred_check_branch
          %358 = sbr.rel (%p356) target = $region74
        $region73: #{utae_forward.21} parent=65 // pred_region
          %s359 = smul.u32 2, %s16
        $region74: #{utae_forward.21} parent=65 // pred_fallthru
          _
      $region66: #{utae_forward.21} parent=5 // pred_fallthru
        _
      %p360 = scmp.le.s32.totalorder 2, %s11
      // Predicated region
      $region75: #{utae_forward.21} parent=5 // pred_check
        %p361 = pneg %p360
      $region76: #{utae_forward.21} parent=5 // pred_check_branch
        %363 = sbr.rel (%p361) target = $region78
      $region77: #{utae_forward.21} parent=5 // pred_region
        %s364 = ssub.s32 %s11, 2
        // Predicated region
        $region79: #{utae_forward.21} parent=77 // pred_check
          %p365 = pneg %p108
        $region80: #{utae_forward.21} parent=77 // pred_check_branch
          %367 = sbr.rel (%p365) target = $region82
        $region81: #{utae_forward.21} parent=77 // pred_region
          %s368 = smul.u32 2, %s17
          %p369 = scmp.lt.s32.totalorder %s368, 3
          %s370 = scalar_select %p369, %s368, 3
          %s371 = scalar_lea.vmem %s3, %s370
        $region82: #{utae_forward.21} parent=77 // pred_fallthru
          _
      $region78: #{utae_forward.21} parent=5 // pred_fallthru
        _
    $region6: #{utae_forward.21} parent=1 // loop_footer
      %s15 = sadd.s32 1, %s11
    $region7: #{utae_forward.21} parent=1 // loop_footer_branch
      %10 = sbr.rel target = $region3
    $region8: #{utae_forward.21} parent=1 // loop_exit
      _

</llo_original>
